<compile_context>
chip_gen: v7x
topology: tpu7x:2x2x1
jax: 0.10.0
libtpu: 0.0.40
codegen_flags: <defaults>
</compile_context>

<pallas_src>
import jax
import jax.numpy as jnp
from jax.experimental import pallas as pl
from jax.experimental.pallas import tpu as pltpu


LANE = 128
SUBLANE = 8


def _round_up(x, m):
    return ((x + m - 1) // m) * m


def _choose_b_tile(batch, requested):
    """Multiple of 8, <= requested, capped so the batch-tile grid has >= 2 steps."""
    req = max(SUBLANE, _round_up(int(requested), SUBLANE))
    if batch <= SUBLANE:
        return SUBLANE                      # single tile; cannot split further
    half = _round_up((batch + 1) // 2, SUBLANE)
    return min(req, half)


def _vmem_limit_bytes(bt, s_pad, d, hp, op):
    """Per-step VMEM estimate (double-buffered activations + resident weights)."""
    act_in = bt * s_pad * d * 2             # bf16 joint tile
    mask_in = bt * s_pad * 4
    out = bt * op * 4
    weights = (d * d + d * hp + hp * op) * 2 + (2 * d + hp + op) * 4
    temps = bt * s_pad * d * 4 * 3          # f32 x / attn*x / misc temporaries
    est = 2 * (act_in + mask_in + out) + 2 * weights + temps
    return int(min(max(2 * est, 32 << 20), 64 << 20))


# -----------------------------------------------------------------------------
# Fused Pallas kernel: one grid step == one tile of b_tile batch elements.
# -----------------------------------------------------------------------------
def fused_classifier_kernel(
    joint_ref,   # (BT, S, D)  bf16 joint token features (batch tile)
    mask_ref,    # (BT, S, 1)  f32 attention mask in {0,1} (0 also marks padding)
    wlin_ref,    # (D, D)      bf16 clip.linear1 weight
    blin_ref,    # (1, D)      f32  clip.linear1 bias
    wattn_ref,   # (1, D)      f32  attention-score weight, as a lane row
    w1_ref,      # (D, HP)     bf16 fc1 weight, lane-padded
    b1_ref,      # (1, HP)     f32  fc1 bias,   lane-padded
    w2_ref,      # (HP, OP)    bf16 fc2 weight, lane-padded
    b2_ref,      # (1, OP)     f32  fc2 bias,   lane-padded
    out_ref,     # (BT, OP)    f32  logits, lane-dense (valid columns are [:O])
):
    BT, S, D = joint_ref.shape

    # Token projection (clip.linear1): one bf16 MXU matmul, f32 accumulation.
    x = jnp.dot(joint_ref[...].reshape(BT * S, D), wlin_ref[...],
                preferred_element_type=jnp.float32)
    x = (x + blin_ref[...]).reshape(BT, S, D)                    # f32 from here

    # Attention-score head: VPU multiply with the broadcast wattn row +
    # cross-lane (XLU) reduce.  Cheaper than widening the MXU matmul by a full
    # extra 128 lanes (D << 128), and no sub-128-lane slices of the MXU output.
    # battn omitted: a constant added to every token's score is a softmax no-op.
    scores = jnp.sum(x * wattn_ref[...], axis=-1, keepdims=True)  # (BT, S, 1)

    # Masked softmax over tokens: additive -1e9 mask BEFORE the max (matches
    # the reference semantics; valid rows never underflow, denom >= 1).
    scores = scores + (mask_ref[...] - 1.0) * 1e9
    m = jnp.max(scores, axis=1, keepdims=True)                    # (BT, 1, 1)
    e = jnp.exp(scores - m)                                       # (BT, S, 1)
    attn = e / jnp.sum(e, axis=1, keepdims=True)                  # exact divide

    # Attention pooling (f32).
    pooled = jnp.sum(attn * x, axis=1)                            # (BT, D)

    # MLP head: Linear -> ReLU -> (dropout: eval identity) -> Linear.
    # bf16 MXU operands, f32 accumulation; biases added in f32.
    h = jnp.dot(pooled.astype(w1_ref.dtype), w1_ref[...],
                preferred_element_type=jnp.float32)
    h = jnp.maximum(h + b1_ref[...], 0.0)                         # (BT, HP)
    logits = jnp.dot(h.astype(w2_ref.dtype), w2_ref[...],
                     preferred_element_type=jnp.float32)
    out_ref[...] = (logits + b2_ref[...]).astype(out_ref.dtype)


# -----------------------------------------------------------------------------
# One-time weight packing (done at parameter-load time, NOT per forward).
# -----------------------------------------------------------------------------
def pack_params(params):
    D = params["wlin"].shape[0]
    H = params["w1"].shape[1]
    O = params["w2"].shape[1]
    HP = _round_up(H, LANE)
    OP = _round_up(O, LANE)
    f32, bf16 = jnp.float32, jnp.bfloat16
    return {
        "wlin": params["wlin"].astype(bf16),
        "blin": params["blin"].astype(f32).reshape(1, D),
        # wattn column -> lane row; battn dropped (softmax shift-invariance).
        "wattn_row": params["wattn"].astype(f32).reshape(1, D),
        "w1": jnp.zeros((D, HP), bf16).at[:, :H].set(params["w1"].astype(bf16)),
        "b1": jnp.zeros((1, HP), f32).at[:, :H].set(params["b1"].astype(f32)),
        "w2": jnp.zeros((HP, OP), bf16).at[:H, :O].set(params["w2"].astype(bf16)),
        "b2": jnp.zeros((1, OP), f32).at[:, :O].set(params["b2"].astype(f32)),
        "dims": (D, H, O, HP, OP),
    }


# -----------------------------------------------------------------------------
# Wrapper: pallas_call with batch-tile grid.
# -----------------------------------------------------------------------------
def model_v2_forward(joint_emb, mask, packed, *, b_tile=64):
    """joint_emb: (B,S,D) bf16/f32, mask: (B,S,1) in {0,1} -> logits (B,O) f32."""
    B, S, D = joint_emb.shape
    Dp, H, O, HP, OP = packed["dims"]
    assert D == Dp

    bt = _choose_b_tile(B, b_tile)
    s_mult = 16 if joint_emb.dtype == jnp.bfloat16 else SUBLANE
    S_pad = _round_up(S, s_mult)
    B_pad = _round_up(B, bt)

    mask = mask.astype(jnp.float32)
    if (B_pad, S_pad) != (B, S):
        # Fallback (extra HBM round trip).  The glue normally emits aligned
        # shapes so this path is skipped entirely.
        jp = jnp.zeros((B_pad, S_pad, D), joint_emb.dtype).at[:B, :S, :].set(joint_emb)
        mp = jnp.zeros((B_pad, S_pad, 1), jnp.float32).at[:B, :S, :].set(mask)
    else:
        jp, mp = joint_emb, mask

    grid = (B_pad // bt,)
    vmem_limit = _vmem_limit_bytes(bt, S_pad, D, HP, OP)

    def _weight_spec(shape, single_buffer):
        idx = lambda b: (0,) * len(shape)    # constant block -> resident weight
        if single_buffer:
            return pl.BlockSpec(shape, idx, pipeline_mode=pl.Buffered(1))
        return pl.BlockSpec(shape, idx)

    def _call(single_buffer_weights):
        grid_spec = pltpu.PrefetchScalarGridSpec(
            num_scalar_prefetch=0,
            grid=grid,
            in_specs=[
                pl.BlockSpec((bt, S_pad, D), lambda b: (b, 0, 0)),
                pl.BlockSpec((bt, S_pad, 1), lambda b: (b, 0, 0)),
                _weight_spec((D, D), single_buffer_weights),
                _weight_spec((1, D), single_buffer_weights),
                _weight_spec((1, D), single_buffer_weights),
                _weight_spec((D, HP), single_buffer_weights),
                _weight_spec((1, HP), single_buffer_weights),
                _weight_spec((HP, OP), single_buffer_weights),
                _weight_spec((1, OP), single_buffer_weights),
            ],
            out_specs=pl.BlockSpec((bt, OP), lambda b: (b, 0)),
        )
        return pl.pallas_call(
            fused_classifier_kernel,
            out_shape=jax.ShapeDtypeStruct((B_pad, OP), jnp.float32),
            grid_spec=grid_spec,
            compiler_params=pltpu.CompilerParams(
                dimension_semantics=("parallel",),   # batch tiles shard over TCs
                vmem_limit_bytes=vmem_limit,
            ),
        )(jp, mp, packed["wlin"], packed["blin"], packed["wattn_row"],
          packed["w1"], packed["b1"], packed["w2"], packed["b2"])

    try:
        out = _call(True)        # single-buffer the grid-invariant weights
    except Exception:            # pipeline_mode / Buffered(1) unsupported -> default
        out = _call(False)
    return out[:B, :O]


# -----------------------------------------------------------------------------
# Plain-JAX reference (for numerical check of the kernel).
# -----------------------------------------------------------------------------
def reference_forward(joint_emb, mask, params, *, bf16_matmuls=False):
    def mm(a):
        return a.astype(jnp.bfloat16) if bf16_matmuls else a.astype(jnp.float32)

    x = jnp.einsum("bsd,de->bse", mm(joint_emb), mm(params["wlin"]),
                   preferred_element_type=jnp.float32) + params["blin"]
    scores = jnp.einsum("bsd,do->bso", x, params["wattn"]) + params["battn"]
    scores = jnp.where(mask > 0.5, scores, -1e9)
    attn = jax.nn.softmax(scores, axis=1)
    pooled = jnp.sum(attn * x, axis=1)                       # (B, D)
    h = jnp.maximum(
        jnp.dot(mm(pooled), mm(params["w1"]),
                preferred_element_type=jnp.float32) + params["b1"], 0.0)
    return jnp.dot(mm(h), mm(params["w2"]),
                   preferred_element_type=jnp.float32) + params["b2"]


# -----------------------------------------------------------------------------
# CLIP stand-in glue (deterministic, not pretrained).
# -----------------------------------------------------------------------------
def patchify_nchw(images, patch):
    """NCHW -> (B, num_patches, C*patch*patch)."""
    B, C, Hh, Ww = images.shape
    gh, gw = Hh // patch, Ww // patch
    x = images.reshape(B, C, gh, patch, gw, patch)
    x = jnp.transpose(x, (0, 2, 4, 1, 3, 5))                 # (B, gh, gw, C, p, p)
    return x.reshape(B, gh * gw, C * patch * patch)


if __name__ == "__main__":
    # --- small, forward-consistent shapes (batch sized so the grid has 2 tiles) ---
    B = 64                # batch
    C, IMG = 3, 16        # image channels / spatial (NCHW input)
    PATCH = 8             # -> 4 patches per image
    ST = 8                # text sequence length
    D = 64                # embedding_dim (CLIP text hidden-size stand-in)
    HID = 32              # classifier hidden_dim
    OUT = 3               # output_dim (3 classes)
    VOCAB = 1000

    key = jax.random.PRNGKey(0)
    keys = jax.random.split(key, 12)

    # inputs ("text" as token ids, "images" NCHW, optional attention_mask)
    text_ids = jax.random.randint(keys[0], (B, ST), 0, VOCAB)
    images = jax.random.normal(keys[1], (B, C, IMG, IMG), dtype=jnp.float32)
    text_mask = jnp.concatenate(
        [jnp.ones((B, ST - 2), jnp.float32), jnp.zeros((B, 2), jnp.float32)], axis=1
    )  # last 2 text tokens are padding

    # deterministic stand-in CLIP parameters
    tok_emb = 0.02 * jax.random.normal(keys[2], (VOCAB, D), dtype=jnp.float32)
    patch_dim = C * PATCH * PATCH
    w_patch = 0.02 * jax.random.normal(keys[3], (patch_dim, D), dtype=jnp.float32)

    # model parameters (clip.linear1 + AttentionClassifier), (in, out) layout
    params = {
        "wlin":  (1.0 / jnp.sqrt(D)) * jax.random.normal(keys[4], (D, D), jnp.float32),
        "blin":  0.01 * jax.random.normal(keys[10], (1, D), jnp.float32),
        "wattn": (1.0 / jnp.sqrt(D)) * jax.random.normal(keys[5], (D, 1), jnp.float32),
        "battn": 0.05 * jax.random.normal(keys[11], (1, 1), jnp.float32),
        "w1":    (1.0 / jnp.sqrt(D)) * jax.random.normal(keys[6], (D, HID), jnp.float32),
        "b1":    0.01 * jax.random.normal(keys[7], (1, HID), jnp.float32),
        "w2":    (1.0 / jnp.sqrt(HID)) * jax.random.normal(keys[8], (HID, OUT), jnp.float32),
        "b2":    0.01 * jax.random.normal(keys[9], (1, OUT), jnp.float32),
    }

    # one-time weight packing (hoisted out of the per-inference path)
    packed = pack_params(params)

    # --- glue: build joint token sequence (text tokens ++ image patches) and
    #     pad the token axis here (once) so the kernel path needs no HBM copy.
    text_feats = tok_emb[text_ids]                              # (B, ST, D)
    img_feats = patchify_nchw(images, PATCH) @ w_patch          # (B, SI, D)
    SI = img_feats.shape[1]
    joint_emb = jnp.concatenate([text_feats, img_feats], axis=1)  # (B, S_raw, D)
    mask = jnp.concatenate([text_mask, jnp.ones((B, SI), jnp.float32)], axis=1)

    S_raw = ST + SI
    S = _round_up(S_raw, 16)                                    # bf16 sublane packing
    if S != S_raw:
        joint_emb = jnp.concatenate(
            [joint_emb, jnp.zeros((B, S - S_raw, D), joint_emb.dtype)], axis=1)
        mask = jnp.concatenate([mask, jnp.zeros((B, S - S_raw), jnp.float32)], axis=1)
    mask = mask.reshape(B, S, 1)

    # activation stream in bf16 (MXU operand dtype, half the DMA bytes)
    joint_bf16 = joint_emb.astype(jnp.bfloat16)

    # --- run Pallas kernel ---
    logits = model_v2_forward(joint_bf16, mask, packed)
    logits = jax.block_until_ready(logits)
    assert logits.shape == (B, OUT)

    # numerical checks: tight vs a reference using the same bf16 MXU operands,
    # loose vs the pure-f32 reference (bf16 rounding is the only difference).
    ref_hw = reference_forward(joint_emb, mask, params, bf16_matmuls=True)
    ref_fp = reference_forward(joint_emb, mask, params, bf16_matmuls=False)
    assert jnp.allclose(logits, ref_hw, rtol=2e-3, atol=2e-3), (logits, ref_hw)
    assert jnp.allclose(logits, ref_fp, rtol=3e-2, atol=3e-2), (logits, ref_fp)

    # predict()-style probabilities (glue, matches output_dim == 3 branch)
    _probs = jax.nn.softmax(logits, axis=-1)

    print("KERNEL_OK")
</pallas_src>

<mosaic_0001>
module attributes {stable_mosaic.version = 11 : i64} {
  func.func @fused_classifier_kernel(%arg0: i32, %arg1: memref<32x16x64xbf16, #tpu.memory_space<vmem>>, %arg2: memref<32x16x1xf32, #tpu.memory_space<vmem>>, %arg3: memref<64x64xbf16, #tpu.memory_space<vmem>>, %arg4: memref<1x64xf32, #tpu.memory_space<vmem>>, %arg5: memref<1x64xf32, #tpu.memory_space<vmem>>, %arg6: memref<64x128xbf16, #tpu.memory_space<vmem>>, %arg7: memref<1x128xf32, #tpu.memory_space<vmem>>, %arg8: memref<128x128xbf16, #tpu.memory_space<vmem>>, %arg9: memref<1x128xf32, #tpu.memory_space<vmem>>, %arg10: memref<32x128xf32, #tpu.memory_space<vmem>>) attributes {dimension_semantics = [#tpu.dimension_semantics<parallel>], iteration_bounds = array<i64: 2>, scalar_prefetch = 0 : i64, scratch_operands = 0 : i64, tpu.core_type = #tpu.core_type<tc>, window_params = [{transform_indices = @transform_0, window_bounds = array<i64: 32, 16, 64>}, {transform_indices = @transform_1, window_bounds = array<i64: 32, 16, 1>}, {pipeline_mode = #tpu.pipeline_mode<synchronous>, transform_indices = @transform_2, window_bounds = array<i64: 64, 64>}, {pipeline_mode = #tpu.pipeline_mode<synchronous>, transform_indices = @transform_3, window_bounds = array<i64: 1, 64>}, {pipeline_mode = #tpu.pipeline_mode<synchronous>, transform_indices = @transform_4, window_bounds = array<i64: 1, 64>}, {pipeline_mode = #tpu.pipeline_mode<synchronous>, transform_indices = @transform_5, window_bounds = array<i64: 64, 128>}, {pipeline_mode = #tpu.pipeline_mode<synchronous>, transform_indices = @transform_6, window_bounds = array<i64: 1, 128>}, {pipeline_mode = #tpu.pipeline_mode<synchronous>, transform_indices = @transform_7, window_bounds = array<i64: 128, 128>}, {pipeline_mode = #tpu.pipeline_mode<synchronous>, transform_indices = @transform_8, window_bounds = array<i64: 1, 128>}, {transform_indices = @transform_9, window_bounds = array<i64: 32, 128>}]} {
    %c0 = arith.constant 0 : index
    %c0_0 = arith.constant 0 : index
    %c0_1 = arith.constant 0 : index
    %0 = vector.load %arg1[%c0, %c0_0, %c0_1] : memref<32x16x64xbf16, #tpu.memory_space<vmem>>, vector<32x16x64xbf16>
    %1 = vector.shape_cast %0 : vector<32x16x64xbf16> to vector<512x64xbf16>
    %c0_2 = arith.constant 0 : index
    %c0_3 = arith.constant 0 : index
    %2 = vector.load %arg3[%c0_2, %c0_3] : memref<64x64xbf16, #tpu.memory_space<vmem>>, vector<64x64xbf16>
    %cst = arith.constant dense<0.000000e+00> : vector<512x64xf32>
    %3 = tpu.matmul %1, %2, %cst {dimension_numbers = #tpu.dot_dimension_numbers<[1], [0], [0], [1], [0, 0, 1, 1], [], []>} : vector<512x64xbf16>, vector<64x64xbf16>, vector<512x64xf32> -> vector<512x64xf32>
    %c0_4 = arith.constant 0 : index
    %c0_5 = arith.constant 0 : index
    %4 = vector.load %arg4[%c0_4, %c0_5] : memref<1x64xf32, #tpu.memory_space<vmem>>, vector<1x64xf32>
    %5 = vector.broadcast %4 : vector<1x64xf32> to vector<512x64xf32>
    %6 = arith.addf %3, %5 : vector<512x64xf32>
    %7 = vector.shape_cast %6 : vector<512x64xf32> to vector<32x16x64xf32>
    %c0_6 = arith.constant 0 : index
    %c0_7 = arith.constant 0 : index
    %8 = vector.load %arg5[%c0_6, %c0_7] : memref<1x64xf32, #tpu.memory_space<vmem>>, vector<1x64xf32>
    %9 = vector.shape_cast %8 : vector<1x64xf32> to vector<1x1x64xf32>
    %10 = vector.broadcast %9 : vector<1x1x64xf32> to vector<32x16x64xf32>
    %11 = arith.mulf %7, %10 : vector<32x16x64xf32>
    %cst_8 = arith.constant dense<0.000000e+00> : vector<32x16xf32>
    %12 = vector.multi_reduction <add>, %11, %cst_8 [2] : vector<32x16x64xf32> to vector<32x16xf32>
    %13 = vector.shape_cast %12 : vector<32x16xf32> to vector<32x16x1xf32>
    %c0_9 = arith.constant 0 : index
    %c0_10 = arith.constant 0 : index
    %c0_11 = arith.constant 0 : index
    %14 = vector.load %arg2[%c0_9, %c0_10, %c0_11] : memref<32x16x1xf32, #tpu.memory_space<vmem>>, vector<32x16x1xf32>
    %cst_12 = arith.constant 1.000000e+00 : f32
    %15 = vector.broadcast %cst_12 : f32 to vector<32x16x1xf32>
    %16 = arith.subf %14, %15 : vector<32x16x1xf32>
    %cst_13 = arith.constant 1.000000e+09 : f32
    %17 = vector.broadcast %cst_13 : f32 to vector<32x16x1xf32>
    %18 = arith.mulf %16, %17 : vector<32x16x1xf32>
    %19 = arith.addf %13, %18 : vector<32x16x1xf32>
    %cst_14 = arith.constant dense<0xFF800000> : vector<32x1xf32>
    %20 = vector.multi_reduction <maximumf>, %19, %cst_14 [1] : vector<32x16x1xf32> to vector<32x1xf32>
    %21 = vector.shape_cast %20 : vector<32x1xf32> to vector<32x1x1xf32>
    %22 = vector.broadcast %21 : vector<32x1x1xf32> to vector<32x16x1xf32>
    %23 = arith.subf %19, %22 : vector<32x16x1xf32>
    %24 = math.exp %23 : vector<32x16x1xf32>
    %cst_15 = arith.constant dense<0.000000e+00> : vector<32x1xf32>
    %25 = vector.multi_reduction <add>, %24, %cst_15 [1] : vector<32x16x1xf32> to vector<32x1xf32>
    %26 = vector.shape_cast %25 : vector<32x1xf32> to vector<32x1x1xf32>
    %27 = vector.broadcast %26 : vector<32x1x1xf32> to vector<32x16x1xf32>
    %28 = arith.divf %24, %27 : vector<32x16x1xf32>
    %29 = vector.broadcast %28 : vector<32x16x1xf32> to vector<32x16x64xf32>
    %30 = arith.mulf %29, %7 : vector<32x16x64xf32>
    %cst_16 = arith.constant dense<0.000000e+00> : vector<32x64xf32>
    %31 = vector.multi_reduction <add>, %30, %cst_16 [1] : vector<32x16x64xf32> to vector<32x64xf32>
    %32 = arith.truncf %31 : vector<32x64xf32> to vector<32x64xbf16>
    %c0_17 = arith.constant 0 : index
    %c0_18 = arith.constant 0 : index
    %33 = vector.load %arg6[%c0_17, %c0_18] : memref<64x128xbf16, #tpu.memory_space<vmem>>, vector<64x128xbf16>
    %cst_19 = arith.constant dense<0.000000e+00> : vector<32x128xf32>
    %34 = tpu.matmul %32, %33, %cst_19 {dimension_numbers = #tpu.dot_dimension_numbers<[1], [0], [0], [1], [0, 0, 1, 1], [], []>} : vector<32x64xbf16>, vector<64x128xbf16>, vector<32x128xf32> -> vector<32x128xf32>
    %c0_20 = arith.constant 0 : index
    %c0_21 = arith.constant 0 : index
    %35 = vector.load %arg7[%c0_20, %c0_21] : memref<1x128xf32, #tpu.memory_space<vmem>>, vector<1x128xf32>
    %36 = vector.broadcast %35 : vector<1x128xf32> to vector<32x128xf32>
    %37 = arith.addf %34, %36 : vector<32x128xf32>
    %cst_22 = arith.constant 0.000000e+00 : f32
    %38 = vector.broadcast %cst_22 : f32 to vector<32x128xf32>
    %39 = arith.maximumf %37, %38 : vector<32x128xf32>
    %40 = arith.truncf %39 : vector<32x128xf32> to vector<32x128xbf16>
    %c0_23 = arith.constant 0 : index
    %c0_24 = arith.constant 0 : index
    %41 = vector.load %arg8[%c0_23, %c0_24] : memref<128x128xbf16, #tpu.memory_space<vmem>>, vector<128x128xbf16>
    %cst_25 = arith.constant dense<0.000000e+00> : vector<32x128xf32>
    %42 = tpu.matmul %40, %41, %cst_25 {dimension_numbers = #tpu.dot_dimension_numbers<[1], [0], [0], [1], [0, 0, 1, 1], [], []>} : vector<32x128xbf16>, vector<128x128xbf16>, vector<32x128xf32> -> vector<32x128xf32>
    %c0_26 = arith.constant 0 : index
    %c0_27 = arith.constant 0 : index
    %43 = vector.load %arg9[%c0_26, %c0_27] : memref<1x128xf32, #tpu.memory_space<vmem>>, vector<1x128xf32>
    %44 = vector.broadcast %43 : vector<1x128xf32> to vector<32x128xf32>
    %45 = arith.addf %42, %44 : vector<32x128xf32>
    %c0_28 = arith.constant 0 : index
    %c0_29 = arith.constant 0 : index
    %46 = vector.load %arg10[%c0_28, %c0_29] : memref<32x128xf32, #tpu.memory_space<vmem>>, vector<32x128xf32>
    tpu.vector_store %arg10[%c0_28, %c0_29], %45 {strides = array<i32>} : memref<32x128xf32, #tpu.memory_space<vmem>>, vector<32x128xf32>,
    return
  }
  func.func @transform_0(%arg0: i32) -> (i32, i32, i32) {
    %c0_i32 = arith.constant 0 : i32
    %c0_i32_0 = arith.constant 0 : i32
    %c0_i32_1 = arith.constant 0 : i32
    return %arg0, %c0_i32, %c0_i32_0 : i32, i32, i32
  }
  func.func @transform_1(%arg0: i32) -> (i32, i32, i32) {
    %c0_i32 = arith.constant 0 : i32
    %c0_i32_0 = arith.constant 0 : i32
    %c0_i32_1 = arith.constant 0 : i32
    return %arg0, %c0_i32, %c0_i32_0 : i32, i32, i32
  }
  func.func @transform_2(%arg0: i32) -> (i32, i32) {
    %c0_i32 = arith.constant 0 : i32
    %c0_i32_0 = arith.constant 0 : i32
    %c0_i32_1 = arith.constant 0 : i32
    return %c0_i32, %c0_i32_0 : i32, i32
  }
  func.func @transform_3(%arg0: i32) -> (i32, i32) {
    %c0_i32 = arith.constant 0 : i32
    %c0_i32_0 = arith.constant 0 : i32
    %c0_i32_1 = arith.constant 0 : i32
    return %c0_i32, %c0_i32_0 : i32, i32
  }
  func.func @transform_4(%arg0: i32) -> (i32, i32) {
    %c0_i32 = arith.constant 0 : i32
    %c0_i32_0 = arith.constant 0 : i32
    %c0_i32_1 = arith.constant 0 : i32
    return %c0_i32, %c0_i32_0 : i32, i32
  }
  func.func @transform_5(%arg0: i32) -> (i32, i32) {
    %c0_i32 = arith.constant 0 : i32
    %c0_i32_0 = arith.constant 0 : i32
    %c0_i32_1 = arith.constant 0 : i32
    return %c0_i32, %c0_i32_0 : i32, i32
  }
  func.func @transform_6(%arg0: i32) -> (i32, i32) {
    %c0_i32 = arith.constant 0 : i32
    %c0_i32_0 = arith.constant 0 : i32
    %c0_i32_1 = arith.constant 0 : i32
    return %c0_i32, %c0_i32_0 : i32, i32
  }
  func.func @transform_7(%arg0: i32) -> (i32, i32) {
    %c0_i32 = arith.constant 0 : i32
    %c0_i32_0 = arith.constant 0 : i32
    %c0_i32_1 = arith.constant 0 : i32
    return %c0_i32, %c0_i32_0 : i32, i32
  }
  func.func @transform_8(%arg0: i32) -> (i32, i32) {
    %c0_i32 = arith.constant 0 : i32
    %c0_i32_0 = arith.constant 0 : i32
    %c0_i32_1 = arith.constant 0 : i32
    return %c0_i32, %c0_i32_0 : i32, i32
  }
  func.func @transform_9(%arg0: i32) -> (i32, i32) {
    %c0_i32 = arith.constant 0 : i32
    %c0_i32_0 = arith.constant 0 : i32
    return %arg0, %c0_i32 : i32, i32
  }
}

module attributes {stable_mosaic.version = 11 : i64} {
  func.func @fused_classifier_kernel(%arg0: i32, %arg1: memref<32x16x64xbf16, #tpu.memory_space<vmem>>, %arg2: memref<32x16x1xf32, #tpu.memory_space<vmem>>, %arg3: memref<64x64xbf16, #tpu.memory_space<vmem>>, %arg4: memref<1x64xf32, #tpu.memory_space<vmem>>, %arg5: memref<1x64xf32, #tpu.memory_space<vmem>>, %arg6: memref<64x128xbf16, #tpu.memory_space<vmem>>, %arg7: memref<1x128xf32, #tpu.memory_space<vmem>>, %arg8: memref<128x128xbf16, #tpu.memory_space<vmem>>, %arg9: memref<1x128xf32, #tpu.memory_space<vmem>>, %arg10: memref<32x128xf32, #tpu.memory_space<vmem>>) attributes {dimension_semantics = [#tpu.dimension_semantics<parallel>], iteration_bounds = array<i64: 2>, scalar_prefetch = 0 : i64, scratch_operands = 0 : i64, tpu.core_type = #tpu.core_type<tc>, window_params = [{transform_indices = @transform_0, window_bounds = array<i64: 32, 16, 64>}, {transform_indices = @transform_1, window_bounds = array<i64: 32, 16, 1>}, {pipeline_mode = #tpu.pipeline_mode<synchronous>, transform_indices = @transform_2, window_bounds = array<i64: 64, 64>}, {pipeline_mode = #tpu.pipeline_mode<synchronous>, transform_indices = @transform_3, window_bounds = array<i64: 1, 64>}, {pipeline_mode = #tpu.pipeline_mode<synchronous>, transform_indices = @transform_4, window_bounds = array<i64: 1, 64>}, {pipeline_mode = #tpu.pipeline_mode<synchronous>, transform_indices = @transform_5, window_bounds = array<i64: 64, 128>}, {pipeline_mode = #tpu.pipeline_mode<synchronous>, transform_indices = @transform_6, window_bounds = array<i64: 1, 128>}, {pipeline_mode = #tpu.pipeline_mode<synchronous>, transform_indices = @transform_7, window_bounds = array<i64: 128, 128>}, {pipeline_mode = #tpu.pipeline_mode<synchronous>, transform_indices = @transform_8, window_bounds = array<i64: 1, 128>}, {transform_indices = @transform_9, window_bounds = array<i64: 32, 128>}]} {
    %c0 = arith.constant 0 : index
    %c0_0 = arith.constant 0 : index
    %c0_1 = arith.constant 0 : index
    %0 = vector.load %arg1[%c0, %c0_0, %c0_1] : memref<32x16x64xbf16, #tpu.memory_space<vmem>>, vector<32x16x64xbf16>
    %1 = vector.shape_cast %0 : vector<32x16x64xbf16> to vector<512x64xbf16>
    %c0_2 = arith.constant 0 : index
    %c0_3 = arith.constant 0 : index
    %2 = vector.load %arg3[%c0_2, %c0_3] : memref<64x64xbf16, #tpu.memory_space<vmem>>, vector<64x64xbf16>
    %cst = arith.constant dense<0.000000e+00> : vector<512x64xf32>
    %3 = tpu.matmul %1, %2, %cst {dimension_numbers = #tpu.dot_dimension_numbers<[1], [0], [0], [1], [0, 0, 1, 1], [], []>} : vector<512x64xbf16>, vector<64x64xbf16>, vector<512x64xf32> -> vector<512x64xf32>
    %c0_4 = arith.constant 0 : index
    %c0_5 = arith.constant 0 : index
    %4 = vector.load %arg4[%c0_4, %c0_5] : memref<1x64xf32, #tpu.memory_space<vmem>>, vector<1x64xf32>
    %5 = vector.broadcast %4 : vector<1x64xf32> to vector<512x64xf32>
    %6 = arith.addf %3, %5 : vector<512x64xf32>
    %7 = vector.shape_cast %6 : vector<512x64xf32> to vector<32x16x64xf32>
    %c0_6 = arith.constant 0 : index
    %c0_7 = arith.constant 0 : index
    %8 = vector.load %arg5[%c0_6, %c0_7] : memref<1x64xf32, #tpu.memory_space<vmem>>, vector<1x64xf32>
    %9 = vector.shape_cast %8 : vector<1x64xf32> to vector<1x1x64xf32>
    %10 = vector.broadcast %9 : vector<1x1x64xf32> to vector<32x16x64xf32>
    %11 = arith.mulf %7, %10 : vector<32x16x64xf32>
    %cst_8 = arith.constant dense<0.000000e+00> : vector<32x16xf32>
    %12 = vector.multi_reduction <add>, %11, %cst_8 [2] : vector<32x16x64xf32> to vector<32x16xf32>
    %13 = vector.shape_cast %12 : vector<32x16xf32> to vector<32x16x1xf32>
    %c0_9 = arith.constant 0 : index
    %c0_10 = arith.constant 0 : index
    %c0_11 = arith.constant 0 : index
    %14 = vector.load %arg2[%c0_9, %c0_10, %c0_11] : memref<32x16x1xf32, #tpu.memory_space<vmem>>, vector<32x16x1xf32>
    %cst_12 = arith.constant 1.000000e+00 : f32
    %15 = vector.broadcast %cst_12 : f32 to vector<32x16x1xf32>
    %16 = arith.subf %14, %15 : vector<32x16x1xf32>
    %cst_13 = arith.constant 1.000000e+09 : f32
    %17 = vector.broadcast %cst_13 : f32 to vector<32x16x1xf32>
    %18 = arith.mulf %16, %17 : vector<32x16x1xf32>
    %19 = arith.addf %13, %18 : vector<32x16x1xf32>
    %cst_14 = arith.constant dense<0xFF800000> : vector<32x1xf32>
    %20 = vector.multi_reduction <maximumf>, %19, %cst_14 [1] : vector<32x16x1xf32> to vector<32x1xf32>
    %21 = vector.shape_cast %20 : vector<32x1xf32> to vector<32x1x1xf32>
    %22 = vector.broadcast %21 : vector<32x1x1xf32> to vector<32x16x1xf32>
    %23 = arith.subf %19, %22 : vector<32x16x1xf32>
    %24 = math.exp %23 : vector<32x16x1xf32>
    %cst_15 = arith.constant dense<0.000000e+00> : vector<32x1xf32>
    %25 = vector.multi_reduction <add>, %24, %cst_15 [1] : vector<32x16x1xf32> to vector<32x1xf32>
    %26 = vector.shape_cast %25 : vector<32x1xf32> to vector<32x1x1xf32>
    %27 = vector.broadcast %26 : vector<32x1x1xf32> to vector<32x16x1xf32>
    %28 = arith.divf %24, %27 : vector<32x16x1xf32>
    %29 = vector.broadcast %28 : vector<32x16x1xf32> to vector<32x16x64xf32>
    %30 = arith.mulf %29, %7 : vector<32x16x64xf32>
    %cst_16 = arith.constant dense<0.000000e+00> : vector<32x64xf32>
    %31 = vector.multi_reduction <add>, %30, %cst_16 [1] : vector<32x16x64xf32> to vector<32x64xf32>
    %32 = arith.truncf %31 : vector<32x64xf32> to vector<32x64xbf16>
    %c0_17 = arith.constant 0 : index
    %c0_18 = arith.constant 0 : index
    %33 = vector.load %arg6[%c0_17, %c0_18] : memref<64x128xbf16, #tpu.memory_space<vmem>>, vector<64x128xbf16>
    %cst_19 = arith.constant dense<0.000000e+00> : vector<32x128xf32>
    %34 = tpu.matmul %32, %33, %cst_19 {dimension_numbers = #tpu.dot_dimension_numbers<[1], [0], [0], [1], [0, 0, 1, 1], [], []>} : vector<32x64xbf16>, vector<64x128xbf16>, vector<32x128xf32> -> vector<32x128xf32>
    %c0_20 = arith.constant 0 : index
    %c0_21 = arith.constant 0 : index
    %35 = vector.load %arg7[%c0_20, %c0_21] : memref<1x128xf32, #tpu.memory_space<vmem>>, vector<1x128xf32>
    %36 = vector.broadcast %35 : vector<1x128xf32> to vector<32x128xf32>
    %37 = arith.addf %34, %36 : vector<32x128xf32>
    %cst_22 = arith.constant 0.000000e+00 : f32
    %38 = vector.broadcast %cst_22 : f32 to vector<32x128xf32>
    %39 = arith.maximumf %37, %38 : vector<32x128xf32>
    %40 = arith.truncf %39 : vector<32x128xf32> to vector<32x128xbf16>
    %c0_23 = arith.constant 0 : index
    %c0_24 = arith.constant 0 : index
    %41 = vector.load %arg8[%c0_23, %c0_24] : memref<128x128xbf16, #tpu.memory_space<vmem>>, vector<128x128xbf16>
    %cst_25 = arith.constant dense<0.000000e+00> : vector<32x128xf32>
    %42 = tpu.matmul %40, %41, %cst_25 {dimension_numbers = #tpu.dot_dimension_numbers<[1], [0], [0], [1], [0, 0, 1, 1], [], []>} : vector<32x128xbf16>, vector<128x128xbf16>, vector<32x128xf32> -> vector<32x128xf32>
    %c0_26 = arith.constant 0 : index
    %c0_27 = arith.constant 0 : index
    %43 = vector.load %arg9[%c0_26, %c0_27] : memref<1x128xf32, #tpu.memory_space<vmem>>, vector<1x128xf32>
    %44 = vector.broadcast %43 : vector<1x128xf32> to vector<32x128xf32>
    %45 = arith.addf %42, %44 : vector<32x128xf32>
    %c0_28 = arith.constant 0 : index
    %c0_29 = arith.constant 0 : index
    %46 = vector.load %arg10[%c0_28, %c0_29] : memref<32x128xf32, #tpu.memory_space<vmem>>, vector<32x128xf32>
    tpu.vector_store %arg10[%c0_28, %c0_29], %45 {strides = array<i32>} : memref<32x128xf32, #tpu.memory_space<vmem>>, vector<32x128xf32>,
    return
  }
  func.func @transform_0(%arg0: i32) -> (i32, i32, i32) {
    %c0_i32 = arith.constant 0 : i32
    %c0_i32_0 = arith.constant 0 : i32
    %c0_i32_1 = arith.constant 0 : i32
    return %arg0, %c0_i32, %c0_i32_0 : i32, i32, i32
  }
  func.func @transform_1(%arg0: i32) -> (i32, i32, i32) {
    %c0_i32 = arith.constant 0 : i32
    %c0_i32_0 = arith.constant 0 : i32
    %c0_i32_1 = arith.constant 0 : i32
    return %arg0, %c0_i32, %c0_i32_0 : i32, i32, i32
  }
  func.func @transform_2(%arg0: i32) -> (i32, i32) {
    %c0_i32 = arith.constant 0 : i32
    %c0_i32_0 = arith.constant 0 : i32
    %c0_i32_1 = arith.constant 0 : i32
    return %c0_i32, %c0_i32_0 : i32, i32
  }
  func.func @transform_3(%arg0: i32) -> (i32, i32) {
    %c0_i32 = arith.constant 0 : i32
    %c0_i32_0 = arith.constant 0 : i32
    %c0_i32_1 = arith.constant 0 : i32
    return %c0_i32, %c0_i32_0 : i32, i32
  }
  func.func @transform_4(%arg0: i32) -> (i32, i32) {
    %c0_i32 = arith.constant 0 : i32
    %c0_i32_0 = arith.constant 0 : i32
    %c0_i32_1 = arith.constant 0 : i32
    return %c0_i32, %c0_i32_0 : i32, i32
  }
  func.func @transform_5(%arg0: i32) -> (i32, i32) {
    %c0_i32 = arith.constant 0 : i32
    %c0_i32_0 = arith.constant 0 : i32
    %c0_i32_1 = arith.constant 0 : i32
    return %c0_i32, %c0_i32_0 : i32, i32
  }
  func.func @transform_6(%arg0: i32) -> (i32, i32) {
    %c0_i32 = arith.constant 0 : i32
    %c0_i32_0 = arith.constant 0 : i32
    %c0_i32_1 = arith.constant 0 : i32
    return %c0_i32, %c0_i32_0 : i32, i32
  }
  func.func @transform_7(%arg0: i32) -> (i32, i32) {
    %c0_i32 = arith.constant 0 : i32
    %c0_i32_0 = arith.constant 0 : i32
    %c0_i32_1 = arith.constant 0 : i32
    return %c0_i32, %c0_i32_0 : i32, i32
  }
  func.func @transform_8(%arg0: i32) -> (i32, i32) {
    %c0_i32 = arith.constant 0 : i32
    %c0_i32_0 = arith.constant 0 : i32
    %c0_i32_1 = arith.constant 0 : i32
    return %c0_i32, %c0_i32_0 : i32, i32
  }
  func.func @transform_9(%arg0: i32) -> (i32, i32) {
    %c0_i32 = arith.constant 0 : i32
    %c0_i32_0 = arith.constant 0 : i32
    return %arg0, %c0_i32 : i32, i32
  }
}

</mosaic_0001>

<llo_original>
// kernel: tpu_custom_call.1
$region0: #{tpu_custom_call.1}
  #allocation0 [shape = 'u32[]', space=smem, size = 0x4, offset = 0x4, fixed_abs, tag = 'smem constant byte address 0x4 - core index']
  #allocation1 [shape = 'u32[144,128]{1,0:T(1,128)}', space=vmem, size = 0x12000, scoped, tag = 'internal scratch']
  %s0 = inlined_call_operand.vmem [shape: bf16[64,16,64], index: 0, kind: input, shape index: {}]
  %s1 = inlined_call_operand.vmem [shape: f32[64,16,1], index: 1, kind: input, shape index: {}]
  %s2 = inlined_call_operand.vmem [shape: bf16[64,64], index: 2, kind: input, shape index: {}]
  %s3 = inlined_call_operand.vmem [shape: f32[1,64], index: 3, kind: input, shape index: {}]
  %s4 = inlined_call_operand.vmem [shape: f32[1,64], index: 4, kind: input, shape index: {}]
  %s5 = inlined_call_operand.vmem [shape: bf16[64,128], index: 5, kind: input, shape index: {}]
  %s6 = inlined_call_operand.vmem [shape: f32[1,128], index: 6, kind: input, shape index: {}]
  %s7 = inlined_call_operand.vmem [shape: bf16[128,128], index: 7, kind: input, shape index: {}]
  %s8 = inlined_call_operand.vmem [shape: f32[1,128], index: 8, kind: input, shape index: {}]
  %s9 = inlined_call_operand.hbm [shape: f32[64,128], index: 9, kind: output, shape index: {}]
  %s10 = sld [smem:[#allocation0]]
  $region69: #{tpu_custom_call.1} parent=0
    _
  %s12 = ssub.s32 1, %s10
  %s13 = scalar_select 0, %s12, %s10
  $region1: #{tpu_custom_call.1} parent=0
    #allocation2 [shape = 'u8[32768]{0}', space=vmem, size = 0x8000, scoped, tag = 'output window, operand 0']
    #allocation3 [shape = 's32[2]{0}', space=sflag, size = 0x8, scoped, tag = 'scoped memory for tpu_custom_call.1']
    %14 = vsyncpa [#allocation3], 0
    %s15 = scalar_lea.sflag [#allocation3], 1
    %16 = vsyncpa %s15, 0
    loop: start=0, step=1, limit=4
    $region2: #{tpu_custom_call.1} parent=1 // loop_pre_header
      _
    $region3: #{tpu_custom_call.1} parent=1 // loop_header
      %s18 = sphi 0, %s22
      %p19 = scmp.ge.s32.totalorder %s18, 4
      %s28 = sphi 0, %s30
      %s31 = sphi 0, %s28
      %s32 = sphi 0, %s31
      %s48 = sphi 0, %s32
      %s54 = sphi 0, %s56
      %s57 = sphi 0, %s54
      %s58 = sphi 0, %s57
      %s74 = sphi 0, %s58
      %s78 = sphi 0, %s78
      %s80 = sphi 0, %s78
      %s81 = sphi 0, %s80
      %s95 = sphi 0, %s81
      %s99 = sphi 0, %s99
      %s101 = sphi 0, %s99
      %s102 = sphi 0, %s101
      %s116 = sphi 0, %s102
      %s120 = sphi 0, %s120
      %s122 = sphi 0, %s120
      %s123 = sphi 0, %s122
      %s137 = sphi 0, %s123
      %s141 = sphi 0, %s141
      %s143 = sphi 0, %s141
      %s144 = sphi 0, %s143
      %s158 = sphi 0, %s144
      %s162 = sphi 0, %s162
      %s164 = sphi 0, %s162
      %s165 = sphi 0, %s164
      %s179 = sphi 0, %s165
      %s183 = sphi 0, %s183
      %s185 = sphi 0, %s183
      %s186 = sphi 0, %s185
      %s200 = sphi 0, %s186
      %s204 = sphi 0, %s204
      %s206 = sphi 0, %s204
      %s207 = sphi 0, %s206
      %s221 = sphi 0, %s207
      %s227 = sphi 0, %s229
      %s230 = sphi 0, %s227
      %s231 = sphi 0, %s230
      %s247 = sphi 0, %s231
    $region4: #{tpu_custom_call.1} parent=1 // loop_header_branch
      %21 = sbr.rel (%p19) target = $region8
    $region5: #{tpu_custom_call.1} parent=1 // loop_body
      %s23 = ssub.s32 %s18, 1
      %s24 = ssub.s32 %s18, 2
      %s25 = sadd.s32 %s18, 1
      %s26 = ssub.s32 %s18, %s25
      %p27 = scmp.eq.s32.totalorder %s26, 0
      %s29 = sadd.s32 %s28, 1
      %s30 = scalar_select %p27, %s28, %s29
      %p33 = pneg %p27
      %p34 = scmp.eq.s32.totalorder %s18, 1
      %p35 = por %p33, %p34
      %p36 = scmp.ne.s32.totalorder %s28, %s31
      %p37 = scmp.eq.s32.totalorder %s18, 0
      %p38 = por %p36, %p37
      %p39 = scmp.ne.s32.totalorder %s28, %s31
      %p40 = scmp.eq.s32.totalorder %s23, 1
      %p41 = por %p39, %p40
      %p42 = scmp.ne.s32.totalorder %s31, %s32
      %p43 = scmp.eq.s32.totalorder %s23, 0
      %p44 = por %p42, %p43
      %p45 = scmp.ne.s32.totalorder %s31, %s32
      %p46 = scmp.eq.s32.totalorder %s24, 1
      %p47 = por %p45, %p46
      %p49 = scmp.ne.s32.totalorder %s32, %s48
      %p50 = scmp.eq.s32.totalorder %s24, 0
      %p51 = por %p49, %p50
      %s52 = ssub.s32 %s18, %s25
      %p53 = scmp.eq.s32.totalorder %s52, 0
      %s55 = sadd.s32 %s54, 1
      %s56 = scalar_select %p53, %s54, %s55
      %p59 = pneg %p53
      %p60 = scmp.eq.s32.totalorder %s18, 1
      %p61 = por %p59, %p60
      %p62 = scmp.ne.s32.totalorder %s54, %s57
      %p63 = scmp.eq.s32.totalorder %s18, 0
      %p64 = por %p62, %p63
      %p65 = scmp.ne.s32.totalorder %s54, %s57
      %p66 = scmp.eq.s32.totalorder %s23, 1
      %p67 = por %p65, %p66
      %p68 = scmp.ne.s32.totalorder %s57, %s58
      %p69 = scmp.eq.s32.totalorder %s23, 0
      %p70 = por %p68, %p69
      %p71 = scmp.ne.s32.totalorder %s57, %s58
      %p72 = scmp.eq.s32.totalorder %s24, 1
      %p73 = por %p71, %p72
      %p75 = scmp.ne.s32.totalorder %s58, %s74
      %p76 = scmp.eq.s32.totalorder %s24, 0
      %p77 = por %p75, %p76
      %s79 = sadd.s32 %s78, 1
      %p82 = scmp.eq.s32.totalorder %s18, 1
      %p83 = scmp.ne.s32.totalorder %s78, %s80
      %p84 = scmp.eq.s32.totalorder %s18, 0
      %p85 = por %p83, %p84
      %p86 = scmp.ne.s32.totalorder %s78, %s80
      %p87 = scmp.eq.s32.totalorder %s23, 1
      %p88 = por %p86, %p87
      %p89 = scmp.ne.s32.totalorder %s80, %s81
      %p90 = scmp.eq.s32.totalorder %s23, 0
      %p91 = por %p89, %p90
      %p92 = scmp.ne.s32.totalorder %s80, %s81
      %p93 = scmp.eq.s32.totalorder %s24, 1
      %p94 = por %p92, %p93
      %p96 = scmp.ne.s32.totalorder %s81, %s95
      %p97 = scmp.eq.s32.totalorder %s24, 0
      %p98 = por %p96, %p97
      %s100 = sadd.s32 %s99, 1
      %p103 = scmp.eq.s32.totalorder %s18, 1
      %p104 = scmp.ne.s32.totalorder %s99, %s101
      %p105 = scmp.eq.s32.totalorder %s18, 0
      %p106 = por %p104, %p105
      %p107 = scmp.ne.s32.totalorder %s99, %s101
      %p108 = scmp.eq.s32.totalorder %s23, 1
      %p109 = por %p107, %p108
      %p110 = scmp.ne.s32.totalorder %s101, %s102
      %p111 = scmp.eq.s32.totalorder %s23, 0
      %p112 = por %p110, %p111
      %p113 = scmp.ne.s32.totalorder %s101, %s102
      %p114 = scmp.eq.s32.totalorder %s24, 1
      %p115 = por %p113, %p114
      %p117 = scmp.ne.s32.totalorder %s102, %s116
      %p118 = scmp.eq.s32.totalorder %s24, 0
      %p119 = por %p117, %p118
      %s121 = sadd.s32 %s120, 1
      %p124 = scmp.eq.s32.totalorder %s18, 1
      %p125 = scmp.ne.s32.totalorder %s120, %s122
      %p126 = scmp.eq.s32.totalorder %s18, 0
      %p127 = por %p125, %p126
      %p128 = scmp.ne.s32.totalorder %s120, %s122
      %p129 = scmp.eq.s32.totalorder %s23, 1
      %p130 = por %p128, %p129
      %p131 = scmp.ne.s32.totalorder %s122, %s123
      %p132 = scmp.eq.s32.totalorder %s23, 0
      %p133 = por %p131, %p132
      %p134 = scmp.ne.s32.totalorder %s122, %s123
      %p135 = scmp.eq.s32.totalorder %s24, 1
      %p136 = por %p134, %p135
      %p138 = scmp.ne.s32.totalorder %s123, %s137
      %p139 = scmp.eq.s32.totalorder %s24, 0
      %p140 = por %p138, %p139
      %s142 = sadd.s32 %s141, 1
      %p145 = scmp.eq.s32.totalorder %s18, 1
      %p146 = scmp.ne.s32.totalorder %s141, %s143
      %p147 = scmp.eq.s32.totalorder %s18, 0
      %p148 = por %p146, %p147
      %p149 = scmp.ne.s32.totalorder %s141, %s143
      %p150 = scmp.eq.s32.totalorder %s23, 1
      %p151 = por %p149, %p150
      %p152 = scmp.ne.s32.totalorder %s143, %s144
      %p153 = scmp.eq.s32.totalorder %s23, 0
      %p154 = por %p152, %p153
      %p155 = scmp.ne.s32.totalorder %s143, %s144
      %p156 = scmp.eq.s32.totalorder %s24, 1
      %p157 = por %p155, %p156
      %p159 = scmp.ne.s32.totalorder %s144, %s158
      %p160 = scmp.eq.s32.totalorder %s24, 0
      %p161 = por %p159, %p160
      %s163 = sadd.s32 %s162, 1
      %p166 = scmp.eq.s32.totalorder %s18, 1
      %p167 = scmp.ne.s32.totalorder %s162, %s164
      %p168 = scmp.eq.s32.totalorder %s18, 0
      %p169 = por %p167, %p168
      %p170 = scmp.ne.s32.totalorder %s162, %s164
      %p171 = scmp.eq.s32.totalorder %s23, 1
      %p172 = por %p170, %p171
      %p173 = scmp.ne.s32.totalorder %s164, %s165
      %p174 = scmp.eq.s32.totalorder %s23, 0
      %p175 = por %p173, %p174
      %p176 = scmp.ne.s32.totalorder %s164, %s165
      %p177 = scmp.eq.s32.totalorder %s24, 1
      %p178 = por %p176, %p177
      %p180 = scmp.ne.s32.totalorder %s165, %s179
      %p181 = scmp.eq.s32.totalorder %s24, 0
      %p182 = por %p180, %p181
      %s184 = sadd.s32 %s183, 1
      %p187 = scmp.eq.s32.totalorder %s18, 1
      %p188 = scmp.ne.s32.totalorder %s183, %s185
      %p189 = scmp.eq.s32.totalorder %s18, 0
      %p190 = por %p188, %p189
      %p191 = scmp.ne.s32.totalorder %s183, %s185
      %p192 = scmp.eq.s32.totalorder %s23, 1
      %p193 = por %p191, %p192
      %p194 = scmp.ne.s32.totalorder %s185, %s186
      %p195 = scmp.eq.s32.totalorder %s23, 0
      %p196 = por %p194, %p195
      %p197 = scmp.ne.s32.totalorder %s185, %s186
      %p198 = scmp.eq.s32.totalorder %s24, 1
      %p199 = por %p197, %p198
      %p201 = scmp.ne.s32.totalorder %s186, %s200
      %p202 = scmp.eq.s32.totalorder %s24, 0
      %p203 = por %p201, %p202
      %s205 = sadd.s32 %s204, 1
      %p208 = scmp.eq.s32.totalorder %s18, 1
      %p209 = scmp.ne.s32.totalorder %s204, %s206
      %p210 = scmp.eq.s32.totalorder %s18, 0
      %p211 = por %p209, %p210
      %p212 = scmp.ne.s32.totalorder %s204, %s206
      %p213 = scmp.eq.s32.totalorder %s23, 1
      %p214 = por %p212, %p213
      %p215 = scmp.ne.s32.totalorder %s206, %s207
      %p216 = scmp.eq.s32.totalorder %s23, 0
      %p217 = por %p215, %p216
      %p218 = scmp.ne.s32.totalorder %s206, %s207
      %p219 = scmp.eq.s32.totalorder %s24, 1
      %p220 = por %p218, %p219
      %p222 = scmp.ne.s32.totalorder %s207, %s221
      %p223 = scmp.eq.s32.totalorder %s24, 0
      %p224 = por %p222, %p223
      %s225 = ssub.s32 %s18, %s25
      %p226 = scmp.eq.s32.totalorder %s225, 0
      %s228 = sadd.s32 %s227, 1
      %s229 = scalar_select %p226, %s227, %s228
      %p232 = pneg %p226
      %p233 = scmp.eq.s32.totalorder %s18, 1
      %p234 = por %p232, %p233
      %p235 = scmp.ne.s32.totalorder %s227, %s230
      %p236 = scmp.eq.s32.totalorder %s18, 0
      %p237 = por %p235, %p236
      %p238 = scmp.ne.s32.totalorder %s227, %s230
      %p239 = scmp.eq.s32.totalorder %s23, 1
      %p240 = por %p238, %p239
      %p241 = scmp.ne.s32.totalorder %s230, %s231
      %p242 = scmp.eq.s32.totalorder %s23, 0
      %p243 = por %p241, %p242
      %p244 = scmp.ne.s32.totalorder %s230, %s231
      %p245 = scmp.eq.s32.totalorder %s24, 1
      %p246 = por %p244, %p245
      %p248 = scmp.ne.s32.totalorder %s231, %s247
      %p249 = scmp.eq.s32.totalorder %s24, 0
      %p250 = por %p248, %p249
      %p251 = scmp.le.s32.totalorder 1, %s18
      %p252 = scmp.lt.s32.totalorder %s18, 3
      %p253 = pnand %p251, %p252
      %p254 = pneg %p253
      // Predicated region
      $region9: #{tpu_custom_call.1} parent=5 // pred_check
        _
      $region10: #{tpu_custom_call.1} parent=5 // pred_check_branch
        %256 = sbr.rel (%p253) target = $region12
      $region11: #{tpu_custom_call.1} parent=5 // pred_region
        %s257 = ssub.s32 %s18, 1
        // Predicated region
        $region13: #{tpu_custom_call.1} parent=11 // pred_check
          %p258 = pneg %p91
        $region14: #{tpu_custom_call.1} parent=11 // pred_check_branch
          %260 = sbr.rel (%p258) target = $region16
        $region15: #{tpu_custom_call.1} parent=11 // pred_region
          _
        $region16: #{tpu_custom_call.1} parent=11 // pred_fallthru
          _
        // Predicated region
        $region17: #{tpu_custom_call.1} parent=11 // pred_check
          %p261 = pneg %p112
        $region18: #{tpu_custom_call.1} parent=11 // pred_check_branch
          %263 = sbr.rel (%p261) target = $region20
        $region19: #{tpu_custom_call.1} parent=11 // pred_region
          _
        $region20: #{tpu_custom_call.1} parent=11 // pred_fallthru
          _
        // Predicated region
        $region21: #{tpu_custom_call.1} parent=11 // pred_check
          %p264 = pneg %p133
        $region22: #{tpu_custom_call.1} parent=11 // pred_check_branch
          %266 = sbr.rel (%p264) target = $region24
        $region23: #{tpu_custom_call.1} parent=11 // pred_region
          _
        $region24: #{tpu_custom_call.1} parent=11 // pred_fallthru
          _
        // Predicated region
        $region25: #{tpu_custom_call.1} parent=11 // pred_check
          %p267 = pneg %p154
        $region26: #{tpu_custom_call.1} parent=11 // pred_check_branch
          %269 = sbr.rel (%p267) target = $region28
        $region27: #{tpu_custom_call.1} parent=11 // pred_region
          _
        $region28: #{tpu_custom_call.1} parent=11 // pred_fallthru
          _
        // Predicated region
        $region29: #{tpu_custom_call.1} parent=11 // pred_check
          %p270 = pneg %p175
        $region30: #{tpu_custom_call.1} parent=11 // pred_check_branch
          %272 = sbr.rel (%p270) target = $region32
        $region31: #{tpu_custom_call.1} parent=11 // pred_region
          _
        $region32: #{tpu_custom_call.1} parent=11 // pred_fallthru
          _
        // Predicated region
        $region33: #{tpu_custom_call.1} parent=11 // pred_check
          %p273 = pneg %p196
        $region34: #{tpu_custom_call.1} parent=11 // pred_check_branch
          %275 = sbr.rel (%p273) target = $region36
        $region35: #{tpu_custom_call.1} parent=11 // pred_region
          _
        $region36: #{tpu_custom_call.1} parent=11 // pred_fallthru
          _
        // Predicated region
        $region37: #{tpu_custom_call.1} parent=11 // pred_check
          %p276 = pneg %p217
        $region38: #{tpu_custom_call.1} parent=11 // pred_check_branch
          %278 = sbr.rel (%p276) target = $region40
        $region39: #{tpu_custom_call.1} parent=11 // pred_region
          _
        $region40: #{tpu_custom_call.1} parent=11 // pred_fallthru
          _
      $region12: #{tpu_custom_call.1} parent=5 // pred_fallthru
        _
      %p279 = scmp.lt.s32.totalorder %s18, 2
      // Predicated region
      $region41: #{tpu_custom_call.1} parent=5 // pred_check
        %p280 = pneg %p279
      $region42: #{tpu_custom_call.1} parent=5 // pred_check_branch
        %282 = sbr.rel (%p280) target = $region44
      $region43: #{tpu_custom_call.1} parent=5 // pred_region
        // Predicated region
        $region45: #{tpu_custom_call.1} parent=43 // pred_check
          %p283 = pneg %p38
        $region46: #{tpu_custom_call.1} parent=43 // pred_check_branch
          %285 = sbr.rel (%p283) target = $region48
        $region47: #{tpu_custom_call.1} parent=43 // pred_region
          %s286 = smul.u32 32, %s18
          %p287 = scmp.lt.s32.totalorder %s286, 63
          %s288 = scalar_select %p287, %s286, 63
          %s289 = smul.addr %s288, 2
          %s290 = smul.addr %s289, 4
          %s291 = scalar_lea.vmem %s0, %s290
          %s292 = smul.u32 32, %s18
        $region48: #{tpu_custom_call.1} parent=43 // pred_fallthru
          _
        // Predicated region
        $region49: #{tpu_custom_call.1} parent=43 // pred_check
          %p293 = pneg %p64
        $region50: #{tpu_custom_call.1} parent=43 // pred_check_branch
          %295 = sbr.rel (%p293) target = $region52
        $region51: #{tpu_custom_call.1} parent=43 // pred_region
          %s296 = smul.u32 32, %s18
          %p297 = scmp.lt.s32.totalorder %s296, 63
          %s298 = scalar_select %p297, %s296, 63
          %s299 = smul.addr %s298, 2
          %s300 = smul.addr %s299, 8
          %s301 = scalar_lea.vmem %s1, %s300
          %s302 = smul.u32 32, %s18
        $region52: #{tpu_custom_call.1} parent=43 // pred_fallthru
          _
      $region44: #{tpu_custom_call.1} parent=5 // pred_fallthru
        _
      %p303 = scmp.le.s32.totalorder 1, %s18
      %p304 = scmp.lt.s32.totalorder %s18, 3
      %p305 = pnand %p303, %p304
      %p306 = pneg %p305
      // Predicated region
      $region53: #{tpu_custom_call.1} parent=5 // pred_check
        _
      $region54: #{tpu_custom_call.1} parent=5 // pred_check_branch
        %308 = sbr.rel (%p305) target = $region56
      $region55: #{tpu_custom_call.1} parent=5 // pred_region
        %s309 = ssub.s32 %s18, 1
        %s310 = smul.u32 32, %s23
        %p311 = scmp.lt.s32.totalorder %s310, 63
        %s312 = scalar_select %p311, %s310, 63
        %s313 = smul.addr %s312, 2
        %s314 = smul.addr %s313, 4
        %s315 = scalar_lea.vmem %s0, %s314
        %p316 = pneg %p44
        %p317 = pneg %p41
        %s318 = smul.u32 32, %s23
        %p319 = scmp.lt.s32.totalorder %s318, 63
        %s320 = scalar_select %p319, %s318, 63
        %s321 = smul.addr %s320, 2
        %s322 = smul.addr %s321, 8
        %s323 = scalar_lea.vmem %s1, %s322
        %p324 = pneg %p70
        %p325 = pneg %p67
        %p326 = pneg %p91
        %p327 = pneg %p88
        %p328 = pneg %p112
        %p329 = pneg %p109
        %p330 = pneg %p133
        %p331 = pneg %p130
        %p332 = pneg %p154
        %p333 = pneg %p151
        %p334 = pneg %p175
        %p335 = pneg %p172
        %p336 = pneg %p196
        %p337 = pneg %p193
        %p338 = pneg %p217
        %p339 = pneg %p214
        %p340 = pneg %p243
        %p341 = pneg %p240
        %s342 = sand.u32 %s230, 1
        %s343 = scalar_lea.sflag [#allocation3], %s342
        %s344 = sand.u32 %s230, 1
        %s345 = smul.addr %s344, 32
        %s346 = scalar_lea.vmem [#allocation2], %s345
        %s347 = smul.u32 32, %s23
        %p348 = scmp.lt.s32.totalorder %s347, 63
        %s349 = scalar_select %p348, %s347, 63
        %s350 = smul.addr %s349, 2
        %s351 = smul.addr %s350, 4
        %s352 = scalar_lea.vmem %s0, %s351
        %s353 = smul.u32 32, %s23
        %s354 = smul.u32 32, %s23
        %p355 = scmp.lt.s32.totalorder %s354, 63
        %s356 = scalar_select %p355, %s354, 63
        %s357 = smul.addr %s356, 2
        %s358 = smul.addr %s357, 8
        %s359 = scalar_lea.vmem %s1, %s358
        %s360 = smul.u32 32, %s23
        %s361 = smul.u32 4, %s23
        %v363 = vld [vmem:[%s352] sm:$0xf]
        %v364 = vld [vmem:[%s352 + $0x4] sm:$0xf]
        %v365 = vld [vmem:[%s352 + $0x8] sm:$0xf]
        %v366 = vld [vmem:[%s352 + $0xc] sm:$0xf]
        %v367 = vld [vmem:[%s352 + $0x10] sm:$0xf]
        %v368 = vld [vmem:[%s352 + $0x14] sm:$0xf]
        %v369 = vld [vmem:[%s352 + $0x18] sm:$0xf]
        %v370 = vld [vmem:[%s352 + $0x1c] sm:$0xf]
        %v371 = vld [vmem:[%s352 + $0x20] sm:$0xf]
        %v372 = vld [vmem:[%s352 + $0x24] sm:$0xf]
        %v373 = vld [vmem:[%s352 + $0x28] sm:$0xf]
        %v374 = vld [vmem:[%s352 + $0x2c] sm:$0xf]
        %v375 = vld [vmem:[%s352 + $0x30] sm:$0xf]
        %v376 = vld [vmem:[%s352 + $0x34] sm:$0xf]
        %v377 = vld [vmem:[%s352 + $0x38] sm:$0xf]
        %v378 = vld [vmem:[%s352 + $0x3c] sm:$0xf]
        %v379 = vld [vmem:[%s352 + $0x40] sm:$0xf]
        %v380 = vld [vmem:[%s352 + $0x44] sm:$0xf]
        %v381 = vld [vmem:[%s352 + $0x48] sm:$0xf]
        %v382 = vld [vmem:[%s352 + $0x4c] sm:$0xf]
        %v383 = vld [vmem:[%s352 + $0x50] sm:$0xf]
        %v384 = vld [vmem:[%s352 + $0x54] sm:$0xf]
        %v385 = vld [vmem:[%s352 + $0x58] sm:$0xf]
        %v386 = vld [vmem:[%s352 + $0x5c] sm:$0xf]
        %v387 = vld [vmem:[%s352 + $0x60] sm:$0xf]
        %v388 = vld [vmem:[%s352 + $0x64] sm:$0xf]
        %v389 = vld [vmem:[%s352 + $0x68] sm:$0xf]
        %v390 = vld [vmem:[%s352 + $0x6c] sm:$0xf]
        %v391 = vld [vmem:[%s352 + $0x70] sm:$0xf]
        %v392 = vld [vmem:[%s352 + $0x74] sm:$0xf]
        %v393 = vld [vmem:[%s352 + $0x78] sm:$0xf]
        %v394 = vld [vmem:[%s352 + $0x7c] sm:$0xf]
        %v395 = vld [vmem:[%s352 + $0x80] sm:$0xf]
        %v396 = vld [vmem:[%s352 + $0x84] sm:$0xf]
        %v397 = vld [vmem:[%s352 + $0x88] sm:$0xf]
        %v398 = vld [vmem:[%s352 + $0x8c] sm:$0xf]
        %v399 = vld [vmem:[%s352 + $0x90] sm:$0xf]
        %v400 = vld [vmem:[%s352 + $0x94] sm:$0xf]
        %v401 = vld [vmem:[%s352 + $0x98] sm:$0xf]
        %v402 = vld [vmem:[%s352 + $0x9c] sm:$0xf]
        %v403 = vld [vmem:[%s352 + $0xa0] sm:$0xf]
        %v404 = vld [vmem:[%s352 + $0xa4] sm:$0xf]
        %v405 = vld [vmem:[%s352 + $0xa8] sm:$0xf]
        %v406 = vld [vmem:[%s352 + $0xac] sm:$0xf]
        %v407 = vld [vmem:[%s352 + $0xb0] sm:$0xf]
        %v408 = vld [vmem:[%s352 + $0xb4] sm:$0xf]
        %v409 = vld [vmem:[%s352 + $0xb8] sm:$0xf]
        %v410 = vld [vmem:[%s352 + $0xbc] sm:$0xf]
        %v411 = vld [vmem:[%s352 + $0xc0] sm:$0xf]
        %v412 = vld [vmem:[%s352 + $0xc4] sm:$0xf]
        %v413 = vld [vmem:[%s352 + $0xc8] sm:$0xf]
        %v414 = vld [vmem:[%s352 + $0xcc] sm:$0xf]
        %v415 = vld [vmem:[%s352 + $0xd0] sm:$0xf]
        %v416 = vld [vmem:[%s352 + $0xd4] sm:$0xf]
        %v417 = vld [vmem:[%s352 + $0xd8] sm:$0xf]
        %v418 = vld [vmem:[%s352 + $0xdc] sm:$0xf]
        %v419 = vld [vmem:[%s352 + $0xe0] sm:$0xf]
        %v420 = vld [vmem:[%s352 + $0xe4] sm:$0xf]
        %v421 = vld [vmem:[%s352 + $0xe8] sm:$0xf]
        %v422 = vld [vmem:[%s352 + $0xec] sm:$0xf]
        %v423 = vld [vmem:[%s352 + $0xf0] sm:$0xf]
        %v424 = vld [vmem:[%s352 + $0xf4] sm:$0xf]
        %v425 = vld [vmem:[%s352 + $0xf8] sm:$0xf]
        %v426 = vld [vmem:[%s352 + $0xfc] sm:$0xf]
        %v427 = vld [vmem:[%s2] sm:$0xf]
        %v428 = vld [vmem:[%s2 + $0x4] sm:$0xf]
        %v429 = vld [vmem:[%s2 + $0x8] sm:$0xf]
        %v430 = vld [vmem:[%s2 + $0xc] sm:$0xf]
        %v431 = vld [vmem:[%s2 + $0x10] sm:$0xf]
        %v432 = vld [vmem:[%s2 + $0x14] sm:$0xf]
        %v433 = vld [vmem:[%s2 + $0x18] sm:$0xf]
        %v434 = vld [vmem:[%s2 + $0x1c] sm:$0xf]
        %v435 = vld [vmem:[%s3] sm:$0x1]
        %v437 = vlaneseq
        %v438 = vshrl.u32 %v437, 7
        %v439 = vsub.s32 0, %v438
        %v440 = vrot.slane %v435, %v439
        %v506 = vunpack.c.l.b16 %v363
        %v507 = vunpack.c.l.b16 %v364
        %v508 = vunpack.c.l.b16 %v365
        %v509 = vunpack.c.l.b16 %v366
        %v510 = vunpack.c.l.b16 %v367
        %v511 = vunpack.c.l.b16 %v368
        %v512 = vunpack.c.l.b16 %v369
        %v513 = vunpack.c.l.b16 %v370
        %v514 = vunpack.c.l.b16 %v371
        %v515 = vunpack.c.l.b16 %v372
        %v516 = vunpack.c.l.b16 %v373
        %v517 = vunpack.c.l.b16 %v374
        %v518 = vunpack.c.l.b16 %v375
        %v519 = vunpack.c.l.b16 %v376
        %v520 = vunpack.c.l.b16 %v377
        %v521 = vunpack.c.l.b16 %v378
        %v522 = vunpack.c.l.b16 %v379
        %v523 = vunpack.c.l.b16 %v380
        %v524 = vunpack.c.l.b16 %v381
        %v525 = vunpack.c.l.b16 %v382
        %v526 = vunpack.c.l.b16 %v383
        %v527 = vunpack.c.l.b16 %v384
        %v528 = vunpack.c.l.b16 %v385
        %v529 = vunpack.c.l.b16 %v386
        %v530 = vunpack.c.l.b16 %v387
        %v531 = vunpack.c.l.b16 %v388
        %v532 = vunpack.c.l.b16 %v389
        %v533 = vunpack.c.l.b16 %v390
        %v534 = vunpack.c.l.b16 %v391
        %v535 = vunpack.c.l.b16 %v392
        %v536 = vunpack.c.l.b16 %v393
        %v537 = vunpack.c.l.b16 %v394
        %v538 = vunpack.c.l.b16 %v395
        %v539 = vunpack.c.l.b16 %v396
        %v540 = vunpack.c.l.b16 %v397
        %v541 = vunpack.c.l.b16 %v398
        %v542 = vunpack.c.l.b16 %v399
        %v543 = vunpack.c.l.b16 %v400
        %v544 = vunpack.c.l.b16 %v401
        %v545 = vunpack.c.l.b16 %v402
        %v546 = vunpack.c.l.b16 %v403
        %v547 = vunpack.c.l.b16 %v404
        %v548 = vunpack.c.l.b16 %v405
        %v549 = vunpack.c.l.b16 %v406
        %v550 = vunpack.c.l.b16 %v407
        %v551 = vunpack.c.l.b16 %v408
        %v552 = vunpack.c.l.b16 %v409
        %v553 = vunpack.c.l.b16 %v410
        %v554 = vunpack.c.l.b16 %v411
        %v555 = vunpack.c.l.b16 %v412
        %v556 = vunpack.c.l.b16 %v413
        %v557 = vunpack.c.l.b16 %v414
        %v558 = vunpack.c.l.b16 %v415
        %v559 = vunpack.c.l.b16 %v416
        %v560 = vunpack.c.l.b16 %v417
        %v561 = vunpack.c.l.b16 %v418
        %v562 = vunpack.c.l.b16 %v419
        %v563 = vunpack.c.l.b16 %v420
        %v564 = vunpack.c.l.b16 %v421
        %v565 = vunpack.c.l.b16 %v422
        %v566 = vunpack.c.l.b16 %v423
        %v567 = vunpack.c.l.b16 %v424
        %v568 = vunpack.c.l.b16 %v425
        %v569 = vunpack.c.l.b16 %v426
        %v570 = vpack.c.b16 %v507, %v506
        %v571 = vpack.c.b16 %v509, %v508
        %v572 = vpack.c.b16 %v511, %v510
        %v573 = vpack.c.b16 %v513, %v512
        %v574 = vpack.c.b16 %v515, %v514
        %v575 = vpack.c.b16 %v517, %v516
        %v576 = vpack.c.b16 %v519, %v518
        %v577 = vpack.c.b16 %v521, %v520
        %v578 = vpack.c.b16 %v523, %v522
        %v579 = vpack.c.b16 %v525, %v524
        %v580 = vpack.c.b16 %v527, %v526
        %v581 = vpack.c.b16 %v529, %v528
        %v582 = vpack.c.b16 %v531, %v530
        %v583 = vpack.c.b16 %v533, %v532
        %v584 = vpack.c.b16 %v535, %v534
        %v585 = vpack.c.b16 %v537, %v536
        %v586 = vpack.c.b16 %v539, %v538
        %v587 = vpack.c.b16 %v541, %v540
        %v588 = vpack.c.b16 %v543, %v542
        %v589 = vpack.c.b16 %v545, %v544
        %v590 = vpack.c.b16 %v547, %v546
        %v591 = vpack.c.b16 %v549, %v548
        %v592 = vpack.c.b16 %v551, %v550
        %v593 = vpack.c.b16 %v553, %v552
        %v594 = vpack.c.b16 %v555, %v554
        %v595 = vpack.c.b16 %v557, %v556
        %v596 = vpack.c.b16 %v559, %v558
        %v597 = vpack.c.b16 %v561, %v560
        %v598 = vpack.c.b16 %v563, %v562
        %v599 = vpack.c.b16 %v565, %v564
        %v600 = vpack.c.b16 %v567, %v566
        %v601 = vpack.c.b16 %v569, %v568
        %v610 = vunpack.c.l.b16 %v427
        %v611 = vunpack.c.l.b16 %v428
        %v612 = vunpack.c.l.b16 %v429
        %v613 = vunpack.c.l.b16 %v430
        %v614 = vunpack.c.l.b16 %v431
        %v615 = vunpack.c.l.b16 %v432
        %v616 = vunpack.c.l.b16 %v433
        %v617 = vunpack.c.l.b16 %v434
        %v618 = vpack.c.b16 %v611, %v610
        %v619 = vpack.c.b16 %v613, %v612
        %v620 = vpack.c.b16 %v615, %v614
        %v621 = vpack.c.b16 %v617, %v616
        %vm626 = vcmask 523264
        %v628 = vsel %vm626, %v570, 0
        %v631 = vsel %vm626, %v571, 0
        %v634 = vsel %vm626, %v572, 0
        %v637 = vsel %vm626, %v573, 0
        %v640 = vsel %vm626, %v574, 0
        %v643 = vsel %vm626, %v575, 0
        %v646 = vsel %vm626, %v576, 0
        %v649 = vsel %vm626, %v577, 0
        %v652 = vsel %vm626, %v578, 0
        %v655 = vsel %vm626, %v579, 0
        %v658 = vsel %vm626, %v580, 0
        %v661 = vsel %vm626, %v581, 0
        %v664 = vsel %vm626, %v582, 0
        %v667 = vsel %vm626, %v583, 0
        %v670 = vsel %vm626, %v584, 0
        %v673 = vsel %vm626, %v585, 0
        %v676 = vsel %vm626, %v586, 0
        %v679 = vsel %vm626, %v587, 0
        %v682 = vsel %vm626, %v588, 0
        %v685 = vsel %vm626, %v589, 0
        %v688 = vsel %vm626, %v590, 0
        %v691 = vsel %vm626, %v591, 0
        %v694 = vsel %vm626, %v592, 0
        %v697 = vsel %vm626, %v593, 0
        %v700 = vsel %vm626, %v594, 0
        %v703 = vsel %vm626, %v595, 0
        %v706 = vsel %vm626, %v596, 0
        %v709 = vsel %vm626, %v597, 0
        %v712 = vsel %vm626, %v598, 0
        %v715 = vsel %vm626, %v599, 0
        %v718 = vsel %vm626, %v600, 0
        %v721 = vsel %vm626, %v601, 0
        %723 = vmatprep.subr.bf16.mxu0 0
        %724 = vmatpush1.bf16.msra.mxu0 %v618
        %725 = vmatprep.subr.bf16.mxu0 0
        %726 = vmatpush1.bf16.msra.mxu0 %v619
        %727 = vmatprep.subr.bf16.mxu0 0
        %728 = vmatpush1.bf16.msra.mxu0 %v620
        %729 = vmatprep.subr.bf16.mxu0 0
        %730 = vmatpush1.bf16.msra.mxu0 %v621
        %731 = vmatprep.subr.bf16.mxu0 0
        %732 = vmatpush1.bf16.msra.mxu0 0
        %733 = vmatprep.subr.bf16.mxu0 0
        %734 = vmatpush1.bf16.msra.mxu0 0
        %735 = vmatprep.subr.bf16.mxu0 0
        %736 = vmatpush1.bf16.msra.mxu0 0
        %737 = vmatprep.subr.bf16.mxu0 0
        %738 = vmatpush1.bf16.msra.mxu0 0
        %739 = vmatprep.subr.bf16.mxu0 0
        %740 = vmatpush1.bf16.msra.mxu0 0
        %741 = vmatprep.subr.bf16.mxu0 0
        %742 = vmatpush1.bf16.msra.mxu0 0
        %743 = vmatprep.subr.bf16.mxu0 0
        %744 = vmatpush1.bf16.msra.mxu0 0
        %745 = vmatprep.subr.bf16.mxu0 0
        %746 = vmatpush1.bf16.msra.mxu0 0
        %747 = vmatprep.subr.bf16.mxu0 0
        %748 = vmatpush1.bf16.msra.mxu0 0
        %749 = vmatprep.subr.bf16.mxu0 0
        %750 = vmatpush1.bf16.msra.mxu0 0
        %751 = vmatprep.subr.bf16.mxu0 0
        %752 = vmatpush1.bf16.msra.mxu0 0
        %753 = vmatprep.subr.bf16.mxu0 0
        %754 = vmatpush1.bf16.msra.mxu0 0
        %755 = vmatprep.mubr.bf16.mxu0 0
        %756 = vmatmul.mubr.bf16.gmra.mrb[0].mxu0 %v628
        %v757 = vpop.f32.mrb[0].mxu0
        %v758 = vadd.f32 %v440, %v757
        %v759 = vpop.f32.mrb[0].mxu0
        %v760 = vpop.f32.mrb[0].mxu0
        %v761 = vadd.f32 %v440, %v760
        %v762 = vpop.f32.mrb[0].mxu0
        %763 = vmatprep.mubr.bf16.mxu0 0
        %764 = vmatmul.mubr.bf16.gmra.mrb[0].mxu0 %v631
        %v765 = vpop.f32.mrb[0].mxu0
        %v766 = vadd.f32 %v440, %v765
        %v767 = vpop.f32.mrb[0].mxu0
        %v768 = vpop.f32.mrb[0].mxu0
        %v769 = vadd.f32 %v440, %v768
        %v770 = vpop.f32.mrb[0].mxu0
        %771 = vmatprep.mubr.bf16.mxu0 0
        %772 = vmatmul.mubr.bf16.gmra.mrb[0].mxu0 %v634
        %v773 = vpop.f32.mrb[0].mxu0
        %v774 = vadd.f32 %v440, %v773
        %v775 = vpop.f32.mrb[0].mxu0
        %v776 = vpop.f32.mrb[0].mxu0
        %v777 = vadd.f32 %v440, %v776
        %v778 = vpop.f32.mrb[0].mxu0
        %779 = vmatprep.mubr.bf16.mxu0 0
        %780 = vmatmul.mubr.bf16.gmra.mrb[0].mxu0 %v637
        %v781 = vpop.f32.mrb[0].mxu0
        %v782 = vadd.f32 %v440, %v781
        %v783 = vpop.f32.mrb[0].mxu0
        %v784 = vpop.f32.mrb[0].mxu0
        %v785 = vadd.f32 %v440, %v784
        %v786 = vpop.f32.mrb[0].mxu0
        %787 = vmatprep.mubr.bf16.mxu0 0
        %788 = vmatmul.mubr.bf16.gmra.mrb[0].mxu0 %v640
        %v789 = vpop.f32.mrb[0].mxu0
        %v790 = vadd.f32 %v440, %v789
        %v791 = vpop.f32.mrb[0].mxu0
        %v792 = vpop.f32.mrb[0].mxu0
        %v793 = vadd.f32 %v440, %v792
        %v794 = vpop.f32.mrb[0].mxu0
        %795 = vmatprep.mubr.bf16.mxu0 0
        %796 = vmatmul.mubr.bf16.gmra.mrb[0].mxu0 %v643
        %v797 = vpop.f32.mrb[0].mxu0
        %v798 = vadd.f32 %v440, %v797
        %v799 = vpop.f32.mrb[0].mxu0
        %v800 = vpop.f32.mrb[0].mxu0
        %v801 = vadd.f32 %v440, %v800
        %v802 = vpop.f32.mrb[0].mxu0
        %803 = vmatprep.mubr.bf16.mxu0 0
        %804 = vmatmul.mubr.bf16.gmra.mrb[0].mxu0 %v646
        %v805 = vpop.f32.mrb[0].mxu0
        %v806 = vadd.f32 %v440, %v805
        %v807 = vpop.f32.mrb[0].mxu0
        %v808 = vpop.f32.mrb[0].mxu0
        %v809 = vadd.f32 %v440, %v808
        %v810 = vpop.f32.mrb[0].mxu0
        %811 = vmatprep.mubr.bf16.mxu0 0
        %812 = vmatmul.mubr.bf16.gmra.mrb[0].mxu0 %v649
        %v813 = vpop.f32.mrb[0].mxu0
        %v814 = vadd.f32 %v440, %v813
        %v815 = vpop.f32.mrb[0].mxu0
        %v816 = vpop.f32.mrb[0].mxu0
        %v817 = vadd.f32 %v440, %v816
        %v818 = vpop.f32.mrb[0].mxu0
        %819 = vmatprep.mubr.bf16.mxu0 0
        %820 = vmatmul.mubr.bf16.gmra.mrb[0].mxu0 %v652
        %v821 = vpop.f32.mrb[0].mxu0
        %v822 = vadd.f32 %v440, %v821
        %v823 = vpop.f32.mrb[0].mxu0
        %v824 = vpop.f32.mrb[0].mxu0
        %v825 = vadd.f32 %v440, %v824
        %v826 = vpop.f32.mrb[0].mxu0
        %827 = vmatprep.mubr.bf16.mxu0 0
        %828 = vmatmul.mubr.bf16.gmra.mrb[0].mxu0 %v655
        %v829 = vpop.f32.mrb[0].mxu0
        %v830 = vadd.f32 %v440, %v829
        %v831 = vpop.f32.mrb[0].mxu0
        %v832 = vpop.f32.mrb[0].mxu0
        %v833 = vadd.f32 %v440, %v832
        %v834 = vpop.f32.mrb[0].mxu0
        %835 = vmatprep.mubr.bf16.mxu0 0
        %836 = vmatmul.mubr.bf16.gmra.mrb[0].mxu0 %v658
        %v837 = vpop.f32.mrb[0].mxu0
        %v838 = vadd.f32 %v440, %v837
        %v839 = vpop.f32.mrb[0].mxu0
        %v840 = vpop.f32.mrb[0].mxu0
        %v841 = vadd.f32 %v440, %v840
        %v842 = vpop.f32.mrb[0].mxu0
        %843 = vmatprep.mubr.bf16.mxu0 0
        %844 = vmatmul.mubr.bf16.gmra.mrb[0].mxu0 %v661
        %v845 = vpop.f32.mrb[0].mxu0
        %v846 = vadd.f32 %v440, %v845
        %v847 = vpop.f32.mrb[0].mxu0
        %v848 = vpop.f32.mrb[0].mxu0
        %v849 = vadd.f32 %v440, %v848
        %v850 = vpop.f32.mrb[0].mxu0
        %851 = vmatprep.mubr.bf16.mxu0 0
        %852 = vmatmul.mubr.bf16.gmra.mrb[0].mxu0 %v664
        %v853 = vpop.f32.mrb[0].mxu0
        %v854 = vadd.f32 %v440, %v853
        %v855 = vpop.f32.mrb[0].mxu0
        %v856 = vpop.f32.mrb[0].mxu0
        %v857 = vadd.f32 %v440, %v856
        %v858 = vpop.f32.mrb[0].mxu0
        %859 = vmatprep.mubr.bf16.mxu0 0
        %860 = vmatmul.mubr.bf16.gmra.mrb[0].mxu0 %v667
        %v861 = vpop.f32.mrb[0].mxu0
        %v862 = vadd.f32 %v440, %v861
        %v863 = vpop.f32.mrb[0].mxu0
        %v864 = vpop.f32.mrb[0].mxu0
        %v865 = vadd.f32 %v440, %v864
        %v866 = vpop.f32.mrb[0].mxu0
        %867 = vmatprep.mubr.bf16.mxu0 0
        %868 = vmatmul.mubr.bf16.gmra.mrb[0].mxu0 %v670
        %v869 = vpop.f32.mrb[0].mxu0
        %v870 = vadd.f32 %v440, %v869
        %v871 = vpop.f32.mrb[0].mxu0
        %v872 = vpop.f32.mrb[0].mxu0
        %v873 = vadd.f32 %v440, %v872
        %v874 = vpop.f32.mrb[0].mxu0
        %875 = vmatprep.mubr.bf16.mxu0 0
        %876 = vmatmul.mubr.bf16.gmra.mrb[0].mxu0 %v673
        %v877 = vpop.f32.mrb[0].mxu0
        %v878 = vadd.f32 %v440, %v877
        %v879 = vpop.f32.mrb[0].mxu0
        %v880 = vpop.f32.mrb[0].mxu0
        %v881 = vadd.f32 %v440, %v880
        %v882 = vpop.f32.mrb[0].mxu0
        %883 = vmatprep.mubr.bf16.mxu0 0
        %884 = vmatmul.mubr.bf16.gmra.mrb[0].mxu0 %v676
        %v885 = vpop.f32.mrb[0].mxu0
        %v886 = vadd.f32 %v440, %v885
        %v887 = vpop.f32.mrb[0].mxu0
        %v888 = vpop.f32.mrb[0].mxu0
        %v889 = vadd.f32 %v440, %v888
        %v890 = vpop.f32.mrb[0].mxu0
        %891 = vmatprep.mubr.bf16.mxu0 0
        %892 = vmatmul.mubr.bf16.gmra.mrb[0].mxu0 %v679
        %v893 = vpop.f32.mrb[0].mxu0
        %v894 = vadd.f32 %v440, %v893
        %v895 = vpop.f32.mrb[0].mxu0
        %v896 = vpop.f32.mrb[0].mxu0
        %v897 = vadd.f32 %v440, %v896
        %v898 = vpop.f32.mrb[0].mxu0
        %899 = vmatprep.mubr.bf16.mxu0 0
        %900 = vmatmul.mubr.bf16.gmra.mrb[0].mxu0 %v682
        %v901 = vpop.f32.mrb[0].mxu0
        %v902 = vadd.f32 %v440, %v901
        %v903 = vpop.f32.mrb[0].mxu0
        %v904 = vpop.f32.mrb[0].mxu0
        %v905 = vadd.f32 %v440, %v904
        %v906 = vpop.f32.mrb[0].mxu0
        %907 = vmatprep.mubr.bf16.mxu0 0
        %908 = vmatmul.mubr.bf16.gmra.mrb[0].mxu0 %v685
        %v909 = vpop.f32.mrb[0].mxu0
        %v910 = vadd.f32 %v440, %v909
        %v911 = vpop.f32.mrb[0].mxu0
        %v912 = vpop.f32.mrb[0].mxu0
        %v913 = vadd.f32 %v440, %v912
        %v914 = vpop.f32.mrb[0].mxu0
        %915 = vmatprep.mubr.bf16.mxu0 0
        %916 = vmatmul.mubr.bf16.gmra.mrb[0].mxu0 %v688
        %v917 = vpop.f32.mrb[0].mxu0
        %v918 = vadd.f32 %v440, %v917
        %v919 = vpop.f32.mrb[0].mxu0
        %v920 = vpop.f32.mrb[0].mxu0
        %v921 = vadd.f32 %v440, %v920
        %v922 = vpop.f32.mrb[0].mxu0
        %923 = vmatprep.mubr.bf16.mxu0 0
        %924 = vmatmul.mubr.bf16.gmra.mrb[0].mxu0 %v691
        %v925 = vpop.f32.mrb[0].mxu0
        %v926 = vadd.f32 %v440, %v925
        %v927 = vpop.f32.mrb[0].mxu0
        %v928 = vpop.f32.mrb[0].mxu0
        %v929 = vadd.f32 %v440, %v928
        %v930 = vpop.f32.mrb[0].mxu0
        %931 = vmatprep.mubr.bf16.mxu0 0
        %932 = vmatmul.mubr.bf16.gmra.mrb[0].mxu0 %v694
        %v933 = vpop.f32.mrb[0].mxu0
        %v934 = vadd.f32 %v440, %v933
        %v935 = vpop.f32.mrb[0].mxu0
        %v936 = vpop.f32.mrb[0].mxu0
        %v937 = vadd.f32 %v440, %v936
        %v938 = vpop.f32.mrb[0].mxu0
        %939 = vmatprep.mubr.bf16.mxu0 0
        %940 = vmatmul.mubr.bf16.gmra.mrb[0].mxu0 %v697
        %v941 = vpop.f32.mrb[0].mxu0
        %v942 = vadd.f32 %v440, %v941
        %v943 = vpop.f32.mrb[0].mxu0
        %v944 = vpop.f32.mrb[0].mxu0
        %v945 = vadd.f32 %v440, %v944
        %v946 = vpop.f32.mrb[0].mxu0
        %947 = vmatprep.mubr.bf16.mxu0 0
        %948 = vmatmul.mubr.bf16.gmra.mrb[0].mxu0 %v700
        %v949 = vpop.f32.mrb[0].mxu0
        %v950 = vadd.f32 %v440, %v949
        %v951 = vpop.f32.mrb[0].mxu0
        %v952 = vpop.f32.mrb[0].mxu0
        %v953 = vadd.f32 %v440, %v952
        %v954 = vpop.f32.mrb[0].mxu0
        %955 = vmatprep.mubr.bf16.mxu0 0
        %956 = vmatmul.mubr.bf16.gmra.mrb[0].mxu0 %v703
        %v957 = vpop.f32.mrb[0].mxu0
        %v958 = vadd.f32 %v440, %v957
        %v959 = vpop.f32.mrb[0].mxu0
        %v960 = vpop.f32.mrb[0].mxu0
        %v961 = vadd.f32 %v440, %v960
        %v962 = vpop.f32.mrb[0].mxu0
        %963 = vmatprep.mubr.bf16.mxu0 0
        %964 = vmatmul.mubr.bf16.gmra.mrb[0].mxu0 %v706
        %v965 = vpop.f32.mrb[0].mxu0
        %v966 = vadd.f32 %v440, %v965
        %v967 = vpop.f32.mrb[0].mxu0
        %v968 = vpop.f32.mrb[0].mxu0
        %v969 = vadd.f32 %v440, %v968
        %v970 = vpop.f32.mrb[0].mxu0
        %971 = vmatprep.mubr.bf16.mxu0 0
        %972 = vmatmul.mubr.bf16.gmra.mrb[0].mxu0 %v709
        %v973 = vpop.f32.mrb[0].mxu0
        %v974 = vadd.f32 %v440, %v973
        %v975 = vpop.f32.mrb[0].mxu0
        %v976 = vpop.f32.mrb[0].mxu0
        %v977 = vadd.f32 %v440, %v976
        %v978 = vpop.f32.mrb[0].mxu0
        %979 = vmatprep.mubr.bf16.mxu0 0
        %980 = vmatmul.mubr.bf16.gmra.mrb[0].mxu0 %v712
        %v981 = vpop.f32.mrb[0].mxu0
        %v982 = vadd.f32 %v440, %v981
        %v983 = vpop.f32.mrb[0].mxu0
        %v984 = vpop.f32.mrb[0].mxu0
        %v985 = vadd.f32 %v440, %v984
        %v986 = vpop.f32.mrb[0].mxu0
        %987 = vmatprep.mubr.bf16.mxu0 0
        %988 = vmatmul.mubr.bf16.gmra.mrb[0].mxu0 %v715
        %v989 = vpop.f32.mrb[0].mxu0
        %v990 = vadd.f32 %v440, %v989
        %v991 = vpop.f32.mrb[0].mxu0
        %v992 = vpop.f32.mrb[0].mxu0
        %v993 = vadd.f32 %v440, %v992
        %v994 = vpop.f32.mrb[0].mxu0
        %995 = vmatprep.mubr.bf16.mxu0 0
        %996 = vmatmul.mubr.bf16.gmra.mrb[0].mxu0 %v718
        %v997 = vpop.f32.mrb[0].mxu0
        %v998 = vadd.f32 %v440, %v997
        %v999 = vpop.f32.mrb[0].mxu0
        %v1000 = vpop.f32.mrb[0].mxu0
        %v1001 = vadd.f32 %v440, %v1000
        %v1002 = vpop.f32.mrb[0].mxu0
        %1003 = vmatprep.mubr.bf16.mxu0 0
        %1004 = vmatmul.mubr.bf16.gmra.mrb[0].mxu0 %v721
        %v1005 = vpop.f32.mrb[0].mxu0
        %v1006 = vadd.f32 %v440, %v1005
        %v1007 = vpop.f32.mrb[0].mxu0
        %v1008 = vpop.f32.mrb[0].mxu0
        %v1009 = vadd.f32 %v440, %v1008
        %v1010 = vpop.f32.mrb[0].mxu0
        %1011 = vdwg.mxu0
        %v1012 = vld [vmem:[%s4] sm:$0x1]
        %v1014 = vlaneseq
        %v1015 = vshrl.u32 %v1014, 7
        %v1016 = vsub.s32 0, %v1015
        %v1017 = vrot.slane %v1012, %v1016
        %v1019 = vmul.f32 %v758, %v1017
        %v1020 = vmul.f32 %v761, %v1017
        %v1021 = vmul.f32 %v766, %v1017
        %v1022 = vmul.f32 %v769, %v1017
        %v1023 = vmul.f32 %v774, %v1017
        %v1024 = vmul.f32 %v777, %v1017
        %v1025 = vmul.f32 %v782, %v1017
        %v1026 = vmul.f32 %v785, %v1017
        %v1027 = vmul.f32 %v790, %v1017
        %v1028 = vmul.f32 %v793, %v1017
        %v1029 = vmul.f32 %v798, %v1017
        %v1030 = vmul.f32 %v801, %v1017
        %v1031 = vmul.f32 %v806, %v1017
        %v1032 = vmul.f32 %v809, %v1017
        %v1033 = vmul.f32 %v814, %v1017
        %v1034 = vmul.f32 %v817, %v1017
        %v1035 = vmul.f32 %v822, %v1017
        %v1036 = vmul.f32 %v825, %v1017
        %v1037 = vmul.f32 %v830, %v1017
        %v1038 = vmul.f32 %v833, %v1017
        %v1039 = vmul.f32 %v838, %v1017
        %v1040 = vmul.f32 %v841, %v1017
        %v1041 = vmul.f32 %v846, %v1017
        %v1042 = vmul.f32 %v849, %v1017
        %v1043 = vmul.f32 %v854, %v1017
        %v1044 = vmul.f32 %v857, %v1017
        %v1045 = vmul.f32 %v862, %v1017
        %v1046 = vmul.f32 %v865, %v1017
        %v1047 = vmul.f32 %v870, %v1017
        %v1048 = vmul.f32 %v873, %v1017
        %v1049 = vmul.f32 %v878, %v1017
        %v1050 = vmul.f32 %v881, %v1017
        %v1051 = vmul.f32 %v886, %v1017
        %v1052 = vmul.f32 %v889, %v1017
        %v1053 = vmul.f32 %v894, %v1017
        %v1054 = vmul.f32 %v897, %v1017
        %v1055 = vmul.f32 %v902, %v1017
        %v1056 = vmul.f32 %v905, %v1017
        %v1057 = vmul.f32 %v910, %v1017
        %v1058 = vmul.f32 %v913, %v1017
        %v1059 = vmul.f32 %v918, %v1017
        %v1060 = vmul.f32 %v921, %v1017
        %v1061 = vmul.f32 %v926, %v1017
        %v1062 = vmul.f32 %v929, %v1017
        %v1063 = vmul.f32 %v934, %v1017
        %v1064 = vmul.f32 %v937, %v1017
        %v1065 = vmul.f32 %v942, %v1017
        %v1066 = vmul.f32 %v945, %v1017
        %v1067 = vmul.f32 %v950, %v1017
        %v1068 = vmul.f32 %v953, %v1017
        %v1069 = vmul.f32 %v958, %v1017
        %v1070 = vmul.f32 %v961, %v1017
        %v1071 = vmul.f32 %v966, %v1017
        %v1072 = vmul.f32 %v969, %v1017
        %v1073 = vmul.f32 %v974, %v1017
        %v1074 = vmul.f32 %v977, %v1017
        %v1075 = vmul.f32 %v982, %v1017
        %v1076 = vmul.f32 %v985, %v1017
        %v1077 = vmul.f32 %v990, %v1017
        %v1078 = vmul.f32 %v993, %v1017
        %v1079 = vmul.f32 %v998, %v1017
        %v1080 = vmul.f32 %v1001, %v1017
        %v1081 = vmul.f32 %v1006, %v1017
        %v1082 = vmul.f32 %v1009, %v1017
        %v1083 = vsel %vm626, %v1019, 0.0
        %1084 = vadd.xlane.f32.xlu0 %v1083
        %v1085 = vpop.xlane.xlu0 %1084
        %v1086 = vsel %vm626, %v1020, 0.0
        %1087 = vadd.xlane.f32.xlu0 %v1086
        %v1088 = vpop.xlane.xlu0 %1087
        %v1089 = vsel %vm626, %v1021, 0.0
        %1090 = vadd.xlane.f32.xlu0 %v1089
        %v1091 = vpop.xlane.xlu0 %1090
        %v1092 = vsel %vm626, %v1022, 0.0
        %1093 = vadd.xlane.f32.xlu0 %v1092
        %v1094 = vpop.xlane.xlu0 %1093
        %v1095 = vsel %vm626, %v1023, 0.0
        %1096 = vadd.xlane.f32.xlu0 %v1095
        %v1097 = vpop.xlane.xlu0 %1096
        %v1098 = vsel %vm626, %v1024, 0.0
        %1099 = vadd.xlane.f32.xlu0 %v1098
        %v1100 = vpop.xlane.xlu0 %1099
        %v1101 = vsel %vm626, %v1025, 0.0
        %1102 = vadd.xlane.f32.xlu0 %v1101
        %v1103 = vpop.xlane.xlu0 %1102
        %v1104 = vsel %vm626, %v1026, 0.0
        %1105 = vadd.xlane.f32.xlu0 %v1104
        %v1106 = vpop.xlane.xlu0 %1105
        %v1107 = vsel %vm626, %v1027, 0.0
        %1108 = vadd.xlane.f32.xlu0 %v1107
        %v1109 = vpop.xlane.xlu0 %1108
        %v1110 = vsel %vm626, %v1028, 0.0
        %1111 = vadd.xlane.f32.xlu0 %v1110
        %v1112 = vpop.xlane.xlu0 %1111
        %v1113 = vsel %vm626, %v1029, 0.0
        %1114 = vadd.xlane.f32.xlu0 %v1113
        %v1115 = vpop.xlane.xlu0 %1114
        %v1116 = vsel %vm626, %v1030, 0.0
        %1117 = vadd.xlane.f32.xlu0 %v1116
        %v1118 = vpop.xlane.xlu0 %1117
        %v1119 = vsel %vm626, %v1031, 0.0
        %1120 = vadd.xlane.f32.xlu0 %v1119
        %v1121 = vpop.xlane.xlu0 %1120
        %v1122 = vsel %vm626, %v1032, 0.0
        %1123 = vadd.xlane.f32.xlu0 %v1122
        %v1124 = vpop.xlane.xlu0 %1123
        %v1125 = vsel %vm626, %v1033, 0.0
        %1126 = vadd.xlane.f32.xlu0 %v1125
        %v1127 = vpop.xlane.xlu0 %1126
        %v1128 = vsel %vm626, %v1034, 0.0
        %1129 = vadd.xlane.f32.xlu0 %v1128
        %v1130 = vpop.xlane.xlu0 %1129
        %v1131 = vsel %vm626, %v1035, 0.0
        %1132 = vadd.xlane.f32.xlu0 %v1131
        %v1133 = vpop.xlane.xlu0 %1132
        %v1134 = vsel %vm626, %v1036, 0.0
        %1135 = vadd.xlane.f32.xlu0 %v1134
        %v1136 = vpop.xlane.xlu0 %1135
        %v1137 = vsel %vm626, %v1037, 0.0
        %1138 = vadd.xlane.f32.xlu0 %v1137
        %v1139 = vpop.xlane.xlu0 %1138
        %v1140 = vsel %vm626, %v1038, 0.0
        %1141 = vadd.xlane.f32.xlu0 %v1140
        %v1142 = vpop.xlane.xlu0 %1141
        %v1143 = vsel %vm626, %v1039, 0.0
        %1144 = vadd.xlane.f32.xlu0 %v1143
        %v1145 = vpop.xlane.xlu0 %1144
        %v1146 = vsel %vm626, %v1040, 0.0
        %1147 = vadd.xlane.f32.xlu0 %v1146
        %v1148 = vpop.xlane.xlu0 %1147
        %v1149 = vsel %vm626, %v1041, 0.0
        %1150 = vadd.xlane.f32.xlu0 %v1149
        %v1151 = vpop.xlane.xlu0 %1150
        %v1152 = vsel %vm626, %v1042, 0.0
        %1153 = vadd.xlane.f32.xlu0 %v1152
        %v1154 = vpop.xlane.xlu0 %1153
        %v1155 = vsel %vm626, %v1043, 0.0
        %1156 = vadd.xlane.f32.xlu0 %v1155
        %v1157 = vpop.xlane.xlu0 %1156
        %v1158 = vsel %vm626, %v1044, 0.0
        %1159 = vadd.xlane.f32.xlu0 %v1158
        %v1160 = vpop.xlane.xlu0 %1159
        %v1161 = vsel %vm626, %v1045, 0.0
        %1162 = vadd.xlane.f32.xlu0 %v1161
        %v1163 = vpop.xlane.xlu0 %1162
        %v1164 = vsel %vm626, %v1046, 0.0
        %1165 = vadd.xlane.f32.xlu0 %v1164
        %v1166 = vpop.xlane.xlu0 %1165
        %v1167 = vsel %vm626, %v1047, 0.0
        %1168 = vadd.xlane.f32.xlu0 %v1167
        %v1169 = vpop.xlane.xlu0 %1168
        %v1170 = vsel %vm626, %v1048, 0.0
        %1171 = vadd.xlane.f32.xlu0 %v1170
        %v1172 = vpop.xlane.xlu0 %1171
        %v1173 = vsel %vm626, %v1049, 0.0
        %1174 = vadd.xlane.f32.xlu0 %v1173
        %v1175 = vpop.xlane.xlu0 %1174
        %v1176 = vsel %vm626, %v1050, 0.0
        %1177 = vadd.xlane.f32.xlu0 %v1176
        %v1178 = vpop.xlane.xlu0 %1177
        %v1179 = vsel %vm626, %v1051, 0.0
        %1180 = vadd.xlane.f32.xlu0 %v1179
        %v1181 = vpop.xlane.xlu0 %1180
        %v1182 = vsel %vm626, %v1052, 0.0
        %1183 = vadd.xlane.f32.xlu0 %v1182
        %v1184 = vpop.xlane.xlu0 %1183
        %v1185 = vsel %vm626, %v1053, 0.0
        %1186 = vadd.xlane.f32.xlu0 %v1185
        %v1187 = vpop.xlane.xlu0 %1186
        %v1188 = vsel %vm626, %v1054, 0.0
        %1189 = vadd.xlane.f32.xlu0 %v1188
        %v1190 = vpop.xlane.xlu0 %1189
        %v1191 = vsel %vm626, %v1055, 0.0
        %1192 = vadd.xlane.f32.xlu0 %v1191
        %v1193 = vpop.xlane.xlu0 %1192
        %v1194 = vsel %vm626, %v1056, 0.0
        %1195 = vadd.xlane.f32.xlu0 %v1194
        %v1196 = vpop.xlane.xlu0 %1195
        %v1197 = vsel %vm626, %v1057, 0.0
        %1198 = vadd.xlane.f32.xlu0 %v1197
        %v1199 = vpop.xlane.xlu0 %1198
        %v1200 = vsel %vm626, %v1058, 0.0
        %1201 = vadd.xlane.f32.xlu0 %v1200
        %v1202 = vpop.xlane.xlu0 %1201
        %v1203 = vsel %vm626, %v1059, 0.0
        %1204 = vadd.xlane.f32.xlu0 %v1203
        %v1205 = vpop.xlane.xlu0 %1204
        %v1206 = vsel %vm626, %v1060, 0.0
        %1207 = vadd.xlane.f32.xlu0 %v1206
        %v1208 = vpop.xlane.xlu0 %1207
        %v1209 = vsel %vm626, %v1061, 0.0
        %1210 = vadd.xlane.f32.xlu0 %v1209
        %v1211 = vpop.xlane.xlu0 %1210
        %v1212 = vsel %vm626, %v1062, 0.0
        %1213 = vadd.xlane.f32.xlu0 %v1212
        %v1214 = vpop.xlane.xlu0 %1213
        %v1215 = vsel %vm626, %v1063, 0.0
        %1216 = vadd.xlane.f32.xlu0 %v1215
        %v1217 = vpop.xlane.xlu0 %1216
        %v1218 = vsel %vm626, %v1064, 0.0
        %1219 = vadd.xlane.f32.xlu0 %v1218
        %v1220 = vpop.xlane.xlu0 %1219
        %v1221 = vsel %vm626, %v1065, 0.0
        %1222 = vadd.xlane.f32.xlu0 %v1221
        %v1223 = vpop.xlane.xlu0 %1222
        %v1224 = vsel %vm626, %v1066, 0.0
        %1225 = vadd.xlane.f32.xlu0 %v1224
        %v1226 = vpop.xlane.xlu0 %1225
        %v1227 = vsel %vm626, %v1067, 0.0
        %1228 = vadd.xlane.f32.xlu0 %v1227
        %v1229 = vpop.xlane.xlu0 %1228
        %v1230 = vsel %vm626, %v1068, 0.0
        %1231 = vadd.xlane.f32.xlu0 %v1230
        %v1232 = vpop.xlane.xlu0 %1231
        %v1233 = vsel %vm626, %v1069, 0.0
        %1234 = vadd.xlane.f32.xlu0 %v1233
        %v1235 = vpop.xlane.xlu0 %1234
        %v1236 = vsel %vm626, %v1070, 0.0
        %1237 = vadd.xlane.f32.xlu0 %v1236
        %v1238 = vpop.xlane.xlu0 %1237
        %v1239 = vsel %vm626, %v1071, 0.0
        %1240 = vadd.xlane.f32.xlu0 %v1239
        %v1241 = vpop.xlane.xlu0 %1240
        %v1242 = vsel %vm626, %v1072, 0.0
        %1243 = vadd.xlane.f32.xlu0 %v1242
        %v1244 = vpop.xlane.xlu0 %1243
        %v1245 = vsel %vm626, %v1073, 0.0
        %1246 = vadd.xlane.f32.xlu0 %v1245
        %v1247 = vpop.xlane.xlu0 %1246
        %v1248 = vsel %vm626, %v1074, 0.0
        %1249 = vadd.xlane.f32.xlu0 %v1248
        %v1250 = vpop.xlane.xlu0 %1249
        %v1251 = vsel %vm626, %v1075, 0.0
        %1252 = vadd.xlane.f32.xlu0 %v1251
        %v1253 = vpop.xlane.xlu0 %1252
        %v1254 = vsel %vm626, %v1076, 0.0
        %1255 = vadd.xlane.f32.xlu0 %v1254
        %v1256 = vpop.xlane.xlu0 %1255
        %v1257 = vsel %vm626, %v1077, 0.0
        %1258 = vadd.xlane.f32.xlu0 %v1257
        %v1259 = vpop.xlane.xlu0 %1258
        %v1260 = vsel %vm626, %v1078, 0.0
        %1261 = vadd.xlane.f32.xlu0 %v1260
        %v1262 = vpop.xlane.xlu0 %1261
        %v1263 = vsel %vm626, %v1079, 0.0
        %1264 = vadd.xlane.f32.xlu0 %v1263
        %v1265 = vpop.xlane.xlu0 %1264
        %v1266 = vsel %vm626, %v1080, 0.0
        %1267 = vadd.xlane.f32.xlu0 %v1266
        %v1268 = vpop.xlane.xlu0 %1267
        %v1269 = vsel %vm626, %v1081, 0.0
        %1270 = vadd.xlane.f32.xlu0 %v1269
        %v1271 = vpop.xlane.xlu0 %1270
        %v1272 = vsel %vm626, %v1082, 0.0
        %1273 = vadd.xlane.f32.xlu0 %v1272
        %v1274 = vpop.xlane.xlu0 %1273
        %v1275 = vld [vmem:[%s359] sm:$0xff]
        %v1276 = vld [vmem:[%s359 + $0x8] sm:$0xff]
        %v1277 = vld [vmem:[%s359 + $0x10] sm:$0xff]
        %v1278 = vld [vmem:[%s359 + $0x18] sm:$0xff]
        %v1279 = vld [vmem:[%s359 + $0x20] sm:$0xff]
        %v1280 = vld [vmem:[%s359 + $0x28] sm:$0xff]
        %v1281 = vld [vmem:[%s359 + $0x30] sm:$0xff]
        %v1282 = vld [vmem:[%s359 + $0x38] sm:$0xff]
        %v1283 = vld [vmem:[%s359 + $0x40] sm:$0xff]
        %v1284 = vld [vmem:[%s359 + $0x48] sm:$0xff]
        %v1285 = vld [vmem:[%s359 + $0x50] sm:$0xff]
        %v1286 = vld [vmem:[%s359 + $0x58] sm:$0xff]
        %v1287 = vld [vmem:[%s359 + $0x60] sm:$0xff]
        %v1288 = vld [vmem:[%s359 + $0x68] sm:$0xff]
        %v1289 = vld [vmem:[%s359 + $0x70] sm:$0xff]
        %v1290 = vld [vmem:[%s359 + $0x78] sm:$0xff]
        %v1291 = vld [vmem:[%s359 + $0x80] sm:$0xff]
        %v1292 = vld [vmem:[%s359 + $0x88] sm:$0xff]
        %v1293 = vld [vmem:[%s359 + $0x90] sm:$0xff]
        %v1294 = vld [vmem:[%s359 + $0x98] sm:$0xff]
        %v1295 = vld [vmem:[%s359 + $0xa0] sm:$0xff]
        %v1296 = vld [vmem:[%s359 + $0xa8] sm:$0xff]
        %v1297 = vld [vmem:[%s359 + $0xb0] sm:$0xff]
        %v1298 = vld [vmem:[%s359 + $0xb8] sm:$0xff]
        %v1299 = vld [vmem:[%s359 + $0xc0] sm:$0xff]
        %v1300 = vld [vmem:[%s359 + $0xc8] sm:$0xff]
        %v1301 = vld [vmem:[%s359 + $0xd0] sm:$0xff]
        %v1302 = vld [vmem:[%s359 + $0xd8] sm:$0xff]
        %v1303 = vld [vmem:[%s359 + $0xe0] sm:$0xff]
        %v1304 = vld [vmem:[%s359 + $0xe8] sm:$0xff]
        %v1305 = vld [vmem:[%s359 + $0xf0] sm:$0xff]
        %v1306 = vld [vmem:[%s359 + $0xf8] sm:$0xff]
        %v1307 = vld [vmem:[%s359 + $0x100] sm:$0xff]
        %v1308 = vld [vmem:[%s359 + $0x108] sm:$0xff]
        %v1309 = vld [vmem:[%s359 + $0x110] sm:$0xff]
        %v1310 = vld [vmem:[%s359 + $0x118] sm:$0xff]
        %v1311 = vld [vmem:[%s359 + $0x120] sm:$0xff]
        %v1312 = vld [vmem:[%s359 + $0x128] sm:$0xff]
        %v1313 = vld [vmem:[%s359 + $0x130] sm:$0xff]
        %v1314 = vld [vmem:[%s359 + $0x138] sm:$0xff]
        %v1315 = vld [vmem:[%s359 + $0x140] sm:$0xff]
        %v1316 = vld [vmem:[%s359 + $0x148] sm:$0xff]
        %v1317 = vld [vmem:[%s359 + $0x150] sm:$0xff]
        %v1318 = vld [vmem:[%s359 + $0x158] sm:$0xff]
        %v1319 = vld [vmem:[%s359 + $0x160] sm:$0xff]
        %v1320 = vld [vmem:[%s359 + $0x168] sm:$0xff]
        %v1321 = vld [vmem:[%s359 + $0x170] sm:$0xff]
        %v1322 = vld [vmem:[%s359 + $0x178] sm:$0xff]
        %v1323 = vld [vmem:[%s359 + $0x180] sm:$0xff]
        %v1324 = vld [vmem:[%s359 + $0x188] sm:$0xff]
        %v1325 = vld [vmem:[%s359 + $0x190] sm:$0xff]
        %v1326 = vld [vmem:[%s359 + $0x198] sm:$0xff]
        %v1327 = vld [vmem:[%s359 + $0x1a0] sm:$0xff]
        %v1328 = vld [vmem:[%s359 + $0x1a8] sm:$0xff]
        %v1329 = vld [vmem:[%s359 + $0x1b0] sm:$0xff]
        %v1330 = vld [vmem:[%s359 + $0x1b8] sm:$0xff]
        %v1331 = vld [vmem:[%s359 + $0x1c0] sm:$0xff]
        %v1332 = vld [vmem:[%s359 + $0x1c8] sm:$0xff]
        %v1333 = vld [vmem:[%s359 + $0x1d0] sm:$0xff]
        %v1334 = vld [vmem:[%s359 + $0x1d8] sm:$0xff]
        %v1335 = vld [vmem:[%s359 + $0x1e0] sm:$0xff]
        %v1336 = vld [vmem:[%s359 + $0x1e8] sm:$0xff]
        %v1337 = vld [vmem:[%s359 + $0x1f0] sm:$0xff]
        %v1338 = vld [vmem:[%s359 + $0x1f8] sm:$0xff]
        %v1339 = vsub.f32 %v1275, 1.0
        %v1340 = vsub.f32 %v1276, 1.0
        %v1341 = vsub.f32 %v1277, 1.0
        %v1342 = vsub.f32 %v1278, 1.0
        %v1343 = vsub.f32 %v1279, 1.0
        %v1344 = vsub.f32 %v1280, 1.0
        %v1345 = vsub.f32 %v1281, 1.0
        %v1346 = vsub.f32 %v1282, 1.0
        %v1347 = vsub.f32 %v1283, 1.0
        %v1348 = vsub.f32 %v1284, 1.0
        %v1349 = vsub.f32 %v1285, 1.0
        %v1350 = vsub.f32 %v1286, 1.0
        %v1351 = vsub.f32 %v1287, 1.0
        %v1352 = vsub.f32 %v1288, 1.0
        %v1353 = vsub.f32 %v1289, 1.0
        %v1354 = vsub.f32 %v1290, 1.0
        %v1355 = vsub.f32 %v1291, 1.0
        %v1356 = vsub.f32 %v1292, 1.0
        %v1357 = vsub.f32 %v1293, 1.0
        %v1358 = vsub.f32 %v1294, 1.0
        %v1359 = vsub.f32 %v1295, 1.0
        %v1360 = vsub.f32 %v1296, 1.0
        %v1361 = vsub.f32 %v1297, 1.0
        %v1362 = vsub.f32 %v1298, 1.0
        %v1363 = vsub.f32 %v1299, 1.0
        %v1364 = vsub.f32 %v1300, 1.0
        %v1365 = vsub.f32 %v1301, 1.0
        %v1366 = vsub.f32 %v1302, 1.0
        %v1367 = vsub.f32 %v1303, 1.0
        %v1368 = vsub.f32 %v1304, 1.0
        %v1369 = vsub.f32 %v1305, 1.0
        %v1370 = vsub.f32 %v1306, 1.0
        %v1371 = vsub.f32 %v1307, 1.0
        %v1372 = vsub.f32 %v1308, 1.0
        %v1373 = vsub.f32 %v1309, 1.0
        %v1374 = vsub.f32 %v1310, 1.0
        %v1375 = vsub.f32 %v1311, 1.0
        %v1376 = vsub.f32 %v1312, 1.0
        %v1377 = vsub.f32 %v1313, 1.0
        %v1378 = vsub.f32 %v1314, 1.0
        %v1379 = vsub.f32 %v1315, 1.0
        %v1380 = vsub.f32 %v1316, 1.0
        %v1381 = vsub.f32 %v1317, 1.0
        %v1382 = vsub.f32 %v1318, 1.0
        %v1383 = vsub.f32 %v1319, 1.0
        %v1384 = vsub.f32 %v1320, 1.0
        %v1385 = vsub.f32 %v1321, 1.0
        %v1386 = vsub.f32 %v1322, 1.0
        %v1387 = vsub.f32 %v1323, 1.0
        %v1388 = vsub.f32 %v1324, 1.0
        %v1389 = vsub.f32 %v1325, 1.0
        %v1390 = vsub.f32 %v1326, 1.0
        %v1391 = vsub.f32 %v1327, 1.0
        %v1392 = vsub.f32 %v1328, 1.0
        %v1393 = vsub.f32 %v1329, 1.0
        %v1394 = vsub.f32 %v1330, 1.0
        %v1395 = vsub.f32 %v1331, 1.0
        %v1396 = vsub.f32 %v1332, 1.0
        %v1397 = vsub.f32 %v1333, 1.0
        %v1398 = vsub.f32 %v1334, 1.0
        %v1399 = vsub.f32 %v1335, 1.0
        %v1400 = vsub.f32 %v1336, 1.0
        %v1401 = vsub.f32 %v1337, 1.0
        %v1402 = vsub.f32 %v1338, 1.0
        %v1403 = vmul.f32 %v1339, 1e+09
        %v1404 = vmul.f32 %v1340, 1e+09
        %v1405 = vmul.f32 %v1341, 1e+09
        %v1406 = vmul.f32 %v1342, 1e+09
        %v1407 = vmul.f32 %v1343, 1e+09
        %v1408 = vmul.f32 %v1344, 1e+09
        %v1409 = vmul.f32 %v1345, 1e+09
        %v1410 = vmul.f32 %v1346, 1e+09
        %v1411 = vmul.f32 %v1347, 1e+09
        %v1412 = vmul.f32 %v1348, 1e+09
        %v1413 = vmul.f32 %v1349, 1e+09
        %v1414 = vmul.f32 %v1350, 1e+09
        %v1415 = vmul.f32 %v1351, 1e+09
        %v1416 = vmul.f32 %v1352, 1e+09
        %v1417 = vmul.f32 %v1353, 1e+09
        %v1418 = vmul.f32 %v1354, 1e+09
        %v1419 = vmul.f32 %v1355, 1e+09
        %v1420 = vmul.f32 %v1356, 1e+09
        %v1421 = vmul.f32 %v1357, 1e+09
        %v1422 = vmul.f32 %v1358, 1e+09
        %v1423 = vmul.f32 %v1359, 1e+09
        %v1424 = vmul.f32 %v1360, 1e+09
        %v1425 = vmul.f32 %v1361, 1e+09
        %v1426 = vmul.f32 %v1362, 1e+09
        %v1427 = vmul.f32 %v1363, 1e+09
        %v1428 = vmul.f32 %v1364, 1e+09
        %v1429 = vmul.f32 %v1365, 1e+09
        %v1430 = vmul.f32 %v1366, 1e+09
        %v1431 = vmul.f32 %v1367, 1e+09
        %v1432 = vmul.f32 %v1368, 1e+09
        %v1433 = vmul.f32 %v1369, 1e+09
        %v1434 = vmul.f32 %v1370, 1e+09
        %v1435 = vmul.f32 %v1371, 1e+09
        %v1436 = vmul.f32 %v1372, 1e+09
        %v1437 = vmul.f32 %v1373, 1e+09
        %v1438 = vmul.f32 %v1374, 1e+09
        %v1439 = vmul.f32 %v1375, 1e+09
        %v1440 = vmul.f32 %v1376, 1e+09
        %v1441 = vmul.f32 %v1377, 1e+09
        %v1442 = vmul.f32 %v1378, 1e+09
        %v1443 = vmul.f32 %v1379, 1e+09
        %v1444 = vmul.f32 %v1380, 1e+09
        %v1445 = vmul.f32 %v1381, 1e+09
        %v1446 = vmul.f32 %v1382, 1e+09
        %v1447 = vmul.f32 %v1383, 1e+09
        %v1448 = vmul.f32 %v1384, 1e+09
        %v1449 = vmul.f32 %v1385, 1e+09
        %v1450 = vmul.f32 %v1386, 1e+09
        %v1451 = vmul.f32 %v1387, 1e+09
        %v1452 = vmul.f32 %v1388, 1e+09
        %v1453 = vmul.f32 %v1389, 1e+09
        %v1454 = vmul.f32 %v1390, 1e+09
        %v1455 = vmul.f32 %v1391, 1e+09
        %v1456 = vmul.f32 %v1392, 1e+09
        %v1457 = vmul.f32 %v1393, 1e+09
        %v1458 = vmul.f32 %v1394, 1e+09
        %v1459 = vmul.f32 %v1395, 1e+09
        %v1460 = vmul.f32 %v1396, 1e+09
        %v1461 = vmul.f32 %v1397, 1e+09
        %v1462 = vmul.f32 %v1398, 1e+09
        %v1463 = vmul.f32 %v1399, 1e+09
        %v1464 = vmul.f32 %v1400, 1e+09
        %v1465 = vmul.f32 %v1401, 1e+09
        %v1466 = vmul.f32 %v1402, 1e+09
        %v1467 = vadd.f32 %v1085, %v1403
        %v1468 = vadd.f32 %v1088, %v1404
        %v1469 = vadd.f32 %v1091, %v1405
        %v1470 = vadd.f32 %v1094, %v1406
        %v1471 = vadd.f32 %v1097, %v1407
        %v1472 = vadd.f32 %v1100, %v1408
        %v1473 = vadd.f32 %v1103, %v1409
        %v1474 = vadd.f32 %v1106, %v1410
        %v1475 = vadd.f32 %v1109, %v1411
        %v1476 = vadd.f32 %v1112, %v1412
        %v1477 = vadd.f32 %v1115, %v1413
        %v1478 = vadd.f32 %v1118, %v1414
        %v1479 = vadd.f32 %v1121, %v1415
        %v1480 = vadd.f32 %v1124, %v1416
        %v1481 = vadd.f32 %v1127, %v1417
        %v1482 = vadd.f32 %v1130, %v1418
        %v1483 = vadd.f32 %v1133, %v1419
        %v1484 = vadd.f32 %v1136, %v1420
        %v1485 = vadd.f32 %v1139, %v1421
        %v1486 = vadd.f32 %v1142, %v1422
        %v1487 = vadd.f32 %v1145, %v1423
        %v1488 = vadd.f32 %v1148, %v1424
        %v1489 = vadd.f32 %v1151, %v1425
        %v1490 = vadd.f32 %v1154, %v1426
        %v1491 = vadd.f32 %v1157, %v1427
        %v1492 = vadd.f32 %v1160, %v1428
        %v1493 = vadd.f32 %v1163, %v1429
        %v1494 = vadd.f32 %v1166, %v1430
        %v1495 = vadd.f32 %v1169, %v1431
        %v1496 = vadd.f32 %v1172, %v1432
        %v1497 = vadd.f32 %v1175, %v1433
        %v1498 = vadd.f32 %v1178, %v1434
        %v1499 = vadd.f32 %v1181, %v1435
        %v1500 = vadd.f32 %v1184, %v1436
        %v1501 = vadd.f32 %v1187, %v1437
        %v1502 = vadd.f32 %v1190, %v1438
        %v1503 = vadd.f32 %v1193, %v1439
        %v1504 = vadd.f32 %v1196, %v1440
        %v1505 = vadd.f32 %v1199, %v1441
        %v1506 = vadd.f32 %v1202, %v1442
        %v1507 = vadd.f32 %v1205, %v1443
        %v1508 = vadd.f32 %v1208, %v1444
        %v1509 = vadd.f32 %v1211, %v1445
        %v1510 = vadd.f32 %v1214, %v1446
        %v1511 = vadd.f32 %v1217, %v1447
        %v1512 = vadd.f32 %v1220, %v1448
        %v1513 = vadd.f32 %v1223, %v1449
        %v1514 = vadd.f32 %v1226, %v1450
        %v1515 = vadd.f32 %v1229, %v1451
        %v1516 = vadd.f32 %v1232, %v1452
        %v1517 = vadd.f32 %v1235, %v1453
        %v1518 = vadd.f32 %v1238, %v1454
        %v1519 = vadd.f32 %v1241, %v1455
        %v1520 = vadd.f32 %v1244, %v1456
        %v1521 = vadd.f32 %v1247, %v1457
        %v1522 = vadd.f32 %v1250, %v1458
        %v1523 = vadd.f32 %v1253, %v1459
        %v1524 = vadd.f32 %v1256, %v1460
        %v1525 = vadd.f32 %v1259, %v1461
        %v1526 = vadd.f32 %v1262, %v1462
        %v1527 = vadd.f32 %v1265, %v1463
        %v1528 = vadd.f32 %v1268, %v1464
        %v1529 = vadd.f32 %v1271, %v1465
        %v1530 = vadd.f32 %v1274, %v1466
        %vm1531 = vcmask 7168
        %v1532 = vsel %vm1531, %v1467, -inf
        %v1533 = vsel %vm1531, %v1468, -inf
        %v1534 = vmax.f32 %v1532, %v1533
        %v1535 = vrot.slane %v1534, 4
        %v1536 = vmax.f32 %v1534, %v1535
        %v1537 = vrot.slane %v1536, 2
        %v1538 = vmax.f32 %v1536, %v1537
        %v1539 = vrot.slane %v1538, 1
        %v1540 = vmax.f32 %v1538, %v1539
        %v1541 = vsel %vm1531, %v1469, -inf
        %v1542 = vsel %vm1531, %v1470, -inf
        %v1543 = vmax.f32 %v1541, %v1542
        %v1544 = vrot.slane %v1543, 4
        %v1545 = vmax.f32 %v1543, %v1544
        %v1546 = vrot.slane %v1545, 2
        %v1547 = vmax.f32 %v1545, %v1546
        %v1548 = vrot.slane %v1547, 1
        %v1549 = vmax.f32 %v1547, %v1548
        %v1550 = vsel %vm1531, %v1471, -inf
        %v1551 = vsel %vm1531, %v1472, -inf
        %v1552 = vmax.f32 %v1550, %v1551
        %v1553 = vrot.slane %v1552, 4
        %v1554 = vmax.f32 %v1552, %v1553
        %v1555 = vrot.slane %v1554, 2
        %v1556 = vmax.f32 %v1554, %v1555
        %v1557 = vrot.slane %v1556, 1
        %v1558 = vmax.f32 %v1556, %v1557
        %v1559 = vsel %vm1531, %v1473, -inf
        %v1560 = vsel %vm1531, %v1474, -inf
        %v1561 = vmax.f32 %v1559, %v1560
        %v1562 = vrot.slane %v1561, 4
        %v1563 = vmax.f32 %v1561, %v1562
        %v1564 = vrot.slane %v1563, 2
        %v1565 = vmax.f32 %v1563, %v1564
        %v1566 = vrot.slane %v1565, 1
        %v1567 = vmax.f32 %v1565, %v1566
        %v1568 = vsel %vm1531, %v1475, -inf
        %v1569 = vsel %vm1531, %v1476, -inf
        %v1570 = vmax.f32 %v1568, %v1569
        %v1571 = vrot.slane %v1570, 4
        %v1572 = vmax.f32 %v1570, %v1571
        %v1573 = vrot.slane %v1572, 2
        %v1574 = vmax.f32 %v1572, %v1573
        %v1575 = vrot.slane %v1574, 1
        %v1576 = vmax.f32 %v1574, %v1575
        %v1577 = vsel %vm1531, %v1477, -inf
        %v1578 = vsel %vm1531, %v1478, -inf
        %v1579 = vmax.f32 %v1577, %v1578
        %v1580 = vrot.slane %v1579, 4
        %v1581 = vmax.f32 %v1579, %v1580
        %v1582 = vrot.slane %v1581, 2
        %v1583 = vmax.f32 %v1581, %v1582
        %v1584 = vrot.slane %v1583, 1
        %v1585 = vmax.f32 %v1583, %v1584
        %v1586 = vsel %vm1531, %v1479, -inf
        %v1587 = vsel %vm1531, %v1480, -inf
        %v1588 = vmax.f32 %v1586, %v1587
        %v1589 = vrot.slane %v1588, 4
        %v1590 = vmax.f32 %v1588, %v1589
        %v1591 = vrot.slane %v1590, 2
        %v1592 = vmax.f32 %v1590, %v1591
        %v1593 = vrot.slane %v1592, 1
        %v1594 = vmax.f32 %v1592, %v1593
        %v1595 = vsel %vm1531, %v1481, -inf
        %v1596 = vsel %vm1531, %v1482, -inf
        %v1597 = vmax.f32 %v1595, %v1596
        %v1598 = vrot.slane %v1597, 4
        %v1599 = vmax.f32 %v1597, %v1598
        %v1600 = vrot.slane %v1599, 2
        %v1601 = vmax.f32 %v1599, %v1600
        %v1602 = vrot.slane %v1601, 1
        %v1603 = vmax.f32 %v1601, %v1602
        %v1604 = vsel %vm1531, %v1483, -inf
        %v1605 = vsel %vm1531, %v1484, -inf
        %v1606 = vmax.f32 %v1604, %v1605
        %v1607 = vrot.slane %v1606, 4
        %v1608 = vmax.f32 %v1606, %v1607
        %v1609 = vrot.slane %v1608, 2
        %v1610 = vmax.f32 %v1608, %v1609
        %v1611 = vrot.slane %v1610, 1
        %v1612 = vmax.f32 %v1610, %v1611
        %v1613 = vsel %vm1531, %v1485, -inf
        %v1614 = vsel %vm1531, %v1486, -inf
        %v1615 = vmax.f32 %v1613, %v1614
        %v1616 = vrot.slane %v1615, 4
        %v1617 = vmax.f32 %v1615, %v1616
        %v1618 = vrot.slane %v1617, 2
        %v1619 = vmax.f32 %v1617, %v1618
        %v1620 = vrot.slane %v1619, 1
        %v1621 = vmax.f32 %v1619, %v1620
        %v1622 = vsel %vm1531, %v1487, -inf
        %v1623 = vsel %vm1531, %v1488, -inf
        %v1624 = vmax.f32 %v1622, %v1623
        %v1625 = vrot.slane %v1624, 4
        %v1626 = vmax.f32 %v1624, %v1625
        %v1627 = vrot.slane %v1626, 2
        %v1628 = vmax.f32 %v1626, %v1627
        %v1629 = vrot.slane %v1628, 1
        %v1630 = vmax.f32 %v1628, %v1629
        %v1631 = vsel %vm1531, %v1489, -inf
        %v1632 = vsel %vm1531, %v1490, -inf
        %v1633 = vmax.f32 %v1631, %v1632
        %v1634 = vrot.slane %v1633, 4
        %v1635 = vmax.f32 %v1633, %v1634
        %v1636 = vrot.slane %v1635, 2
        %v1637 = vmax.f32 %v1635, %v1636
        %v1638 = vrot.slane %v1637, 1
        %v1639 = vmax.f32 %v1637, %v1638
        %v1640 = vsel %vm1531, %v1491, -inf
        %v1641 = vsel %vm1531, %v1492, -inf
        %v1642 = vmax.f32 %v1640, %v1641
        %v1643 = vrot.slane %v1642, 4
        %v1644 = vmax.f32 %v1642, %v1643
        %v1645 = vrot.slane %v1644, 2
        %v1646 = vmax.f32 %v1644, %v1645
        %v1647 = vrot.slane %v1646, 1
        %v1648 = vmax.f32 %v1646, %v1647
        %v1649 = vsel %vm1531, %v1493, -inf
        %v1650 = vsel %vm1531, %v1494, -inf
        %v1651 = vmax.f32 %v1649, %v1650
        %v1652 = vrot.slane %v1651, 4
        %v1653 = vmax.f32 %v1651, %v1652
        %v1654 = vrot.slane %v1653, 2
        %v1655 = vmax.f32 %v1653, %v1654
        %v1656 = vrot.slane %v1655, 1
        %v1657 = vmax.f32 %v1655, %v1656
        %v1658 = vsel %vm1531, %v1495, -inf
        %v1659 = vsel %vm1531, %v1496, -inf
        %v1660 = vmax.f32 %v1658, %v1659
        %v1661 = vrot.slane %v1660, 4
        %v1662 = vmax.f32 %v1660, %v1661
        %v1663 = vrot.slane %v1662, 2
        %v1664 = vmax.f32 %v1662, %v1663
        %v1665 = vrot.slane %v1664, 1
        %v1666 = vmax.f32 %v1664, %v1665
        %v1667 = vsel %vm1531, %v1497, -inf
        %v1668 = vsel %vm1531, %v1498, -inf
        %v1669 = vmax.f32 %v1667, %v1668
        %v1670 = vrot.slane %v1669, 4
        %v1671 = vmax.f32 %v1669, %v1670
        %v1672 = vrot.slane %v1671, 2
        %v1673 = vmax.f32 %v1671, %v1672
        %v1674 = vrot.slane %v1673, 1
        %v1675 = vmax.f32 %v1673, %v1674
        %v1676 = vsel %vm1531, %v1499, -inf
        %v1677 = vsel %vm1531, %v1500, -inf
        %v1678 = vmax.f32 %v1676, %v1677
        %v1679 = vrot.slane %v1678, 4
        %v1680 = vmax.f32 %v1678, %v1679
        %v1681 = vrot.slane %v1680, 2
        %v1682 = vmax.f32 %v1680, %v1681
        %v1683 = vrot.slane %v1682, 1
        %v1684 = vmax.f32 %v1682, %v1683
        %v1685 = vsel %vm1531, %v1501, -inf
        %v1686 = vsel %vm1531, %v1502, -inf
        %v1687 = vmax.f32 %v1685, %v1686
        %v1688 = vrot.slane %v1687, 4
        %v1689 = vmax.f32 %v1687, %v1688
        %v1690 = vrot.slane %v1689, 2
        %v1691 = vmax.f32 %v1689, %v1690
        %v1692 = vrot.slane %v1691, 1
        %v1693 = vmax.f32 %v1691, %v1692
        %v1694 = vsel %vm1531, %v1503, -inf
        %v1695 = vsel %vm1531, %v1504, -inf
        %v1696 = vmax.f32 %v1694, %v1695
        %v1697 = vrot.slane %v1696, 4
        %v1698 = vmax.f32 %v1696, %v1697
        %v1699 = vrot.slane %v1698, 2
        %v1700 = vmax.f32 %v1698, %v1699
        %v1701 = vrot.slane %v1700, 1
        %v1702 = vmax.f32 %v1700, %v1701
        %v1703 = vsel %vm1531, %v1505, -inf
        %v1704 = vsel %vm1531, %v1506, -inf
        %v1705 = vmax.f32 %v1703, %v1704
        %v1706 = vrot.slane %v1705, 4
        %v1707 = vmax.f32 %v1705, %v1706
        %v1708 = vrot.slane %v1707, 2
        %v1709 = vmax.f32 %v1707, %v1708
        %v1710 = vrot.slane %v1709, 1
        %v1711 = vmax.f32 %v1709, %v1710
        %v1712 = vsel %vm1531, %v1507, -inf
        %v1713 = vsel %vm1531, %v1508, -inf
        %v1714 = vmax.f32 %v1712, %v1713
        %v1715 = vrot.slane %v1714, 4
        %v1716 = vmax.f32 %v1714, %v1715
        %v1717 = vrot.slane %v1716, 2
        %v1718 = vmax.f32 %v1716, %v1717
        %v1719 = vrot.slane %v1718, 1
        %v1720 = vmax.f32 %v1718, %v1719
        %v1721 = vsel %vm1531, %v1509, -inf
        %v1722 = vsel %vm1531, %v1510, -inf
        %v1723 = vmax.f32 %v1721, %v1722
        %v1724 = vrot.slane %v1723, 4
        %v1725 = vmax.f32 %v1723, %v1724
        %v1726 = vrot.slane %v1725, 2
        %v1727 = vmax.f32 %v1725, %v1726
        %v1728 = vrot.slane %v1727, 1
        %v1729 = vmax.f32 %v1727, %v1728
        %v1730 = vsel %vm1531, %v1511, -inf
        %v1731 = vsel %vm1531, %v1512, -inf
        %v1732 = vmax.f32 %v1730, %v1731
        %v1733 = vrot.slane %v1732, 4
        %v1734 = vmax.f32 %v1732, %v1733
        %v1735 = vrot.slane %v1734, 2
        %v1736 = vmax.f32 %v1734, %v1735
        %v1737 = vrot.slane %v1736, 1
        %v1738 = vmax.f32 %v1736, %v1737
        %v1739 = vsel %vm1531, %v1513, -inf
        %v1740 = vsel %vm1531, %v1514, -inf
        %v1741 = vmax.f32 %v1739, %v1740
        %v1742 = vrot.slane %v1741, 4
        %v1743 = vmax.f32 %v1741, %v1742
        %v1744 = vrot.slane %v1743, 2
        %v1745 = vmax.f32 %v1743, %v1744
        %v1746 = vrot.slane %v1745, 1
        %v1747 = vmax.f32 %v1745, %v1746
        %v1748 = vsel %vm1531, %v1515, -inf
        %v1749 = vsel %vm1531, %v1516, -inf
        %v1750 = vmax.f32 %v1748, %v1749
        %v1751 = vrot.slane %v1750, 4
        %v1752 = vmax.f32 %v1750, %v1751
        %v1753 = vrot.slane %v1752, 2
        %v1754 = vmax.f32 %v1752, %v1753
        %v1755 = vrot.slane %v1754, 1
        %v1756 = vmax.f32 %v1754, %v1755
        %v1757 = vsel %vm1531, %v1517, -inf
        %v1758 = vsel %vm1531, %v1518, -inf
        %v1759 = vmax.f32 %v1757, %v1758
        %v1760 = vrot.slane %v1759, 4
        %v1761 = vmax.f32 %v1759, %v1760
        %v1762 = vrot.slane %v1761, 2
        %v1763 = vmax.f32 %v1761, %v1762
        %v1764 = vrot.slane %v1763, 1
        %v1765 = vmax.f32 %v1763, %v1764
        %v1766 = vsel %vm1531, %v1519, -inf
        %v1767 = vsel %vm1531, %v1520, -inf
        %v1768 = vmax.f32 %v1766, %v1767
        %v1769 = vrot.slane %v1768, 4
        %v1770 = vmax.f32 %v1768, %v1769
        %v1771 = vrot.slane %v1770, 2
        %v1772 = vmax.f32 %v1770, %v1771
        %v1773 = vrot.slane %v1772, 1
        %v1774 = vmax.f32 %v1772, %v1773
        %v1775 = vsel %vm1531, %v1521, -inf
        %v1776 = vsel %vm1531, %v1522, -inf
        %v1777 = vmax.f32 %v1775, %v1776
        %v1778 = vrot.slane %v1777, 4
        %v1779 = vmax.f32 %v1777, %v1778
        %v1780 = vrot.slane %v1779, 2
        %v1781 = vmax.f32 %v1779, %v1780
        %v1782 = vrot.slane %v1781, 1
        %v1783 = vmax.f32 %v1781, %v1782
        %v1784 = vsel %vm1531, %v1523, -inf
        %v1785 = vsel %vm1531, %v1524, -inf
        %v1786 = vmax.f32 %v1784, %v1785
        %v1787 = vrot.slane %v1786, 4
        %v1788 = vmax.f32 %v1786, %v1787
        %v1789 = vrot.slane %v1788, 2
        %v1790 = vmax.f32 %v1788, %v1789
        %v1791 = vrot.slane %v1790, 1
        %v1792 = vmax.f32 %v1790, %v1791
        %v1793 = vsel %vm1531, %v1525, -inf
        %v1794 = vsel %vm1531, %v1526, -inf
        %v1795 = vmax.f32 %v1793, %v1794
        %v1796 = vrot.slane %v1795, 4
        %v1797 = vmax.f32 %v1795, %v1796
        %v1798 = vrot.slane %v1797, 2
        %v1799 = vmax.f32 %v1797, %v1798
        %v1800 = vrot.slane %v1799, 1
        %v1801 = vmax.f32 %v1799, %v1800
        %v1802 = vsel %vm1531, %v1527, -inf
        %v1803 = vsel %vm1531, %v1528, -inf
        %v1804 = vmax.f32 %v1802, %v1803
        %v1805 = vrot.slane %v1804, 4
        %v1806 = vmax.f32 %v1804, %v1805
        %v1807 = vrot.slane %v1806, 2
        %v1808 = vmax.f32 %v1806, %v1807
        %v1809 = vrot.slane %v1808, 1
        %v1810 = vmax.f32 %v1808, %v1809
        %v1811 = vsel %vm1531, %v1529, -inf
        %v1812 = vsel %vm1531, %v1530, -inf
        %v1813 = vmax.f32 %v1811, %v1812
        %v1814 = vrot.slane %v1813, 4
        %v1815 = vmax.f32 %v1813, %v1814
        %v1816 = vrot.slane %v1815, 2
        %v1817 = vmax.f32 %v1815, %v1816
        %v1818 = vrot.slane %v1817, 1
        %v1819 = vmax.f32 %v1817, %v1818
        %v1820 = vsub.f32 %v1467, %v1540
        %v1821 = vsub.f32 %v1468, %v1540
        %v1822 = vsub.f32 %v1469, %v1549
        %v1823 = vsub.f32 %v1470, %v1549
        %v1824 = vsub.f32 %v1471, %v1558
        %v1825 = vsub.f32 %v1472, %v1558
        %v1826 = vsub.f32 %v1473, %v1567
        %v1827 = vsub.f32 %v1474, %v1567
        %v1828 = vsub.f32 %v1475, %v1576
        %v1829 = vsub.f32 %v1476, %v1576
        %v1830 = vsub.f32 %v1477, %v1585
        %v1831 = vsub.f32 %v1478, %v1585
        %v1832 = vsub.f32 %v1479, %v1594
        %v1833 = vsub.f32 %v1480, %v1594
        %v1834 = vsub.f32 %v1481, %v1603
        %v1835 = vsub.f32 %v1482, %v1603
        %v1836 = vsub.f32 %v1483, %v1612
        %v1837 = vsub.f32 %v1484, %v1612
        %v1838 = vsub.f32 %v1485, %v1621
        %v1839 = vsub.f32 %v1486, %v1621
        %v1840 = vsub.f32 %v1487, %v1630
        %v1841 = vsub.f32 %v1488, %v1630
        %v1842 = vsub.f32 %v1489, %v1639
        %v1843 = vsub.f32 %v1490, %v1639
        %v1844 = vsub.f32 %v1491, %v1648
        %v1845 = vsub.f32 %v1492, %v1648
        %v1846 = vsub.f32 %v1493, %v1657
        %v1847 = vsub.f32 %v1494, %v1657
        %v1848 = vsub.f32 %v1495, %v1666
        %v1849 = vsub.f32 %v1496, %v1666
        %v1850 = vsub.f32 %v1497, %v1675
        %v1851 = vsub.f32 %v1498, %v1675
        %v1852 = vsub.f32 %v1499, %v1684
        %v1853 = vsub.f32 %v1500, %v1684
        %v1854 = vsub.f32 %v1501, %v1693
        %v1855 = vsub.f32 %v1502, %v1693
        %v1856 = vsub.f32 %v1503, %v1702
        %v1857 = vsub.f32 %v1504, %v1702
        %v1858 = vsub.f32 %v1505, %v1711
        %v1859 = vsub.f32 %v1506, %v1711
        %v1860 = vsub.f32 %v1507, %v1720
        %v1861 = vsub.f32 %v1508, %v1720
        %v1862 = vsub.f32 %v1509, %v1729
        %v1863 = vsub.f32 %v1510, %v1729
        %v1864 = vsub.f32 %v1511, %v1738
        %v1865 = vsub.f32 %v1512, %v1738
        %v1866 = vsub.f32 %v1513, %v1747
        %v1867 = vsub.f32 %v1514, %v1747
        %v1868 = vsub.f32 %v1515, %v1756
        %v1869 = vsub.f32 %v1516, %v1756
        %v1870 = vsub.f32 %v1517, %v1765
        %v1871 = vsub.f32 %v1518, %v1765
        %v1872 = vsub.f32 %v1519, %v1774
        %v1873 = vsub.f32 %v1520, %v1774
        %v1874 = vsub.f32 %v1521, %v1783
        %v1875 = vsub.f32 %v1522, %v1783
        %v1876 = vsub.f32 %v1523, %v1792
        %v1877 = vsub.f32 %v1524, %v1792
        %v1878 = vsub.f32 %v1525, %v1801
        %v1879 = vsub.f32 %v1526, %v1801
        %v1880 = vsub.f32 %v1527, %v1810
        %v1881 = vsub.f32 %v1528, %v1810
        %v1882 = vsub.f32 %v1529, %v1819
        %v1883 = vsub.f32 %v1530, %v1819
        %v1884 = vmul.f32 %v1820, 1.442695
        %v1885 = vpow.pop %v1884
        %v1886 = vmul.f32 %v1821, 1.442695
        %v1887 = vpow.pop %v1886
        %v1888 = vmul.f32 %v1822, 1.442695
        %v1889 = vpow.pop %v1888
        %v1890 = vmul.f32 %v1823, 1.442695
        %v1891 = vpow.pop %v1890
        %v1892 = vmul.f32 %v1824, 1.442695
        %v1893 = vpow.pop %v1892
        %v1894 = vmul.f32 %v1825, 1.442695
        %v1895 = vpow.pop %v1894
        %v1896 = vmul.f32 %v1826, 1.442695
        %v1897 = vpow.pop %v1896
        %v1898 = vmul.f32 %v1827, 1.442695
        %v1899 = vpow.pop %v1898
        %v1900 = vmul.f32 %v1828, 1.442695
        %v1901 = vpow.pop %v1900
        %v1902 = vmul.f32 %v1829, 1.442695
        %v1903 = vpow.pop %v1902
        %v1904 = vmul.f32 %v1830, 1.442695
        %v1905 = vpow.pop %v1904
        %v1906 = vmul.f32 %v1831, 1.442695
        %v1907 = vpow.pop %v1906
        %v1908 = vmul.f32 %v1832, 1.442695
        %v1909 = vpow.pop %v1908
        %v1910 = vmul.f32 %v1833, 1.442695
        %v1911 = vpow.pop %v1910
        %v1912 = vmul.f32 %v1834, 1.442695
        %v1913 = vpow.pop %v1912
        %v1914 = vmul.f32 %v1835, 1.442695
        %v1915 = vpow.pop %v1914
        %v1916 = vmul.f32 %v1836, 1.442695
        %v1917 = vpow.pop %v1916
        %v1918 = vmul.f32 %v1837, 1.442695
        %v1919 = vpow.pop %v1918
        %v1920 = vmul.f32 %v1838, 1.442695
        %v1921 = vpow.pop %v1920
        %v1922 = vmul.f32 %v1839, 1.442695
        %v1923 = vpow.pop %v1922
        %v1924 = vmul.f32 %v1840, 1.442695
        %v1925 = vpow.pop %v1924
        %v1926 = vmul.f32 %v1841, 1.442695
        %v1927 = vpow.pop %v1926
        %v1928 = vmul.f32 %v1842, 1.442695
        %v1929 = vpow.pop %v1928
        %v1930 = vmul.f32 %v1843, 1.442695
        %v1931 = vpow.pop %v1930
        %v1932 = vmul.f32 %v1844, 1.442695
        %v1933 = vpow.pop %v1932
        %v1934 = vmul.f32 %v1845, 1.442695
        %v1935 = vpow.pop %v1934
        %v1936 = vmul.f32 %v1846, 1.442695
        %v1937 = vpow.pop %v1936
        %v1938 = vmul.f32 %v1847, 1.442695
        %v1939 = vpow.pop %v1938
        %v1940 = vmul.f32 %v1848, 1.442695
        %v1941 = vpow.pop %v1940
        %v1942 = vmul.f32 %v1849, 1.442695
        %v1943 = vpow.pop %v1942
        %v1944 = vmul.f32 %v1850, 1.442695
        %v1945 = vpow.pop %v1944
        %v1946 = vmul.f32 %v1851, 1.442695
        %v1947 = vpow.pop %v1946
        %v1948 = vmul.f32 %v1852, 1.442695
        %v1949 = vpow.pop %v1948
        %v1950 = vmul.f32 %v1853, 1.442695
        %v1951 = vpow.pop %v1950
        %v1952 = vmul.f32 %v1854, 1.442695
        %v1953 = vpow.pop %v1952
        %v1954 = vmul.f32 %v1855, 1.442695
        %v1955 = vpow.pop %v1954
        %v1956 = vmul.f32 %v1856, 1.442695
        %v1957 = vpow.pop %v1956
        %v1958 = vmul.f32 %v1857, 1.442695
        %v1959 = vpow.pop %v1958
        %v1960 = vmul.f32 %v1858, 1.442695
        %v1961 = vpow.pop %v1960
        %v1962 = vmul.f32 %v1859, 1.442695
        %v1963 = vpow.pop %v1962
        %v1964 = vmul.f32 %v1860, 1.442695
        %v1965 = vpow.pop %v1964
        %v1966 = vmul.f32 %v1861, 1.442695
        %v1967 = vpow.pop %v1966
        %v1968 = vmul.f32 %v1862, 1.442695
        %v1969 = vpow.pop %v1968
        %v1970 = vmul.f32 %v1863, 1.442695
        %v1971 = vpow.pop %v1970
        %v1972 = vmul.f32 %v1864, 1.442695
        %v1973 = vpow.pop %v1972
        %v1974 = vmul.f32 %v1865, 1.442695
        %v1975 = vpow.pop %v1974
        %v1976 = vmul.f32 %v1866, 1.442695
        %v1977 = vpow.pop %v1976
        %v1978 = vmul.f32 %v1867, 1.442695
        %v1979 = vpow.pop %v1978
        %v1980 = vmul.f32 %v1868, 1.442695
        %v1981 = vpow.pop %v1980
        %v1982 = vmul.f32 %v1869, 1.442695
        %v1983 = vpow.pop %v1982
        %v1984 = vmul.f32 %v1870, 1.442695
        %v1985 = vpow.pop %v1984
        %v1986 = vmul.f32 %v1871, 1.442695
        %v1987 = vpow.pop %v1986
        %v1988 = vmul.f32 %v1872, 1.442695
        %v1989 = vpow.pop %v1988
        %v1990 = vmul.f32 %v1873, 1.442695
        %v1991 = vpow.pop %v1990
        %v1992 = vmul.f32 %v1874, 1.442695
        %v1993 = vpow.pop %v1992
        %v1994 = vmul.f32 %v1875, 1.442695
        %v1995 = vpow.pop %v1994
        %v1996 = vmul.f32 %v1876, 1.442695
        %v1997 = vpow.pop %v1996
        %v1998 = vmul.f32 %v1877, 1.442695
        %v1999 = vpow.pop %v1998
        %v2000 = vmul.f32 %v1878, 1.442695
        %v2001 = vpow.pop %v2000
        %v2002 = vmul.f32 %v1879, 1.442695
        %v2003 = vpow.pop %v2002
        %v2004 = vmul.f32 %v1880, 1.442695
        %v2005 = vpow.pop %v2004
        %v2006 = vmul.f32 %v1881, 1.442695
        %v2007 = vpow.pop %v2006
        %v2008 = vmul.f32 %v1882, 1.442695
        %v2009 = vpow.pop %v2008
        %v2010 = vmul.f32 %v1883, 1.442695
        %v2011 = vpow.pop %v2010
        %v2012 = vsel %vm1531, %v1885, 0.0
        %v2013 = vsel %vm1531, %v1887, 0.0
        %v2014 = vadd.f32 %v2012, %v2013
        %v2015 = vrot.slane %v2014, 4
        %v2016 = vadd.f32 %v2014, %v2015
        %v2017 = vrot.slane %v2016, 2
        %v2018 = vadd.f32 %v2016, %v2017
        %v2019 = vrot.slane %v2018, 1
        %v2020 = vadd.f32 %v2018, %v2019
        %v2021 = vsel %vm1531, %v1889, 0.0
        %v2022 = vsel %vm1531, %v1891, 0.0
        %v2023 = vadd.f32 %v2021, %v2022
        %v2024 = vrot.slane %v2023, 4
        %v2025 = vadd.f32 %v2023, %v2024
        %v2026 = vrot.slane %v2025, 2
        %v2027 = vadd.f32 %v2025, %v2026
        %v2028 = vrot.slane %v2027, 1
        %v2029 = vadd.f32 %v2027, %v2028
        %v2030 = vsel %vm1531, %v1893, 0.0
        %v2031 = vsel %vm1531, %v1895, 0.0
        %v2032 = vadd.f32 %v2030, %v2031
        %v2033 = vrot.slane %v2032, 4
        %v2034 = vadd.f32 %v2032, %v2033
        %v2035 = vrot.slane %v2034, 2
        %v2036 = vadd.f32 %v2034, %v2035
        %v2037 = vrot.slane %v2036, 1
        %v2038 = vadd.f32 %v2036, %v2037
        %v2039 = vsel %vm1531, %v1897, 0.0
        %v2040 = vsel %vm1531, %v1899, 0.0
        %v2041 = vadd.f32 %v2039, %v2040
        %v2042 = vrot.slane %v2041, 4
        %v2043 = vadd.f32 %v2041, %v2042
        %v2044 = vrot.slane %v2043, 2
        %v2045 = vadd.f32 %v2043, %v2044
        %v2046 = vrot.slane %v2045, 1
        %v2047 = vadd.f32 %v2045, %v2046
        %v2048 = vsel %vm1531, %v1901, 0.0
        %v2049 = vsel %vm1531, %v1903, 0.0
        %v2050 = vadd.f32 %v2048, %v2049
        %v2051 = vrot.slane %v2050, 4
        %v2052 = vadd.f32 %v2050, %v2051
        %v2053 = vrot.slane %v2052, 2
        %v2054 = vadd.f32 %v2052, %v2053
        %v2055 = vrot.slane %v2054, 1
        %v2056 = vadd.f32 %v2054, %v2055
        %v2057 = vsel %vm1531, %v1905, 0.0
        %v2058 = vsel %vm1531, %v1907, 0.0
        %v2059 = vadd.f32 %v2057, %v2058
        %v2060 = vrot.slane %v2059, 4
        %v2061 = vadd.f32 %v2059, %v2060
        %v2062 = vrot.slane %v2061, 2
        %v2063 = vadd.f32 %v2061, %v2062
        %v2064 = vrot.slane %v2063, 1
        %v2065 = vadd.f32 %v2063, %v2064
        %v2066 = vsel %vm1531, %v1909, 0.0
        %v2067 = vsel %vm1531, %v1911, 0.0
        %v2068 = vadd.f32 %v2066, %v2067
        %v2069 = vrot.slane %v2068, 4
        %v2070 = vadd.f32 %v2068, %v2069
        %v2071 = vrot.slane %v2070, 2
        %v2072 = vadd.f32 %v2070, %v2071
        %v2073 = vrot.slane %v2072, 1
        %v2074 = vadd.f32 %v2072, %v2073
        %v2075 = vsel %vm1531, %v1913, 0.0
        %v2076 = vsel %vm1531, %v1915, 0.0
        %v2077 = vadd.f32 %v2075, %v2076
        %v2078 = vrot.slane %v2077, 4
        %v2079 = vadd.f32 %v2077, %v2078
        %v2080 = vrot.slane %v2079, 2
        %v2081 = vadd.f32 %v2079, %v2080
        %v2082 = vrot.slane %v2081, 1
        %v2083 = vadd.f32 %v2081, %v2082
        %v2084 = vsel %vm1531, %v1917, 0.0
        %v2085 = vsel %vm1531, %v1919, 0.0
        %v2086 = vadd.f32 %v2084, %v2085
        %v2087 = vrot.slane %v2086, 4
        %v2088 = vadd.f32 %v2086, %v2087
        %v2089 = vrot.slane %v2088, 2
        %v2090 = vadd.f32 %v2088, %v2089
        %v2091 = vrot.slane %v2090, 1
        %v2092 = vadd.f32 %v2090, %v2091
        %v2093 = vsel %vm1531, %v1921, 0.0
        %v2094 = vsel %vm1531, %v1923, 0.0
        %v2095 = vadd.f32 %v2093, %v2094
        %v2096 = vrot.slane %v2095, 4
        %v2097 = vadd.f32 %v2095, %v2096
        %v2098 = vrot.slane %v2097, 2
        %v2099 = vadd.f32 %v2097, %v2098
        %v2100 = vrot.slane %v2099, 1
        %v2101 = vadd.f32 %v2099, %v2100
        %v2102 = vsel %vm1531, %v1925, 0.0
        %v2103 = vsel %vm1531, %v1927, 0.0
        %v2104 = vadd.f32 %v2102, %v2103
        %v2105 = vrot.slane %v2104, 4
        %v2106 = vadd.f32 %v2104, %v2105
        %v2107 = vrot.slane %v2106, 2
        %v2108 = vadd.f32 %v2106, %v2107
        %v2109 = vrot.slane %v2108, 1
        %v2110 = vadd.f32 %v2108, %v2109
        %v2111 = vsel %vm1531, %v1929, 0.0
        %v2112 = vsel %vm1531, %v1931, 0.0
        %v2113 = vadd.f32 %v2111, %v2112
        %v2114 = vrot.slane %v2113, 4
        %v2115 = vadd.f32 %v2113, %v2114
        %v2116 = vrot.slane %v2115, 2
        %v2117 = vadd.f32 %v2115, %v2116
        %v2118 = vrot.slane %v2117, 1
        %v2119 = vadd.f32 %v2117, %v2118
        %v2120 = vsel %vm1531, %v1933, 0.0
        %v2121 = vsel %vm1531, %v1935, 0.0
        %v2122 = vadd.f32 %v2120, %v2121
        %v2123 = vrot.slane %v2122, 4
        %v2124 = vadd.f32 %v2122, %v2123
        %v2125 = vrot.slane %v2124, 2
        %v2126 = vadd.f32 %v2124, %v2125
        %v2127 = vrot.slane %v2126, 1
        %v2128 = vadd.f32 %v2126, %v2127
        %v2129 = vsel %vm1531, %v1937, 0.0
        %v2130 = vsel %vm1531, %v1939, 0.0
        %v2131 = vadd.f32 %v2129, %v2130
        %v2132 = vrot.slane %v2131, 4
        %v2133 = vadd.f32 %v2131, %v2132
        %v2134 = vrot.slane %v2133, 2
        %v2135 = vadd.f32 %v2133, %v2134
        %v2136 = vrot.slane %v2135, 1
        %v2137 = vadd.f32 %v2135, %v2136
        %v2138 = vsel %vm1531, %v1941, 0.0
        %v2139 = vsel %vm1531, %v1943, 0.0
        %v2140 = vadd.f32 %v2138, %v2139
        %v2141 = vrot.slane %v2140, 4
        %v2142 = vadd.f32 %v2140, %v2141
        %v2143 = vrot.slane %v2142, 2
        %v2144 = vadd.f32 %v2142, %v2143
        %v2145 = vrot.slane %v2144, 1
        %v2146 = vadd.f32 %v2144, %v2145
        %v2147 = vsel %vm1531, %v1945, 0.0
        %v2148 = vsel %vm1531, %v1947, 0.0
        %v2149 = vadd.f32 %v2147, %v2148
        %v2150 = vrot.slane %v2149, 4
        %v2151 = vadd.f32 %v2149, %v2150
        %v2152 = vrot.slane %v2151, 2
        %v2153 = vadd.f32 %v2151, %v2152
        %v2154 = vrot.slane %v2153, 1
        %v2155 = vadd.f32 %v2153, %v2154
        %v2156 = vsel %vm1531, %v1949, 0.0
        %v2157 = vsel %vm1531, %v1951, 0.0
        %v2158 = vadd.f32 %v2156, %v2157
        %v2159 = vrot.slane %v2158, 4
        %v2160 = vadd.f32 %v2158, %v2159
        %v2161 = vrot.slane %v2160, 2
        %v2162 = vadd.f32 %v2160, %v2161
        %v2163 = vrot.slane %v2162, 1
        %v2164 = vadd.f32 %v2162, %v2163
        %v2165 = vsel %vm1531, %v1953, 0.0
        %v2166 = vsel %vm1531, %v1955, 0.0
        %v2167 = vadd.f32 %v2165, %v2166
        %v2168 = vrot.slane %v2167, 4
        %v2169 = vadd.f32 %v2167, %v2168
        %v2170 = vrot.slane %v2169, 2
        %v2171 = vadd.f32 %v2169, %v2170
        %v2172 = vrot.slane %v2171, 1
        %v2173 = vadd.f32 %v2171, %v2172
        %v2174 = vsel %vm1531, %v1957, 0.0
        %v2175 = vsel %vm1531, %v1959, 0.0
        %v2176 = vadd.f32 %v2174, %v2175
        %v2177 = vrot.slane %v2176, 4
        %v2178 = vadd.f32 %v2176, %v2177
        %v2179 = vrot.slane %v2178, 2
        %v2180 = vadd.f32 %v2178, %v2179
        %v2181 = vrot.slane %v2180, 1
        %v2182 = vadd.f32 %v2180, %v2181
        %v2183 = vsel %vm1531, %v1961, 0.0
        %v2184 = vsel %vm1531, %v1963, 0.0
        %v2185 = vadd.f32 %v2183, %v2184
        %v2186 = vrot.slane %v2185, 4
        %v2187 = vadd.f32 %v2185, %v2186
        %v2188 = vrot.slane %v2187, 2
        %v2189 = vadd.f32 %v2187, %v2188
        %v2190 = vrot.slane %v2189, 1
        %v2191 = vadd.f32 %v2189, %v2190
        %v2192 = vsel %vm1531, %v1965, 0.0
        %v2193 = vsel %vm1531, %v1967, 0.0
        %v2194 = vadd.f32 %v2192, %v2193
        %v2195 = vrot.slane %v2194, 4
        %v2196 = vadd.f32 %v2194, %v2195
        %v2197 = vrot.slane %v2196, 2
        %v2198 = vadd.f32 %v2196, %v2197
        %v2199 = vrot.slane %v2198, 1
        %v2200 = vadd.f32 %v2198, %v2199
        %v2201 = vsel %vm1531, %v1969, 0.0
        %v2202 = vsel %vm1531, %v1971, 0.0
        %v2203 = vadd.f32 %v2201, %v2202
        %v2204 = vrot.slane %v2203, 4
        %v2205 = vadd.f32 %v2203, %v2204
        %v2206 = vrot.slane %v2205, 2
        %v2207 = vadd.f32 %v2205, %v2206
        %v2208 = vrot.slane %v2207, 1
        %v2209 = vadd.f32 %v2207, %v2208
        %v2210 = vsel %vm1531, %v1973, 0.0
        %v2211 = vsel %vm1531, %v1975, 0.0
        %v2212 = vadd.f32 %v2210, %v2211
        %v2213 = vrot.slane %v2212, 4
        %v2214 = vadd.f32 %v2212, %v2213
        %v2215 = vrot.slane %v2214, 2
        %v2216 = vadd.f32 %v2214, %v2215
        %v2217 = vrot.slane %v2216, 1
        %v2218 = vadd.f32 %v2216, %v2217
        %v2219 = vsel %vm1531, %v1977, 0.0
        %v2220 = vsel %vm1531, %v1979, 0.0
        %v2221 = vadd.f32 %v2219, %v2220
        %v2222 = vrot.slane %v2221, 4
        %v2223 = vadd.f32 %v2221, %v2222
        %v2224 = vrot.slane %v2223, 2
        %v2225 = vadd.f32 %v2223, %v2224
        %v2226 = vrot.slane %v2225, 1
        %v2227 = vadd.f32 %v2225, %v2226
        %v2228 = vsel %vm1531, %v1981, 0.0
        %v2229 = vsel %vm1531, %v1983, 0.0
        %v2230 = vadd.f32 %v2228, %v2229
        %v2231 = vrot.slane %v2230, 4
        %v2232 = vadd.f32 %v2230, %v2231
        %v2233 = vrot.slane %v2232, 2
        %v2234 = vadd.f32 %v2232, %v2233
        %v2235 = vrot.slane %v2234, 1
        %v2236 = vadd.f32 %v2234, %v2235
        %v2237 = vsel %vm1531, %v1985, 0.0
        %v2238 = vsel %vm1531, %v1987, 0.0
        %v2239 = vadd.f32 %v2237, %v2238
        %v2240 = vrot.slane %v2239, 4
        %v2241 = vadd.f32 %v2239, %v2240
        %v2242 = vrot.slane %v2241, 2
        %v2243 = vadd.f32 %v2241, %v2242
        %v2244 = vrot.slane %v2243, 1
        %v2245 = vadd.f32 %v2243, %v2244
        %v2246 = vsel %vm1531, %v1989, 0.0
        %v2247 = vsel %vm1531, %v1991, 0.0
        %v2248 = vadd.f32 %v2246, %v2247
        %v2249 = vrot.slane %v2248, 4
        %v2250 = vadd.f32 %v2248, %v2249
        %v2251 = vrot.slane %v2250, 2
        %v2252 = vadd.f32 %v2250, %v2251
        %v2253 = vrot.slane %v2252, 1
        %v2254 = vadd.f32 %v2252, %v2253
        %v2255 = vsel %vm1531, %v1993, 0.0
        %v2256 = vsel %vm1531, %v1995, 0.0
        %v2257 = vadd.f32 %v2255, %v2256
        %v2258 = vrot.slane %v2257, 4
        %v2259 = vadd.f32 %v2257, %v2258
        %v2260 = vrot.slane %v2259, 2
        %v2261 = vadd.f32 %v2259, %v2260
        %v2262 = vrot.slane %v2261, 1
        %v2263 = vadd.f32 %v2261, %v2262
        %v2264 = vsel %vm1531, %v1997, 0.0
        %v2265 = vsel %vm1531, %v1999, 0.0
        %v2266 = vadd.f32 %v2264, %v2265
        %v2267 = vrot.slane %v2266, 4
        %v2268 = vadd.f32 %v2266, %v2267
        %v2269 = vrot.slane %v2268, 2
        %v2270 = vadd.f32 %v2268, %v2269
        %v2271 = vrot.slane %v2270, 1
        %v2272 = vadd.f32 %v2270, %v2271
        %v2273 = vsel %vm1531, %v2001, 0.0
        %v2274 = vsel %vm1531, %v2003, 0.0
        %v2275 = vadd.f32 %v2273, %v2274
        %v2276 = vrot.slane %v2275, 4
        %v2277 = vadd.f32 %v2275, %v2276
        %v2278 = vrot.slane %v2277, 2
        %v2279 = vadd.f32 %v2277, %v2278
        %v2280 = vrot.slane %v2279, 1
        %v2281 = vadd.f32 %v2279, %v2280
        %v2282 = vsel %vm1531, %v2005, 0.0
        %v2283 = vsel %vm1531, %v2007, 0.0
        %v2284 = vadd.f32 %v2282, %v2283
        %v2285 = vrot.slane %v2284, 4
        %v2286 = vadd.f32 %v2284, %v2285
        %v2287 = vrot.slane %v2286, 2
        %v2288 = vadd.f32 %v2286, %v2287
        %v2289 = vrot.slane %v2288, 1
        %v2290 = vadd.f32 %v2288, %v2289
        %v2291 = vsel %vm1531, %v2009, 0.0
        %v2292 = vsel %vm1531, %v2011, 0.0
        %v2293 = vadd.f32 %v2291, %v2292
        %v2294 = vrot.slane %v2293, 4
        %v2295 = vadd.f32 %v2293, %v2294
        %v2296 = vrot.slane %v2295, 2
        %v2297 = vadd.f32 %v2295, %v2296
        %v2298 = vrot.slane %v2297, 1
        %v2299 = vadd.f32 %v2297, %v2298
        %v2300 = vrcp.pop %v2020
        %v2301 = vmul.f32 %v1885, %v2300
        %v2302 = vmul.f32 %v1887, %v2300
        %v2303 = vrcp.pop %v2029
        %v2304 = vmul.f32 %v1889, %v2303
        %v2305 = vmul.f32 %v1891, %v2303
        %v2306 = vrcp.pop %v2038
        %v2307 = vmul.f32 %v1893, %v2306
        %v2308 = vmul.f32 %v1895, %v2306
        %v2309 = vrcp.pop %v2047
        %v2310 = vmul.f32 %v1897, %v2309
        %v2311 = vmul.f32 %v1899, %v2309
        %v2312 = vrcp.pop %v2056
        %v2313 = vmul.f32 %v1901, %v2312
        %v2314 = vmul.f32 %v1903, %v2312
        %v2315 = vrcp.pop %v2065
        %v2316 = vmul.f32 %v1905, %v2315
        %v2317 = vmul.f32 %v1907, %v2315
        %v2318 = vrcp.pop %v2074
        %v2319 = vmul.f32 %v1909, %v2318
        %v2320 = vmul.f32 %v1911, %v2318
        %v2321 = vrcp.pop %v2083
        %v2322 = vmul.f32 %v1913, %v2321
        %v2323 = vmul.f32 %v1915, %v2321
        %v2324 = vrcp.pop %v2092
        %v2325 = vmul.f32 %v1917, %v2324
        %v2326 = vmul.f32 %v1919, %v2324
        %v2327 = vrcp.pop %v2101
        %v2328 = vmul.f32 %v1921, %v2327
        %v2329 = vmul.f32 %v1923, %v2327
        %v2330 = vrcp.pop %v2110
        %v2331 = vmul.f32 %v1925, %v2330
        %v2332 = vmul.f32 %v1927, %v2330
        %v2333 = vrcp.pop %v2119
        %v2334 = vmul.f32 %v1929, %v2333
        %v2335 = vmul.f32 %v1931, %v2333
        %v2336 = vrcp.pop %v2128
        %v2337 = vmul.f32 %v1933, %v2336
        %v2338 = vmul.f32 %v1935, %v2336
        %v2339 = vrcp.pop %v2137
        %v2340 = vmul.f32 %v1937, %v2339
        %v2341 = vmul.f32 %v1939, %v2339
        %v2342 = vrcp.pop %v2146
        %v2343 = vmul.f32 %v1941, %v2342
        %v2344 = vmul.f32 %v1943, %v2342
        %v2345 = vrcp.pop %v2155
        %v2346 = vmul.f32 %v1945, %v2345
        %v2347 = vmul.f32 %v1947, %v2345
        %v2348 = vrcp.pop %v2164
        %v2349 = vmul.f32 %v1949, %v2348
        %v2350 = vmul.f32 %v1951, %v2348
        %v2351 = vrcp.pop %v2173
        %v2352 = vmul.f32 %v1953, %v2351
        %v2353 = vmul.f32 %v1955, %v2351
        %v2354 = vrcp.pop %v2182
        %v2355 = vmul.f32 %v1957, %v2354
        %v2356 = vmul.f32 %v1959, %v2354
        %v2357 = vrcp.pop %v2191
        %v2358 = vmul.f32 %v1961, %v2357
        %v2359 = vmul.f32 %v1963, %v2357
        %v2360 = vrcp.pop %v2200
        %v2361 = vmul.f32 %v1965, %v2360
        %v2362 = vmul.f32 %v1967, %v2360
        %v2363 = vrcp.pop %v2209
        %v2364 = vmul.f32 %v1969, %v2363
        %v2365 = vmul.f32 %v1971, %v2363
        %v2366 = vrcp.pop %v2218
        %v2367 = vmul.f32 %v1973, %v2366
        %v2368 = vmul.f32 %v1975, %v2366
        %v2369 = vrcp.pop %v2227
        %v2370 = vmul.f32 %v1977, %v2369
        %v2371 = vmul.f32 %v1979, %v2369
        %v2372 = vrcp.pop %v2236
        %v2373 = vmul.f32 %v1981, %v2372
        %v2374 = vmul.f32 %v1983, %v2372
        %v2375 = vrcp.pop %v2245
        %v2376 = vmul.f32 %v1985, %v2375
        %v2377 = vmul.f32 %v1987, %v2375
        %v2378 = vrcp.pop %v2254
        %v2379 = vmul.f32 %v1989, %v2378
        %v2380 = vmul.f32 %v1991, %v2378
        %v2381 = vrcp.pop %v2263
        %v2382 = vmul.f32 %v1993, %v2381
        %v2383 = vmul.f32 %v1995, %v2381
        %v2384 = vrcp.pop %v2272
        %v2385 = vmul.f32 %v1997, %v2384
        %v2386 = vmul.f32 %v1999, %v2384
        %v2387 = vrcp.pop %v2281
        %v2388 = vmul.f32 %v2001, %v2387
        %v2389 = vmul.f32 %v2003, %v2387
        %v2390 = vrcp.pop %v2290
        %v2391 = vmul.f32 %v2005, %v2390
        %v2392 = vmul.f32 %v2007, %v2390
        %v2393 = vrcp.pop %v2299
        %v2394 = vmul.f32 %v2009, %v2393
        %v2395 = vmul.f32 %v2011, %v2393
        %2397 = vset.pattern.permute.xlu0 0
        %2398 = vperm.xlu0 %2397, %v2301
        %v2399 = vpop.permute.xlu0 %2398
        %2402 = vset.pattern.permute.xlu0 0
        %2403 = vperm.xlu0 %2402, %v2302
        %v2404 = vpop.permute.xlu0 %2403
        %2407 = vset.pattern.permute.xlu0 0
        %2408 = vperm.xlu0 %2407, %v2304
        %v2409 = vpop.permute.xlu0 %2408
        %2412 = vset.pattern.permute.xlu0 0
        %2413 = vperm.xlu0 %2412, %v2305
        %v2414 = vpop.permute.xlu0 %2413
        %2417 = vset.pattern.permute.xlu0 0
        %2418 = vperm.xlu0 %2417, %v2307
        %v2419 = vpop.permute.xlu0 %2418
        %2422 = vset.pattern.permute.xlu0 0
        %2423 = vperm.xlu0 %2422, %v2308
        %v2424 = vpop.permute.xlu0 %2423
        %2427 = vset.pattern.permute.xlu0 0
        %2428 = vperm.xlu0 %2427, %v2310
        %v2429 = vpop.permute.xlu0 %2428
        %2432 = vset.pattern.permute.xlu0 0
        %2433 = vperm.xlu0 %2432, %v2311
        %v2434 = vpop.permute.xlu0 %2433
        %2437 = vset.pattern.permute.xlu0 0
        %2438 = vperm.xlu0 %2437, %v2313
        %v2439 = vpop.permute.xlu0 %2438
        %2442 = vset.pattern.permute.xlu0 0
        %2443 = vperm.xlu0 %2442, %v2314
        %v2444 = vpop.permute.xlu0 %2443
        %2447 = vset.pattern.permute.xlu0 0
        %2448 = vperm.xlu0 %2447, %v2316
        %v2449 = vpop.permute.xlu0 %2448
        %2452 = vset.pattern.permute.xlu0 0
        %2453 = vperm.xlu0 %2452, %v2317
        %v2454 = vpop.permute.xlu0 %2453
        %2457 = vset.pattern.permute.xlu0 0
        %2458 = vperm.xlu0 %2457, %v2319
        %v2459 = vpop.permute.xlu0 %2458
        %2462 = vset.pattern.permute.xlu0 0
        %2463 = vperm.xlu0 %2462, %v2320
        %v2464 = vpop.permute.xlu0 %2463
        %2467 = vset.pattern.permute.xlu0 0
        %2468 = vperm.xlu0 %2467, %v2322
        %v2469 = vpop.permute.xlu0 %2468
        %2472 = vset.pattern.permute.xlu0 0
        %2473 = vperm.xlu0 %2472, %v2323
        %v2474 = vpop.permute.xlu0 %2473
        %2477 = vset.pattern.permute.xlu0 0
        %2478 = vperm.xlu0 %2477, %v2325
        %v2479 = vpop.permute.xlu0 %2478
        %2482 = vset.pattern.permute.xlu0 0
        %2483 = vperm.xlu0 %2482, %v2326
        %v2484 = vpop.permute.xlu0 %2483
        %2487 = vset.pattern.permute.xlu0 0
        %2488 = vperm.xlu0 %2487, %v2328
        %v2489 = vpop.permute.xlu0 %2488
        %2492 = vset.pattern.permute.xlu0 0
        %2493 = vperm.xlu0 %2492, %v2329
        %v2494 = vpop.permute.xlu0 %2493
        %2497 = vset.pattern.permute.xlu0 0
        %2498 = vperm.xlu0 %2497, %v2331
        %v2499 = vpop.permute.xlu0 %2498
        %2502 = vset.pattern.permute.xlu0 0
        %2503 = vperm.xlu0 %2502, %v2332
        %v2504 = vpop.permute.xlu0 %2503
        %2507 = vset.pattern.permute.xlu0 0
        %2508 = vperm.xlu0 %2507, %v2334
        %v2509 = vpop.permute.xlu0 %2508
        %2512 = vset.pattern.permute.xlu0 0
        %2513 = vperm.xlu0 %2512, %v2335
        %v2514 = vpop.permute.xlu0 %2513
        %2517 = vset.pattern.permute.xlu0 0
        %2518 = vperm.xlu0 %2517, %v2337
        %v2519 = vpop.permute.xlu0 %2518
        %2522 = vset.pattern.permute.xlu0 0
        %2523 = vperm.xlu0 %2522, %v2338
        %v2524 = vpop.permute.xlu0 %2523
        %2527 = vset.pattern.permute.xlu0 0
        %2528 = vperm.xlu0 %2527, %v2340
        %v2529 = vpop.permute.xlu0 %2528
        %2532 = vset.pattern.permute.xlu0 0
        %2533 = vperm.xlu0 %2532, %v2341
        %v2534 = vpop.permute.xlu0 %2533
        %2537 = vset.pattern.permute.xlu0 0
        %2538 = vperm.xlu0 %2537, %v2343
        %v2539 = vpop.permute.xlu0 %2538
        %2542 = vset.pattern.permute.xlu0 0
        %2543 = vperm.xlu0 %2542, %v2344
        %v2544 = vpop.permute.xlu0 %2543
        %2547 = vset.pattern.permute.xlu0 0
        %2548 = vperm.xlu0 %2547, %v2346
        %v2549 = vpop.permute.xlu0 %2548
        %2552 = vset.pattern.permute.xlu0 0
        %2553 = vperm.xlu0 %2552, %v2347
        %v2554 = vpop.permute.xlu0 %2553
        %2557 = vset.pattern.permute.xlu0 0
        %2558 = vperm.xlu0 %2557, %v2349
        %v2559 = vpop.permute.xlu0 %2558
        %2562 = vset.pattern.permute.xlu0 0
        %2563 = vperm.xlu0 %2562, %v2350
        %v2564 = vpop.permute.xlu0 %2563
        %2567 = vset.pattern.permute.xlu0 0
        %2568 = vperm.xlu0 %2567, %v2352
        %v2569 = vpop.permute.xlu0 %2568
        %2572 = vset.pattern.permute.xlu0 0
        %2573 = vperm.xlu0 %2572, %v2353
        %v2574 = vpop.permute.xlu0 %2573
        %2577 = vset.pattern.permute.xlu0 0
        %2578 = vperm.xlu0 %2577, %v2355
        %v2579 = vpop.permute.xlu0 %2578
        %2582 = vset.pattern.permute.xlu0 0
        %2583 = vperm.xlu0 %2582, %v2356
        %v2584 = vpop.permute.xlu0 %2583
        %2587 = vset.pattern.permute.xlu0 0
        %2588 = vperm.xlu0 %2587, %v2358
        %v2589 = vpop.permute.xlu0 %2588
        %2592 = vset.pattern.permute.xlu0 0
        %2593 = vperm.xlu0 %2592, %v2359
        %v2594 = vpop.permute.xlu0 %2593
        %2597 = vset.pattern.permute.xlu0 0
        %2598 = vperm.xlu0 %2597, %v2361
        %v2599 = vpop.permute.xlu0 %2598
        %2602 = vset.pattern.permute.xlu0 0
        %2603 = vperm.xlu0 %2602, %v2362
        %v2604 = vpop.permute.xlu0 %2603
        %2607 = vset.pattern.permute.xlu0 0
        %2608 = vperm.xlu0 %2607, %v2364
        %v2609 = vpop.permute.xlu0 %2608
        %2612 = vset.pattern.permute.xlu0 0
        %2613 = vperm.xlu0 %2612, %v2365
        %v2614 = vpop.permute.xlu0 %2613
        %2617 = vset.pattern.permute.xlu0 0
        %2618 = vperm.xlu0 %2617, %v2367
        %v2619 = vpop.permute.xlu0 %2618
        %2622 = vset.pattern.permute.xlu0 0
        %2623 = vperm.xlu0 %2622, %v2368
        %v2624 = vpop.permute.xlu0 %2623
        %2627 = vset.pattern.permute.xlu0 0
        %2628 = vperm.xlu0 %2627, %v2370
        %v2629 = vpop.permute.xlu0 %2628
        %2632 = vset.pattern.permute.xlu0 0
        %2633 = vperm.xlu0 %2632, %v2371
        %v2634 = vpop.permute.xlu0 %2633
        %2637 = vset.pattern.permute.xlu0 0
        %2638 = vperm.xlu0 %2637, %v2373
        %v2639 = vpop.permute.xlu0 %2638
        %2642 = vset.pattern.permute.xlu0 0
        %2643 = vperm.xlu0 %2642, %v2374
        %v2644 = vpop.permute.xlu0 %2643
        %2647 = vset.pattern.permute.xlu0 0
        %2648 = vperm.xlu0 %2647, %v2376
        %v2649 = vpop.permute.xlu0 %2648
        %2652 = vset.pattern.permute.xlu0 0
        %2653 = vperm.xlu0 %2652, %v2377
        %v2654 = vpop.permute.xlu0 %2653
        %2657 = vset.pattern.permute.xlu0 0
        %2658 = vperm.xlu0 %2657, %v2379
        %v2659 = vpop.permute.xlu0 %2658
        %2662 = vset.pattern.permute.xlu0 0
        %2663 = vperm.xlu0 %2662, %v2380
        %v2664 = vpop.permute.xlu0 %2663
        %2667 = vset.pattern.permute.xlu0 0
        %2668 = vperm.xlu0 %2667, %v2382
        %v2669 = vpop.permute.xlu0 %2668
        %2672 = vset.pattern.permute.xlu0 0
        %2673 = vperm.xlu0 %2672, %v2383
        %v2674 = vpop.permute.xlu0 %2673
        %2677 = vset.pattern.permute.xlu0 0
        %2678 = vperm.xlu0 %2677, %v2385
        %v2679 = vpop.permute.xlu0 %2678
        %2682 = vset.pattern.permute.xlu0 0
        %2683 = vperm.xlu0 %2682, %v2386
        %v2684 = vpop.permute.xlu0 %2683
        %2687 = vset.pattern.permute.xlu0 0
        %2688 = vperm.xlu0 %2687, %v2388
        %v2689 = vpop.permute.xlu0 %2688
        %2692 = vset.pattern.permute.xlu0 0
        %2693 = vperm.xlu0 %2692, %v2389
        %v2694 = vpop.permute.xlu0 %2693
        %2697 = vset.pattern.permute.xlu0 0
        %2698 = vperm.xlu0 %2697, %v2391
        %v2699 = vpop.permute.xlu0 %2698
        %2702 = vset.pattern.permute.xlu0 0
        %2703 = vperm.xlu0 %2702, %v2392
        %v2704 = vpop.permute.xlu0 %2703
        %2707 = vset.pattern.permute.xlu0 0
        %2708 = vperm.xlu0 %2707, %v2394
        %v2709 = vpop.permute.xlu0 %2708
        %2712 = vset.pattern.permute.xlu0 0
        %2713 = vperm.xlu0 %2712, %v2395
        %v2714 = vpop.permute.xlu0 %2713
        %v2716 = vmul.f32 %v2399, %v758
        %v2717 = vmul.f32 %v2404, %v761
        %v2718 = vmul.f32 %v2409, %v766
        %v2719 = vmul.f32 %v2414, %v769
        %v2720 = vmul.f32 %v2419, %v774
        %v2721 = vmul.f32 %v2424, %v777
        %v2722 = vmul.f32 %v2429, %v782
        %v2723 = vmul.f32 %v2434, %v785
        %v2724 = vmul.f32 %v2439, %v790
        %v2725 = vmul.f32 %v2444, %v793
        %v2726 = vmul.f32 %v2449, %v798
        %v2727 = vmul.f32 %v2454, %v801
        %v2728 = vmul.f32 %v2459, %v806
        %v2729 = vmul.f32 %v2464, %v809
        %v2730 = vmul.f32 %v2469, %v814
        %v2731 = vmul.f32 %v2474, %v817
        %v2732 = vmul.f32 %v2479, %v822
        %v2733 = vmul.f32 %v2484, %v825
        %v2734 = vmul.f32 %v2489, %v830
        %v2735 = vmul.f32 %v2494, %v833
        %v2736 = vmul.f32 %v2499, %v838
        %v2737 = vmul.f32 %v2504, %v841
        %v2738 = vmul.f32 %v2509, %v846
        %v2739 = vmul.f32 %v2514, %v849
        %v2740 = vmul.f32 %v2519, %v854
        %v2741 = vmul.f32 %v2524, %v857
        %v2742 = vmul.f32 %v2529, %v862
        %v2743 = vmul.f32 %v2534, %v865
        %v2744 = vmul.f32 %v2539, %v870
        %v2745 = vmul.f32 %v2544, %v873
        %v2746 = vmul.f32 %v2549, %v878
        %v2747 = vmul.f32 %v2554, %v881
        %v2748 = vmul.f32 %v2559, %v886
        %v2749 = vmul.f32 %v2564, %v889
        %v2750 = vmul.f32 %v2569, %v894
        %v2751 = vmul.f32 %v2574, %v897
        %v2752 = vmul.f32 %v2579, %v902
        %v2753 = vmul.f32 %v2584, %v905
        %v2754 = vmul.f32 %v2589, %v910
        %v2755 = vmul.f32 %v2594, %v913
        %v2756 = vmul.f32 %v2599, %v918
        %v2757 = vmul.f32 %v2604, %v921
        %v2758 = vmul.f32 %v2609, %v926
        %v2759 = vmul.f32 %v2614, %v929
        %v2760 = vmul.f32 %v2619, %v934
        %v2761 = vmul.f32 %v2624, %v937
        %v2762 = vmul.f32 %v2629, %v942
        %v2763 = vmul.f32 %v2634, %v945
        %v2764 = vmul.f32 %v2639, %v950
        %v2765 = vmul.f32 %v2644, %v953
        %v2766 = vmul.f32 %v2649, %v958
        %v2767 = vmul.f32 %v2654, %v961
        %v2768 = vmul.f32 %v2659, %v966
        %v2769 = vmul.f32 %v2664, %v969
        %v2770 = vmul.f32 %v2669, %v974
        %v2771 = vmul.f32 %v2674, %v977
        %v2772 = vmul.f32 %v2679, %v982
        %v2773 = vmul.f32 %v2684, %v985
        %v2774 = vmul.f32 %v2689, %v990
        %v2775 = vmul.f32 %v2694, %v993
        %v2776 = vmul.f32 %v2699, %v998
        %v2777 = vmul.f32 %v2704, %v1001
        %v2778 = vmul.f32 %v2709, %v1006
        %v2779 = vmul.f32 %v2714, %v1009
        %v2780 = vsel %vm626, %v2716, 0.0
        %v2781 = vsel %vm626, %v2717, 0.0
        %v2782 = vadd.f32 %v2780, %v2781
        %v2783 = vrot.slane %v2782, 4
        %v2784 = vadd.f32 %v2782, %v2783
        %v2785 = vrot.slane %v2784, 2
        %v2786 = vadd.f32 %v2784, %v2785
        %v2787 = vrot.slane %v2786, 1
        %v2788 = vadd.f32 %v2786, %v2787
        %v2789 = vsel %vm626, %v2718, 0.0
        %v2790 = vsel %vm626, %v2719, 0.0
        %v2791 = vadd.f32 %v2789, %v2790
        %v2792 = vrot.slane %v2791, 4
        %v2793 = vadd.f32 %v2791, %v2792
        %v2794 = vrot.slane %v2793, 2
        %v2795 = vadd.f32 %v2793, %v2794
        %v2796 = vrot.slane %v2795, 1
        %v2797 = vadd.f32 %v2795, %v2796
        %v2798 = vsel %vm626, %v2720, 0.0
        %v2799 = vsel %vm626, %v2721, 0.0
        %v2800 = vadd.f32 %v2798, %v2799
        %v2801 = vrot.slane %v2800, 4
        %v2802 = vadd.f32 %v2800, %v2801
        %v2803 = vrot.slane %v2802, 2
        %v2804 = vadd.f32 %v2802, %v2803
        %v2805 = vrot.slane %v2804, 1
        %v2806 = vadd.f32 %v2804, %v2805
        %v2807 = vsel %vm626, %v2722, 0.0
        %v2808 = vsel %vm626, %v2723, 0.0
        %v2809 = vadd.f32 %v2807, %v2808
        %v2810 = vrot.slane %v2809, 4
        %v2811 = vadd.f32 %v2809, %v2810
        %v2812 = vrot.slane %v2811, 2
        %v2813 = vadd.f32 %v2811, %v2812
        %v2814 = vrot.slane %v2813, 1
        %v2815 = vadd.f32 %v2813, %v2814
        %v2816 = vsel %vm626, %v2724, 0.0
        %v2817 = vsel %vm626, %v2725, 0.0
        %v2818 = vadd.f32 %v2816, %v2817
        %v2819 = vrot.slane %v2818, 4
        %v2820 = vadd.f32 %v2818, %v2819
        %v2821 = vrot.slane %v2820, 2
        %v2822 = vadd.f32 %v2820, %v2821
        %v2823 = vrot.slane %v2822, 1
        %v2824 = vadd.f32 %v2822, %v2823
        %v2825 = vsel %vm626, %v2726, 0.0
        %v2826 = vsel %vm626, %v2727, 0.0
        %v2827 = vadd.f32 %v2825, %v2826
        %v2828 = vrot.slane %v2827, 4
        %v2829 = vadd.f32 %v2827, %v2828
        %v2830 = vrot.slane %v2829, 2
        %v2831 = vadd.f32 %v2829, %v2830
        %v2832 = vrot.slane %v2831, 1
        %v2833 = vadd.f32 %v2831, %v2832
        %v2834 = vsel %vm626, %v2728, 0.0
        %v2835 = vsel %vm626, %v2729, 0.0
        %v2836 = vadd.f32 %v2834, %v2835
        %v2837 = vrot.slane %v2836, 4
        %v2838 = vadd.f32 %v2836, %v2837
        %v2839 = vrot.slane %v2838, 2
        %v2840 = vadd.f32 %v2838, %v2839
        %v2841 = vrot.slane %v2840, 1
        %v2842 = vadd.f32 %v2840, %v2841
        %v2843 = vsel %vm626, %v2730, 0.0
        %v2844 = vsel %vm626, %v2731, 0.0
        %v2845 = vadd.f32 %v2843, %v2844
        %v2846 = vrot.slane %v2845, 4
        %v2847 = vadd.f32 %v2845, %v2846
        %v2848 = vrot.slane %v2847, 2
        %v2849 = vadd.f32 %v2847, %v2848
        %v2850 = vrot.slane %v2849, 1
        %v2851 = vadd.f32 %v2849, %v2850
        %v2852 = vsel %vm626, %v2732, 0.0
        %v2853 = vsel %vm626, %v2733, 0.0
        %v2854 = vadd.f32 %v2852, %v2853
        %v2855 = vrot.slane %v2854, 4
        %v2856 = vadd.f32 %v2854, %v2855
        %v2857 = vrot.slane %v2856, 2
        %v2858 = vadd.f32 %v2856, %v2857
        %v2859 = vrot.slane %v2858, 1
        %v2860 = vadd.f32 %v2858, %v2859
        %v2861 = vsel %vm626, %v2734, 0.0
        %v2862 = vsel %vm626, %v2735, 0.0
        %v2863 = vadd.f32 %v2861, %v2862
        %v2864 = vrot.slane %v2863, 4
        %v2865 = vadd.f32 %v2863, %v2864
        %v2866 = vrot.slane %v2865, 2
        %v2867 = vadd.f32 %v2865, %v2866
        %v2868 = vrot.slane %v2867, 1
        %v2869 = vadd.f32 %v2867, %v2868
        %v2870 = vsel %vm626, %v2736, 0.0
        %v2871 = vsel %vm626, %v2737, 0.0
        %v2872 = vadd.f32 %v2870, %v2871
        %v2873 = vrot.slane %v2872, 4
        %v2874 = vadd.f32 %v2872, %v2873
        %v2875 = vrot.slane %v2874, 2
        %v2876 = vadd.f32 %v2874, %v2875
        %v2877 = vrot.slane %v2876, 1
        %v2878 = vadd.f32 %v2876, %v2877
        %v2879 = vsel %vm626, %v2738, 0.0
        %v2880 = vsel %vm626, %v2739, 0.0
        %v2881 = vadd.f32 %v2879, %v2880
        %v2882 = vrot.slane %v2881, 4
        %v2883 = vadd.f32 %v2881, %v2882
        %v2884 = vrot.slane %v2883, 2
        %v2885 = vadd.f32 %v2883, %v2884
        %v2886 = vrot.slane %v2885, 1
        %v2887 = vadd.f32 %v2885, %v2886
        %v2888 = vsel %vm626, %v2740, 0.0
        %v2889 = vsel %vm626, %v2741, 0.0
        %v2890 = vadd.f32 %v2888, %v2889
        %v2891 = vrot.slane %v2890, 4
        %v2892 = vadd.f32 %v2890, %v2891
        %v2893 = vrot.slane %v2892, 2
        %v2894 = vadd.f32 %v2892, %v2893
        %v2895 = vrot.slane %v2894, 1
        %v2896 = vadd.f32 %v2894, %v2895
        %v2897 = vsel %vm626, %v2742, 0.0
        %v2898 = vsel %vm626, %v2743, 0.0
        %v2899 = vadd.f32 %v2897, %v2898
        %v2900 = vrot.slane %v2899, 4
        %v2901 = vadd.f32 %v2899, %v2900
        %v2902 = vrot.slane %v2901, 2
        %v2903 = vadd.f32 %v2901, %v2902
        %v2904 = vrot.slane %v2903, 1
        %v2905 = vadd.f32 %v2903, %v2904
        %v2906 = vsel %vm626, %v2744, 0.0
        %v2907 = vsel %vm626, %v2745, 0.0
        %v2908 = vadd.f32 %v2906, %v2907
        %v2909 = vrot.slane %v2908, 4
        %v2910 = vadd.f32 %v2908, %v2909
        %v2911 = vrot.slane %v2910, 2
        %v2912 = vadd.f32 %v2910, %v2911
        %v2913 = vrot.slane %v2912, 1
        %v2914 = vadd.f32 %v2912, %v2913
        %v2915 = vsel %vm626, %v2746, 0.0
        %v2916 = vsel %vm626, %v2747, 0.0
        %v2917 = vadd.f32 %v2915, %v2916
        %v2918 = vrot.slane %v2917, 4
        %v2919 = vadd.f32 %v2917, %v2918
        %v2920 = vrot.slane %v2919, 2
        %v2921 = vadd.f32 %v2919, %v2920
        %v2922 = vrot.slane %v2921, 1
        %v2923 = vadd.f32 %v2921, %v2922
        %v2924 = vsel %vm626, %v2748, 0.0
        %v2925 = vsel %vm626, %v2749, 0.0
        %v2926 = vadd.f32 %v2924, %v2925
        %v2927 = vrot.slane %v2926, 4
        %v2928 = vadd.f32 %v2926, %v2927
        %v2929 = vrot.slane %v2928, 2
        %v2930 = vadd.f32 %v2928, %v2929
        %v2931 = vrot.slane %v2930, 1
        %v2932 = vadd.f32 %v2930, %v2931
        %v2933 = vsel %vm626, %v2750, 0.0
        %v2934 = vsel %vm626, %v2751, 0.0
        %v2935 = vadd.f32 %v2933, %v2934
        %v2936 = vrot.slane %v2935, 4
        %v2937 = vadd.f32 %v2935, %v2936
        %v2938 = vrot.slane %v2937, 2
        %v2939 = vadd.f32 %v2937, %v2938
        %v2940 = vrot.slane %v2939, 1
        %v2941 = vadd.f32 %v2939, %v2940
        %v2942 = vsel %vm626, %v2752, 0.0
        %v2943 = vsel %vm626, %v2753, 0.0
        %v2944 = vadd.f32 %v2942, %v2943
        %v2945 = vrot.slane %v2944, 4
        %v2946 = vadd.f32 %v2944, %v2945
        %v2947 = vrot.slane %v2946, 2
        %v2948 = vadd.f32 %v2946, %v2947
        %v2949 = vrot.slane %v2948, 1
        %v2950 = vadd.f32 %v2948, %v2949
        %v2951 = vsel %vm626, %v2754, 0.0
        %v2952 = vsel %vm626, %v2755, 0.0
        %v2953 = vadd.f32 %v2951, %v2952
        %v2954 = vrot.slane %v2953, 4
        %v2955 = vadd.f32 %v2953, %v2954
        %v2956 = vrot.slane %v2955, 2
        %v2957 = vadd.f32 %v2955, %v2956
        %v2958 = vrot.slane %v2957, 1
        %v2959 = vadd.f32 %v2957, %v2958
        %v2960 = vsel %vm626, %v2756, 0.0
        %v2961 = vsel %vm626, %v2757, 0.0
        %v2962 = vadd.f32 %v2960, %v2961
        %v2963 = vrot.slane %v2962, 4
        %v2964 = vadd.f32 %v2962, %v2963
        %v2965 = vrot.slane %v2964, 2
        %v2966 = vadd.f32 %v2964, %v2965
        %v2967 = vrot.slane %v2966, 1
        %v2968 = vadd.f32 %v2966, %v2967
        %v2969 = vsel %vm626, %v2758, 0.0
        %v2970 = vsel %vm626, %v2759, 0.0
        %v2971 = vadd.f32 %v2969, %v2970
        %v2972 = vrot.slane %v2971, 4
        %v2973 = vadd.f32 %v2971, %v2972
        %v2974 = vrot.slane %v2973, 2
        %v2975 = vadd.f32 %v2973, %v2974
        %v2976 = vrot.slane %v2975, 1
        %v2977 = vadd.f32 %v2975, %v2976
        %v2978 = vsel %vm626, %v2760, 0.0
        %v2979 = vsel %vm626, %v2761, 0.0
        %v2980 = vadd.f32 %v2978, %v2979
        %v2981 = vrot.slane %v2980, 4
        %v2982 = vadd.f32 %v2980, %v2981
        %v2983 = vrot.slane %v2982, 2
        %v2984 = vadd.f32 %v2982, %v2983
        %v2985 = vrot.slane %v2984, 1
        %v2986 = vadd.f32 %v2984, %v2985
        %v2987 = vsel %vm626, %v2762, 0.0
        %v2988 = vsel %vm626, %v2763, 0.0
        %v2989 = vadd.f32 %v2987, %v2988
        %v2990 = vrot.slane %v2989, 4
        %v2991 = vadd.f32 %v2989, %v2990
        %v2992 = vrot.slane %v2991, 2
        %v2993 = vadd.f32 %v2991, %v2992
        %v2994 = vrot.slane %v2993, 1
        %v2995 = vadd.f32 %v2993, %v2994
        %v2996 = vsel %vm626, %v2764, 0.0
        %v2997 = vsel %vm626, %v2765, 0.0
        %v2998 = vadd.f32 %v2996, %v2997
        %v2999 = vrot.slane %v2998, 4
        %v3000 = vadd.f32 %v2998, %v2999
        %v3001 = vrot.slane %v3000, 2
        %v3002 = vadd.f32 %v3000, %v3001
        %v3003 = vrot.slane %v3002, 1
        %v3004 = vadd.f32 %v3002, %v3003
        %v3005 = vsel %vm626, %v2766, 0.0
        %v3006 = vsel %vm626, %v2767, 0.0
        %v3007 = vadd.f32 %v3005, %v3006
        %v3008 = vrot.slane %v3007, 4
        %v3009 = vadd.f32 %v3007, %v3008
        %v3010 = vrot.slane %v3009, 2
        %v3011 = vadd.f32 %v3009, %v3010
        %v3012 = vrot.slane %v3011, 1
        %v3013 = vadd.f32 %v3011, %v3012
        %v3014 = vsel %vm626, %v2768, 0.0
        %v3015 = vsel %vm626, %v2769, 0.0
        %v3016 = vadd.f32 %v3014, %v3015
        %v3017 = vrot.slane %v3016, 4
        %v3018 = vadd.f32 %v3016, %v3017
        %v3019 = vrot.slane %v3018, 2
        %v3020 = vadd.f32 %v3018, %v3019
        %v3021 = vrot.slane %v3020, 1
        %v3022 = vadd.f32 %v3020, %v3021
        %v3023 = vsel %vm626, %v2770, 0.0
        %v3024 = vsel %vm626, %v2771, 0.0
        %v3025 = vadd.f32 %v3023, %v3024
        %v3026 = vrot.slane %v3025, 4
        %v3027 = vadd.f32 %v3025, %v3026
        %v3028 = vrot.slane %v3027, 2
        %v3029 = vadd.f32 %v3027, %v3028
        %v3030 = vrot.slane %v3029, 1
        %v3031 = vadd.f32 %v3029, %v3030
        %v3032 = vsel %vm626, %v2772, 0.0
        %v3033 = vsel %vm626, %v2773, 0.0
        %v3034 = vadd.f32 %v3032, %v3033
        %v3035 = vrot.slane %v3034, 4
        %v3036 = vadd.f32 %v3034, %v3035
        %v3037 = vrot.slane %v3036, 2
        %v3038 = vadd.f32 %v3036, %v3037
        %v3039 = vrot.slane %v3038, 1
        %v3040 = vadd.f32 %v3038, %v3039
        %v3041 = vsel %vm626, %v2774, 0.0
        %v3042 = vsel %vm626, %v2775, 0.0
        %v3043 = vadd.f32 %v3041, %v3042
        %v3044 = vrot.slane %v3043, 4
        %v3045 = vadd.f32 %v3043, %v3044
        %v3046 = vrot.slane %v3045, 2
        %v3047 = vadd.f32 %v3045, %v3046
        %v3048 = vrot.slane %v3047, 1
        %v3049 = vadd.f32 %v3047, %v3048
        %v3050 = vsel %vm626, %v2776, 0.0
        %v3051 = vsel %vm626, %v2777, 0.0
        %v3052 = vadd.f32 %v3050, %v3051
        %v3053 = vrot.slane %v3052, 4
        %v3054 = vadd.f32 %v3052, %v3053
        %v3055 = vrot.slane %v3054, 2
        %v3056 = vadd.f32 %v3054, %v3055
        %v3057 = vrot.slane %v3056, 1
        %v3058 = vadd.f32 %v3056, %v3057
        %v3059 = vsel %vm626, %v2778, 0.0
        %v3060 = vsel %vm626, %v2779, 0.0
        %v3061 = vadd.f32 %v3059, %v3060
        %v3062 = vrot.slane %v3061, 4
        %v3063 = vadd.f32 %v3061, %v3062
        %v3064 = vrot.slane %v3063, 2
        %v3065 = vadd.f32 %v3063, %v3064
        %v3066 = vrot.slane %v3065, 1
        %v3067 = vadd.f32 %v3065, %v3066
        %v3068 = vpack.c.bf16 %v2788, %v2788
        %v3069 = vpack.c.bf16 %v2797, %v2797
        %v3070 = vpack.c.bf16 %v2806, %v2806
        %v3071 = vpack.c.bf16 %v2815, %v2815
        %v3072 = vpack.c.bf16 %v2824, %v2824
        %v3073 = vpack.c.bf16 %v2833, %v2833
        %v3074 = vpack.c.bf16 %v2842, %v2842
        %v3075 = vpack.c.bf16 %v2851, %v2851
        %v3076 = vpack.c.bf16 %v2860, %v2860
        %v3077 = vpack.c.bf16 %v2869, %v2869
        %v3078 = vpack.c.bf16 %v2878, %v2878
        %v3079 = vpack.c.bf16 %v2887, %v2887
        %v3080 = vpack.c.bf16 %v2896, %v2896
        %v3081 = vpack.c.bf16 %v2905, %v2905
        %v3082 = vpack.c.bf16 %v2914, %v2914
        %v3083 = vpack.c.bf16 %v2923, %v2923
        %v3084 = vpack.c.bf16 %v2932, %v2932
        %v3085 = vpack.c.bf16 %v2941, %v2941
        %v3086 = vpack.c.bf16 %v2950, %v2950
        %v3087 = vpack.c.bf16 %v2959, %v2959
        %v3088 = vpack.c.bf16 %v2968, %v2968
        %v3089 = vpack.c.bf16 %v2977, %v2977
        %v3090 = vpack.c.bf16 %v2986, %v2986
        %v3091 = vpack.c.bf16 %v2995, %v2995
        %v3092 = vpack.c.bf16 %v3004, %v3004
        %v3093 = vpack.c.bf16 %v3013, %v3013
        %v3094 = vpack.c.bf16 %v3022, %v3022
        %v3095 = vpack.c.bf16 %v3031, %v3031
        %v3096 = vpack.c.bf16 %v3040, %v3040
        %v3097 = vpack.c.bf16 %v3049, %v3049
        %v3098 = vpack.c.bf16 %v3058, %v3058
        %v3099 = vpack.c.bf16 %v3067, %v3067
        %v3100 = vld [vmem:[%s5] sm:$0xf]
        %v3101 = vld [vmem:[%s5 + $0x4] sm:$0xf]
        %v3102 = vld [vmem:[%s5 + $0x8] sm:$0xf]
        %v3103 = vld [vmem:[%s5 + $0xc] sm:$0xf]
        %v3104 = vld [vmem:[%s5 + $0x10] sm:$0xf]
        %v3105 = vld [vmem:[%s5 + $0x14] sm:$0xf]
        %v3106 = vld [vmem:[%s5 + $0x18] sm:$0xf]
        %v3107 = vld [vmem:[%s5 + $0x1c] sm:$0xf]
        %v3108 = vld [vmem:[%s6] sm:$0x1]
        %v3110 = vlaneseq
        %v3111 = vshrl.u32 %v3110, 7
        %v3112 = vsub.s32 0, %v3111
        %v3113 = vrot.slane %v3108, %v3112
        %v3147 = vunpack.c.l.b16 %v3068
        %v3148 = vunpack.c.l.b16 %v3069
        %v3149 = vunpack.c.l.b16 %v3070
        %v3150 = vunpack.c.l.b16 %v3071
        %v3151 = vunpack.c.l.b16 %v3072
        %v3152 = vunpack.c.l.b16 %v3073
        %v3153 = vunpack.c.l.b16 %v3074
        %v3154 = vunpack.c.l.b16 %v3075
        %v3155 = vunpack.c.l.b16 %v3076
        %v3156 = vunpack.c.l.b16 %v3077
        %v3157 = vunpack.c.l.b16 %v3078
        %v3158 = vunpack.c.l.b16 %v3079
        %v3159 = vunpack.c.l.b16 %v3080
        %v3160 = vunpack.c.l.b16 %v3081
        %v3161 = vunpack.c.l.b16 %v3082
        %v3162 = vunpack.c.l.b16 %v3083
        %v3163 = vunpack.c.l.b16 %v3084
        %v3164 = vunpack.c.l.b16 %v3085
        %v3165 = vunpack.c.l.b16 %v3086
        %v3166 = vunpack.c.l.b16 %v3087
        %v3167 = vunpack.c.l.b16 %v3088
        %v3168 = vunpack.c.l.b16 %v3089
        %v3169 = vunpack.c.l.b16 %v3090
        %v3170 = vunpack.c.l.b16 %v3091
        %v3171 = vunpack.c.l.b16 %v3092
        %v3172 = vunpack.c.l.b16 %v3093
        %v3173 = vunpack.c.l.b16 %v3094
        %v3174 = vunpack.c.l.b16 %v3095
        %v3175 = vunpack.c.l.b16 %v3096
        %v3176 = vunpack.c.l.b16 %v3097
        %v3177 = vunpack.c.l.b16 %v3098
        %v3178 = vunpack.c.l.b16 %v3099
        %vm3179 = vcmask 1041409
        %v3180 = vsel %vm3179, %v3148, %v3147
        %vm3181 = vcmask 1042434
        %v3182 = vsel %vm3181, %v3149, %v3180
        %vm3183 = vcmask 1043459
        %v3184 = vsel %vm3183, %v3150, %v3182
        %vm3185 = vcmask 1044484
        %v3186 = vsel %vm3185, %v3151, %v3184
        %vm3187 = vcmask 1045509
        %v3188 = vsel %vm3187, %v3152, %v3186
        %vm3189 = vcmask 1046534
        %v3190 = vsel %vm3189, %v3153, %v3188
        %vm3191 = vcmask 1047559
        %v3192 = vsel %vm3191, %v3154, %v3190
        %v3193 = vsel %vm3179, %v3156, %v3155
        %v3194 = vsel %vm3181, %v3157, %v3193
        %v3195 = vsel %vm3183, %v3158, %v3194
        %v3196 = vsel %vm3185, %v3159, %v3195
        %v3197 = vsel %vm3187, %v3160, %v3196
        %v3198 = vsel %vm3189, %v3161, %v3197
        %v3199 = vsel %vm3191, %v3162, %v3198
        %v3200 = vsel %vm3179, %v3164, %v3163
        %v3201 = vsel %vm3181, %v3165, %v3200
        %v3202 = vsel %vm3183, %v3166, %v3201
        %v3203 = vsel %vm3185, %v3167, %v3202
        %v3204 = vsel %vm3187, %v3168, %v3203
        %v3205 = vsel %vm3189, %v3169, %v3204
        %v3206 = vsel %vm3191, %v3170, %v3205
        %v3207 = vsel %vm3179, %v3172, %v3171
        %v3208 = vsel %vm3181, %v3173, %v3207
        %v3209 = vsel %vm3183, %v3174, %v3208
        %v3210 = vsel %vm3185, %v3175, %v3209
        %v3211 = vsel %vm3187, %v3176, %v3210
        %v3212 = vsel %vm3189, %v3177, %v3211
        %v3213 = vsel %vm3191, %v3178, %v3212
        %v3214 = vpack.c.b16 %v3199, %v3192
        %v3215 = vpack.c.b16 %v3213, %v3206
        %v3224 = vunpack.c.l.b16 %v3100
        %v3225 = vunpack.c.l.b16 %v3101
        %v3226 = vunpack.c.l.b16 %v3102
        %v3227 = vunpack.c.l.b16 %v3103
        %v3228 = vunpack.c.l.b16 %v3104
        %v3229 = vunpack.c.l.b16 %v3105
        %v3230 = vunpack.c.l.b16 %v3106
        %v3231 = vunpack.c.l.b16 %v3107
        %v3232 = vpack.c.b16 %v3225, %v3224
        %v3233 = vpack.c.b16 %v3227, %v3226
        %v3234 = vpack.c.b16 %v3229, %v3228
        %v3235 = vpack.c.b16 %v3231, %v3230
        %v3241 = vsel %vm626, %v3214, 0
        %v3244 = vsel %vm626, %v3215, 0
        %3246 = vmatprep.subr.bf16.mxu0 0
        %3247 = vmatpush1.bf16.msra.mxu0 %v3232
        %3248 = vmatprep.subr.bf16.mxu0 0
        %3249 = vmatpush1.bf16.msra.mxu0 %v3233
        %3250 = vmatprep.subr.bf16.mxu0 0
        %3251 = vmatpush1.bf16.msra.mxu0 %v3234
        %3252 = vmatprep.subr.bf16.mxu0 0
        %3253 = vmatpush1.bf16.msra.mxu0 %v3235
        %3254 = vmatprep.subr.bf16.mxu0 0
        %3255 = vmatpush1.bf16.msra.mxu0 0
        %3256 = vmatprep.subr.bf16.mxu0 0
        %3257 = vmatpush1.bf16.msra.mxu0 0
        %3258 = vmatprep.subr.bf16.mxu0 0
        %3259 = vmatpush1.bf16.msra.mxu0 0
        %3260 = vmatprep.subr.bf16.mxu0 0
        %3261 = vmatpush1.bf16.msra.mxu0 0
        %3262 = vmatprep.subr.bf16.mxu0 0
        %3263 = vmatpush1.bf16.msra.mxu0 0
        %3264 = vmatprep.subr.bf16.mxu0 0
        %3265 = vmatpush1.bf16.msra.mxu0 0
        %3266 = vmatprep.subr.bf16.mxu0 0
        %3267 = vmatpush1.bf16.msra.mxu0 0
        %3268 = vmatprep.subr.bf16.mxu0 0
        %3269 = vmatpush1.bf16.msra.mxu0 0
        %3270 = vmatprep.subr.bf16.mxu0 0
        %3271 = vmatpush1.bf16.msra.mxu0 0
        %3272 = vmatprep.subr.bf16.mxu0 0
        %3273 = vmatpush1.bf16.msra.mxu0 0
        %3274 = vmatprep.subr.bf16.mxu0 0
        %3275 = vmatpush1.bf16.msra.mxu0 0
        %3276 = vmatprep.subr.bf16.mxu0 0
        %3277 = vmatpush1.bf16.msra.mxu0 0
        %3278 = vmatprep.mubr.bf16.mxu0 0
        %3279 = vmatmul.mubr.bf16.gmra.mrb[0].mxu0 %v3241
        %v3280 = vpop.f32.mrb[0].mxu0
        %v3281 = vadd.f32 %v3113, %v3280
        %v3282 = vpop.f32.mrb[0].mxu0
        %v3283 = vpop.f32.mrb[0].mxu0
        %v3284 = vadd.f32 %v3113, %v3283
        %v3285 = vpop.f32.mrb[0].mxu0
        %3286 = vmatprep.mubr.bf16.mxu0 0
        %3287 = vmatmul.mubr.bf16.gmra.mrb[0].mxu0 %v3244
        %v3288 = vpop.f32.mrb[0].mxu0
        %v3289 = vadd.f32 %v3113, %v3288
        %v3290 = vpop.f32.mrb[0].mxu0
        %v3291 = vpop.f32.mrb[0].mxu0
        %v3292 = vadd.f32 %v3113, %v3291
        %v3293 = vpop.f32.mrb[0].mxu0
        %3294 = vdwg.mxu0
        %v3295 = vmax.f32 %v3281, 0.0
        %v3296 = vmax.f32 %v3284, 0.0
        %v3297 = vmax.f32 %v3289, 0.0
        %v3298 = vmax.f32 %v3292, 0.0
        %v3299 = vpack.c.bf16 %v3296, %v3295
        %v3300 = vpack.c.bf16 %v3298, %v3297
        %v3301 = vld [vmem:[%s7] sm:$0xf]
        %v3302 = vld [vmem:[%s7 + $0x4] sm:$0xf]
        %v3303 = vld [vmem:[%s7 + $0x8] sm:$0xf]
        %v3304 = vld [vmem:[%s7 + $0xc] sm:$0xf]
        %v3305 = vld [vmem:[%s7 + $0x10] sm:$0xf]
        %v3306 = vld [vmem:[%s7 + $0x14] sm:$0xf]
        %v3307 = vld [vmem:[%s7 + $0x18] sm:$0xf]
        %v3308 = vld [vmem:[%s7 + $0x1c] sm:$0xf]
        %v3309 = vld [vmem:[%s7 + $0x20] sm:$0xf]
        %v3310 = vld [vmem:[%s7 + $0x24] sm:$0xf]
        %v3311 = vld [vmem:[%s7 + $0x28] sm:$0xf]
        %v3312 = vld [vmem:[%s7 + $0x2c] sm:$0xf]
        %v3313 = vld [vmem:[%s7 + $0x30] sm:$0xf]
        %v3314 = vld [vmem:[%s7 + $0x34] sm:$0xf]
        %v3315 = vld [vmem:[%s7 + $0x38] sm:$0xf]
        %v3316 = vld [vmem:[%s7 + $0x3c] sm:$0xf]
        %v3317 = vld [vmem:[%s8] sm:$0x1]
        %v3319 = vlaneseq
        %v3320 = vshrl.u32 %v3319, 7
        %v3321 = vsub.s32 0, %v3320
        %v3322 = vrot.slane %v3317, %v3321
        %v3340 = vunpack.c.l.b16 %v3301
        %v3341 = vunpack.c.l.b16 %v3302
        %v3342 = vunpack.c.l.b16 %v3303
        %v3343 = vunpack.c.l.b16 %v3304
        %v3344 = vunpack.c.l.b16 %v3305
        %v3345 = vunpack.c.l.b16 %v3306
        %v3346 = vunpack.c.l.b16 %v3307
        %v3347 = vunpack.c.l.b16 %v3308
        %v3348 = vunpack.c.l.b16 %v3309
        %v3349 = vunpack.c.l.b16 %v3310
        %v3350 = vunpack.c.l.b16 %v3311
        %v3351 = vunpack.c.l.b16 %v3312
        %v3352 = vunpack.c.l.b16 %v3313
        %v3353 = vunpack.c.l.b16 %v3314
        %v3354 = vunpack.c.l.b16 %v3315
        %v3355 = vunpack.c.l.b16 %v3316
        %v3356 = vpack.c.b16 %v3341, %v3340
        %v3357 = vpack.c.b16 %v3343, %v3342
        %v3358 = vpack.c.b16 %v3345, %v3344
        %v3359 = vpack.c.b16 %v3347, %v3346
        %v3360 = vpack.c.b16 %v3349, %v3348
        %v3361 = vpack.c.b16 %v3351, %v3350
        %v3362 = vpack.c.b16 %v3353, %v3352
        %v3363 = vpack.c.b16 %v3355, %v3354
        %3372 = vmatprep.subr.bf16.mxu0 0
        %3373 = vmatpush1.bf16.msra.mxu0 %v3356
        %3374 = vmatprep.subr.bf16.mxu0 0
        %3375 = vmatpush1.bf16.msra.mxu0 %v3357
        %3376 = vmatprep.subr.bf16.mxu0 0
        %3377 = vmatpush1.bf16.msra.mxu0 %v3358
        %3378 = vmatprep.subr.bf16.mxu0 0
        %3379 = vmatpush1.bf16.msra.mxu0 %v3359
        %3380 = vmatprep.subr.bf16.mxu0 0
        %3381 = vmatpush1.bf16.msra.mxu0 %v3360
        %3382 = vmatprep.subr.bf16.mxu0 0
        %3383 = vmatpush1.bf16.msra.mxu0 %v3361
        %3384 = vmatprep.subr.bf16.mxu0 0
        %3385 = vmatpush1.bf16.msra.mxu0 %v3362
        %3386 = vmatprep.subr.bf16.mxu0 0
        %3387 = vmatpush1.bf16.msra.mxu0 %v3363
        %3388 = vmatprep.subr.bf16.mxu0 0
        %3389 = vmatpush1.bf16.msra.mxu0 0
        %3390 = vmatprep.subr.bf16.mxu0 0
        %3391 = vmatpush1.bf16.msra.mxu0 0
        %3392 = vmatprep.subr.bf16.mxu0 0
        %3393 = vmatpush1.bf16.msra.mxu0 0
        %3394 = vmatprep.subr.bf16.mxu0 0
        %3395 = vmatpush1.bf16.msra.mxu0 0
        %3396 = vmatprep.subr.bf16.mxu0 0
        %3397 = vmatpush1.bf16.msra.mxu0 0
        %3398 = vmatprep.subr.bf16.mxu0 0
        %3399 = vmatpush1.bf16.msra.mxu0 0
        %3400 = vmatprep.subr.bf16.mxu0 0
        %3401 = vmatpush1.bf16.msra.mxu0 0
        %3402 = vmatprep.subr.bf16.mxu0 0
        %3403 = vmatpush1.bf16.msra.mxu0 0
        %3404 = vmatprep.mubr.bf16.mxu0 0
        %3405 = vmatmul.mubr.bf16.gmra.mrb[0].mxu0 %v3299
        %v3406 = vpop.f32.mrb[0].mxu0
        %v3407 = vadd.f32 %v3322, %v3406
        %v3408 = vpop.f32.mrb[0].mxu0
        %v3409 = vpop.f32.mrb[0].mxu0
        %v3410 = vadd.f32 %v3322, %v3409
        %v3411 = vpop.f32.mrb[0].mxu0
        %3412 = vmatprep.mubr.bf16.mxu0 0
        %3413 = vmatmul.mubr.bf16.gmra.mrb[0].mxu0 %v3300
        %v3414 = vpop.f32.mrb[0].mxu0
        %v3415 = vadd.f32 %v3322, %v3414
        %v3416 = vpop.f32.mrb[0].mxu0
        %v3417 = vpop.f32.mrb[0].mxu0
        %v3418 = vadd.f32 %v3322, %v3417
        %v3419 = vpop.f32.mrb[0].mxu0
        %3420 = vdwg.mxu0
        %3421 = vst [vmem:[%s346] sm:$0xff] %v3407
        %3422 = vst [vmem:[%s346 + $0x8] sm:$0xff] %v3410
        %3423 = vst [vmem:[%s346 + $0x10] sm:$0xff] %v3415
        %3424 = vst [vmem:[%s346 + $0x18] sm:$0xff] %v3418
        %s3425 = sand.u32 %s230, 1
        %s3426 = scalar_lea.sflag [#allocation3], %s3425
        %s3427 = sand.u32 %s230, 1
        %s3428 = smul.addr %s3427, 32
        %s3429 = scalar_lea.vmem [#allocation2], %s3428
        // Predicated region
        $region57: #{tpu_custom_call.1} parent=55 // pred_check
          %p3430 = pneg %p240
        $region58: #{tpu_custom_call.1} parent=55 // pred_check_branch
          %3432 = sbr.rel (%p3430) target = $region60
        $region59: #{tpu_custom_call.1} parent=55 // pred_region
          %s3433 = smul.u32 4, %s23
          %s3435 = ssub.s32 512, 512
          %3436 = vsyncadd %s3426, %s3435
          %s3437 = smul.addr %s3433, 128
          %s3438 = scalar_lea.hbm %s9, %s3437
          %s3439 = sshll.u32 %s3429, 4
          %s3440 = int_to_ptr.vmem [resolvable:$true] %s3439
          %3445 = dma.vmem_to_hbm [thread:$0]  %s3440, 512, %s3438, %s3426, 128, 128, 8
        $region60: #{tpu_custom_call.1} parent=55 // pred_fallthru
          _
      $region56: #{tpu_custom_call.1} parent=5 // pred_fallthru
        _
      %p3446 = scmp.le.s32.totalorder 2, %s18
      // Predicated region
      $region61: #{tpu_custom_call.1} parent=5 // pred_check
        %p3447 = pneg %p3446
      $region62: #{tpu_custom_call.1} parent=5 // pred_check_branch
        %3449 = sbr.rel (%p3447) target = $region64
      $region63: #{tpu_custom_call.1} parent=5 // pred_region
        %s3450 = ssub.s32 %s18, 2
        // Predicated region
        $region65: #{tpu_custom_call.1} parent=63 // pred_check
          %p3451 = pneg %p246
        $region66: #{tpu_custom_call.1} parent=63 // pred_check_branch
          %3453 = sbr.rel (%p3451) target = $region68
        $region67: #{tpu_custom_call.1} parent=63 // pred_region
          %s3454 = sand.u32 %s231, 1
          %s3455 = scalar_lea.sflag [#allocation3], %s3454
          %s3456 = sand.u32 %s231, 1
          %s3457 = smul.addr %s3456, 32
          %s3458 = scalar_lea.vmem [#allocation2], %s3457
          %3459 = dma.done %s3455, 512
        $region68: #{tpu_custom_call.1} parent=63 // pred_fallthru
          _
      $region64: #{tpu_custom_call.1} parent=5 // pred_fallthru
        _
    $region6: #{tpu_custom_call.1} parent=1 // loop_footer
      %s22 = sadd.s32 1, %s18
    $region7: #{tpu_custom_call.1} parent=1 // loop_footer_branch
      %17 = sbr.rel target = $region3
    $region8: #{tpu_custom_call.1} parent=1 // loop_exit
      _
    %3460 = vsyncpa [#allocation3], 1
    %s3461 = scalar_lea.sflag [#allocation3], 1
    %3462 = vsyncpa %s3461, 1

// kernel: tpu_custom_call.1
$region0: #{tpu_custom_call.1}
  #allocation0 [shape = 'u32[]', space=smem, size = 0x4, offset = 0x4, fixed_abs, tag = 'smem constant byte address 0x4 - core index']
  #allocation1 [shape = 'u32[144,128]{1,0:T(1,128)}', space=vmem, size = 0x12000, scoped, tag = 'internal scratch']
  %s0 = inlined_call_operand.vmem [shape: bf16[64,16,64], index: 0, kind: input, shape index: {}]
  %s1 = inlined_call_operand.vmem [shape: f32[64,16,1], index: 1, kind: input, shape index: {}]
  %s2 = inlined_call_operand.vmem [shape: bf16[64,64], index: 2, kind: input, shape index: {}]
  %s3 = inlined_call_operand.vmem [shape: f32[1,64], index: 3, kind: input, shape index: {}]
  %s4 = inlined_call_operand.vmem [shape: f32[1,64], index: 4, kind: input, shape index: {}]
  %s5 = inlined_call_operand.vmem [shape: bf16[64,128], index: 5, kind: input, shape index: {}]
  %s6 = inlined_call_operand.vmem [shape: f32[1,128], index: 6, kind: input, shape index: {}]
  %s7 = inlined_call_operand.vmem [shape: bf16[128,128], index: 7, kind: input, shape index: {}]
  %s8 = inlined_call_operand.vmem [shape: f32[1,128], index: 8, kind: input, shape index: {}]
  %s9 = inlined_call_operand.hbm [shape: f32[64,128], index: 9, kind: output, shape index: {}]
  %s10 = sld [smem:[#allocation0]]
  $region69: #{tpu_custom_call.1} parent=0
    _
  %s12 = ssub.s32 1, %s10
  %s13 = scalar_select 0, %s12, %s10
  $region1: #{tpu_custom_call.1} parent=0
    #allocation2 [shape = 'u8[32768]{0}', space=vmem, size = 0x8000, scoped, tag = 'output window, operand 0']
    #allocation3 [shape = 's32[2]{0}', space=sflag, size = 0x8, scoped, tag = 'scoped memory for tpu_custom_call.1']
    %14 = vsyncpa [#allocation3], 0
    %s15 = scalar_lea.sflag [#allocation3], 1
    %16 = vsyncpa %s15, 0
    loop: start=0, step=1, limit=4
    $region2: #{tpu_custom_call.1} parent=1 // loop_pre_header
      _
    $region3: #{tpu_custom_call.1} parent=1 // loop_header
      %s18 = sphi 0, %s22
      %p19 = scmp.ge.s32.totalorder %s18, 4
      %s28 = sphi 0, %s30
      %s31 = sphi 0, %s28
      %s32 = sphi 0, %s31
      %s48 = sphi 0, %s32
      %s54 = sphi 0, %s56
      %s57 = sphi 0, %s54
      %s58 = sphi 0, %s57
      %s74 = sphi 0, %s58
      %s78 = sphi 0, %s78
      %s80 = sphi 0, %s78
      %s81 = sphi 0, %s80
      %s95 = sphi 0, %s81
      %s99 = sphi 0, %s99
      %s101 = sphi 0, %s99
      %s102 = sphi 0, %s101
      %s116 = sphi 0, %s102
      %s120 = sphi 0, %s120
      %s122 = sphi 0, %s120
      %s123 = sphi 0, %s122
      %s137 = sphi 0, %s123
      %s141 = sphi 0, %s141
      %s143 = sphi 0, %s141
      %s144 = sphi 0, %s143
      %s158 = sphi 0, %s144
      %s162 = sphi 0, %s162
      %s164 = sphi 0, %s162
      %s165 = sphi 0, %s164
      %s179 = sphi 0, %s165
      %s183 = sphi 0, %s183
      %s185 = sphi 0, %s183
      %s186 = sphi 0, %s185
      %s200 = sphi 0, %s186
      %s204 = sphi 0, %s204
      %s206 = sphi 0, %s204
      %s207 = sphi 0, %s206
      %s221 = sphi 0, %s207
      %s227 = sphi 0, %s229
      %s230 = sphi 0, %s227
      %s231 = sphi 0, %s230
      %s247 = sphi 0, %s231
    $region4: #{tpu_custom_call.1} parent=1 // loop_header_branch
      %21 = sbr.rel (%p19) target = $region8
    $region5: #{tpu_custom_call.1} parent=1 // loop_body
      %s23 = ssub.s32 %s18, 1
      %s24 = ssub.s32 %s18, 2
      %s25 = sadd.s32 %s18, 1
      %s26 = ssub.s32 %s18, %s25
      %p27 = scmp.eq.s32.totalorder %s26, 0
      %s29 = sadd.s32 %s28, 1
      %s30 = scalar_select %p27, %s28, %s29
      %p33 = pneg %p27
      %p34 = scmp.eq.s32.totalorder %s18, 1
      %p35 = por %p33, %p34
      %p36 = scmp.ne.s32.totalorder %s28, %s31
      %p37 = scmp.eq.s32.totalorder %s18, 0
      %p38 = por %p36, %p37
      %p39 = scmp.ne.s32.totalorder %s28, %s31
      %p40 = scmp.eq.s32.totalorder %s23, 1
      %p41 = por %p39, %p40
      %p42 = scmp.ne.s32.totalorder %s31, %s32
      %p43 = scmp.eq.s32.totalorder %s23, 0
      %p44 = por %p42, %p43
      %p45 = scmp.ne.s32.totalorder %s31, %s32
      %p46 = scmp.eq.s32.totalorder %s24, 1
      %p47 = por %p45, %p46
      %p49 = scmp.ne.s32.totalorder %s32, %s48
      %p50 = scmp.eq.s32.totalorder %s24, 0
      %p51 = por %p49, %p50
      %s52 = ssub.s32 %s18, %s25
      %p53 = scmp.eq.s32.totalorder %s52, 0
      %s55 = sadd.s32 %s54, 1
      %s56 = scalar_select %p53, %s54, %s55
      %p59 = pneg %p53
      %p60 = scmp.eq.s32.totalorder %s18, 1
      %p61 = por %p59, %p60
      %p62 = scmp.ne.s32.totalorder %s54, %s57
      %p63 = scmp.eq.s32.totalorder %s18, 0
      %p64 = por %p62, %p63
      %p65 = scmp.ne.s32.totalorder %s54, %s57
      %p66 = scmp.eq.s32.totalorder %s23, 1
      %p67 = por %p65, %p66
      %p68 = scmp.ne.s32.totalorder %s57, %s58
      %p69 = scmp.eq.s32.totalorder %s23, 0
      %p70 = por %p68, %p69
      %p71 = scmp.ne.s32.totalorder %s57, %s58
      %p72 = scmp.eq.s32.totalorder %s24, 1
      %p73 = por %p71, %p72
      %p75 = scmp.ne.s32.totalorder %s58, %s74
      %p76 = scmp.eq.s32.totalorder %s24, 0
      %p77 = por %p75, %p76
      %s79 = sadd.s32 %s78, 1
      %p82 = scmp.eq.s32.totalorder %s18, 1
      %p83 = scmp.ne.s32.totalorder %s78, %s80
      %p84 = scmp.eq.s32.totalorder %s18, 0
      %p85 = por %p83, %p84
      %p86 = scmp.ne.s32.totalorder %s78, %s80
      %p87 = scmp.eq.s32.totalorder %s23, 1
      %p88 = por %p86, %p87
      %p89 = scmp.ne.s32.totalorder %s80, %s81
      %p90 = scmp.eq.s32.totalorder %s23, 0
      %p91 = por %p89, %p90
      %p92 = scmp.ne.s32.totalorder %s80, %s81
      %p93 = scmp.eq.s32.totalorder %s24, 1
      %p94 = por %p92, %p93
      %p96 = scmp.ne.s32.totalorder %s81, %s95
      %p97 = scmp.eq.s32.totalorder %s24, 0
      %p98 = por %p96, %p97
      %s100 = sadd.s32 %s99, 1
      %p103 = scmp.eq.s32.totalorder %s18, 1
      %p104 = scmp.ne.s32.totalorder %s99, %s101
      %p105 = scmp.eq.s32.totalorder %s18, 0
      %p106 = por %p104, %p105
      %p107 = scmp.ne.s32.totalorder %s99, %s101
      %p108 = scmp.eq.s32.totalorder %s23, 1
      %p109 = por %p107, %p108
      %p110 = scmp.ne.s32.totalorder %s101, %s102
      %p111 = scmp.eq.s32.totalorder %s23, 0
      %p112 = por %p110, %p111
      %p113 = scmp.ne.s32.totalorder %s101, %s102
      %p114 = scmp.eq.s32.totalorder %s24, 1
      %p115 = por %p113, %p114
      %p117 = scmp.ne.s32.totalorder %s102, %s116
      %p118 = scmp.eq.s32.totalorder %s24, 0
      %p119 = por %p117, %p118
      %s121 = sadd.s32 %s120, 1
      %p124 = scmp.eq.s32.totalorder %s18, 1
      %p125 = scmp.ne.s32.totalorder %s120, %s122
      %p126 = scmp.eq.s32.totalorder %s18, 0
      %p127 = por %p125, %p126
      %p128 = scmp.ne.s32.totalorder %s120, %s122
      %p129 = scmp.eq.s32.totalorder %s23, 1
      %p130 = por %p128, %p129
      %p131 = scmp.ne.s32.totalorder %s122, %s123
      %p132 = scmp.eq.s32.totalorder %s23, 0
      %p133 = por %p131, %p132
      %p134 = scmp.ne.s32.totalorder %s122, %s123
      %p135 = scmp.eq.s32.totalorder %s24, 1
      %p136 = por %p134, %p135
      %p138 = scmp.ne.s32.totalorder %s123, %s137
      %p139 = scmp.eq.s32.totalorder %s24, 0
      %p140 = por %p138, %p139
      %s142 = sadd.s32 %s141, 1
      %p145 = scmp.eq.s32.totalorder %s18, 1
      %p146 = scmp.ne.s32.totalorder %s141, %s143
      %p147 = scmp.eq.s32.totalorder %s18, 0
      %p148 = por %p146, %p147
      %p149 = scmp.ne.s32.totalorder %s141, %s143
      %p150 = scmp.eq.s32.totalorder %s23, 1
      %p151 = por %p149, %p150
      %p152 = scmp.ne.s32.totalorder %s143, %s144
      %p153 = scmp.eq.s32.totalorder %s23, 0
      %p154 = por %p152, %p153
      %p155 = scmp.ne.s32.totalorder %s143, %s144
      %p156 = scmp.eq.s32.totalorder %s24, 1
      %p157 = por %p155, %p156
      %p159 = scmp.ne.s32.totalorder %s144, %s158
      %p160 = scmp.eq.s32.totalorder %s24, 0
      %p161 = por %p159, %p160
      %s163 = sadd.s32 %s162, 1
      %p166 = scmp.eq.s32.totalorder %s18, 1
      %p167 = scmp.ne.s32.totalorder %s162, %s164
      %p168 = scmp.eq.s32.totalorder %s18, 0
      %p169 = por %p167, %p168
      %p170 = scmp.ne.s32.totalorder %s162, %s164
      %p171 = scmp.eq.s32.totalorder %s23, 1
      %p172 = por %p170, %p171
      %p173 = scmp.ne.s32.totalorder %s164, %s165
      %p174 = scmp.eq.s32.totalorder %s23, 0
      %p175 = por %p173, %p174
      %p176 = scmp.ne.s32.totalorder %s164, %s165
      %p177 = scmp.eq.s32.totalorder %s24, 1
      %p178 = por %p176, %p177
      %p180 = scmp.ne.s32.totalorder %s165, %s179
      %p181 = scmp.eq.s32.totalorder %s24, 0
      %p182 = por %p180, %p181
      %s184 = sadd.s32 %s183, 1
      %p187 = scmp.eq.s32.totalorder %s18, 1
      %p188 = scmp.ne.s32.totalorder %s183, %s185
      %p189 = scmp.eq.s32.totalorder %s18, 0
      %p190 = por %p188, %p189
      %p191 = scmp.ne.s32.totalorder %s183, %s185
      %p192 = scmp.eq.s32.totalorder %s23, 1
      %p193 = por %p191, %p192
      %p194 = scmp.ne.s32.totalorder %s185, %s186
      %p195 = scmp.eq.s32.totalorder %s23, 0
      %p196 = por %p194, %p195
      %p197 = scmp.ne.s32.totalorder %s185, %s186
      %p198 = scmp.eq.s32.totalorder %s24, 1
      %p199 = por %p197, %p198
      %p201 = scmp.ne.s32.totalorder %s186, %s200
      %p202 = scmp.eq.s32.totalorder %s24, 0
      %p203 = por %p201, %p202
      %s205 = sadd.s32 %s204, 1
      %p208 = scmp.eq.s32.totalorder %s18, 1
      %p209 = scmp.ne.s32.totalorder %s204, %s206
      %p210 = scmp.eq.s32.totalorder %s18, 0
      %p211 = por %p209, %p210
      %p212 = scmp.ne.s32.totalorder %s204, %s206
      %p213 = scmp.eq.s32.totalorder %s23, 1
      %p214 = por %p212, %p213
      %p215 = scmp.ne.s32.totalorder %s206, %s207
      %p216 = scmp.eq.s32.totalorder %s23, 0
      %p217 = por %p215, %p216
      %p218 = scmp.ne.s32.totalorder %s206, %s207
      %p219 = scmp.eq.s32.totalorder %s24, 1
      %p220 = por %p218, %p219
      %p222 = scmp.ne.s32.totalorder %s207, %s221
      %p223 = scmp.eq.s32.totalorder %s24, 0
      %p224 = por %p222, %p223
      %s225 = ssub.s32 %s18, %s25
      %p226 = scmp.eq.s32.totalorder %s225, 0
      %s228 = sadd.s32 %s227, 1
      %s229 = scalar_select %p226, %s227, %s228
      %p232 = pneg %p226
      %p233 = scmp.eq.s32.totalorder %s18, 1
      %p234 = por %p232, %p233
      %p235 = scmp.ne.s32.totalorder %s227, %s230
      %p236 = scmp.eq.s32.totalorder %s18, 0
      %p237 = por %p235, %p236
      %p238 = scmp.ne.s32.totalorder %s227, %s230
      %p239 = scmp.eq.s32.totalorder %s23, 1
      %p240 = por %p238, %p239
      %p241 = scmp.ne.s32.totalorder %s230, %s231
      %p242 = scmp.eq.s32.totalorder %s23, 0
      %p243 = por %p241, %p242
      %p244 = scmp.ne.s32.totalorder %s230, %s231
      %p245 = scmp.eq.s32.totalorder %s24, 1
      %p246 = por %p244, %p245
      %p248 = scmp.ne.s32.totalorder %s231, %s247
      %p249 = scmp.eq.s32.totalorder %s24, 0
      %p250 = por %p248, %p249
      %p251 = scmp.le.s32.totalorder 1, %s18
      %p252 = scmp.lt.s32.totalorder %s18, 3
      %p253 = pnand %p251, %p252
      %p254 = pneg %p253
      // Predicated region
      $region9: #{tpu_custom_call.1} parent=5 // pred_check
        _
      $region10: #{tpu_custom_call.1} parent=5 // pred_check_branch
        %256 = sbr.rel (%p253) target = $region12
      $region11: #{tpu_custom_call.1} parent=5 // pred_region
        %s257 = ssub.s32 %s18, 1
        // Predicated region
        $region13: #{tpu_custom_call.1} parent=11 // pred_check
          %p258 = pneg %p91
        $region14: #{tpu_custom_call.1} parent=11 // pred_check_branch
          %260 = sbr.rel (%p258) target = $region16
        $region15: #{tpu_custom_call.1} parent=11 // pred_region
          _
        $region16: #{tpu_custom_call.1} parent=11 // pred_fallthru
          _
        // Predicated region
        $region17: #{tpu_custom_call.1} parent=11 // pred_check
          %p261 = pneg %p112
        $region18: #{tpu_custom_call.1} parent=11 // pred_check_branch
          %263 = sbr.rel (%p261) target = $region20
        $region19: #{tpu_custom_call.1} parent=11 // pred_region
          _
        $region20: #{tpu_custom_call.1} parent=11 // pred_fallthru
          _
        // Predicated region
        $region21: #{tpu_custom_call.1} parent=11 // pred_check
          %p264 = pneg %p133
        $region22: #{tpu_custom_call.1} parent=11 // pred_check_branch
          %266 = sbr.rel (%p264) target = $region24
        $region23: #{tpu_custom_call.1} parent=11 // pred_region
          _
        $region24: #{tpu_custom_call.1} parent=11 // pred_fallthru
          _
        // Predicated region
        $region25: #{tpu_custom_call.1} parent=11 // pred_check
          %p267 = pneg %p154
        $region26: #{tpu_custom_call.1} parent=11 // pred_check_branch
          %269 = sbr.rel (%p267) target = $region28
        $region27: #{tpu_custom_call.1} parent=11 // pred_region
          _
        $region28: #{tpu_custom_call.1} parent=11 // pred_fallthru
          _
        // Predicated region
        $region29: #{tpu_custom_call.1} parent=11 // pred_check
          %p270 = pneg %p175
        $region30: #{tpu_custom_call.1} parent=11 // pred_check_branch
          %272 = sbr.rel (%p270) target = $region32
        $region31: #{tpu_custom_call.1} parent=11 // pred_region
          _
        $region32: #{tpu_custom_call.1} parent=11 // pred_fallthru
          _
        // Predicated region
        $region33: #{tpu_custom_call.1} parent=11 // pred_check
          %p273 = pneg %p196
        $region34: #{tpu_custom_call.1} parent=11 // pred_check_branch
          %275 = sbr.rel (%p273) target = $region36
        $region35: #{tpu_custom_call.1} parent=11 // pred_region
          _
        $region36: #{tpu_custom_call.1} parent=11 // pred_fallthru
          _
        // Predicated region
        $region37: #{tpu_custom_call.1} parent=11 // pred_check
          %p276 = pneg %p217
        $region38: #{tpu_custom_call.1} parent=11 // pred_check_branch
          %278 = sbr.rel (%p276) target = $region40
        $region39: #{tpu_custom_call.1} parent=11 // pred_region
          _
        $region40: #{tpu_custom_call.1} parent=11 // pred_fallthru
          _
      $region12: #{tpu_custom_call.1} parent=5 // pred_fallthru
        _
      %p279 = scmp.lt.s32.totalorder %s18, 2
      // Predicated region
      $region41: #{tpu_custom_call.1} parent=5 // pred_check
        %p280 = pneg %p279
      $region42: #{tpu_custom_call.1} parent=5 // pred_check_branch
        %282 = sbr.rel (%p280) target = $region44
      $region43: #{tpu_custom_call.1} parent=5 // pred_region
        // Predicated region
        $region45: #{tpu_custom_call.1} parent=43 // pred_check
          %p283 = pneg %p38
        $region46: #{tpu_custom_call.1} parent=43 // pred_check_branch
          %285 = sbr.rel (%p283) target = $region48
        $region47: #{tpu_custom_call.1} parent=43 // pred_region
          %s286 = smul.u32 32, %s18
          %p287 = scmp.lt.s32.totalorder %s286, 63
          %s288 = scalar_select %p287, %s286, 63
          %s289 = smul.addr %s288, 2
          %s290 = smul.addr %s289, 4
          %s291 = scalar_lea.vmem %s0, %s290
          %s292 = smul.u32 32, %s18
        $region48: #{tpu_custom_call.1} parent=43 // pred_fallthru
          _
        // Predicated region
        $region49: #{tpu_custom_call.1} parent=43 // pred_check
          %p293 = pneg %p64
        $region50: #{tpu_custom_call.1} parent=43 // pred_check_branch
          %295 = sbr.rel (%p293) target = $region52
        $region51: #{tpu_custom_call.1} parent=43 // pred_region
          %s296 = smul.u32 32, %s18
          %p297 = scmp.lt.s32.totalorder %s296, 63
          %s298 = scalar_select %p297, %s296, 63
          %s299 = smul.addr %s298, 2
          %s300 = smul.addr %s299, 8
          %s301 = scalar_lea.vmem %s1, %s300
          %s302 = smul.u32 32, %s18
        $region52: #{tpu_custom_call.1} parent=43 // pred_fallthru
          _
      $region44: #{tpu_custom_call.1} parent=5 // pred_fallthru
        _
      %p303 = scmp.le.s32.totalorder 1, %s18
      %p304 = scmp.lt.s32.totalorder %s18, 3
      %p305 = pnand %p303, %p304
      %p306 = pneg %p305
      // Predicated region
      $region53: #{tpu_custom_call.1} parent=5 // pred_check
        _
      $region54: #{tpu_custom_call.1} parent=5 // pred_check_branch
        %308 = sbr.rel (%p305) target = $region56
      $region55: #{tpu_custom_call.1} parent=5 // pred_region
        %s309 = ssub.s32 %s18, 1
        %s310 = smul.u32 32, %s23
        %p311 = scmp.lt.s32.totalorder %s310, 63
        %s312 = scalar_select %p311, %s310, 63
        %s313 = smul.addr %s312, 2
        %s314 = smul.addr %s313, 4
        %s315 = scalar_lea.vmem %s0, %s314
        %p316 = pneg %p44
        %p317 = pneg %p41
        %s318 = smul.u32 32, %s23
        %p319 = scmp.lt.s32.totalorder %s318, 63
        %s320 = scalar_select %p319, %s318, 63
        %s321 = smul.addr %s320, 2
        %s322 = smul.addr %s321, 8
        %s323 = scalar_lea.vmem %s1, %s322
        %p324 = pneg %p70
        %p325 = pneg %p67
        %p326 = pneg %p91
        %p327 = pneg %p88
        %p328 = pneg %p112
        %p329 = pneg %p109
        %p330 = pneg %p133
        %p331 = pneg %p130
        %p332 = pneg %p154
        %p333 = pneg %p151
        %p334 = pneg %p175
        %p335 = pneg %p172
        %p336 = pneg %p196
        %p337 = pneg %p193
        %p338 = pneg %p217
        %p339 = pneg %p214
        %p340 = pneg %p243
        %p341 = pneg %p240
        %s342 = sand.u32 %s230, 1
        %s343 = scalar_lea.sflag [#allocation3], %s342
        %s344 = sand.u32 %s230, 1
        %s345 = smul.addr %s344, 32
        %s346 = scalar_lea.vmem [#allocation2], %s345
        %s347 = smul.u32 32, %s23
        %p348 = scmp.lt.s32.totalorder %s347, 63
        %s349 = scalar_select %p348, %s347, 63
        %s350 = smul.addr %s349, 2
        %s351 = smul.addr %s350, 4
        %s352 = scalar_lea.vmem %s0, %s351
        %s353 = smul.u32 32, %s23
        %s354 = smul.u32 32, %s23
        %p355 = scmp.lt.s32.totalorder %s354, 63
        %s356 = scalar_select %p355, %s354, 63
        %s357 = smul.addr %s356, 2
        %s358 = smul.addr %s357, 8
        %s359 = scalar_lea.vmem %s1, %s358
        %s360 = smul.u32 32, %s23
        %s361 = smul.u32 4, %s23
        %v363 = vld [vmem:[%s352] sm:$0xf]
        %v364 = vld [vmem:[%s352 + $0x4] sm:$0xf]
        %v365 = vld [vmem:[%s352 + $0x8] sm:$0xf]
        %v366 = vld [vmem:[%s352 + $0xc] sm:$0xf]
        %v367 = vld [vmem:[%s352 + $0x10] sm:$0xf]
        %v368 = vld [vmem:[%s352 + $0x14] sm:$0xf]
        %v369 = vld [vmem:[%s352 + $0x18] sm:$0xf]
        %v370 = vld [vmem:[%s352 + $0x1c] sm:$0xf]
        %v371 = vld [vmem:[%s352 + $0x20] sm:$0xf]
        %v372 = vld [vmem:[%s352 + $0x24] sm:$0xf]
        %v373 = vld [vmem:[%s352 + $0x28] sm:$0xf]
        %v374 = vld [vmem:[%s352 + $0x2c] sm:$0xf]
        %v375 = vld [vmem:[%s352 + $0x30] sm:$0xf]
        %v376 = vld [vmem:[%s352 + $0x34] sm:$0xf]
        %v377 = vld [vmem:[%s352 + $0x38] sm:$0xf]
        %v378 = vld [vmem:[%s352 + $0x3c] sm:$0xf]
        %v379 = vld [vmem:[%s352 + $0x40] sm:$0xf]
        %v380 = vld [vmem:[%s352 + $0x44] sm:$0xf]
        %v381 = vld [vmem:[%s352 + $0x48] sm:$0xf]
        %v382 = vld [vmem:[%s352 + $0x4c] sm:$0xf]
        %v383 = vld [vmem:[%s352 + $0x50] sm:$0xf]
        %v384 = vld [vmem:[%s352 + $0x54] sm:$0xf]
        %v385 = vld [vmem:[%s352 + $0x58] sm:$0xf]
        %v386 = vld [vmem:[%s352 + $0x5c] sm:$0xf]
        %v387 = vld [vmem:[%s352 + $0x60] sm:$0xf]
        %v388 = vld [vmem:[%s352 + $0x64] sm:$0xf]
        %v389 = vld [vmem:[%s352 + $0x68] sm:$0xf]
        %v390 = vld [vmem:[%s352 + $0x6c] sm:$0xf]
        %v391 = vld [vmem:[%s352 + $0x70] sm:$0xf]
        %v392 = vld [vmem:[%s352 + $0x74] sm:$0xf]
        %v393 = vld [vmem:[%s352 + $0x78] sm:$0xf]
        %v394 = vld [vmem:[%s352 + $0x7c] sm:$0xf]
        %v395 = vld [vmem:[%s352 + $0x80] sm:$0xf]
        %v396 = vld [vmem:[%s352 + $0x84] sm:$0xf]
        %v397 = vld [vmem:[%s352 + $0x88] sm:$0xf]
        %v398 = vld [vmem:[%s352 + $0x8c] sm:$0xf]
        %v399 = vld [vmem:[%s352 + $0x90] sm:$0xf]
        %v400 = vld [vmem:[%s352 + $0x94] sm:$0xf]
        %v401 = vld [vmem:[%s352 + $0x98] sm:$0xf]
        %v402 = vld [vmem:[%s352 + $0x9c] sm:$0xf]
        %v403 = vld [vmem:[%s352 + $0xa0] sm:$0xf]
        %v404 = vld [vmem:[%s352 + $0xa4] sm:$0xf]
        %v405 = vld [vmem:[%s352 + $0xa8] sm:$0xf]
        %v406 = vld [vmem:[%s352 + $0xac] sm:$0xf]
        %v407 = vld [vmem:[%s352 + $0xb0] sm:$0xf]
        %v408 = vld [vmem:[%s352 + $0xb4] sm:$0xf]
        %v409 = vld [vmem:[%s352 + $0xb8] sm:$0xf]
        %v410 = vld [vmem:[%s352 + $0xbc] sm:$0xf]
        %v411 = vld [vmem:[%s352 + $0xc0] sm:$0xf]
        %v412 = vld [vmem:[%s352 + $0xc4] sm:$0xf]
        %v413 = vld [vmem:[%s352 + $0xc8] sm:$0xf]
        %v414 = vld [vmem:[%s352 + $0xcc] sm:$0xf]
        %v415 = vld [vmem:[%s352 + $0xd0] sm:$0xf]
        %v416 = vld [vmem:[%s352 + $0xd4] sm:$0xf]
        %v417 = vld [vmem:[%s352 + $0xd8] sm:$0xf]
        %v418 = vld [vmem:[%s352 + $0xdc] sm:$0xf]
        %v419 = vld [vmem:[%s352 + $0xe0] sm:$0xf]
        %v420 = vld [vmem:[%s352 + $0xe4] sm:$0xf]
        %v421 = vld [vmem:[%s352 + $0xe8] sm:$0xf]
        %v422 = vld [vmem:[%s352 + $0xec] sm:$0xf]
        %v423 = vld [vmem:[%s352 + $0xf0] sm:$0xf]
        %v424 = vld [vmem:[%s352 + $0xf4] sm:$0xf]
        %v425 = vld [vmem:[%s352 + $0xf8] sm:$0xf]
        %v426 = vld [vmem:[%s352 + $0xfc] sm:$0xf]
        %v427 = vld [vmem:[%s2] sm:$0xf]
        %v428 = vld [vmem:[%s2 + $0x4] sm:$0xf]
        %v429 = vld [vmem:[%s2 + $0x8] sm:$0xf]
        %v430 = vld [vmem:[%s2 + $0xc] sm:$0xf]
        %v431 = vld [vmem:[%s2 + $0x10] sm:$0xf]
        %v432 = vld [vmem:[%s2 + $0x14] sm:$0xf]
        %v433 = vld [vmem:[%s2 + $0x18] sm:$0xf]
        %v434 = vld [vmem:[%s2 + $0x1c] sm:$0xf]
        %v435 = vld [vmem:[%s3] sm:$0x1]
        %v437 = vlaneseq
        %v438 = vshrl.u32 %v437, 7
        %v439 = vsub.s32 0, %v438
        %v440 = vrot.slane %v435, %v439
        %v506 = vunpack.c.l.b16 %v363
        %v507 = vunpack.c.l.b16 %v364
        %v508 = vunpack.c.l.b16 %v365
        %v509 = vunpack.c.l.b16 %v366
        %v510 = vunpack.c.l.b16 %v367
        %v511 = vunpack.c.l.b16 %v368
        %v512 = vunpack.c.l.b16 %v369
        %v513 = vunpack.c.l.b16 %v370
        %v514 = vunpack.c.l.b16 %v371
        %v515 = vunpack.c.l.b16 %v372
        %v516 = vunpack.c.l.b16 %v373
        %v517 = vunpack.c.l.b16 %v374
        %v518 = vunpack.c.l.b16 %v375
        %v519 = vunpack.c.l.b16 %v376
        %v520 = vunpack.c.l.b16 %v377
        %v521 = vunpack.c.l.b16 %v378
        %v522 = vunpack.c.l.b16 %v379
        %v523 = vunpack.c.l.b16 %v380
        %v524 = vunpack.c.l.b16 %v381
        %v525 = vunpack.c.l.b16 %v382
        %v526 = vunpack.c.l.b16 %v383
        %v527 = vunpack.c.l.b16 %v384
        %v528 = vunpack.c.l.b16 %v385
        %v529 = vunpack.c.l.b16 %v386
        %v530 = vunpack.c.l.b16 %v387
        %v531 = vunpack.c.l.b16 %v388
        %v532 = vunpack.c.l.b16 %v389
        %v533 = vunpack.c.l.b16 %v390
        %v534 = vunpack.c.l.b16 %v391
        %v535 = vunpack.c.l.b16 %v392
        %v536 = vunpack.c.l.b16 %v393
        %v537 = vunpack.c.l.b16 %v394
        %v538 = vunpack.c.l.b16 %v395
        %v539 = vunpack.c.l.b16 %v396
        %v540 = vunpack.c.l.b16 %v397
        %v541 = vunpack.c.l.b16 %v398
        %v542 = vunpack.c.l.b16 %v399
        %v543 = vunpack.c.l.b16 %v400
        %v544 = vunpack.c.l.b16 %v401
        %v545 = vunpack.c.l.b16 %v402
        %v546 = vunpack.c.l.b16 %v403
        %v547 = vunpack.c.l.b16 %v404
        %v548 = vunpack.c.l.b16 %v405
        %v549 = vunpack.c.l.b16 %v406
        %v550 = vunpack.c.l.b16 %v407
        %v551 = vunpack.c.l.b16 %v408
        %v552 = vunpack.c.l.b16 %v409
        %v553 = vunpack.c.l.b16 %v410
        %v554 = vunpack.c.l.b16 %v411
        %v555 = vunpack.c.l.b16 %v412
        %v556 = vunpack.c.l.b16 %v413
        %v557 = vunpack.c.l.b16 %v414
        %v558 = vunpack.c.l.b16 %v415
        %v559 = vunpack.c.l.b16 %v416
        %v560 = vunpack.c.l.b16 %v417
        %v561 = vunpack.c.l.b16 %v418
        %v562 = vunpack.c.l.b16 %v419
        %v563 = vunpack.c.l.b16 %v420
        %v564 = vunpack.c.l.b16 %v421
        %v565 = vunpack.c.l.b16 %v422
        %v566 = vunpack.c.l.b16 %v423
        %v567 = vunpack.c.l.b16 %v424
        %v568 = vunpack.c.l.b16 %v425
        %v569 = vunpack.c.l.b16 %v426
        %v570 = vpack.c.b16 %v507, %v506
        %v571 = vpack.c.b16 %v509, %v508
        %v572 = vpack.c.b16 %v511, %v510
        %v573 = vpack.c.b16 %v513, %v512
        %v574 = vpack.c.b16 %v515, %v514
        %v575 = vpack.c.b16 %v517, %v516
        %v576 = vpack.c.b16 %v519, %v518
        %v577 = vpack.c.b16 %v521, %v520
        %v578 = vpack.c.b16 %v523, %v522
        %v579 = vpack.c.b16 %v525, %v524
        %v580 = vpack.c.b16 %v527, %v526
        %v581 = vpack.c.b16 %v529, %v528
        %v582 = vpack.c.b16 %v531, %v530
        %v583 = vpack.c.b16 %v533, %v532
        %v584 = vpack.c.b16 %v535, %v534
        %v585 = vpack.c.b16 %v537, %v536
        %v586 = vpack.c.b16 %v539, %v538
        %v587 = vpack.c.b16 %v541, %v540
        %v588 = vpack.c.b16 %v543, %v542
        %v589 = vpack.c.b16 %v545, %v544
        %v590 = vpack.c.b16 %v547, %v546
        %v591 = vpack.c.b16 %v549, %v548
        %v592 = vpack.c.b16 %v551, %v550
        %v593 = vpack.c.b16 %v553, %v552
        %v594 = vpack.c.b16 %v555, %v554
        %v595 = vpack.c.b16 %v557, %v556
        %v596 = vpack.c.b16 %v559, %v558
        %v597 = vpack.c.b16 %v561, %v560
        %v598 = vpack.c.b16 %v563, %v562
        %v599 = vpack.c.b16 %v565, %v564
        %v600 = vpack.c.b16 %v567, %v566
        %v601 = vpack.c.b16 %v569, %v568
        %v610 = vunpack.c.l.b16 %v427
        %v611 = vunpack.c.l.b16 %v428
        %v612 = vunpack.c.l.b16 %v429
        %v613 = vunpack.c.l.b16 %v430
        %v614 = vunpack.c.l.b16 %v431
        %v615 = vunpack.c.l.b16 %v432
        %v616 = vunpack.c.l.b16 %v433
        %v617 = vunpack.c.l.b16 %v434
        %v618 = vpack.c.b16 %v611, %v610
        %v619 = vpack.c.b16 %v613, %v612
        %v620 = vpack.c.b16 %v615, %v614
        %v621 = vpack.c.b16 %v617, %v616
        %vm626 = vcmask 523264
        %v628 = vsel %vm626, %v570, 0
        %v631 = vsel %vm626, %v571, 0
        %v634 = vsel %vm626, %v572, 0
        %v637 = vsel %vm626, %v573, 0
        %v640 = vsel %vm626, %v574, 0
        %v643 = vsel %vm626, %v575, 0
        %v646 = vsel %vm626, %v576, 0
        %v649 = vsel %vm626, %v577, 0
        %v652 = vsel %vm626, %v578, 0
        %v655 = vsel %vm626, %v579, 0
        %v658 = vsel %vm626, %v580, 0
        %v661 = vsel %vm626, %v581, 0
        %v664 = vsel %vm626, %v582, 0
        %v667 = vsel %vm626, %v583, 0
        %v670 = vsel %vm626, %v584, 0
        %v673 = vsel %vm626, %v585, 0
        %v676 = vsel %vm626, %v586, 0
        %v679 = vsel %vm626, %v587, 0
        %v682 = vsel %vm626, %v588, 0
        %v685 = vsel %vm626, %v589, 0
        %v688 = vsel %vm626, %v590, 0
        %v691 = vsel %vm626, %v591, 0
        %v694 = vsel %vm626, %v592, 0
        %v697 = vsel %vm626, %v593, 0
        %v700 = vsel %vm626, %v594, 0
        %v703 = vsel %vm626, %v595, 0
        %v706 = vsel %vm626, %v596, 0
        %v709 = vsel %vm626, %v597, 0
        %v712 = vsel %vm626, %v598, 0
        %v715 = vsel %vm626, %v599, 0
        %v718 = vsel %vm626, %v600, 0
        %v721 = vsel %vm626, %v601, 0
        %723 = vmatprep.subr.bf16.mxu0 0
        %724 = vmatpush1.bf16.msra.mxu0 %v618
        %725 = vmatprep.subr.bf16.mxu0 0
        %726 = vmatpush1.bf16.msra.mxu0 %v619
        %727 = vmatprep.subr.bf16.mxu0 0
        %728 = vmatpush1.bf16.msra.mxu0 %v620
        %729 = vmatprep.subr.bf16.mxu0 0
        %730 = vmatpush1.bf16.msra.mxu0 %v621
        %731 = vmatprep.subr.bf16.mxu0 0
        %732 = vmatpush1.bf16.msra.mxu0 0
        %733 = vmatprep.subr.bf16.mxu0 0
        %734 = vmatpush1.bf16.msra.mxu0 0
        %735 = vmatprep.subr.bf16.mxu0 0
        %736 = vmatpush1.bf16.msra.mxu0 0
        %737 = vmatprep.subr.bf16.mxu0 0
        %738 = vmatpush1.bf16.msra.mxu0 0
        %739 = vmatprep.subr.bf16.mxu0 0
        %740 = vmatpush1.bf16.msra.mxu0 0
        %741 = vmatprep.subr.bf16.mxu0 0
        %742 = vmatpush1.bf16.msra.mxu0 0
        %743 = vmatprep.subr.bf16.mxu0 0
        %744 = vmatpush1.bf16.msra.mxu0 0
        %745 = vmatprep.subr.bf16.mxu0 0
        %746 = vmatpush1.bf16.msra.mxu0 0
        %747 = vmatprep.subr.bf16.mxu0 0
        %748 = vmatpush1.bf16.msra.mxu0 0
        %749 = vmatprep.subr.bf16.mxu0 0
        %750 = vmatpush1.bf16.msra.mxu0 0
        %751 = vmatprep.subr.bf16.mxu0 0
        %752 = vmatpush1.bf16.msra.mxu0 0
        %753 = vmatprep.subr.bf16.mxu0 0
        %754 = vmatpush1.bf16.msra.mxu0 0
        %755 = vmatprep.mubr.bf16.mxu0 0
        %756 = vmatmul.mubr.bf16.gmra.mrb[0].mxu0 %v628
        %v757 = vpop.f32.mrb[0].mxu0
        %v758 = vadd.f32 %v440, %v757
        %v759 = vpop.f32.mrb[0].mxu0
        %v760 = vpop.f32.mrb[0].mxu0
        %v761 = vadd.f32 %v440, %v760
        %v762 = vpop.f32.mrb[0].mxu0
        %763 = vmatprep.mubr.bf16.mxu0 0
        %764 = vmatmul.mubr.bf16.gmra.mrb[0].mxu0 %v631
        %v765 = vpop.f32.mrb[0].mxu0
        %v766 = vadd.f32 %v440, %v765
        %v767 = vpop.f32.mrb[0].mxu0
        %v768 = vpop.f32.mrb[0].mxu0
        %v769 = vadd.f32 %v440, %v768
        %v770 = vpop.f32.mrb[0].mxu0
        %771 = vmatprep.mubr.bf16.mxu0 0
        %772 = vmatmul.mubr.bf16.gmra.mrb[0].mxu0 %v634
        %v773 = vpop.f32.mrb[0].mxu0
        %v774 = vadd.f32 %v440, %v773
        %v775 = vpop.f32.mrb[0].mxu0
        %v776 = vpop.f32.mrb[0].mxu0
        %v777 = vadd.f32 %v440, %v776
        %v778 = vpop.f32.mrb[0].mxu0
        %779 = vmatprep.mubr.bf16.mxu0 0
        %780 = vmatmul.mubr.bf16.gmra.mrb[0].mxu0 %v637
        %v781 = vpop.f32.mrb[0].mxu0
        %v782 = vadd.f32 %v440, %v781
        %v783 = vpop.f32.mrb[0].mxu0
        %v784 = vpop.f32.mrb[0].mxu0
        %v785 = vadd.f32 %v440, %v784
        %v786 = vpop.f32.mrb[0].mxu0
        %787 = vmatprep.mubr.bf16.mxu0 0
        %788 = vmatmul.mubr.bf16.gmra.mrb[0].mxu0 %v640
        %v789 = vpop.f32.mrb[0].mxu0
        %v790 = vadd.f32 %v440, %v789
        %v791 = vpop.f32.mrb[0].mxu0
        %v792 = vpop.f32.mrb[0].mxu0
        %v793 = vadd.f32 %v440, %v792
        %v794 = vpop.f32.mrb[0].mxu0
        %795 = vmatprep.mubr.bf16.mxu0 0
        %796 = vmatmul.mubr.bf16.gmra.mrb[0].mxu0 %v643
        %v797 = vpop.f32.mrb[0].mxu0
        %v798 = vadd.f32 %v440, %v797
        %v799 = vpop.f32.mrb[0].mxu0
        %v800 = vpop.f32.mrb[0].mxu0
        %v801 = vadd.f32 %v440, %v800
        %v802 = vpop.f32.mrb[0].mxu0
        %803 = vmatprep.mubr.bf16.mxu0 0
        %804 = vmatmul.mubr.bf16.gmra.mrb[0].mxu0 %v646
        %v805 = vpop.f32.mrb[0].mxu0
        %v806 = vadd.f32 %v440, %v805
        %v807 = vpop.f32.mrb[0].mxu0
        %v808 = vpop.f32.mrb[0].mxu0
        %v809 = vadd.f32 %v440, %v808
        %v810 = vpop.f32.mrb[0].mxu0
        %811 = vmatprep.mubr.bf16.mxu0 0
        %812 = vmatmul.mubr.bf16.gmra.mrb[0].mxu0 %v649
        %v813 = vpop.f32.mrb[0].mxu0
        %v814 = vadd.f32 %v440, %v813
        %v815 = vpop.f32.mrb[0].mxu0
        %v816 = vpop.f32.mrb[0].mxu0
        %v817 = vadd.f32 %v440, %v816
        %v818 = vpop.f32.mrb[0].mxu0
        %819 = vmatprep.mubr.bf16.mxu0 0
        %820 = vmatmul.mubr.bf16.gmra.mrb[0].mxu0 %v652
        %v821 = vpop.f32.mrb[0].mxu0
        %v822 = vadd.f32 %v440, %v821
        %v823 = vpop.f32.mrb[0].mxu0
        %v824 = vpop.f32.mrb[0].mxu0
        %v825 = vadd.f32 %v440, %v824
        %v826 = vpop.f32.mrb[0].mxu0
        %827 = vmatprep.mubr.bf16.mxu0 0
        %828 = vmatmul.mubr.bf16.gmra.mrb[0].mxu0 %v655
        %v829 = vpop.f32.mrb[0].mxu0
        %v830 = vadd.f32 %v440, %v829
        %v831 = vpop.f32.mrb[0].mxu0
        %v832 = vpop.f32.mrb[0].mxu0
        %v833 = vadd.f32 %v440, %v832
        %v834 = vpop.f32.mrb[0].mxu0
        %835 = vmatprep.mubr.bf16.mxu0 0
        %836 = vmatmul.mubr.bf16.gmra.mrb[0].mxu0 %v658
        %v837 = vpop.f32.mrb[0].mxu0
        %v838 = vadd.f32 %v440, %v837
        %v839 = vpop.f32.mrb[0].mxu0
        %v840 = vpop.f32.mrb[0].mxu0
        %v841 = vadd.f32 %v440, %v840
        %v842 = vpop.f32.mrb[0].mxu0
        %843 = vmatprep.mubr.bf16.mxu0 0
        %844 = vmatmul.mubr.bf16.gmra.mrb[0].mxu0 %v661
        %v845 = vpop.f32.mrb[0].mxu0
        %v846 = vadd.f32 %v440, %v845
        %v847 = vpop.f32.mrb[0].mxu0
        %v848 = vpop.f32.mrb[0].mxu0
        %v849 = vadd.f32 %v440, %v848
        %v850 = vpop.f32.mrb[0].mxu0
        %851 = vmatprep.mubr.bf16.mxu0 0
        %852 = vmatmul.mubr.bf16.gmra.mrb[0].mxu0 %v664
        %v853 = vpop.f32.mrb[0].mxu0
        %v854 = vadd.f32 %v440, %v853
        %v855 = vpop.f32.mrb[0].mxu0
        %v856 = vpop.f32.mrb[0].mxu0
        %v857 = vadd.f32 %v440, %v856
        %v858 = vpop.f32.mrb[0].mxu0
        %859 = vmatprep.mubr.bf16.mxu0 0
        %860 = vmatmul.mubr.bf16.gmra.mrb[0].mxu0 %v667
        %v861 = vpop.f32.mrb[0].mxu0
        %v862 = vadd.f32 %v440, %v861
        %v863 = vpop.f32.mrb[0].mxu0
        %v864 = vpop.f32.mrb[0].mxu0
        %v865 = vadd.f32 %v440, %v864
        %v866 = vpop.f32.mrb[0].mxu0
        %867 = vmatprep.mubr.bf16.mxu0 0
        %868 = vmatmul.mubr.bf16.gmra.mrb[0].mxu0 %v670
        %v869 = vpop.f32.mrb[0].mxu0
        %v870 = vadd.f32 %v440, %v869
        %v871 = vpop.f32.mrb[0].mxu0
        %v872 = vpop.f32.mrb[0].mxu0
        %v873 = vadd.f32 %v440, %v872
        %v874 = vpop.f32.mrb[0].mxu0
        %875 = vmatprep.mubr.bf16.mxu0 0
        %876 = vmatmul.mubr.bf16.gmra.mrb[0].mxu0 %v673
        %v877 = vpop.f32.mrb[0].mxu0
        %v878 = vadd.f32 %v440, %v877
        %v879 = vpop.f32.mrb[0].mxu0
        %v880 = vpop.f32.mrb[0].mxu0
        %v881 = vadd.f32 %v440, %v880
        %v882 = vpop.f32.mrb[0].mxu0
        %883 = vmatprep.mubr.bf16.mxu0 0
        %884 = vmatmul.mubr.bf16.gmra.mrb[0].mxu0 %v676
        %v885 = vpop.f32.mrb[0].mxu0
        %v886 = vadd.f32 %v440, %v885
        %v887 = vpop.f32.mrb[0].mxu0
        %v888 = vpop.f32.mrb[0].mxu0
        %v889 = vadd.f32 %v440, %v888
        %v890 = vpop.f32.mrb[0].mxu0
        %891 = vmatprep.mubr.bf16.mxu0 0
        %892 = vmatmul.mubr.bf16.gmra.mrb[0].mxu0 %v679
        %v893 = vpop.f32.mrb[0].mxu0
        %v894 = vadd.f32 %v440, %v893
        %v895 = vpop.f32.mrb[0].mxu0
        %v896 = vpop.f32.mrb[0].mxu0
        %v897 = vadd.f32 %v440, %v896
        %v898 = vpop.f32.mrb[0].mxu0
        %899 = vmatprep.mubr.bf16.mxu0 0
        %900 = vmatmul.mubr.bf16.gmra.mrb[0].mxu0 %v682
        %v901 = vpop.f32.mrb[0].mxu0
        %v902 = vadd.f32 %v440, %v901
        %v903 = vpop.f32.mrb[0].mxu0
        %v904 = vpop.f32.mrb[0].mxu0
        %v905 = vadd.f32 %v440, %v904
        %v906 = vpop.f32.mrb[0].mxu0
        %907 = vmatprep.mubr.bf16.mxu0 0
        %908 = vmatmul.mubr.bf16.gmra.mrb[0].mxu0 %v685
        %v909 = vpop.f32.mrb[0].mxu0
        %v910 = vadd.f32 %v440, %v909
        %v911 = vpop.f32.mrb[0].mxu0
        %v912 = vpop.f32.mrb[0].mxu0
        %v913 = vadd.f32 %v440, %v912
        %v914 = vpop.f32.mrb[0].mxu0
        %915 = vmatprep.mubr.bf16.mxu0 0
        %916 = vmatmul.mubr.bf16.gmra.mrb[0].mxu0 %v688
        %v917 = vpop.f32.mrb[0].mxu0
        %v918 = vadd.f32 %v440, %v917
        %v919 = vpop.f32.mrb[0].mxu0
        %v920 = vpop.f32.mrb[0].mxu0
        %v921 = vadd.f32 %v440, %v920
        %v922 = vpop.f32.mrb[0].mxu0
        %923 = vmatprep.mubr.bf16.mxu0 0
        %924 = vmatmul.mubr.bf16.gmra.mrb[0].mxu0 %v691
        %v925 = vpop.f32.mrb[0].mxu0
        %v926 = vadd.f32 %v440, %v925
        %v927 = vpop.f32.mrb[0].mxu0
        %v928 = vpop.f32.mrb[0].mxu0
        %v929 = vadd.f32 %v440, %v928
        %v930 = vpop.f32.mrb[0].mxu0
        %931 = vmatprep.mubr.bf16.mxu0 0
        %932 = vmatmul.mubr.bf16.gmra.mrb[0].mxu0 %v694
        %v933 = vpop.f32.mrb[0].mxu0
        %v934 = vadd.f32 %v440, %v933
        %v935 = vpop.f32.mrb[0].mxu0
        %v936 = vpop.f32.mrb[0].mxu0
        %v937 = vadd.f32 %v440, %v936
        %v938 = vpop.f32.mrb[0].mxu0
        %939 = vmatprep.mubr.bf16.mxu0 0
        %940 = vmatmul.mubr.bf16.gmra.mrb[0].mxu0 %v697
        %v941 = vpop.f32.mrb[0].mxu0
        %v942 = vadd.f32 %v440, %v941
        %v943 = vpop.f32.mrb[0].mxu0
        %v944 = vpop.f32.mrb[0].mxu0
        %v945 = vadd.f32 %v440, %v944
        %v946 = vpop.f32.mrb[0].mxu0
        %947 = vmatprep.mubr.bf16.mxu0 0
        %948 = vmatmul.mubr.bf16.gmra.mrb[0].mxu0 %v700
        %v949 = vpop.f32.mrb[0].mxu0
        %v950 = vadd.f32 %v440, %v949
        %v951 = vpop.f32.mrb[0].mxu0
        %v952 = vpop.f32.mrb[0].mxu0
        %v953 = vadd.f32 %v440, %v952
        %v954 = vpop.f32.mrb[0].mxu0
        %955 = vmatprep.mubr.bf16.mxu0 0
        %956 = vmatmul.mubr.bf16.gmra.mrb[0].mxu0 %v703
        %v957 = vpop.f32.mrb[0].mxu0
        %v958 = vadd.f32 %v440, %v957
        %v959 = vpop.f32.mrb[0].mxu0
        %v960 = vpop.f32.mrb[0].mxu0
        %v961 = vadd.f32 %v440, %v960
        %v962 = vpop.f32.mrb[0].mxu0
        %963 = vmatprep.mubr.bf16.mxu0 0
        %964 = vmatmul.mubr.bf16.gmra.mrb[0].mxu0 %v706
        %v965 = vpop.f32.mrb[0].mxu0
        %v966 = vadd.f32 %v440, %v965
        %v967 = vpop.f32.mrb[0].mxu0
        %v968 = vpop.f32.mrb[0].mxu0
        %v969 = vadd.f32 %v440, %v968
        %v970 = vpop.f32.mrb[0].mxu0
        %971 = vmatprep.mubr.bf16.mxu0 0
        %972 = vmatmul.mubr.bf16.gmra.mrb[0].mxu0 %v709
        %v973 = vpop.f32.mrb[0].mxu0
        %v974 = vadd.f32 %v440, %v973
        %v975 = vpop.f32.mrb[0].mxu0
        %v976 = vpop.f32.mrb[0].mxu0
        %v977 = vadd.f32 %v440, %v976
        %v978 = vpop.f32.mrb[0].mxu0
        %979 = vmatprep.mubr.bf16.mxu0 0
        %980 = vmatmul.mubr.bf16.gmra.mrb[0].mxu0 %v712
        %v981 = vpop.f32.mrb[0].mxu0
        %v982 = vadd.f32 %v440, %v981
        %v983 = vpop.f32.mrb[0].mxu0
        %v984 = vpop.f32.mrb[0].mxu0
        %v985 = vadd.f32 %v440, %v984
        %v986 = vpop.f32.mrb[0].mxu0
        %987 = vmatprep.mubr.bf16.mxu0 0
        %988 = vmatmul.mubr.bf16.gmra.mrb[0].mxu0 %v715
        %v989 = vpop.f32.mrb[0].mxu0
        %v990 = vadd.f32 %v440, %v989
        %v991 = vpop.f32.mrb[0].mxu0
        %v992 = vpop.f32.mrb[0].mxu0
        %v993 = vadd.f32 %v440, %v992
        %v994 = vpop.f32.mrb[0].mxu0
        %995 = vmatprep.mubr.bf16.mxu0 0
        %996 = vmatmul.mubr.bf16.gmra.mrb[0].mxu0 %v718
        %v997 = vpop.f32.mrb[0].mxu0
        %v998 = vadd.f32 %v440, %v997
        %v999 = vpop.f32.mrb[0].mxu0
        %v1000 = vpop.f32.mrb[0].mxu0
        %v1001 = vadd.f32 %v440, %v1000
        %v1002 = vpop.f32.mrb[0].mxu0
        %1003 = vmatprep.mubr.bf16.mxu0 0
        %1004 = vmatmul.mubr.bf16.gmra.mrb[0].mxu0 %v721
        %v1005 = vpop.f32.mrb[0].mxu0
        %v1006 = vadd.f32 %v440, %v1005
        %v1007 = vpop.f32.mrb[0].mxu0
        %v1008 = vpop.f32.mrb[0].mxu0
        %v1009 = vadd.f32 %v440, %v1008
        %v1010 = vpop.f32.mrb[0].mxu0
        %1011 = vdwg.mxu0
        %v1012 = vld [vmem:[%s4] sm:$0x1]
        %v1014 = vlaneseq
        %v1015 = vshrl.u32 %v1014, 7
        %v1016 = vsub.s32 0, %v1015
        %v1017 = vrot.slane %v1012, %v1016
        %v1019 = vmul.f32 %v758, %v1017
        %v1020 = vmul.f32 %v761, %v1017
        %v1021 = vmul.f32 %v766, %v1017
        %v1022 = vmul.f32 %v769, %v1017
        %v1023 = vmul.f32 %v774, %v1017
        %v1024 = vmul.f32 %v777, %v1017
        %v1025 = vmul.f32 %v782, %v1017
        %v1026 = vmul.f32 %v785, %v1017
        %v1027 = vmul.f32 %v790, %v1017
        %v1028 = vmul.f32 %v793, %v1017
        %v1029 = vmul.f32 %v798, %v1017
        %v1030 = vmul.f32 %v801, %v1017
        %v1031 = vmul.f32 %v806, %v1017
        %v1032 = vmul.f32 %v809, %v1017
        %v1033 = vmul.f32 %v814, %v1017
        %v1034 = vmul.f32 %v817, %v1017
        %v1035 = vmul.f32 %v822, %v1017
        %v1036 = vmul.f32 %v825, %v1017
        %v1037 = vmul.f32 %v830, %v1017
        %v1038 = vmul.f32 %v833, %v1017
        %v1039 = vmul.f32 %v838, %v1017
        %v1040 = vmul.f32 %v841, %v1017
        %v1041 = vmul.f32 %v846, %v1017
        %v1042 = vmul.f32 %v849, %v1017
        %v1043 = vmul.f32 %v854, %v1017
        %v1044 = vmul.f32 %v857, %v1017
        %v1045 = vmul.f32 %v862, %v1017
        %v1046 = vmul.f32 %v865, %v1017
        %v1047 = vmul.f32 %v870, %v1017
        %v1048 = vmul.f32 %v873, %v1017
        %v1049 = vmul.f32 %v878, %v1017
        %v1050 = vmul.f32 %v881, %v1017
        %v1051 = vmul.f32 %v886, %v1017
        %v1052 = vmul.f32 %v889, %v1017
        %v1053 = vmul.f32 %v894, %v1017
        %v1054 = vmul.f32 %v897, %v1017
        %v1055 = vmul.f32 %v902, %v1017
        %v1056 = vmul.f32 %v905, %v1017
        %v1057 = vmul.f32 %v910, %v1017
        %v1058 = vmul.f32 %v913, %v1017
        %v1059 = vmul.f32 %v918, %v1017
        %v1060 = vmul.f32 %v921, %v1017
        %v1061 = vmul.f32 %v926, %v1017
        %v1062 = vmul.f32 %v929, %v1017
        %v1063 = vmul.f32 %v934, %v1017
        %v1064 = vmul.f32 %v937, %v1017
        %v1065 = vmul.f32 %v942, %v1017
        %v1066 = vmul.f32 %v945, %v1017
        %v1067 = vmul.f32 %v950, %v1017
        %v1068 = vmul.f32 %v953, %v1017
        %v1069 = vmul.f32 %v958, %v1017
        %v1070 = vmul.f32 %v961, %v1017
        %v1071 = vmul.f32 %v966, %v1017
        %v1072 = vmul.f32 %v969, %v1017
        %v1073 = vmul.f32 %v974, %v1017
        %v1074 = vmul.f32 %v977, %v1017
        %v1075 = vmul.f32 %v982, %v1017
        %v1076 = vmul.f32 %v985, %v1017
        %v1077 = vmul.f32 %v990, %v1017
        %v1078 = vmul.f32 %v993, %v1017
        %v1079 = vmul.f32 %v998, %v1017
        %v1080 = vmul.f32 %v1001, %v1017
        %v1081 = vmul.f32 %v1006, %v1017
        %v1082 = vmul.f32 %v1009, %v1017
        %v1083 = vsel %vm626, %v1019, 0.0
        %1084 = vadd.xlane.f32.xlu0 %v1083
        %v1085 = vpop.xlane.xlu0 %1084
        %v1086 = vsel %vm626, %v1020, 0.0
        %1087 = vadd.xlane.f32.xlu0 %v1086
        %v1088 = vpop.xlane.xlu0 %1087
        %v1089 = vsel %vm626, %v1021, 0.0
        %1090 = vadd.xlane.f32.xlu0 %v1089
        %v1091 = vpop.xlane.xlu0 %1090
        %v1092 = vsel %vm626, %v1022, 0.0
        %1093 = vadd.xlane.f32.xlu0 %v1092
        %v1094 = vpop.xlane.xlu0 %1093
        %v1095 = vsel %vm626, %v1023, 0.0
        %1096 = vadd.xlane.f32.xlu0 %v1095
        %v1097 = vpop.xlane.xlu0 %1096
        %v1098 = vsel %vm626, %v1024, 0.0
        %1099 = vadd.xlane.f32.xlu0 %v1098
        %v1100 = vpop.xlane.xlu0 %1099
        %v1101 = vsel %vm626, %v1025, 0.0
        %1102 = vadd.xlane.f32.xlu0 %v1101
        %v1103 = vpop.xlane.xlu0 %1102
        %v1104 = vsel %vm626, %v1026, 0.0
        %1105 = vadd.xlane.f32.xlu0 %v1104
        %v1106 = vpop.xlane.xlu0 %1105
        %v1107 = vsel %vm626, %v1027, 0.0
        %1108 = vadd.xlane.f32.xlu0 %v1107
        %v1109 = vpop.xlane.xlu0 %1108
        %v1110 = vsel %vm626, %v1028, 0.0
        %1111 = vadd.xlane.f32.xlu0 %v1110
        %v1112 = vpop.xlane.xlu0 %1111
        %v1113 = vsel %vm626, %v1029, 0.0
        %1114 = vadd.xlane.f32.xlu0 %v1113
        %v1115 = vpop.xlane.xlu0 %1114
        %v1116 = vsel %vm626, %v1030, 0.0
        %1117 = vadd.xlane.f32.xlu0 %v1116
        %v1118 = vpop.xlane.xlu0 %1117
        %v1119 = vsel %vm626, %v1031, 0.0
        %1120 = vadd.xlane.f32.xlu0 %v1119
        %v1121 = vpop.xlane.xlu0 %1120
        %v1122 = vsel %vm626, %v1032, 0.0
        %1123 = vadd.xlane.f32.xlu0 %v1122
        %v1124 = vpop.xlane.xlu0 %1123
        %v1125 = vsel %vm626, %v1033, 0.0
        %1126 = vadd.xlane.f32.xlu0 %v1125
        %v1127 = vpop.xlane.xlu0 %1126
        %v1128 = vsel %vm626, %v1034, 0.0
        %1129 = vadd.xlane.f32.xlu0 %v1128
        %v1130 = vpop.xlane.xlu0 %1129
        %v1131 = vsel %vm626, %v1035, 0.0
        %1132 = vadd.xlane.f32.xlu0 %v1131
        %v1133 = vpop.xlane.xlu0 %1132
        %v1134 = vsel %vm626, %v1036, 0.0
        %1135 = vadd.xlane.f32.xlu0 %v1134
        %v1136 = vpop.xlane.xlu0 %1135
        %v1137 = vsel %vm626, %v1037, 0.0
        %1138 = vadd.xlane.f32.xlu0 %v1137
        %v1139 = vpop.xlane.xlu0 %1138
        %v1140 = vsel %vm626, %v1038, 0.0
        %1141 = vadd.xlane.f32.xlu0 %v1140
        %v1142 = vpop.xlane.xlu0 %1141
        %v1143 = vsel %vm626, %v1039, 0.0
        %1144 = vadd.xlane.f32.xlu0 %v1143
        %v1145 = vpop.xlane.xlu0 %1144
        %v1146 = vsel %vm626, %v1040, 0.0
        %1147 = vadd.xlane.f32.xlu0 %v1146
        %v1148 = vpop.xlane.xlu0 %1147
        %v1149 = vsel %vm626, %v1041, 0.0
        %1150 = vadd.xlane.f32.xlu0 %v1149
        %v1151 = vpop.xlane.xlu0 %1150
        %v1152 = vsel %vm626, %v1042, 0.0
        %1153 = vadd.xlane.f32.xlu0 %v1152
        %v1154 = vpop.xlane.xlu0 %1153
        %v1155 = vsel %vm626, %v1043, 0.0
        %1156 = vadd.xlane.f32.xlu0 %v1155
        %v1157 = vpop.xlane.xlu0 %1156
        %v1158 = vsel %vm626, %v1044, 0.0
        %1159 = vadd.xlane.f32.xlu0 %v1158
        %v1160 = vpop.xlane.xlu0 %1159
        %v1161 = vsel %vm626, %v1045, 0.0
        %1162 = vadd.xlane.f32.xlu0 %v1161
        %v1163 = vpop.xlane.xlu0 %1162
        %v1164 = vsel %vm626, %v1046, 0.0
        %1165 = vadd.xlane.f32.xlu0 %v1164
        %v1166 = vpop.xlane.xlu0 %1165
        %v1167 = vsel %vm626, %v1047, 0.0
        %1168 = vadd.xlane.f32.xlu0 %v1167
        %v1169 = vpop.xlane.xlu0 %1168
        %v1170 = vsel %vm626, %v1048, 0.0
        %1171 = vadd.xlane.f32.xlu0 %v1170
        %v1172 = vpop.xlane.xlu0 %1171
        %v1173 = vsel %vm626, %v1049, 0.0
        %1174 = vadd.xlane.f32.xlu0 %v1173
        %v1175 = vpop.xlane.xlu0 %1174
        %v1176 = vsel %vm626, %v1050, 0.0
        %1177 = vadd.xlane.f32.xlu0 %v1176
        %v1178 = vpop.xlane.xlu0 %1177
        %v1179 = vsel %vm626, %v1051, 0.0
        %1180 = vadd.xlane.f32.xlu0 %v1179
        %v1181 = vpop.xlane.xlu0 %1180
        %v1182 = vsel %vm626, %v1052, 0.0
        %1183 = vadd.xlane.f32.xlu0 %v1182
        %v1184 = vpop.xlane.xlu0 %1183
        %v1185 = vsel %vm626, %v1053, 0.0
        %1186 = vadd.xlane.f32.xlu0 %v1185
        %v1187 = vpop.xlane.xlu0 %1186
        %v1188 = vsel %vm626, %v1054, 0.0
        %1189 = vadd.xlane.f32.xlu0 %v1188
        %v1190 = vpop.xlane.xlu0 %1189
        %v1191 = vsel %vm626, %v1055, 0.0
        %1192 = vadd.xlane.f32.xlu0 %v1191
        %v1193 = vpop.xlane.xlu0 %1192
        %v1194 = vsel %vm626, %v1056, 0.0
        %1195 = vadd.xlane.f32.xlu0 %v1194
        %v1196 = vpop.xlane.xlu0 %1195
        %v1197 = vsel %vm626, %v1057, 0.0
        %1198 = vadd.xlane.f32.xlu0 %v1197
        %v1199 = vpop.xlane.xlu0 %1198
        %v1200 = vsel %vm626, %v1058, 0.0
        %1201 = vadd.xlane.f32.xlu0 %v1200
        %v1202 = vpop.xlane.xlu0 %1201
        %v1203 = vsel %vm626, %v1059, 0.0
        %1204 = vadd.xlane.f32.xlu0 %v1203
        %v1205 = vpop.xlane.xlu0 %1204
        %v1206 = vsel %vm626, %v1060, 0.0
        %1207 = vadd.xlane.f32.xlu0 %v1206
        %v1208 = vpop.xlane.xlu0 %1207
        %v1209 = vsel %vm626, %v1061, 0.0
        %1210 = vadd.xlane.f32.xlu0 %v1209
        %v1211 = vpop.xlane.xlu0 %1210
        %v1212 = vsel %vm626, %v1062, 0.0
        %1213 = vadd.xlane.f32.xlu0 %v1212
        %v1214 = vpop.xlane.xlu0 %1213
        %v1215 = vsel %vm626, %v1063, 0.0
        %1216 = vadd.xlane.f32.xlu0 %v1215
        %v1217 = vpop.xlane.xlu0 %1216
        %v1218 = vsel %vm626, %v1064, 0.0
        %1219 = vadd.xlane.f32.xlu0 %v1218
        %v1220 = vpop.xlane.xlu0 %1219
        %v1221 = vsel %vm626, %v1065, 0.0
        %1222 = vadd.xlane.f32.xlu0 %v1221
        %v1223 = vpop.xlane.xlu0 %1222
        %v1224 = vsel %vm626, %v1066, 0.0
        %1225 = vadd.xlane.f32.xlu0 %v1224
        %v1226 = vpop.xlane.xlu0 %1225
        %v1227 = vsel %vm626, %v1067, 0.0
        %1228 = vadd.xlane.f32.xlu0 %v1227
        %v1229 = vpop.xlane.xlu0 %1228
        %v1230 = vsel %vm626, %v1068, 0.0
        %1231 = vadd.xlane.f32.xlu0 %v1230
        %v1232 = vpop.xlane.xlu0 %1231
        %v1233 = vsel %vm626, %v1069, 0.0
        %1234 = vadd.xlane.f32.xlu0 %v1233
        %v1235 = vpop.xlane.xlu0 %1234
        %v1236 = vsel %vm626, %v1070, 0.0
        %1237 = vadd.xlane.f32.xlu0 %v1236
        %v1238 = vpop.xlane.xlu0 %1237
        %v1239 = vsel %vm626, %v1071, 0.0
        %1240 = vadd.xlane.f32.xlu0 %v1239
        %v1241 = vpop.xlane.xlu0 %1240
        %v1242 = vsel %vm626, %v1072, 0.0
        %1243 = vadd.xlane.f32.xlu0 %v1242
        %v1244 = vpop.xlane.xlu0 %1243
        %v1245 = vsel %vm626, %v1073, 0.0
        %1246 = vadd.xlane.f32.xlu0 %v1245
        %v1247 = vpop.xlane.xlu0 %1246
        %v1248 = vsel %vm626, %v1074, 0.0
        %1249 = vadd.xlane.f32.xlu0 %v1248
        %v1250 = vpop.xlane.xlu0 %1249
        %v1251 = vsel %vm626, %v1075, 0.0
        %1252 = vadd.xlane.f32.xlu0 %v1251
        %v1253 = vpop.xlane.xlu0 %1252
        %v1254 = vsel %vm626, %v1076, 0.0
        %1255 = vadd.xlane.f32.xlu0 %v1254
        %v1256 = vpop.xlane.xlu0 %1255
        %v1257 = vsel %vm626, %v1077, 0.0
        %1258 = vadd.xlane.f32.xlu0 %v1257
        %v1259 = vpop.xlane.xlu0 %1258
        %v1260 = vsel %vm626, %v1078, 0.0
        %1261 = vadd.xlane.f32.xlu0 %v1260
        %v1262 = vpop.xlane.xlu0 %1261
        %v1263 = vsel %vm626, %v1079, 0.0
        %1264 = vadd.xlane.f32.xlu0 %v1263
        %v1265 = vpop.xlane.xlu0 %1264
        %v1266 = vsel %vm626, %v1080, 0.0
        %1267 = vadd.xlane.f32.xlu0 %v1266
        %v1268 = vpop.xlane.xlu0 %1267
        %v1269 = vsel %vm626, %v1081, 0.0
        %1270 = vadd.xlane.f32.xlu0 %v1269
        %v1271 = vpop.xlane.xlu0 %1270
        %v1272 = vsel %vm626, %v1082, 0.0
        %1273 = vadd.xlane.f32.xlu0 %v1272
        %v1274 = vpop.xlane.xlu0 %1273
        %v1275 = vld [vmem:[%s359] sm:$0xff]
        %v1276 = vld [vmem:[%s359 + $0x8] sm:$0xff]
        %v1277 = vld [vmem:[%s359 + $0x10] sm:$0xff]
        %v1278 = vld [vmem:[%s359 + $0x18] sm:$0xff]
        %v1279 = vld [vmem:[%s359 + $0x20] sm:$0xff]
        %v1280 = vld [vmem:[%s359 + $0x28] sm:$0xff]
        %v1281 = vld [vmem:[%s359 + $0x30] sm:$0xff]
        %v1282 = vld [vmem:[%s359 + $0x38] sm:$0xff]
        %v1283 = vld [vmem:[%s359 + $0x40] sm:$0xff]
        %v1284 = vld [vmem:[%s359 + $0x48] sm:$0xff]
        %v1285 = vld [vmem:[%s359 + $0x50] sm:$0xff]
        %v1286 = vld [vmem:[%s359 + $0x58] sm:$0xff]
        %v1287 = vld [vmem:[%s359 + $0x60] sm:$0xff]
        %v1288 = vld [vmem:[%s359 + $0x68] sm:$0xff]
        %v1289 = vld [vmem:[%s359 + $0x70] sm:$0xff]
        %v1290 = vld [vmem:[%s359 + $0x78] sm:$0xff]
        %v1291 = vld [vmem:[%s359 + $0x80] sm:$0xff]
        %v1292 = vld [vmem:[%s359 + $0x88] sm:$0xff]
        %v1293 = vld [vmem:[%s359 + $0x90] sm:$0xff]
        %v1294 = vld [vmem:[%s359 + $0x98] sm:$0xff]
        %v1295 = vld [vmem:[%s359 + $0xa0] sm:$0xff]
        %v1296 = vld [vmem:[%s359 + $0xa8] sm:$0xff]
        %v1297 = vld [vmem:[%s359 + $0xb0] sm:$0xff]
        %v1298 = vld [vmem:[%s359 + $0xb8] sm:$0xff]
        %v1299 = vld [vmem:[%s359 + $0xc0] sm:$0xff]
        %v1300 = vld [vmem:[%s359 + $0xc8] sm:$0xff]
        %v1301 = vld [vmem:[%s359 + $0xd0] sm:$0xff]
        %v1302 = vld [vmem:[%s359 + $0xd8] sm:$0xff]
        %v1303 = vld [vmem:[%s359 + $0xe0] sm:$0xff]
        %v1304 = vld [vmem:[%s359 + $0xe8] sm:$0xff]
        %v1305 = vld [vmem:[%s359 + $0xf0] sm:$0xff]
        %v1306 = vld [vmem:[%s359 + $0xf8] sm:$0xff]
        %v1307 = vld [vmem:[%s359 + $0x100] sm:$0xff]
        %v1308 = vld [vmem:[%s359 + $0x108] sm:$0xff]
        %v1309 = vld [vmem:[%s359 + $0x110] sm:$0xff]
        %v1310 = vld [vmem:[%s359 + $0x118] sm:$0xff]
        %v1311 = vld [vmem:[%s359 + $0x120] sm:$0xff]
        %v1312 = vld [vmem:[%s359 + $0x128] sm:$0xff]
        %v1313 = vld [vmem:[%s359 + $0x130] sm:$0xff]
        %v1314 = vld [vmem:[%s359 + $0x138] sm:$0xff]
        %v1315 = vld [vmem:[%s359 + $0x140] sm:$0xff]
        %v1316 = vld [vmem:[%s359 + $0x148] sm:$0xff]
        %v1317 = vld [vmem:[%s359 + $0x150] sm:$0xff]
        %v1318 = vld [vmem:[%s359 + $0x158] sm:$0xff]
        %v1319 = vld [vmem:[%s359 + $0x160] sm:$0xff]
        %v1320 = vld [vmem:[%s359 + $0x168] sm:$0xff]
        %v1321 = vld [vmem:[%s359 + $0x170] sm:$0xff]
        %v1322 = vld [vmem:[%s359 + $0x178] sm:$0xff]
        %v1323 = vld [vmem:[%s359 + $0x180] sm:$0xff]
        %v1324 = vld [vmem:[%s359 + $0x188] sm:$0xff]
        %v1325 = vld [vmem:[%s359 + $0x190] sm:$0xff]
        %v1326 = vld [vmem:[%s359 + $0x198] sm:$0xff]
        %v1327 = vld [vmem:[%s359 + $0x1a0] sm:$0xff]
        %v1328 = vld [vmem:[%s359 + $0x1a8] sm:$0xff]
        %v1329 = vld [vmem:[%s359 + $0x1b0] sm:$0xff]
        %v1330 = vld [vmem:[%s359 + $0x1b8] sm:$0xff]
        %v1331 = vld [vmem:[%s359 + $0x1c0] sm:$0xff]
        %v1332 = vld [vmem:[%s359 + $0x1c8] sm:$0xff]
        %v1333 = vld [vmem:[%s359 + $0x1d0] sm:$0xff]
        %v1334 = vld [vmem:[%s359 + $0x1d8] sm:$0xff]
        %v1335 = vld [vmem:[%s359 + $0x1e0] sm:$0xff]
        %v1336 = vld [vmem:[%s359 + $0x1e8] sm:$0xff]
        %v1337 = vld [vmem:[%s359 + $0x1f0] sm:$0xff]
        %v1338 = vld [vmem:[%s359 + $0x1f8] sm:$0xff]
        %v1339 = vsub.f32 %v1275, 1.0
        %v1340 = vsub.f32 %v1276, 1.0
        %v1341 = vsub.f32 %v1277, 1.0
        %v1342 = vsub.f32 %v1278, 1.0
        %v1343 = vsub.f32 %v1279, 1.0
        %v1344 = vsub.f32 %v1280, 1.0
        %v1345 = vsub.f32 %v1281, 1.0
        %v1346 = vsub.f32 %v1282, 1.0
        %v1347 = vsub.f32 %v1283, 1.0
        %v1348 = vsub.f32 %v1284, 1.0
        %v1349 = vsub.f32 %v1285, 1.0
        %v1350 = vsub.f32 %v1286, 1.0
        %v1351 = vsub.f32 %v1287, 1.0
        %v1352 = vsub.f32 %v1288, 1.0
        %v1353 = vsub.f32 %v1289, 1.0
        %v1354 = vsub.f32 %v1290, 1.0
        %v1355 = vsub.f32 %v1291, 1.0
        %v1356 = vsub.f32 %v1292, 1.0
        %v1357 = vsub.f32 %v1293, 1.0
        %v1358 = vsub.f32 %v1294, 1.0
        %v1359 = vsub.f32 %v1295, 1.0
        %v1360 = vsub.f32 %v1296, 1.0
        %v1361 = vsub.f32 %v1297, 1.0
        %v1362 = vsub.f32 %v1298, 1.0
        %v1363 = vsub.f32 %v1299, 1.0
        %v1364 = vsub.f32 %v1300, 1.0
        %v1365 = vsub.f32 %v1301, 1.0
        %v1366 = vsub.f32 %v1302, 1.0
        %v1367 = vsub.f32 %v1303, 1.0
        %v1368 = vsub.f32 %v1304, 1.0
        %v1369 = vsub.f32 %v1305, 1.0
        %v1370 = vsub.f32 %v1306, 1.0
        %v1371 = vsub.f32 %v1307, 1.0
        %v1372 = vsub.f32 %v1308, 1.0
        %v1373 = vsub.f32 %v1309, 1.0
        %v1374 = vsub.f32 %v1310, 1.0
        %v1375 = vsub.f32 %v1311, 1.0
        %v1376 = vsub.f32 %v1312, 1.0
        %v1377 = vsub.f32 %v1313, 1.0
        %v1378 = vsub.f32 %v1314, 1.0
        %v1379 = vsub.f32 %v1315, 1.0
        %v1380 = vsub.f32 %v1316, 1.0
        %v1381 = vsub.f32 %v1317, 1.0
        %v1382 = vsub.f32 %v1318, 1.0
        %v1383 = vsub.f32 %v1319, 1.0
        %v1384 = vsub.f32 %v1320, 1.0
        %v1385 = vsub.f32 %v1321, 1.0
        %v1386 = vsub.f32 %v1322, 1.0
        %v1387 = vsub.f32 %v1323, 1.0
        %v1388 = vsub.f32 %v1324, 1.0
        %v1389 = vsub.f32 %v1325, 1.0
        %v1390 = vsub.f32 %v1326, 1.0
        %v1391 = vsub.f32 %v1327, 1.0
        %v1392 = vsub.f32 %v1328, 1.0
        %v1393 = vsub.f32 %v1329, 1.0
        %v1394 = vsub.f32 %v1330, 1.0
        %v1395 = vsub.f32 %v1331, 1.0
        %v1396 = vsub.f32 %v1332, 1.0
        %v1397 = vsub.f32 %v1333, 1.0
        %v1398 = vsub.f32 %v1334, 1.0
        %v1399 = vsub.f32 %v1335, 1.0
        %v1400 = vsub.f32 %v1336, 1.0
        %v1401 = vsub.f32 %v1337, 1.0
        %v1402 = vsub.f32 %v1338, 1.0
        %v1403 = vmul.f32 %v1339, 1e+09
        %v1404 = vmul.f32 %v1340, 1e+09
        %v1405 = vmul.f32 %v1341, 1e+09
        %v1406 = vmul.f32 %v1342, 1e+09
        %v1407 = vmul.f32 %v1343, 1e+09
        %v1408 = vmul.f32 %v1344, 1e+09
        %v1409 = vmul.f32 %v1345, 1e+09
        %v1410 = vmul.f32 %v1346, 1e+09
        %v1411 = vmul.f32 %v1347, 1e+09
        %v1412 = vmul.f32 %v1348, 1e+09
        %v1413 = vmul.f32 %v1349, 1e+09
        %v1414 = vmul.f32 %v1350, 1e+09
        %v1415 = vmul.f32 %v1351, 1e+09
        %v1416 = vmul.f32 %v1352, 1e+09
        %v1417 = vmul.f32 %v1353, 1e+09
        %v1418 = vmul.f32 %v1354, 1e+09
        %v1419 = vmul.f32 %v1355, 1e+09
        %v1420 = vmul.f32 %v1356, 1e+09
        %v1421 = vmul.f32 %v1357, 1e+09
        %v1422 = vmul.f32 %v1358, 1e+09
        %v1423 = vmul.f32 %v1359, 1e+09
        %v1424 = vmul.f32 %v1360, 1e+09
        %v1425 = vmul.f32 %v1361, 1e+09
        %v1426 = vmul.f32 %v1362, 1e+09
        %v1427 = vmul.f32 %v1363, 1e+09
        %v1428 = vmul.f32 %v1364, 1e+09
        %v1429 = vmul.f32 %v1365, 1e+09
        %v1430 = vmul.f32 %v1366, 1e+09
        %v1431 = vmul.f32 %v1367, 1e+09
        %v1432 = vmul.f32 %v1368, 1e+09
        %v1433 = vmul.f32 %v1369, 1e+09
        %v1434 = vmul.f32 %v1370, 1e+09
        %v1435 = vmul.f32 %v1371, 1e+09
        %v1436 = vmul.f32 %v1372, 1e+09
        %v1437 = vmul.f32 %v1373, 1e+09
        %v1438 = vmul.f32 %v1374, 1e+09
        %v1439 = vmul.f32 %v1375, 1e+09
        %v1440 = vmul.f32 %v1376, 1e+09
        %v1441 = vmul.f32 %v1377, 1e+09
        %v1442 = vmul.f32 %v1378, 1e+09
        %v1443 = vmul.f32 %v1379, 1e+09
        %v1444 = vmul.f32 %v1380, 1e+09
        %v1445 = vmul.f32 %v1381, 1e+09
        %v1446 = vmul.f32 %v1382, 1e+09
        %v1447 = vmul.f32 %v1383, 1e+09
        %v1448 = vmul.f32 %v1384, 1e+09
        %v1449 = vmul.f32 %v1385, 1e+09
        %v1450 = vmul.f32 %v1386, 1e+09
        %v1451 = vmul.f32 %v1387, 1e+09
        %v1452 = vmul.f32 %v1388, 1e+09
        %v1453 = vmul.f32 %v1389, 1e+09
        %v1454 = vmul.f32 %v1390, 1e+09
        %v1455 = vmul.f32 %v1391, 1e+09
        %v1456 = vmul.f32 %v1392, 1e+09
        %v1457 = vmul.f32 %v1393, 1e+09
        %v1458 = vmul.f32 %v1394, 1e+09
        %v1459 = vmul.f32 %v1395, 1e+09
        %v1460 = vmul.f32 %v1396, 1e+09
        %v1461 = vmul.f32 %v1397, 1e+09
        %v1462 = vmul.f32 %v1398, 1e+09
        %v1463 = vmul.f32 %v1399, 1e+09
        %v1464 = vmul.f32 %v1400, 1e+09
        %v1465 = vmul.f32 %v1401, 1e+09
        %v1466 = vmul.f32 %v1402, 1e+09
        %v1467 = vadd.f32 %v1085, %v1403
        %v1468 = vadd.f32 %v1088, %v1404
        %v1469 = vadd.f32 %v1091, %v1405
        %v1470 = vadd.f32 %v1094, %v1406
        %v1471 = vadd.f32 %v1097, %v1407
        %v1472 = vadd.f32 %v1100, %v1408
        %v1473 = vadd.f32 %v1103, %v1409
        %v1474 = vadd.f32 %v1106, %v1410
        %v1475 = vadd.f32 %v1109, %v1411
        %v1476 = vadd.f32 %v1112, %v1412
        %v1477 = vadd.f32 %v1115, %v1413
        %v1478 = vadd.f32 %v1118, %v1414
        %v1479 = vadd.f32 %v1121, %v1415
        %v1480 = vadd.f32 %v1124, %v1416
        %v1481 = vadd.f32 %v1127, %v1417
        %v1482 = vadd.f32 %v1130, %v1418
        %v1483 = vadd.f32 %v1133, %v1419
        %v1484 = vadd.f32 %v1136, %v1420
        %v1485 = vadd.f32 %v1139, %v1421
        %v1486 = vadd.f32 %v1142, %v1422
        %v1487 = vadd.f32 %v1145, %v1423
        %v1488 = vadd.f32 %v1148, %v1424
        %v1489 = vadd.f32 %v1151, %v1425
        %v1490 = vadd.f32 %v1154, %v1426
        %v1491 = vadd.f32 %v1157, %v1427
        %v1492 = vadd.f32 %v1160, %v1428
        %v1493 = vadd.f32 %v1163, %v1429
        %v1494 = vadd.f32 %v1166, %v1430
        %v1495 = vadd.f32 %v1169, %v1431
        %v1496 = vadd.f32 %v1172, %v1432
        %v1497 = vadd.f32 %v1175, %v1433
        %v1498 = vadd.f32 %v1178, %v1434
        %v1499 = vadd.f32 %v1181, %v1435
        %v1500 = vadd.f32 %v1184, %v1436
        %v1501 = vadd.f32 %v1187, %v1437
        %v1502 = vadd.f32 %v1190, %v1438
        %v1503 = vadd.f32 %v1193, %v1439
        %v1504 = vadd.f32 %v1196, %v1440
        %v1505 = vadd.f32 %v1199, %v1441
        %v1506 = vadd.f32 %v1202, %v1442
        %v1507 = vadd.f32 %v1205, %v1443
        %v1508 = vadd.f32 %v1208, %v1444
        %v1509 = vadd.f32 %v1211, %v1445
        %v1510 = vadd.f32 %v1214, %v1446
        %v1511 = vadd.f32 %v1217, %v1447
        %v1512 = vadd.f32 %v1220, %v1448
        %v1513 = vadd.f32 %v1223, %v1449
        %v1514 = vadd.f32 %v1226, %v1450
        %v1515 = vadd.f32 %v1229, %v1451
        %v1516 = vadd.f32 %v1232, %v1452
        %v1517 = vadd.f32 %v1235, %v1453
        %v1518 = vadd.f32 %v1238, %v1454
        %v1519 = vadd.f32 %v1241, %v1455
        %v1520 = vadd.f32 %v1244, %v1456
        %v1521 = vadd.f32 %v1247, %v1457
        %v1522 = vadd.f32 %v1250, %v1458
        %v1523 = vadd.f32 %v1253, %v1459
        %v1524 = vadd.f32 %v1256, %v1460
        %v1525 = vadd.f32 %v1259, %v1461
        %v1526 = vadd.f32 %v1262, %v1462
        %v1527 = vadd.f32 %v1265, %v1463
        %v1528 = vadd.f32 %v1268, %v1464
        %v1529 = vadd.f32 %v1271, %v1465
        %v1530 = vadd.f32 %v1274, %v1466
        %vm1531 = vcmask 7168
        %v1532 = vsel %vm1531, %v1467, -inf
        %v1533 = vsel %vm1531, %v1468, -inf
        %v1534 = vmax.f32 %v1532, %v1533
        %v1535 = vrot.slane %v1534, 4
        %v1536 = vmax.f32 %v1534, %v1535
        %v1537 = vrot.slane %v1536, 2
        %v1538 = vmax.f32 %v1536, %v1537
        %v1539 = vrot.slane %v1538, 1
        %v1540 = vmax.f32 %v1538, %v1539
        %v1541 = vsel %vm1531, %v1469, -inf
        %v1542 = vsel %vm1531, %v1470, -inf
        %v1543 = vmax.f32 %v1541, %v1542
        %v1544 = vrot.slane %v1543, 4
        %v1545 = vmax.f32 %v1543, %v1544
        %v1546 = vrot.slane %v1545, 2
        %v1547 = vmax.f32 %v1545, %v1546
        %v1548 = vrot.slane %v1547, 1
        %v1549 = vmax.f32 %v1547, %v1548
        %v1550 = vsel %vm1531, %v1471, -inf
        %v1551 = vsel %vm1531, %v1472, -inf
        %v1552 = vmax.f32 %v1550, %v1551
        %v1553 = vrot.slane %v1552, 4
        %v1554 = vmax.f32 %v1552, %v1553
        %v1555 = vrot.slane %v1554, 2
        %v1556 = vmax.f32 %v1554, %v1555
        %v1557 = vrot.slane %v1556, 1
        %v1558 = vmax.f32 %v1556, %v1557
        %v1559 = vsel %vm1531, %v1473, -inf
        %v1560 = vsel %vm1531, %v1474, -inf
        %v1561 = vmax.f32 %v1559, %v1560
        %v1562 = vrot.slane %v1561, 4
        %v1563 = vmax.f32 %v1561, %v1562
        %v1564 = vrot.slane %v1563, 2
        %v1565 = vmax.f32 %v1563, %v1564
        %v1566 = vrot.slane %v1565, 1
        %v1567 = vmax.f32 %v1565, %v1566
        %v1568 = vsel %vm1531, %v1475, -inf
        %v1569 = vsel %vm1531, %v1476, -inf
        %v1570 = vmax.f32 %v1568, %v1569
        %v1571 = vrot.slane %v1570, 4
        %v1572 = vmax.f32 %v1570, %v1571
        %v1573 = vrot.slane %v1572, 2
        %v1574 = vmax.f32 %v1572, %v1573
        %v1575 = vrot.slane %v1574, 1
        %v1576 = vmax.f32 %v1574, %v1575
        %v1577 = vsel %vm1531, %v1477, -inf
        %v1578 = vsel %vm1531, %v1478, -inf
        %v1579 = vmax.f32 %v1577, %v1578
        %v1580 = vrot.slane %v1579, 4
        %v1581 = vmax.f32 %v1579, %v1580
        %v1582 = vrot.slane %v1581, 2
        %v1583 = vmax.f32 %v1581, %v1582
        %v1584 = vrot.slane %v1583, 1
        %v1585 = vmax.f32 %v1583, %v1584
        %v1586 = vsel %vm1531, %v1479, -inf
        %v1587 = vsel %vm1531, %v1480, -inf
        %v1588 = vmax.f32 %v1586, %v1587
        %v1589 = vrot.slane %v1588, 4
        %v1590 = vmax.f32 %v1588, %v1589
        %v1591 = vrot.slane %v1590, 2
        %v1592 = vmax.f32 %v1590, %v1591
        %v1593 = vrot.slane %v1592, 1
        %v1594 = vmax.f32 %v1592, %v1593
        %v1595 = vsel %vm1531, %v1481, -inf
        %v1596 = vsel %vm1531, %v1482, -inf
        %v1597 = vmax.f32 %v1595, %v1596
        %v1598 = vrot.slane %v1597, 4
        %v1599 = vmax.f32 %v1597, %v1598
        %v1600 = vrot.slane %v1599, 2
        %v1601 = vmax.f32 %v1599, %v1600
        %v1602 = vrot.slane %v1601, 1
        %v1603 = vmax.f32 %v1601, %v1602
        %v1604 = vsel %vm1531, %v1483, -inf
        %v1605 = vsel %vm1531, %v1484, -inf
        %v1606 = vmax.f32 %v1604, %v1605
        %v1607 = vrot.slane %v1606, 4
        %v1608 = vmax.f32 %v1606, %v1607
        %v1609 = vrot.slane %v1608, 2
        %v1610 = vmax.f32 %v1608, %v1609
        %v1611 = vrot.slane %v1610, 1
        %v1612 = vmax.f32 %v1610, %v1611
        %v1613 = vsel %vm1531, %v1485, -inf
        %v1614 = vsel %vm1531, %v1486, -inf
        %v1615 = vmax.f32 %v1613, %v1614
        %v1616 = vrot.slane %v1615, 4
        %v1617 = vmax.f32 %v1615, %v1616
        %v1618 = vrot.slane %v1617, 2
        %v1619 = vmax.f32 %v1617, %v1618
        %v1620 = vrot.slane %v1619, 1
        %v1621 = vmax.f32 %v1619, %v1620
        %v1622 = vsel %vm1531, %v1487, -inf
        %v1623 = vsel %vm1531, %v1488, -inf
        %v1624 = vmax.f32 %v1622, %v1623
        %v1625 = vrot.slane %v1624, 4
        %v1626 = vmax.f32 %v1624, %v1625
        %v1627 = vrot.slane %v1626, 2
        %v1628 = vmax.f32 %v1626, %v1627
        %v1629 = vrot.slane %v1628, 1
        %v1630 = vmax.f32 %v1628, %v1629
        %v1631 = vsel %vm1531, %v1489, -inf
        %v1632 = vsel %vm1531, %v1490, -inf
        %v1633 = vmax.f32 %v1631, %v1632
        %v1634 = vrot.slane %v1633, 4
        %v1635 = vmax.f32 %v1633, %v1634
        %v1636 = vrot.slane %v1635, 2
        %v1637 = vmax.f32 %v1635, %v1636
        %v1638 = vrot.slane %v1637, 1
        %v1639 = vmax.f32 %v1637, %v1638
        %v1640 = vsel %vm1531, %v1491, -inf
        %v1641 = vsel %vm1531, %v1492, -inf
        %v1642 = vmax.f32 %v1640, %v1641
        %v1643 = vrot.slane %v1642, 4
        %v1644 = vmax.f32 %v1642, %v1643
        %v1645 = vrot.slane %v1644, 2
        %v1646 = vmax.f32 %v1644, %v1645
        %v1647 = vrot.slane %v1646, 1
        %v1648 = vmax.f32 %v1646, %v1647
        %v1649 = vsel %vm1531, %v1493, -inf
        %v1650 = vsel %vm1531, %v1494, -inf
        %v1651 = vmax.f32 %v1649, %v1650
        %v1652 = vrot.slane %v1651, 4
        %v1653 = vmax.f32 %v1651, %v1652
        %v1654 = vrot.slane %v1653, 2
        %v1655 = vmax.f32 %v1653, %v1654
        %v1656 = vrot.slane %v1655, 1
        %v1657 = vmax.f32 %v1655, %v1656
        %v1658 = vsel %vm1531, %v1495, -inf
        %v1659 = vsel %vm1531, %v1496, -inf
        %v1660 = vmax.f32 %v1658, %v1659
        %v1661 = vrot.slane %v1660, 4
        %v1662 = vmax.f32 %v1660, %v1661
        %v1663 = vrot.slane %v1662, 2
        %v1664 = vmax.f32 %v1662, %v1663
        %v1665 = vrot.slane %v1664, 1
        %v1666 = vmax.f32 %v1664, %v1665
        %v1667 = vsel %vm1531, %v1497, -inf
        %v1668 = vsel %vm1531, %v1498, -inf
        %v1669 = vmax.f32 %v1667, %v1668
        %v1670 = vrot.slane %v1669, 4
        %v1671 = vmax.f32 %v1669, %v1670
        %v1672 = vrot.slane %v1671, 2
        %v1673 = vmax.f32 %v1671, %v1672
        %v1674 = vrot.slane %v1673, 1
        %v1675 = vmax.f32 %v1673, %v1674
        %v1676 = vsel %vm1531, %v1499, -inf
        %v1677 = vsel %vm1531, %v1500, -inf
        %v1678 = vmax.f32 %v1676, %v1677
        %v1679 = vrot.slane %v1678, 4
        %v1680 = vmax.f32 %v1678, %v1679
        %v1681 = vrot.slane %v1680, 2
        %v1682 = vmax.f32 %v1680, %v1681
        %v1683 = vrot.slane %v1682, 1
        %v1684 = vmax.f32 %v1682, %v1683
        %v1685 = vsel %vm1531, %v1501, -inf
        %v1686 = vsel %vm1531, %v1502, -inf
        %v1687 = vmax.f32 %v1685, %v1686
        %v1688 = vrot.slane %v1687, 4
        %v1689 = vmax.f32 %v1687, %v1688
        %v1690 = vrot.slane %v1689, 2
        %v1691 = vmax.f32 %v1689, %v1690
        %v1692 = vrot.slane %v1691, 1
        %v1693 = vmax.f32 %v1691, %v1692
        %v1694 = vsel %vm1531, %v1503, -inf
        %v1695 = vsel %vm1531, %v1504, -inf
        %v1696 = vmax.f32 %v1694, %v1695
        %v1697 = vrot.slane %v1696, 4
        %v1698 = vmax.f32 %v1696, %v1697
        %v1699 = vrot.slane %v1698, 2
        %v1700 = vmax.f32 %v1698, %v1699
        %v1701 = vrot.slane %v1700, 1
        %v1702 = vmax.f32 %v1700, %v1701
        %v1703 = vsel %vm1531, %v1505, -inf
        %v1704 = vsel %vm1531, %v1506, -inf
        %v1705 = vmax.f32 %v1703, %v1704
        %v1706 = vrot.slane %v1705, 4
        %v1707 = vmax.f32 %v1705, %v1706
        %v1708 = vrot.slane %v1707, 2
        %v1709 = vmax.f32 %v1707, %v1708
        %v1710 = vrot.slane %v1709, 1
        %v1711 = vmax.f32 %v1709, %v1710
        %v1712 = vsel %vm1531, %v1507, -inf
        %v1713 = vsel %vm1531, %v1508, -inf
        %v1714 = vmax.f32 %v1712, %v1713
        %v1715 = vrot.slane %v1714, 4
        %v1716 = vmax.f32 %v1714, %v1715
        %v1717 = vrot.slane %v1716, 2
        %v1718 = vmax.f32 %v1716, %v1717
        %v1719 = vrot.slane %v1718, 1
        %v1720 = vmax.f32 %v1718, %v1719
        %v1721 = vsel %vm1531, %v1509, -inf
        %v1722 = vsel %vm1531, %v1510, -inf
        %v1723 = vmax.f32 %v1721, %v1722
        %v1724 = vrot.slane %v1723, 4
        %v1725 = vmax.f32 %v1723, %v1724
        %v1726 = vrot.slane %v1725, 2
        %v1727 = vmax.f32 %v1725, %v1726
        %v1728 = vrot.slane %v1727, 1
        %v1729 = vmax.f32 %v1727, %v1728
        %v1730 = vsel %vm1531, %v1511, -inf
        %v1731 = vsel %vm1531, %v1512, -inf
        %v1732 = vmax.f32 %v1730, %v1731
        %v1733 = vrot.slane %v1732, 4
        %v1734 = vmax.f32 %v1732, %v1733
        %v1735 = vrot.slane %v1734, 2
        %v1736 = vmax.f32 %v1734, %v1735
        %v1737 = vrot.slane %v1736, 1
        %v1738 = vmax.f32 %v1736, %v1737
        %v1739 = vsel %vm1531, %v1513, -inf
        %v1740 = vsel %vm1531, %v1514, -inf
        %v1741 = vmax.f32 %v1739, %v1740
        %v1742 = vrot.slane %v1741, 4
        %v1743 = vmax.f32 %v1741, %v1742
        %v1744 = vrot.slane %v1743, 2
        %v1745 = vmax.f32 %v1743, %v1744
        %v1746 = vrot.slane %v1745, 1
        %v1747 = vmax.f32 %v1745, %v1746
        %v1748 = vsel %vm1531, %v1515, -inf
        %v1749 = vsel %vm1531, %v1516, -inf
        %v1750 = vmax.f32 %v1748, %v1749
        %v1751 = vrot.slane %v1750, 4
        %v1752 = vmax.f32 %v1750, %v1751
        %v1753 = vrot.slane %v1752, 2
        %v1754 = vmax.f32 %v1752, %v1753
        %v1755 = vrot.slane %v1754, 1
        %v1756 = vmax.f32 %v1754, %v1755
        %v1757 = vsel %vm1531, %v1517, -inf
        %v1758 = vsel %vm1531, %v1518, -inf
        %v1759 = vmax.f32 %v1757, %v1758
        %v1760 = vrot.slane %v1759, 4
        %v1761 = vmax.f32 %v1759, %v1760
        %v1762 = vrot.slane %v1761, 2
        %v1763 = vmax.f32 %v1761, %v1762
        %v1764 = vrot.slane %v1763, 1
        %v1765 = vmax.f32 %v1763, %v1764
        %v1766 = vsel %vm1531, %v1519, -inf
        %v1767 = vsel %vm1531, %v1520, -inf
        %v1768 = vmax.f32 %v1766, %v1767
        %v1769 = vrot.slane %v1768, 4
        %v1770 = vmax.f32 %v1768, %v1769
        %v1771 = vrot.slane %v1770, 2
        %v1772 = vmax.f32 %v1770, %v1771
        %v1773 = vrot.slane %v1772, 1
        %v1774 = vmax.f32 %v1772, %v1773
        %v1775 = vsel %vm1531, %v1521, -inf
        %v1776 = vsel %vm1531, %v1522, -inf
        %v1777 = vmax.f32 %v1775, %v1776
        %v1778 = vrot.slane %v1777, 4
        %v1779 = vmax.f32 %v1777, %v1778
        %v1780 = vrot.slane %v1779, 2
        %v1781 = vmax.f32 %v1779, %v1780
        %v1782 = vrot.slane %v1781, 1
        %v1783 = vmax.f32 %v1781, %v1782
        %v1784 = vsel %vm1531, %v1523, -inf
        %v1785 = vsel %vm1531, %v1524, -inf
        %v1786 = vmax.f32 %v1784, %v1785
        %v1787 = vrot.slane %v1786, 4
        %v1788 = vmax.f32 %v1786, %v1787
        %v1789 = vrot.slane %v1788, 2
        %v1790 = vmax.f32 %v1788, %v1789
        %v1791 = vrot.slane %v1790, 1
        %v1792 = vmax.f32 %v1790, %v1791
        %v1793 = vsel %vm1531, %v1525, -inf
        %v1794 = vsel %vm1531, %v1526, -inf
        %v1795 = vmax.f32 %v1793, %v1794
        %v1796 = vrot.slane %v1795, 4
        %v1797 = vmax.f32 %v1795, %v1796
        %v1798 = vrot.slane %v1797, 2
        %v1799 = vmax.f32 %v1797, %v1798
        %v1800 = vrot.slane %v1799, 1
        %v1801 = vmax.f32 %v1799, %v1800
        %v1802 = vsel %vm1531, %v1527, -inf
        %v1803 = vsel %vm1531, %v1528, -inf
        %v1804 = vmax.f32 %v1802, %v1803
        %v1805 = vrot.slane %v1804, 4
        %v1806 = vmax.f32 %v1804, %v1805
        %v1807 = vrot.slane %v1806, 2
        %v1808 = vmax.f32 %v1806, %v1807
        %v1809 = vrot.slane %v1808, 1
        %v1810 = vmax.f32 %v1808, %v1809
        %v1811 = vsel %vm1531, %v1529, -inf
        %v1812 = vsel %vm1531, %v1530, -inf
        %v1813 = vmax.f32 %v1811, %v1812
        %v1814 = vrot.slane %v1813, 4
        %v1815 = vmax.f32 %v1813, %v1814
        %v1816 = vrot.slane %v1815, 2
        %v1817 = vmax.f32 %v1815, %v1816
        %v1818 = vrot.slane %v1817, 1
        %v1819 = vmax.f32 %v1817, %v1818
        %v1820 = vsub.f32 %v1467, %v1540
        %v1821 = vsub.f32 %v1468, %v1540
        %v1822 = vsub.f32 %v1469, %v1549
        %v1823 = vsub.f32 %v1470, %v1549
        %v1824 = vsub.f32 %v1471, %v1558
        %v1825 = vsub.f32 %v1472, %v1558
        %v1826 = vsub.f32 %v1473, %v1567
        %v1827 = vsub.f32 %v1474, %v1567
        %v1828 = vsub.f32 %v1475, %v1576
        %v1829 = vsub.f32 %v1476, %v1576
        %v1830 = vsub.f32 %v1477, %v1585
        %v1831 = vsub.f32 %v1478, %v1585
        %v1832 = vsub.f32 %v1479, %v1594
        %v1833 = vsub.f32 %v1480, %v1594
        %v1834 = vsub.f32 %v1481, %v1603
        %v1835 = vsub.f32 %v1482, %v1603
        %v1836 = vsub.f32 %v1483, %v1612
        %v1837 = vsub.f32 %v1484, %v1612
        %v1838 = vsub.f32 %v1485, %v1621
        %v1839 = vsub.f32 %v1486, %v1621
        %v1840 = vsub.f32 %v1487, %v1630
        %v1841 = vsub.f32 %v1488, %v1630
        %v1842 = vsub.f32 %v1489, %v1639
        %v1843 = vsub.f32 %v1490, %v1639
        %v1844 = vsub.f32 %v1491, %v1648
        %v1845 = vsub.f32 %v1492, %v1648
        %v1846 = vsub.f32 %v1493, %v1657
        %v1847 = vsub.f32 %v1494, %v1657
        %v1848 = vsub.f32 %v1495, %v1666
        %v1849 = vsub.f32 %v1496, %v1666
        %v1850 = vsub.f32 %v1497, %v1675
        %v1851 = vsub.f32 %v1498, %v1675
        %v1852 = vsub.f32 %v1499, %v1684
        %v1853 = vsub.f32 %v1500, %v1684
        %v1854 = vsub.f32 %v1501, %v1693
        %v1855 = vsub.f32 %v1502, %v1693
        %v1856 = vsub.f32 %v1503, %v1702
        %v1857 = vsub.f32 %v1504, %v1702
        %v1858 = vsub.f32 %v1505, %v1711
        %v1859 = vsub.f32 %v1506, %v1711
        %v1860 = vsub.f32 %v1507, %v1720
        %v1861 = vsub.f32 %v1508, %v1720
        %v1862 = vsub.f32 %v1509, %v1729
        %v1863 = vsub.f32 %v1510, %v1729
        %v1864 = vsub.f32 %v1511, %v1738
        %v1865 = vsub.f32 %v1512, %v1738
        %v1866 = vsub.f32 %v1513, %v1747
        %v1867 = vsub.f32 %v1514, %v1747
        %v1868 = vsub.f32 %v1515, %v1756
        %v1869 = vsub.f32 %v1516, %v1756
        %v1870 = vsub.f32 %v1517, %v1765
        %v1871 = vsub.f32 %v1518, %v1765
        %v1872 = vsub.f32 %v1519, %v1774
        %v1873 = vsub.f32 %v1520, %v1774
        %v1874 = vsub.f32 %v1521, %v1783
        %v1875 = vsub.f32 %v1522, %v1783
        %v1876 = vsub.f32 %v1523, %v1792
        %v1877 = vsub.f32 %v1524, %v1792
        %v1878 = vsub.f32 %v1525, %v1801
        %v1879 = vsub.f32 %v1526, %v1801
        %v1880 = vsub.f32 %v1527, %v1810
        %v1881 = vsub.f32 %v1528, %v1810
        %v1882 = vsub.f32 %v1529, %v1819
        %v1883 = vsub.f32 %v1530, %v1819
        %v1884 = vmul.f32 %v1820, 1.442695
        %v1885 = vpow.pop %v1884
        %v1886 = vmul.f32 %v1821, 1.442695
        %v1887 = vpow.pop %v1886
        %v1888 = vmul.f32 %v1822, 1.442695
        %v1889 = vpow.pop %v1888
        %v1890 = vmul.f32 %v1823, 1.442695
        %v1891 = vpow.pop %v1890
        %v1892 = vmul.f32 %v1824, 1.442695
        %v1893 = vpow.pop %v1892
        %v1894 = vmul.f32 %v1825, 1.442695
        %v1895 = vpow.pop %v1894
        %v1896 = vmul.f32 %v1826, 1.442695
        %v1897 = vpow.pop %v1896
        %v1898 = vmul.f32 %v1827, 1.442695
        %v1899 = vpow.pop %v1898
        %v1900 = vmul.f32 %v1828, 1.442695
        %v1901 = vpow.pop %v1900
        %v1902 = vmul.f32 %v1829, 1.442695
        %v1903 = vpow.pop %v1902
        %v1904 = vmul.f32 %v1830, 1.442695
        %v1905 = vpow.pop %v1904
        %v1906 = vmul.f32 %v1831, 1.442695
        %v1907 = vpow.pop %v1906
        %v1908 = vmul.f32 %v1832, 1.442695
        %v1909 = vpow.pop %v1908
        %v1910 = vmul.f32 %v1833, 1.442695
        %v1911 = vpow.pop %v1910
        %v1912 = vmul.f32 %v1834, 1.442695
        %v1913 = vpow.pop %v1912
        %v1914 = vmul.f32 %v1835, 1.442695
        %v1915 = vpow.pop %v1914
        %v1916 = vmul.f32 %v1836, 1.442695
        %v1917 = vpow.pop %v1916
        %v1918 = vmul.f32 %v1837, 1.442695
        %v1919 = vpow.pop %v1918
        %v1920 = vmul.f32 %v1838, 1.442695
        %v1921 = vpow.pop %v1920
        %v1922 = vmul.f32 %v1839, 1.442695
        %v1923 = vpow.pop %v1922
        %v1924 = vmul.f32 %v1840, 1.442695
        %v1925 = vpow.pop %v1924
        %v1926 = vmul.f32 %v1841, 1.442695
        %v1927 = vpow.pop %v1926
        %v1928 = vmul.f32 %v1842, 1.442695
        %v1929 = vpow.pop %v1928
        %v1930 = vmul.f32 %v1843, 1.442695
        %v1931 = vpow.pop %v1930
        %v1932 = vmul.f32 %v1844, 1.442695
        %v1933 = vpow.pop %v1932
        %v1934 = vmul.f32 %v1845, 1.442695
        %v1935 = vpow.pop %v1934
        %v1936 = vmul.f32 %v1846, 1.442695
        %v1937 = vpow.pop %v1936
        %v1938 = vmul.f32 %v1847, 1.442695
        %v1939 = vpow.pop %v1938
        %v1940 = vmul.f32 %v1848, 1.442695
        %v1941 = vpow.pop %v1940
        %v1942 = vmul.f32 %v1849, 1.442695
        %v1943 = vpow.pop %v1942
        %v1944 = vmul.f32 %v1850, 1.442695
        %v1945 = vpow.pop %v1944
        %v1946 = vmul.f32 %v1851, 1.442695
        %v1947 = vpow.pop %v1946
        %v1948 = vmul.f32 %v1852, 1.442695
        %v1949 = vpow.pop %v1948
        %v1950 = vmul.f32 %v1853, 1.442695
        %v1951 = vpow.pop %v1950
        %v1952 = vmul.f32 %v1854, 1.442695
        %v1953 = vpow.pop %v1952
        %v1954 = vmul.f32 %v1855, 1.442695
        %v1955 = vpow.pop %v1954
        %v1956 = vmul.f32 %v1856, 1.442695
        %v1957 = vpow.pop %v1956
        %v1958 = vmul.f32 %v1857, 1.442695
        %v1959 = vpow.pop %v1958
        %v1960 = vmul.f32 %v1858, 1.442695
        %v1961 = vpow.pop %v1960
        %v1962 = vmul.f32 %v1859, 1.442695
        %v1963 = vpow.pop %v1962
        %v1964 = vmul.f32 %v1860, 1.442695
        %v1965 = vpow.pop %v1964
        %v1966 = vmul.f32 %v1861, 1.442695
        %v1967 = vpow.pop %v1966
        %v1968 = vmul.f32 %v1862, 1.442695
        %v1969 = vpow.pop %v1968
        %v1970 = vmul.f32 %v1863, 1.442695
        %v1971 = vpow.pop %v1970
        %v1972 = vmul.f32 %v1864, 1.442695
        %v1973 = vpow.pop %v1972
        %v1974 = vmul.f32 %v1865, 1.442695
        %v1975 = vpow.pop %v1974
        %v1976 = vmul.f32 %v1866, 1.442695
        %v1977 = vpow.pop %v1976
        %v1978 = vmul.f32 %v1867, 1.442695
        %v1979 = vpow.pop %v1978
        %v1980 = vmul.f32 %v1868, 1.442695
        %v1981 = vpow.pop %v1980
        %v1982 = vmul.f32 %v1869, 1.442695
        %v1983 = vpow.pop %v1982
        %v1984 = vmul.f32 %v1870, 1.442695
        %v1985 = vpow.pop %v1984
        %v1986 = vmul.f32 %v1871, 1.442695
        %v1987 = vpow.pop %v1986
        %v1988 = vmul.f32 %v1872, 1.442695
        %v1989 = vpow.pop %v1988
        %v1990 = vmul.f32 %v1873, 1.442695
        %v1991 = vpow.pop %v1990
        %v1992 = vmul.f32 %v1874, 1.442695
        %v1993 = vpow.pop %v1992
        %v1994 = vmul.f32 %v1875, 1.442695
        %v1995 = vpow.pop %v1994
        %v1996 = vmul.f32 %v1876, 1.442695
        %v1997 = vpow.pop %v1996
        %v1998 = vmul.f32 %v1877, 1.442695
        %v1999 = vpow.pop %v1998
        %v2000 = vmul.f32 %v1878, 1.442695
        %v2001 = vpow.pop %v2000
        %v2002 = vmul.f32 %v1879, 1.442695
        %v2003 = vpow.pop %v2002
        %v2004 = vmul.f32 %v1880, 1.442695
        %v2005 = vpow.pop %v2004
        %v2006 = vmul.f32 %v1881, 1.442695
        %v2007 = vpow.pop %v2006
        %v2008 = vmul.f32 %v1882, 1.442695
        %v2009 = vpow.pop %v2008
        %v2010 = vmul.f32 %v1883, 1.442695
        %v2011 = vpow.pop %v2010
        %v2012 = vsel %vm1531, %v1885, 0.0
        %v2013 = vsel %vm1531, %v1887, 0.0
        %v2014 = vadd.f32 %v2012, %v2013
        %v2015 = vrot.slane %v2014, 4
        %v2016 = vadd.f32 %v2014, %v2015
        %v2017 = vrot.slane %v2016, 2
        %v2018 = vadd.f32 %v2016, %v2017
        %v2019 = vrot.slane %v2018, 1
        %v2020 = vadd.f32 %v2018, %v2019
        %v2021 = vsel %vm1531, %v1889, 0.0
        %v2022 = vsel %vm1531, %v1891, 0.0
        %v2023 = vadd.f32 %v2021, %v2022
        %v2024 = vrot.slane %v2023, 4
        %v2025 = vadd.f32 %v2023, %v2024
        %v2026 = vrot.slane %v2025, 2
        %v2027 = vadd.f32 %v2025, %v2026
        %v2028 = vrot.slane %v2027, 1
        %v2029 = vadd.f32 %v2027, %v2028
        %v2030 = vsel %vm1531, %v1893, 0.0
        %v2031 = vsel %vm1531, %v1895, 0.0
        %v2032 = vadd.f32 %v2030, %v2031
        %v2033 = vrot.slane %v2032, 4
        %v2034 = vadd.f32 %v2032, %v2033
        %v2035 = vrot.slane %v2034, 2
        %v2036 = vadd.f32 %v2034, %v2035
        %v2037 = vrot.slane %v2036, 1
        %v2038 = vadd.f32 %v2036, %v2037
        %v2039 = vsel %vm1531, %v1897, 0.0
        %v2040 = vsel %vm1531, %v1899, 0.0
        %v2041 = vadd.f32 %v2039, %v2040
        %v2042 = vrot.slane %v2041, 4
        %v2043 = vadd.f32 %v2041, %v2042
        %v2044 = vrot.slane %v2043, 2
        %v2045 = vadd.f32 %v2043, %v2044
        %v2046 = vrot.slane %v2045, 1
        %v2047 = vadd.f32 %v2045, %v2046
        %v2048 = vsel %vm1531, %v1901, 0.0
        %v2049 = vsel %vm1531, %v1903, 0.0
        %v2050 = vadd.f32 %v2048, %v2049
        %v2051 = vrot.slane %v2050, 4
        %v2052 = vadd.f32 %v2050, %v2051
        %v2053 = vrot.slane %v2052, 2
        %v2054 = vadd.f32 %v2052, %v2053
        %v2055 = vrot.slane %v2054, 1
        %v2056 = vadd.f32 %v2054, %v2055
        %v2057 = vsel %vm1531, %v1905, 0.0
        %v2058 = vsel %vm1531, %v1907, 0.0
        %v2059 = vadd.f32 %v2057, %v2058
        %v2060 = vrot.slane %v2059, 4
        %v2061 = vadd.f32 %v2059, %v2060
        %v2062 = vrot.slane %v2061, 2
        %v2063 = vadd.f32 %v2061, %v2062
        %v2064 = vrot.slane %v2063, 1
        %v2065 = vadd.f32 %v2063, %v2064
        %v2066 = vsel %vm1531, %v1909, 0.0
        %v2067 = vsel %vm1531, %v1911, 0.0
        %v2068 = vadd.f32 %v2066, %v2067
        %v2069 = vrot.slane %v2068, 4
        %v2070 = vadd.f32 %v2068, %v2069
        %v2071 = vrot.slane %v2070, 2
        %v2072 = vadd.f32 %v2070, %v2071
        %v2073 = vrot.slane %v2072, 1
        %v2074 = vadd.f32 %v2072, %v2073
        %v2075 = vsel %vm1531, %v1913, 0.0
        %v2076 = vsel %vm1531, %v1915, 0.0
        %v2077 = vadd.f32 %v2075, %v2076
        %v2078 = vrot.slane %v2077, 4
        %v2079 = vadd.f32 %v2077, %v2078
        %v2080 = vrot.slane %v2079, 2
        %v2081 = vadd.f32 %v2079, %v2080
        %v2082 = vrot.slane %v2081, 1
        %v2083 = vadd.f32 %v2081, %v2082
        %v2084 = vsel %vm1531, %v1917, 0.0
        %v2085 = vsel %vm1531, %v1919, 0.0
        %v2086 = vadd.f32 %v2084, %v2085
        %v2087 = vrot.slane %v2086, 4
        %v2088 = vadd.f32 %v2086, %v2087
        %v2089 = vrot.slane %v2088, 2
        %v2090 = vadd.f32 %v2088, %v2089
        %v2091 = vrot.slane %v2090, 1
        %v2092 = vadd.f32 %v2090, %v2091
        %v2093 = vsel %vm1531, %v1921, 0.0
        %v2094 = vsel %vm1531, %v1923, 0.0
        %v2095 = vadd.f32 %v2093, %v2094
        %v2096 = vrot.slane %v2095, 4
        %v2097 = vadd.f32 %v2095, %v2096
        %v2098 = vrot.slane %v2097, 2
        %v2099 = vadd.f32 %v2097, %v2098
        %v2100 = vrot.slane %v2099, 1
        %v2101 = vadd.f32 %v2099, %v2100
        %v2102 = vsel %vm1531, %v1925, 0.0
        %v2103 = vsel %vm1531, %v1927, 0.0
        %v2104 = vadd.f32 %v2102, %v2103
        %v2105 = vrot.slane %v2104, 4
        %v2106 = vadd.f32 %v2104, %v2105
        %v2107 = vrot.slane %v2106, 2
        %v2108 = vadd.f32 %v2106, %v2107
        %v2109 = vrot.slane %v2108, 1
        %v2110 = vadd.f32 %v2108, %v2109
        %v2111 = vsel %vm1531, %v1929, 0.0
        %v2112 = vsel %vm1531, %v1931, 0.0
        %v2113 = vadd.f32 %v2111, %v2112
        %v2114 = vrot.slane %v2113, 4
        %v2115 = vadd.f32 %v2113, %v2114
        %v2116 = vrot.slane %v2115, 2
        %v2117 = vadd.f32 %v2115, %v2116
        %v2118 = vrot.slane %v2117, 1
        %v2119 = vadd.f32 %v2117, %v2118
        %v2120 = vsel %vm1531, %v1933, 0.0
        %v2121 = vsel %vm1531, %v1935, 0.0
        %v2122 = vadd.f32 %v2120, %v2121
        %v2123 = vrot.slane %v2122, 4
        %v2124 = vadd.f32 %v2122, %v2123
        %v2125 = vrot.slane %v2124, 2
        %v2126 = vadd.f32 %v2124, %v2125
        %v2127 = vrot.slane %v2126, 1
        %v2128 = vadd.f32 %v2126, %v2127
        %v2129 = vsel %vm1531, %v1937, 0.0
        %v2130 = vsel %vm1531, %v1939, 0.0
        %v2131 = vadd.f32 %v2129, %v2130
        %v2132 = vrot.slane %v2131, 4
        %v2133 = vadd.f32 %v2131, %v2132
        %v2134 = vrot.slane %v2133, 2
        %v2135 = vadd.f32 %v2133, %v2134
        %v2136 = vrot.slane %v2135, 1
        %v2137 = vadd.f32 %v2135, %v2136
        %v2138 = vsel %vm1531, %v1941, 0.0
        %v2139 = vsel %vm1531, %v1943, 0.0
        %v2140 = vadd.f32 %v2138, %v2139
        %v2141 = vrot.slane %v2140, 4
        %v2142 = vadd.f32 %v2140, %v2141
        %v2143 = vrot.slane %v2142, 2
        %v2144 = vadd.f32 %v2142, %v2143
        %v2145 = vrot.slane %v2144, 1
        %v2146 = vadd.f32 %v2144, %v2145
        %v2147 = vsel %vm1531, %v1945, 0.0
        %v2148 = vsel %vm1531, %v1947, 0.0
        %v2149 = vadd.f32 %v2147, %v2148
        %v2150 = vrot.slane %v2149, 4
        %v2151 = vadd.f32 %v2149, %v2150
        %v2152 = vrot.slane %v2151, 2
        %v2153 = vadd.f32 %v2151, %v2152
        %v2154 = vrot.slane %v2153, 1
        %v2155 = vadd.f32 %v2153, %v2154
        %v2156 = vsel %vm1531, %v1949, 0.0
        %v2157 = vsel %vm1531, %v1951, 0.0
        %v2158 = vadd.f32 %v2156, %v2157
        %v2159 = vrot.slane %v2158, 4
        %v2160 = vadd.f32 %v2158, %v2159
        %v2161 = vrot.slane %v2160, 2
        %v2162 = vadd.f32 %v2160, %v2161
        %v2163 = vrot.slane %v2162, 1
        %v2164 = vadd.f32 %v2162, %v2163
        %v2165 = vsel %vm1531, %v1953, 0.0
        %v2166 = vsel %vm1531, %v1955, 0.0
        %v2167 = vadd.f32 %v2165, %v2166
        %v2168 = vrot.slane %v2167, 4
        %v2169 = vadd.f32 %v2167, %v2168
        %v2170 = vrot.slane %v2169, 2
        %v2171 = vadd.f32 %v2169, %v2170
        %v2172 = vrot.slane %v2171, 1
        %v2173 = vadd.f32 %v2171, %v2172
        %v2174 = vsel %vm1531, %v1957, 0.0
        %v2175 = vsel %vm1531, %v1959, 0.0
        %v2176 = vadd.f32 %v2174, %v2175
        %v2177 = vrot.slane %v2176, 4
        %v2178 = vadd.f32 %v2176, %v2177
        %v2179 = vrot.slane %v2178, 2
        %v2180 = vadd.f32 %v2178, %v2179
        %v2181 = vrot.slane %v2180, 1
        %v2182 = vadd.f32 %v2180, %v2181
        %v2183 = vsel %vm1531, %v1961, 0.0
        %v2184 = vsel %vm1531, %v1963, 0.0
        %v2185 = vadd.f32 %v2183, %v2184
        %v2186 = vrot.slane %v2185, 4
        %v2187 = vadd.f32 %v2185, %v2186
        %v2188 = vrot.slane %v2187, 2
        %v2189 = vadd.f32 %v2187, %v2188
        %v2190 = vrot.slane %v2189, 1
        %v2191 = vadd.f32 %v2189, %v2190
        %v2192 = vsel %vm1531, %v1965, 0.0
        %v2193 = vsel %vm1531, %v1967, 0.0
        %v2194 = vadd.f32 %v2192, %v2193
        %v2195 = vrot.slane %v2194, 4
        %v2196 = vadd.f32 %v2194, %v2195
        %v2197 = vrot.slane %v2196, 2
        %v2198 = vadd.f32 %v2196, %v2197
        %v2199 = vrot.slane %v2198, 1
        %v2200 = vadd.f32 %v2198, %v2199
        %v2201 = vsel %vm1531, %v1969, 0.0
        %v2202 = vsel %vm1531, %v1971, 0.0
        %v2203 = vadd.f32 %v2201, %v2202
        %v2204 = vrot.slane %v2203, 4
        %v2205 = vadd.f32 %v2203, %v2204
        %v2206 = vrot.slane %v2205, 2
        %v2207 = vadd.f32 %v2205, %v2206
        %v2208 = vrot.slane %v2207, 1
        %v2209 = vadd.f32 %v2207, %v2208
        %v2210 = vsel %vm1531, %v1973, 0.0
        %v2211 = vsel %vm1531, %v1975, 0.0
        %v2212 = vadd.f32 %v2210, %v2211
        %v2213 = vrot.slane %v2212, 4
        %v2214 = vadd.f32 %v2212, %v2213
        %v2215 = vrot.slane %v2214, 2
        %v2216 = vadd.f32 %v2214, %v2215
        %v2217 = vrot.slane %v2216, 1
        %v2218 = vadd.f32 %v2216, %v2217
        %v2219 = vsel %vm1531, %v1977, 0.0
        %v2220 = vsel %vm1531, %v1979, 0.0
        %v2221 = vadd.f32 %v2219, %v2220
        %v2222 = vrot.slane %v2221, 4
        %v2223 = vadd.f32 %v2221, %v2222
        %v2224 = vrot.slane %v2223, 2
        %v2225 = vadd.f32 %v2223, %v2224
        %v2226 = vrot.slane %v2225, 1
        %v2227 = vadd.f32 %v2225, %v2226
        %v2228 = vsel %vm1531, %v1981, 0.0
        %v2229 = vsel %vm1531, %v1983, 0.0
        %v2230 = vadd.f32 %v2228, %v2229
        %v2231 = vrot.slane %v2230, 4
        %v2232 = vadd.f32 %v2230, %v2231
        %v2233 = vrot.slane %v2232, 2
        %v2234 = vadd.f32 %v2232, %v2233
        %v2235 = vrot.slane %v2234, 1
        %v2236 = vadd.f32 %v2234, %v2235
        %v2237 = vsel %vm1531, %v1985, 0.0
        %v2238 = vsel %vm1531, %v1987, 0.0
        %v2239 = vadd.f32 %v2237, %v2238
        %v2240 = vrot.slane %v2239, 4
        %v2241 = vadd.f32 %v2239, %v2240
        %v2242 = vrot.slane %v2241, 2
        %v2243 = vadd.f32 %v2241, %v2242
        %v2244 = vrot.slane %v2243, 1
        %v2245 = vadd.f32 %v2243, %v2244
        %v2246 = vsel %vm1531, %v1989, 0.0
        %v2247 = vsel %vm1531, %v1991, 0.0
        %v2248 = vadd.f32 %v2246, %v2247
        %v2249 = vrot.slane %v2248, 4
        %v2250 = vadd.f32 %v2248, %v2249
        %v2251 = vrot.slane %v2250, 2
        %v2252 = vadd.f32 %v2250, %v2251
        %v2253 = vrot.slane %v2252, 1
        %v2254 = vadd.f32 %v2252, %v2253
        %v2255 = vsel %vm1531, %v1993, 0.0
        %v2256 = vsel %vm1531, %v1995, 0.0
        %v2257 = vadd.f32 %v2255, %v2256
        %v2258 = vrot.slane %v2257, 4
        %v2259 = vadd.f32 %v2257, %v2258
        %v2260 = vrot.slane %v2259, 2
        %v2261 = vadd.f32 %v2259, %v2260
        %v2262 = vrot.slane %v2261, 1
        %v2263 = vadd.f32 %v2261, %v2262
        %v2264 = vsel %vm1531, %v1997, 0.0
        %v2265 = vsel %vm1531, %v1999, 0.0
        %v2266 = vadd.f32 %v2264, %v2265
        %v2267 = vrot.slane %v2266, 4
        %v2268 = vadd.f32 %v2266, %v2267
        %v2269 = vrot.slane %v2268, 2
        %v2270 = vadd.f32 %v2268, %v2269
        %v2271 = vrot.slane %v2270, 1
        %v2272 = vadd.f32 %v2270, %v2271
        %v2273 = vsel %vm1531, %v2001, 0.0
        %v2274 = vsel %vm1531, %v2003, 0.0
        %v2275 = vadd.f32 %v2273, %v2274
        %v2276 = vrot.slane %v2275, 4
        %v2277 = vadd.f32 %v2275, %v2276
        %v2278 = vrot.slane %v2277, 2
        %v2279 = vadd.f32 %v2277, %v2278
        %v2280 = vrot.slane %v2279, 1
        %v2281 = vadd.f32 %v2279, %v2280
        %v2282 = vsel %vm1531, %v2005, 0.0
        %v2283 = vsel %vm1531, %v2007, 0.0
        %v2284 = vadd.f32 %v2282, %v2283
        %v2285 = vrot.slane %v2284, 4
        %v2286 = vadd.f32 %v2284, %v2285
        %v2287 = vrot.slane %v2286, 2
        %v2288 = vadd.f32 %v2286, %v2287
        %v2289 = vrot.slane %v2288, 1
        %v2290 = vadd.f32 %v2288, %v2289
        %v2291 = vsel %vm1531, %v2009, 0.0
        %v2292 = vsel %vm1531, %v2011, 0.0
        %v2293 = vadd.f32 %v2291, %v2292
        %v2294 = vrot.slane %v2293, 4
        %v2295 = vadd.f32 %v2293, %v2294
        %v2296 = vrot.slane %v2295, 2
        %v2297 = vadd.f32 %v2295, %v2296
        %v2298 = vrot.slane %v2297, 1
        %v2299 = vadd.f32 %v2297, %v2298
        %v2300 = vrcp.pop %v2020
        %v2301 = vmul.f32 %v1885, %v2300
        %v2302 = vmul.f32 %v1887, %v2300
        %v2303 = vrcp.pop %v2029
        %v2304 = vmul.f32 %v1889, %v2303
        %v2305 = vmul.f32 %v1891, %v2303
        %v2306 = vrcp.pop %v2038
        %v2307 = vmul.f32 %v1893, %v2306
        %v2308 = vmul.f32 %v1895, %v2306
        %v2309 = vrcp.pop %v2047
        %v2310 = vmul.f32 %v1897, %v2309
        %v2311 = vmul.f32 %v1899, %v2309
        %v2312 = vrcp.pop %v2056
        %v2313 = vmul.f32 %v1901, %v2312
        %v2314 = vmul.f32 %v1903, %v2312
        %v2315 = vrcp.pop %v2065
        %v2316 = vmul.f32 %v1905, %v2315
        %v2317 = vmul.f32 %v1907, %v2315
        %v2318 = vrcp.pop %v2074
        %v2319 = vmul.f32 %v1909, %v2318
        %v2320 = vmul.f32 %v1911, %v2318
        %v2321 = vrcp.pop %v2083
        %v2322 = vmul.f32 %v1913, %v2321
        %v2323 = vmul.f32 %v1915, %v2321
        %v2324 = vrcp.pop %v2092
        %v2325 = vmul.f32 %v1917, %v2324
        %v2326 = vmul.f32 %v1919, %v2324
        %v2327 = vrcp.pop %v2101
        %v2328 = vmul.f32 %v1921, %v2327
        %v2329 = vmul.f32 %v1923, %v2327
        %v2330 = vrcp.pop %v2110
        %v2331 = vmul.f32 %v1925, %v2330
        %v2332 = vmul.f32 %v1927, %v2330
        %v2333 = vrcp.pop %v2119
        %v2334 = vmul.f32 %v1929, %v2333
        %v2335 = vmul.f32 %v1931, %v2333
        %v2336 = vrcp.pop %v2128
        %v2337 = vmul.f32 %v1933, %v2336
        %v2338 = vmul.f32 %v1935, %v2336
        %v2339 = vrcp.pop %v2137
        %v2340 = vmul.f32 %v1937, %v2339
        %v2341 = vmul.f32 %v1939, %v2339
        %v2342 = vrcp.pop %v2146
        %v2343 = vmul.f32 %v1941, %v2342
        %v2344 = vmul.f32 %v1943, %v2342
        %v2345 = vrcp.pop %v2155
        %v2346 = vmul.f32 %v1945, %v2345
        %v2347 = vmul.f32 %v1947, %v2345
        %v2348 = vrcp.pop %v2164
        %v2349 = vmul.f32 %v1949, %v2348
        %v2350 = vmul.f32 %v1951, %v2348
        %v2351 = vrcp.pop %v2173
        %v2352 = vmul.f32 %v1953, %v2351
        %v2353 = vmul.f32 %v1955, %v2351
        %v2354 = vrcp.pop %v2182
        %v2355 = vmul.f32 %v1957, %v2354
        %v2356 = vmul.f32 %v1959, %v2354
        %v2357 = vrcp.pop %v2191
        %v2358 = vmul.f32 %v1961, %v2357
        %v2359 = vmul.f32 %v1963, %v2357
        %v2360 = vrcp.pop %v2200
        %v2361 = vmul.f32 %v1965, %v2360
        %v2362 = vmul.f32 %v1967, %v2360
        %v2363 = vrcp.pop %v2209
        %v2364 = vmul.f32 %v1969, %v2363
        %v2365 = vmul.f32 %v1971, %v2363
        %v2366 = vrcp.pop %v2218
        %v2367 = vmul.f32 %v1973, %v2366
        %v2368 = vmul.f32 %v1975, %v2366
        %v2369 = vrcp.pop %v2227
        %v2370 = vmul.f32 %v1977, %v2369
        %v2371 = vmul.f32 %v1979, %v2369
        %v2372 = vrcp.pop %v2236
        %v2373 = vmul.f32 %v1981, %v2372
        %v2374 = vmul.f32 %v1983, %v2372
        %v2375 = vrcp.pop %v2245
        %v2376 = vmul.f32 %v1985, %v2375
        %v2377 = vmul.f32 %v1987, %v2375
        %v2378 = vrcp.pop %v2254
        %v2379 = vmul.f32 %v1989, %v2378
        %v2380 = vmul.f32 %v1991, %v2378
        %v2381 = vrcp.pop %v2263
        %v2382 = vmul.f32 %v1993, %v2381
        %v2383 = vmul.f32 %v1995, %v2381
        %v2384 = vrcp.pop %v2272
        %v2385 = vmul.f32 %v1997, %v2384
        %v2386 = vmul.f32 %v1999, %v2384
        %v2387 = vrcp.pop %v2281
        %v2388 = vmul.f32 %v2001, %v2387
        %v2389 = vmul.f32 %v2003, %v2387
        %v2390 = vrcp.pop %v2290
        %v2391 = vmul.f32 %v2005, %v2390
        %v2392 = vmul.f32 %v2007, %v2390
        %v2393 = vrcp.pop %v2299
        %v2394 = vmul.f32 %v2009, %v2393
        %v2395 = vmul.f32 %v2011, %v2393
        %2397 = vset.pattern.permute.xlu0 0
        %2398 = vperm.xlu0 %2397, %v2301
        %v2399 = vpop.permute.xlu0 %2398
        %2402 = vset.pattern.permute.xlu0 0
        %2403 = vperm.xlu0 %2402, %v2302
        %v2404 = vpop.permute.xlu0 %2403
        %2407 = vset.pattern.permute.xlu0 0
        %2408 = vperm.xlu0 %2407, %v2304
        %v2409 = vpop.permute.xlu0 %2408
        %2412 = vset.pattern.permute.xlu0 0
        %2413 = vperm.xlu0 %2412, %v2305
        %v2414 = vpop.permute.xlu0 %2413
        %2417 = vset.pattern.permute.xlu0 0
        %2418 = vperm.xlu0 %2417, %v2307
        %v2419 = vpop.permute.xlu0 %2418
        %2422 = vset.pattern.permute.xlu0 0
        %2423 = vperm.xlu0 %2422, %v2308
        %v2424 = vpop.permute.xlu0 %2423
        %2427 = vset.pattern.permute.xlu0 0
        %2428 = vperm.xlu0 %2427, %v2310
        %v2429 = vpop.permute.xlu0 %2428
        %2432 = vset.pattern.permute.xlu0 0
        %2433 = vperm.xlu0 %2432, %v2311
        %v2434 = vpop.permute.xlu0 %2433
        %2437 = vset.pattern.permute.xlu0 0
        %2438 = vperm.xlu0 %2437, %v2313
        %v2439 = vpop.permute.xlu0 %2438
        %2442 = vset.pattern.permute.xlu0 0
        %2443 = vperm.xlu0 %2442, %v2314
        %v2444 = vpop.permute.xlu0 %2443
        %2447 = vset.pattern.permute.xlu0 0
        %2448 = vperm.xlu0 %2447, %v2316
        %v2449 = vpop.permute.xlu0 %2448
        %2452 = vset.pattern.permute.xlu0 0
        %2453 = vperm.xlu0 %2452, %v2317
        %v2454 = vpop.permute.xlu0 %2453
        %2457 = vset.pattern.permute.xlu0 0
        %2458 = vperm.xlu0 %2457, %v2319
        %v2459 = vpop.permute.xlu0 %2458
        %2462 = vset.pattern.permute.xlu0 0
        %2463 = vperm.xlu0 %2462, %v2320
        %v2464 = vpop.permute.xlu0 %2463
        %2467 = vset.pattern.permute.xlu0 0
        %2468 = vperm.xlu0 %2467, %v2322
        %v2469 = vpop.permute.xlu0 %2468
        %2472 = vset.pattern.permute.xlu0 0
        %2473 = vperm.xlu0 %2472, %v2323
        %v2474 = vpop.permute.xlu0 %2473
        %2477 = vset.pattern.permute.xlu0 0
        %2478 = vperm.xlu0 %2477, %v2325
        %v2479 = vpop.permute.xlu0 %2478
        %2482 = vset.pattern.permute.xlu0 0
        %2483 = vperm.xlu0 %2482, %v2326
        %v2484 = vpop.permute.xlu0 %2483
        %2487 = vset.pattern.permute.xlu0 0
        %2488 = vperm.xlu0 %2487, %v2328
        %v2489 = vpop.permute.xlu0 %2488
        %2492 = vset.pattern.permute.xlu0 0
        %2493 = vperm.xlu0 %2492, %v2329
        %v2494 = vpop.permute.xlu0 %2493
        %2497 = vset.pattern.permute.xlu0 0
        %2498 = vperm.xlu0 %2497, %v2331
        %v2499 = vpop.permute.xlu0 %2498
        %2502 = vset.pattern.permute.xlu0 0
        %2503 = vperm.xlu0 %2502, %v2332
        %v2504 = vpop.permute.xlu0 %2503
        %2507 = vset.pattern.permute.xlu0 0
        %2508 = vperm.xlu0 %2507, %v2334
        %v2509 = vpop.permute.xlu0 %2508
        %2512 = vset.pattern.permute.xlu0 0
        %2513 = vperm.xlu0 %2512, %v2335
        %v2514 = vpop.permute.xlu0 %2513
        %2517 = vset.pattern.permute.xlu0 0
        %2518 = vperm.xlu0 %2517, %v2337
        %v2519 = vpop.permute.xlu0 %2518
        %2522 = vset.pattern.permute.xlu0 0
        %2523 = vperm.xlu0 %2522, %v2338
        %v2524 = vpop.permute.xlu0 %2523
        %2527 = vset.pattern.permute.xlu0 0
        %2528 = vperm.xlu0 %2527, %v2340
        %v2529 = vpop.permute.xlu0 %2528
        %2532 = vset.pattern.permute.xlu0 0
        %2533 = vperm.xlu0 %2532, %v2341
        %v2534 = vpop.permute.xlu0 %2533
        %2537 = vset.pattern.permute.xlu0 0
        %2538 = vperm.xlu0 %2537, %v2343
        %v2539 = vpop.permute.xlu0 %2538
        %2542 = vset.pattern.permute.xlu0 0
        %2543 = vperm.xlu0 %2542, %v2344
        %v2544 = vpop.permute.xlu0 %2543
        %2547 = vset.pattern.permute.xlu0 0
        %2548 = vperm.xlu0 %2547, %v2346
        %v2549 = vpop.permute.xlu0 %2548
        %2552 = vset.pattern.permute.xlu0 0
        %2553 = vperm.xlu0 %2552, %v2347
        %v2554 = vpop.permute.xlu0 %2553
        %2557 = vset.pattern.permute.xlu0 0
        %2558 = vperm.xlu0 %2557, %v2349
        %v2559 = vpop.permute.xlu0 %2558
        %2562 = vset.pattern.permute.xlu0 0
        %2563 = vperm.xlu0 %2562, %v2350
        %v2564 = vpop.permute.xlu0 %2563
        %2567 = vset.pattern.permute.xlu0 0
        %2568 = vperm.xlu0 %2567, %v2352
        %v2569 = vpop.permute.xlu0 %2568
        %2572 = vset.pattern.permute.xlu0 0
        %2573 = vperm.xlu0 %2572, %v2353
        %v2574 = vpop.permute.xlu0 %2573
        %2577 = vset.pattern.permute.xlu0 0
        %2578 = vperm.xlu0 %2577, %v2355
        %v2579 = vpop.permute.xlu0 %2578
        %2582 = vset.pattern.permute.xlu0 0
        %2583 = vperm.xlu0 %2582, %v2356
        %v2584 = vpop.permute.xlu0 %2583
        %2587 = vset.pattern.permute.xlu0 0
        %2588 = vperm.xlu0 %2587, %v2358
        %v2589 = vpop.permute.xlu0 %2588
        %2592 = vset.pattern.permute.xlu0 0
        %2593 = vperm.xlu0 %2592, %v2359
        %v2594 = vpop.permute.xlu0 %2593
        %2597 = vset.pattern.permute.xlu0 0
        %2598 = vperm.xlu0 %2597, %v2361
        %v2599 = vpop.permute.xlu0 %2598
        %2602 = vset.pattern.permute.xlu0 0
        %2603 = vperm.xlu0 %2602, %v2362
        %v2604 = vpop.permute.xlu0 %2603
        %2607 = vset.pattern.permute.xlu0 0
        %2608 = vperm.xlu0 %2607, %v2364
        %v2609 = vpop.permute.xlu0 %2608
        %2612 = vset.pattern.permute.xlu0 0
        %2613 = vperm.xlu0 %2612, %v2365
        %v2614 = vpop.permute.xlu0 %2613
        %2617 = vset.pattern.permute.xlu0 0
        %2618 = vperm.xlu0 %2617, %v2367
        %v2619 = vpop.permute.xlu0 %2618
        %2622 = vset.pattern.permute.xlu0 0
        %2623 = vperm.xlu0 %2622, %v2368
        %v2624 = vpop.permute.xlu0 %2623
        %2627 = vset.pattern.permute.xlu0 0
        %2628 = vperm.xlu0 %2627, %v2370
        %v2629 = vpop.permute.xlu0 %2628
        %2632 = vset.pattern.permute.xlu0 0
        %2633 = vperm.xlu0 %2632, %v2371
        %v2634 = vpop.permute.xlu0 %2633
        %2637 = vset.pattern.permute.xlu0 0
        %2638 = vperm.xlu0 %2637, %v2373
        %v2639 = vpop.permute.xlu0 %2638
        %2642 = vset.pattern.permute.xlu0 0
        %2643 = vperm.xlu0 %2642, %v2374
        %v2644 = vpop.permute.xlu0 %2643
        %2647 = vset.pattern.permute.xlu0 0
        %2648 = vperm.xlu0 %2647, %v2376
        %v2649 = vpop.permute.xlu0 %2648
        %2652 = vset.pattern.permute.xlu0 0
        %2653 = vperm.xlu0 %2652, %v2377
        %v2654 = vpop.permute.xlu0 %2653
        %2657 = vset.pattern.permute.xlu0 0
        %2658 = vperm.xlu0 %2657, %v2379
        %v2659 = vpop.permute.xlu0 %2658
        %2662 = vset.pattern.permute.xlu0 0
        %2663 = vperm.xlu0 %2662, %v2380
        %v2664 = vpop.permute.xlu0 %2663
        %2667 = vset.pattern.permute.xlu0 0
        %2668 = vperm.xlu0 %2667, %v2382
        %v2669 = vpop.permute.xlu0 %2668
        %2672 = vset.pattern.permute.xlu0 0
        %2673 = vperm.xlu0 %2672, %v2383
        %v2674 = vpop.permute.xlu0 %2673
        %2677 = vset.pattern.permute.xlu0 0
        %2678 = vperm.xlu0 %2677, %v2385
        %v2679 = vpop.permute.xlu0 %2678
        %2682 = vset.pattern.permute.xlu0 0
        %2683 = vperm.xlu0 %2682, %v2386
        %v2684 = vpop.permute.xlu0 %2683
        %2687 = vset.pattern.permute.xlu0 0
        %2688 = vperm.xlu0 %2687, %v2388
        %v2689 = vpop.permute.xlu0 %2688
        %2692 = vset.pattern.permute.xlu0 0
        %2693 = vperm.xlu0 %2692, %v2389
        %v2694 = vpop.permute.xlu0 %2693
        %2697 = vset.pattern.permute.xlu0 0
        %2698 = vperm.xlu0 %2697, %v2391
        %v2699 = vpop.permute.xlu0 %2698
        %2702 = vset.pattern.permute.xlu0 0
        %2703 = vperm.xlu0 %2702, %v2392
        %v2704 = vpop.permute.xlu0 %2703
        %2707 = vset.pattern.permute.xlu0 0
        %2708 = vperm.xlu0 %2707, %v2394
        %v2709 = vpop.permute.xlu0 %2708
        %2712 = vset.pattern.permute.xlu0 0
        %2713 = vperm.xlu0 %2712, %v2395
        %v2714 = vpop.permute.xlu0 %2713
        %v2716 = vmul.f32 %v2399, %v758
        %v2717 = vmul.f32 %v2404, %v761
        %v2718 = vmul.f32 %v2409, %v766
        %v2719 = vmul.f32 %v2414, %v769
        %v2720 = vmul.f32 %v2419, %v774
        %v2721 = vmul.f32 %v2424, %v777
        %v2722 = vmul.f32 %v2429, %v782
        %v2723 = vmul.f32 %v2434, %v785
        %v2724 = vmul.f32 %v2439, %v790
        %v2725 = vmul.f32 %v2444, %v793
        %v2726 = vmul.f32 %v2449, %v798
        %v2727 = vmul.f32 %v2454, %v801
        %v2728 = vmul.f32 %v2459, %v806
        %v2729 = vmul.f32 %v2464, %v809
        %v2730 = vmul.f32 %v2469, %v814
        %v2731 = vmul.f32 %v2474, %v817
        %v2732 = vmul.f32 %v2479, %v822
        %v2733 = vmul.f32 %v2484, %v825
        %v2734 = vmul.f32 %v2489, %v830
        %v2735 = vmul.f32 %v2494, %v833
        %v2736 = vmul.f32 %v2499, %v838
        %v2737 = vmul.f32 %v2504, %v841
        %v2738 = vmul.f32 %v2509, %v846
        %v2739 = vmul.f32 %v2514, %v849
        %v2740 = vmul.f32 %v2519, %v854
        %v2741 = vmul.f32 %v2524, %v857
        %v2742 = vmul.f32 %v2529, %v862
        %v2743 = vmul.f32 %v2534, %v865
        %v2744 = vmul.f32 %v2539, %v870
        %v2745 = vmul.f32 %v2544, %v873
        %v2746 = vmul.f32 %v2549, %v878
        %v2747 = vmul.f32 %v2554, %v881
        %v2748 = vmul.f32 %v2559, %v886
        %v2749 = vmul.f32 %v2564, %v889
        %v2750 = vmul.f32 %v2569, %v894
        %v2751 = vmul.f32 %v2574, %v897
        %v2752 = vmul.f32 %v2579, %v902
        %v2753 = vmul.f32 %v2584, %v905
        %v2754 = vmul.f32 %v2589, %v910
        %v2755 = vmul.f32 %v2594, %v913
        %v2756 = vmul.f32 %v2599, %v918
        %v2757 = vmul.f32 %v2604, %v921
        %v2758 = vmul.f32 %v2609, %v926
        %v2759 = vmul.f32 %v2614, %v929
        %v2760 = vmul.f32 %v2619, %v934
        %v2761 = vmul.f32 %v2624, %v937
        %v2762 = vmul.f32 %v2629, %v942
        %v2763 = vmul.f32 %v2634, %v945
        %v2764 = vmul.f32 %v2639, %v950
        %v2765 = vmul.f32 %v2644, %v953
        %v2766 = vmul.f32 %v2649, %v958
        %v2767 = vmul.f32 %v2654, %v961
        %v2768 = vmul.f32 %v2659, %v966
        %v2769 = vmul.f32 %v2664, %v969
        %v2770 = vmul.f32 %v2669, %v974
        %v2771 = vmul.f32 %v2674, %v977
        %v2772 = vmul.f32 %v2679, %v982
        %v2773 = vmul.f32 %v2684, %v985
        %v2774 = vmul.f32 %v2689, %v990
        %v2775 = vmul.f32 %v2694, %v993
        %v2776 = vmul.f32 %v2699, %v998
        %v2777 = vmul.f32 %v2704, %v1001
        %v2778 = vmul.f32 %v2709, %v1006
        %v2779 = vmul.f32 %v2714, %v1009
        %v2780 = vsel %vm626, %v2716, 0.0
        %v2781 = vsel %vm626, %v2717, 0.0
        %v2782 = vadd.f32 %v2780, %v2781
        %v2783 = vrot.slane %v2782, 4
        %v2784 = vadd.f32 %v2782, %v2783
        %v2785 = vrot.slane %v2784, 2
        %v2786 = vadd.f32 %v2784, %v2785
        %v2787 = vrot.slane %v2786, 1
        %v2788 = vadd.f32 %v2786, %v2787
        %v2789 = vsel %vm626, %v2718, 0.0
        %v2790 = vsel %vm626, %v2719, 0.0
        %v2791 = vadd.f32 %v2789, %v2790
        %v2792 = vrot.slane %v2791, 4
        %v2793 = vadd.f32 %v2791, %v2792
        %v2794 = vrot.slane %v2793, 2
        %v2795 = vadd.f32 %v2793, %v2794
        %v2796 = vrot.slane %v2795, 1
        %v2797 = vadd.f32 %v2795, %v2796
        %v2798 = vsel %vm626, %v2720, 0.0
        %v2799 = vsel %vm626, %v2721, 0.0
        %v2800 = vadd.f32 %v2798, %v2799
        %v2801 = vrot.slane %v2800, 4
        %v2802 = vadd.f32 %v2800, %v2801
        %v2803 = vrot.slane %v2802, 2
        %v2804 = vadd.f32 %v2802, %v2803
        %v2805 = vrot.slane %v2804, 1
        %v2806 = vadd.f32 %v2804, %v2805
        %v2807 = vsel %vm626, %v2722, 0.0
        %v2808 = vsel %vm626, %v2723, 0.0
        %v2809 = vadd.f32 %v2807, %v2808
        %v2810 = vrot.slane %v2809, 4
        %v2811 = vadd.f32 %v2809, %v2810
        %v2812 = vrot.slane %v2811, 2
        %v2813 = vadd.f32 %v2811, %v2812
        %v2814 = vrot.slane %v2813, 1
        %v2815 = vadd.f32 %v2813, %v2814
        %v2816 = vsel %vm626, %v2724, 0.0
        %v2817 = vsel %vm626, %v2725, 0.0
        %v2818 = vadd.f32 %v2816, %v2817
        %v2819 = vrot.slane %v2818, 4
        %v2820 = vadd.f32 %v2818, %v2819
        %v2821 = vrot.slane %v2820, 2
        %v2822 = vadd.f32 %v2820, %v2821
        %v2823 = vrot.slane %v2822, 1
        %v2824 = vadd.f32 %v2822, %v2823
        %v2825 = vsel %vm626, %v2726, 0.0
        %v2826 = vsel %vm626, %v2727, 0.0
        %v2827 = vadd.f32 %v2825, %v2826
        %v2828 = vrot.slane %v2827, 4
        %v2829 = vadd.f32 %v2827, %v2828
        %v2830 = vrot.slane %v2829, 2
        %v2831 = vadd.f32 %v2829, %v2830
        %v2832 = vrot.slane %v2831, 1
        %v2833 = vadd.f32 %v2831, %v2832
        %v2834 = vsel %vm626, %v2728, 0.0
        %v2835 = vsel %vm626, %v2729, 0.0
        %v2836 = vadd.f32 %v2834, %v2835
        %v2837 = vrot.slane %v2836, 4
        %v2838 = vadd.f32 %v2836, %v2837
        %v2839 = vrot.slane %v2838, 2
        %v2840 = vadd.f32 %v2838, %v2839
        %v2841 = vrot.slane %v2840, 1
        %v2842 = vadd.f32 %v2840, %v2841
        %v2843 = vsel %vm626, %v2730, 0.0
        %v2844 = vsel %vm626, %v2731, 0.0
        %v2845 = vadd.f32 %v2843, %v2844
        %v2846 = vrot.slane %v2845, 4
        %v2847 = vadd.f32 %v2845, %v2846
        %v2848 = vrot.slane %v2847, 2
        %v2849 = vadd.f32 %v2847, %v2848
        %v2850 = vrot.slane %v2849, 1
        %v2851 = vadd.f32 %v2849, %v2850
        %v2852 = vsel %vm626, %v2732, 0.0
        %v2853 = vsel %vm626, %v2733, 0.0
        %v2854 = vadd.f32 %v2852, %v2853
        %v2855 = vrot.slane %v2854, 4
        %v2856 = vadd.f32 %v2854, %v2855
        %v2857 = vrot.slane %v2856, 2
        %v2858 = vadd.f32 %v2856, %v2857
        %v2859 = vrot.slane %v2858, 1
        %v2860 = vadd.f32 %v2858, %v2859
        %v2861 = vsel %vm626, %v2734, 0.0
        %v2862 = vsel %vm626, %v2735, 0.0
        %v2863 = vadd.f32 %v2861, %v2862
        %v2864 = vrot.slane %v2863, 4
        %v2865 = vadd.f32 %v2863, %v2864
        %v2866 = vrot.slane %v2865, 2
        %v2867 = vadd.f32 %v2865, %v2866
        %v2868 = vrot.slane %v2867, 1
        %v2869 = vadd.f32 %v2867, %v2868
        %v2870 = vsel %vm626, %v2736, 0.0
        %v2871 = vsel %vm626, %v2737, 0.0
        %v2872 = vadd.f32 %v2870, %v2871
        %v2873 = vrot.slane %v2872, 4
        %v2874 = vadd.f32 %v2872, %v2873
        %v2875 = vrot.slane %v2874, 2
        %v2876 = vadd.f32 %v2874, %v2875
        %v2877 = vrot.slane %v2876, 1
        %v2878 = vadd.f32 %v2876, %v2877
        %v2879 = vsel %vm626, %v2738, 0.0
        %v2880 = vsel %vm626, %v2739, 0.0
        %v2881 = vadd.f32 %v2879, %v2880
        %v2882 = vrot.slane %v2881, 4
        %v2883 = vadd.f32 %v2881, %v2882
        %v2884 = vrot.slane %v2883, 2
        %v2885 = vadd.f32 %v2883, %v2884
        %v2886 = vrot.slane %v2885, 1
        %v2887 = vadd.f32 %v2885, %v2886
        %v2888 = vsel %vm626, %v2740, 0.0
        %v2889 = vsel %vm626, %v2741, 0.0
        %v2890 = vadd.f32 %v2888, %v2889
        %v2891 = vrot.slane %v2890, 4
        %v2892 = vadd.f32 %v2890, %v2891
        %v2893 = vrot.slane %v2892, 2
        %v2894 = vadd.f32 %v2892, %v2893
        %v2895 = vrot.slane %v2894, 1
        %v2896 = vadd.f32 %v2894, %v2895
        %v2897 = vsel %vm626, %v2742, 0.0
        %v2898 = vsel %vm626, %v2743, 0.0
        %v2899 = vadd.f32 %v2897, %v2898
        %v2900 = vrot.slane %v2899, 4
        %v2901 = vadd.f32 %v2899, %v2900
        %v2902 = vrot.slane %v2901, 2
        %v2903 = vadd.f32 %v2901, %v2902
        %v2904 = vrot.slane %v2903, 1
        %v2905 = vadd.f32 %v2903, %v2904
        %v2906 = vsel %vm626, %v2744, 0.0
        %v2907 = vsel %vm626, %v2745, 0.0
        %v2908 = vadd.f32 %v2906, %v2907
        %v2909 = vrot.slane %v2908, 4
        %v2910 = vadd.f32 %v2908, %v2909
        %v2911 = vrot.slane %v2910, 2
        %v2912 = vadd.f32 %v2910, %v2911
        %v2913 = vrot.slane %v2912, 1
        %v2914 = vadd.f32 %v2912, %v2913
        %v2915 = vsel %vm626, %v2746, 0.0
        %v2916 = vsel %vm626, %v2747, 0.0
        %v2917 = vadd.f32 %v2915, %v2916
        %v2918 = vrot.slane %v2917, 4
        %v2919 = vadd.f32 %v2917, %v2918
        %v2920 = vrot.slane %v2919, 2
        %v2921 = vadd.f32 %v2919, %v2920
        %v2922 = vrot.slane %v2921, 1
        %v2923 = vadd.f32 %v2921, %v2922
        %v2924 = vsel %vm626, %v2748, 0.0
        %v2925 = vsel %vm626, %v2749, 0.0
        %v2926 = vadd.f32 %v2924, %v2925
        %v2927 = vrot.slane %v2926, 4
        %v2928 = vadd.f32 %v2926, %v2927
        %v2929 = vrot.slane %v2928, 2
        %v2930 = vadd.f32 %v2928, %v2929
        %v2931 = vrot.slane %v2930, 1
        %v2932 = vadd.f32 %v2930, %v2931
        %v2933 = vsel %vm626, %v2750, 0.0
        %v2934 = vsel %vm626, %v2751, 0.0
        %v2935 = vadd.f32 %v2933, %v2934
        %v2936 = vrot.slane %v2935, 4
        %v2937 = vadd.f32 %v2935, %v2936
        %v2938 = vrot.slane %v2937, 2
        %v2939 = vadd.f32 %v2937, %v2938
        %v2940 = vrot.slane %v2939, 1
        %v2941 = vadd.f32 %v2939, %v2940
        %v2942 = vsel %vm626, %v2752, 0.0
        %v2943 = vsel %vm626, %v2753, 0.0
        %v2944 = vadd.f32 %v2942, %v2943
        %v2945 = vrot.slane %v2944, 4
        %v2946 = vadd.f32 %v2944, %v2945
        %v2947 = vrot.slane %v2946, 2
        %v2948 = vadd.f32 %v2946, %v2947
        %v2949 = vrot.slane %v2948, 1
        %v2950 = vadd.f32 %v2948, %v2949
        %v2951 = vsel %vm626, %v2754, 0.0
        %v2952 = vsel %vm626, %v2755, 0.0
        %v2953 = vadd.f32 %v2951, %v2952
        %v2954 = vrot.slane %v2953, 4
        %v2955 = vadd.f32 %v2953, %v2954
        %v2956 = vrot.slane %v2955, 2
        %v2957 = vadd.f32 %v2955, %v2956
        %v2958 = vrot.slane %v2957, 1
        %v2959 = vadd.f32 %v2957, %v2958
        %v2960 = vsel %vm626, %v2756, 0.0
        %v2961 = vsel %vm626, %v2757, 0.0
        %v2962 = vadd.f32 %v2960, %v2961
        %v2963 = vrot.slane %v2962, 4
        %v2964 = vadd.f32 %v2962, %v2963
        %v2965 = vrot.slane %v2964, 2
        %v2966 = vadd.f32 %v2964, %v2965
        %v2967 = vrot.slane %v2966, 1
        %v2968 = vadd.f32 %v2966, %v2967
        %v2969 = vsel %vm626, %v2758, 0.0
        %v2970 = vsel %vm626, %v2759, 0.0
        %v2971 = vadd.f32 %v2969, %v2970
        %v2972 = vrot.slane %v2971, 4
        %v2973 = vadd.f32 %v2971, %v2972
        %v2974 = vrot.slane %v2973, 2
        %v2975 = vadd.f32 %v2973, %v2974
        %v2976 = vrot.slane %v2975, 1
        %v2977 = vadd.f32 %v2975, %v2976
        %v2978 = vsel %vm626, %v2760, 0.0
        %v2979 = vsel %vm626, %v2761, 0.0
        %v2980 = vadd.f32 %v2978, %v2979
        %v2981 = vrot.slane %v2980, 4
        %v2982 = vadd.f32 %v2980, %v2981
        %v2983 = vrot.slane %v2982, 2
        %v2984 = vadd.f32 %v2982, %v2983
        %v2985 = vrot.slane %v2984, 1
        %v2986 = vadd.f32 %v2984, %v2985
        %v2987 = vsel %vm626, %v2762, 0.0
        %v2988 = vsel %vm626, %v2763, 0.0
        %v2989 = vadd.f32 %v2987, %v2988
        %v2990 = vrot.slane %v2989, 4
        %v2991 = vadd.f32 %v2989, %v2990
        %v2992 = vrot.slane %v2991, 2
        %v2993 = vadd.f32 %v2991, %v2992
        %v2994 = vrot.slane %v2993, 1
        %v2995 = vadd.f32 %v2993, %v2994
        %v2996 = vsel %vm626, %v2764, 0.0
        %v2997 = vsel %vm626, %v2765, 0.0
        %v2998 = vadd.f32 %v2996, %v2997
        %v2999 = vrot.slane %v2998, 4
        %v3000 = vadd.f32 %v2998, %v2999
        %v3001 = vrot.slane %v3000, 2
        %v3002 = vadd.f32 %v3000, %v3001
        %v3003 = vrot.slane %v3002, 1
        %v3004 = vadd.f32 %v3002, %v3003
        %v3005 = vsel %vm626, %v2766, 0.0
        %v3006 = vsel %vm626, %v2767, 0.0
        %v3007 = vadd.f32 %v3005, %v3006
        %v3008 = vrot.slane %v3007, 4
        %v3009 = vadd.f32 %v3007, %v3008
        %v3010 = vrot.slane %v3009, 2
        %v3011 = vadd.f32 %v3009, %v3010
        %v3012 = vrot.slane %v3011, 1
        %v3013 = vadd.f32 %v3011, %v3012
        %v3014 = vsel %vm626, %v2768, 0.0
        %v3015 = vsel %vm626, %v2769, 0.0
        %v3016 = vadd.f32 %v3014, %v3015
        %v3017 = vrot.slane %v3016, 4
        %v3018 = vadd.f32 %v3016, %v3017
        %v3019 = vrot.slane %v3018, 2
        %v3020 = vadd.f32 %v3018, %v3019
        %v3021 = vrot.slane %v3020, 1
        %v3022 = vadd.f32 %v3020, %v3021
        %v3023 = vsel %vm626, %v2770, 0.0
        %v3024 = vsel %vm626, %v2771, 0.0
        %v3025 = vadd.f32 %v3023, %v3024
        %v3026 = vrot.slane %v3025, 4
        %v3027 = vadd.f32 %v3025, %v3026
        %v3028 = vrot.slane %v3027, 2
        %v3029 = vadd.f32 %v3027, %v3028
        %v3030 = vrot.slane %v3029, 1
        %v3031 = vadd.f32 %v3029, %v3030
        %v3032 = vsel %vm626, %v2772, 0.0
        %v3033 = vsel %vm626, %v2773, 0.0
        %v3034 = vadd.f32 %v3032, %v3033
        %v3035 = vrot.slane %v3034, 4
        %v3036 = vadd.f32 %v3034, %v3035
        %v3037 = vrot.slane %v3036, 2
        %v3038 = vadd.f32 %v3036, %v3037
        %v3039 = vrot.slane %v3038, 1
        %v3040 = vadd.f32 %v3038, %v3039
        %v3041 = vsel %vm626, %v2774, 0.0
        %v3042 = vsel %vm626, %v2775, 0.0
        %v3043 = vadd.f32 %v3041, %v3042
        %v3044 = vrot.slane %v3043, 4
        %v3045 = vadd.f32 %v3043, %v3044
        %v3046 = vrot.slane %v3045, 2
        %v3047 = vadd.f32 %v3045, %v3046
        %v3048 = vrot.slane %v3047, 1
        %v3049 = vadd.f32 %v3047, %v3048
        %v3050 = vsel %vm626, %v2776, 0.0
        %v3051 = vsel %vm626, %v2777, 0.0
        %v3052 = vadd.f32 %v3050, %v3051
        %v3053 = vrot.slane %v3052, 4
        %v3054 = vadd.f32 %v3052, %v3053
        %v3055 = vrot.slane %v3054, 2
        %v3056 = vadd.f32 %v3054, %v3055
        %v3057 = vrot.slane %v3056, 1
        %v3058 = vadd.f32 %v3056, %v3057
        %v3059 = vsel %vm626, %v2778, 0.0
        %v3060 = vsel %vm626, %v2779, 0.0
        %v3061 = vadd.f32 %v3059, %v3060
        %v3062 = vrot.slane %v3061, 4
        %v3063 = vadd.f32 %v3061, %v3062
        %v3064 = vrot.slane %v3063, 2
        %v3065 = vadd.f32 %v3063, %v3064
        %v3066 = vrot.slane %v3065, 1
        %v3067 = vadd.f32 %v3065, %v3066
        %v3068 = vpack.c.bf16 %v2788, %v2788
        %v3069 = vpack.c.bf16 %v2797, %v2797
        %v3070 = vpack.c.bf16 %v2806, %v2806
        %v3071 = vpack.c.bf16 %v2815, %v2815
        %v3072 = vpack.c.bf16 %v2824, %v2824
        %v3073 = vpack.c.bf16 %v2833, %v2833
        %v3074 = vpack.c.bf16 %v2842, %v2842
        %v3075 = vpack.c.bf16 %v2851, %v2851
        %v3076 = vpack.c.bf16 %v2860, %v2860
        %v3077 = vpack.c.bf16 %v2869, %v2869
        %v3078 = vpack.c.bf16 %v2878, %v2878
        %v3079 = vpack.c.bf16 %v2887, %v2887
        %v3080 = vpack.c.bf16 %v2896, %v2896
        %v3081 = vpack.c.bf16 %v2905, %v2905
        %v3082 = vpack.c.bf16 %v2914, %v2914
        %v3083 = vpack.c.bf16 %v2923, %v2923
        %v3084 = vpack.c.bf16 %v2932, %v2932
        %v3085 = vpack.c.bf16 %v2941, %v2941
        %v3086 = vpack.c.bf16 %v2950, %v2950
        %v3087 = vpack.c.bf16 %v2959, %v2959
        %v3088 = vpack.c.bf16 %v2968, %v2968
        %v3089 = vpack.c.bf16 %v2977, %v2977
        %v3090 = vpack.c.bf16 %v2986, %v2986
        %v3091 = vpack.c.bf16 %v2995, %v2995
        %v3092 = vpack.c.bf16 %v3004, %v3004
        %v3093 = vpack.c.bf16 %v3013, %v3013
        %v3094 = vpack.c.bf16 %v3022, %v3022
        %v3095 = vpack.c.bf16 %v3031, %v3031
        %v3096 = vpack.c.bf16 %v3040, %v3040
        %v3097 = vpack.c.bf16 %v3049, %v3049
        %v3098 = vpack.c.bf16 %v3058, %v3058
        %v3099 = vpack.c.bf16 %v3067, %v3067
        %v3100 = vld [vmem:[%s5] sm:$0xf]
        %v3101 = vld [vmem:[%s5 + $0x4] sm:$0xf]
        %v3102 = vld [vmem:[%s5 + $0x8] sm:$0xf]
        %v3103 = vld [vmem:[%s5 + $0xc] sm:$0xf]
        %v3104 = vld [vmem:[%s5 + $0x10] sm:$0xf]
        %v3105 = vld [vmem:[%s5 + $0x14] sm:$0xf]
        %v3106 = vld [vmem:[%s5 + $0x18] sm:$0xf]
        %v3107 = vld [vmem:[%s5 + $0x1c] sm:$0xf]
        %v3108 = vld [vmem:[%s6] sm:$0x1]
        %v3110 = vlaneseq
        %v3111 = vshrl.u32 %v3110, 7
        %v3112 = vsub.s32 0, %v3111
        %v3113 = vrot.slane %v3108, %v3112
        %v3147 = vunpack.c.l.b16 %v3068
        %v3148 = vunpack.c.l.b16 %v3069
        %v3149 = vunpack.c.l.b16 %v3070
        %v3150 = vunpack.c.l.b16 %v3071
        %v3151 = vunpack.c.l.b16 %v3072
        %v3152 = vunpack.c.l.b16 %v3073
        %v3153 = vunpack.c.l.b16 %v3074
        %v3154 = vunpack.c.l.b16 %v3075
        %v3155 = vunpack.c.l.b16 %v3076
        %v3156 = vunpack.c.l.b16 %v3077
        %v3157 = vunpack.c.l.b16 %v3078
        %v3158 = vunpack.c.l.b16 %v3079
        %v3159 = vunpack.c.l.b16 %v3080
        %v3160 = vunpack.c.l.b16 %v3081
        %v3161 = vunpack.c.l.b16 %v3082
        %v3162 = vunpack.c.l.b16 %v3083
        %v3163 = vunpack.c.l.b16 %v3084
        %v3164 = vunpack.c.l.b16 %v3085
        %v3165 = vunpack.c.l.b16 %v3086
        %v3166 = vunpack.c.l.b16 %v3087
        %v3167 = vunpack.c.l.b16 %v3088
        %v3168 = vunpack.c.l.b16 %v3089
        %v3169 = vunpack.c.l.b16 %v3090
        %v3170 = vunpack.c.l.b16 %v3091
        %v3171 = vunpack.c.l.b16 %v3092
        %v3172 = vunpack.c.l.b16 %v3093
        %v3173 = vunpack.c.l.b16 %v3094
        %v3174 = vunpack.c.l.b16 %v3095
        %v3175 = vunpack.c.l.b16 %v3096
        %v3176 = vunpack.c.l.b16 %v3097
        %v3177 = vunpack.c.l.b16 %v3098
        %v3178 = vunpack.c.l.b16 %v3099
        %vm3179 = vcmask 1041409
        %v3180 = vsel %vm3179, %v3148, %v3147
        %vm3181 = vcmask 1042434
        %v3182 = vsel %vm3181, %v3149, %v3180
        %vm3183 = vcmask 1043459
        %v3184 = vsel %vm3183, %v3150, %v3182
        %vm3185 = vcmask 1044484
        %v3186 = vsel %vm3185, %v3151, %v3184
        %vm3187 = vcmask 1045509
        %v3188 = vsel %vm3187, %v3152, %v3186
        %vm3189 = vcmask 1046534
        %v3190 = vsel %vm3189, %v3153, %v3188
        %vm3191 = vcmask 1047559
        %v3192 = vsel %vm3191, %v3154, %v3190
        %v3193 = vsel %vm3179, %v3156, %v3155
        %v3194 = vsel %vm3181, %v3157, %v3193
        %v3195 = vsel %vm3183, %v3158, %v3194
        %v3196 = vsel %vm3185, %v3159, %v3195
        %v3197 = vsel %vm3187, %v3160, %v3196
        %v3198 = vsel %vm3189, %v3161, %v3197
        %v3199 = vsel %vm3191, %v3162, %v3198
        %v3200 = vsel %vm3179, %v3164, %v3163
        %v3201 = vsel %vm3181, %v3165, %v3200
        %v3202 = vsel %vm3183, %v3166, %v3201
        %v3203 = vsel %vm3185, %v3167, %v3202
        %v3204 = vsel %vm3187, %v3168, %v3203
        %v3205 = vsel %vm3189, %v3169, %v3204
        %v3206 = vsel %vm3191, %v3170, %v3205
        %v3207 = vsel %vm3179, %v3172, %v3171
        %v3208 = vsel %vm3181, %v3173, %v3207
        %v3209 = vsel %vm3183, %v3174, %v3208
        %v3210 = vsel %vm3185, %v3175, %v3209
        %v3211 = vsel %vm3187, %v3176, %v3210
        %v3212 = vsel %vm3189, %v3177, %v3211
        %v3213 = vsel %vm3191, %v3178, %v3212
        %v3214 = vpack.c.b16 %v3199, %v3192
        %v3215 = vpack.c.b16 %v3213, %v3206
        %v3224 = vunpack.c.l.b16 %v3100
        %v3225 = vunpack.c.l.b16 %v3101
        %v3226 = vunpack.c.l.b16 %v3102
        %v3227 = vunpack.c.l.b16 %v3103
        %v3228 = vunpack.c.l.b16 %v3104
        %v3229 = vunpack.c.l.b16 %v3105
        %v3230 = vunpack.c.l.b16 %v3106
        %v3231 = vunpack.c.l.b16 %v3107
        %v3232 = vpack.c.b16 %v3225, %v3224
        %v3233 = vpack.c.b16 %v3227, %v3226
        %v3234 = vpack.c.b16 %v3229, %v3228
        %v3235 = vpack.c.b16 %v3231, %v3230
        %v3241 = vsel %vm626, %v3214, 0
        %v3244 = vsel %vm626, %v3215, 0
        %3246 = vmatprep.subr.bf16.mxu0 0
        %3247 = vmatpush1.bf16.msra.mxu0 %v3232
        %3248 = vmatprep.subr.bf16.mxu0 0
        %3249 = vmatpush1.bf16.msra.mxu0 %v3233
        %3250 = vmatprep.subr.bf16.mxu0 0
        %3251 = vmatpush1.bf16.msra.mxu0 %v3234
        %3252 = vmatprep.subr.bf16.mxu0 0
        %3253 = vmatpush1.bf16.msra.mxu0 %v3235
        %3254 = vmatprep.subr.bf16.mxu0 0
        %3255 = vmatpush1.bf16.msra.mxu0 0
        %3256 = vmatprep.subr.bf16.mxu0 0
        %3257 = vmatpush1.bf16.msra.mxu0 0
        %3258 = vmatprep.subr.bf16.mxu0 0
        %3259 = vmatpush1.bf16.msra.mxu0 0
        %3260 = vmatprep.subr.bf16.mxu0 0
        %3261 = vmatpush1.bf16.msra.mxu0 0
        %3262 = vmatprep.subr.bf16.mxu0 0
        %3263 = vmatpush1.bf16.msra.mxu0 0
        %3264 = vmatprep.subr.bf16.mxu0 0
        %3265 = vmatpush1.bf16.msra.mxu0 0
        %3266 = vmatprep.subr.bf16.mxu0 0
        %3267 = vmatpush1.bf16.msra.mxu0 0
        %3268 = vmatprep.subr.bf16.mxu0 0
        %3269 = vmatpush1.bf16.msra.mxu0 0
        %3270 = vmatprep.subr.bf16.mxu0 0
        %3271 = vmatpush1.bf16.msra.mxu0 0
        %3272 = vmatprep.subr.bf16.mxu0 0
        %3273 = vmatpush1.bf16.msra.mxu0 0
        %3274 = vmatprep.subr.bf16.mxu0 0
        %3275 = vmatpush1.bf16.msra.mxu0 0
        %3276 = vmatprep.subr.bf16.mxu0 0
        %3277 = vmatpush1.bf16.msra.mxu0 0
        %3278 = vmatprep.mubr.bf16.mxu0 0
        %3279 = vmatmul.mubr.bf16.gmra.mrb[0].mxu0 %v3241
        %v3280 = vpop.f32.mrb[0].mxu0
        %v3281 = vadd.f32 %v3113, %v3280
        %v3282 = vpop.f32.mrb[0].mxu0
        %v3283 = vpop.f32.mrb[0].mxu0
        %v3284 = vadd.f32 %v3113, %v3283
        %v3285 = vpop.f32.mrb[0].mxu0
        %3286 = vmatprep.mubr.bf16.mxu0 0
        %3287 = vmatmul.mubr.bf16.gmra.mrb[0].mxu0 %v3244
        %v3288 = vpop.f32.mrb[0].mxu0
        %v3289 = vadd.f32 %v3113, %v3288
        %v3290 = vpop.f32.mrb[0].mxu0
        %v3291 = vpop.f32.mrb[0].mxu0
        %v3292 = vadd.f32 %v3113, %v3291
        %v3293 = vpop.f32.mrb[0].mxu0
        %3294 = vdwg.mxu0
        %v3295 = vmax.f32 %v3281, 0.0
        %v3296 = vmax.f32 %v3284, 0.0
        %v3297 = vmax.f32 %v3289, 0.0
        %v3298 = vmax.f32 %v3292, 0.0
        %v3299 = vpack.c.bf16 %v3296, %v3295
        %v3300 = vpack.c.bf16 %v3298, %v3297
        %v3301 = vld [vmem:[%s7] sm:$0xf]
        %v3302 = vld [vmem:[%s7 + $0x4] sm:$0xf]
        %v3303 = vld [vmem:[%s7 + $0x8] sm:$0xf]
        %v3304 = vld [vmem:[%s7 + $0xc] sm:$0xf]
        %v3305 = vld [vmem:[%s7 + $0x10] sm:$0xf]
        %v3306 = vld [vmem:[%s7 + $0x14] sm:$0xf]
        %v3307 = vld [vmem:[%s7 + $0x18] sm:$0xf]
        %v3308 = vld [vmem:[%s7 + $0x1c] sm:$0xf]
        %v3309 = vld [vmem:[%s7 + $0x20] sm:$0xf]
        %v3310 = vld [vmem:[%s7 + $0x24] sm:$0xf]
        %v3311 = vld [vmem:[%s7 + $0x28] sm:$0xf]
        %v3312 = vld [vmem:[%s7 + $0x2c] sm:$0xf]
        %v3313 = vld [vmem:[%s7 + $0x30] sm:$0xf]
        %v3314 = vld [vmem:[%s7 + $0x34] sm:$0xf]
        %v3315 = vld [vmem:[%s7 + $0x38] sm:$0xf]
        %v3316 = vld [vmem:[%s7 + $0x3c] sm:$0xf]
        %v3317 = vld [vmem:[%s8] sm:$0x1]
        %v3319 = vlaneseq
        %v3320 = vshrl.u32 %v3319, 7
        %v3321 = vsub.s32 0, %v3320
        %v3322 = vrot.slane %v3317, %v3321
        %v3340 = vunpack.c.l.b16 %v3301
        %v3341 = vunpack.c.l.b16 %v3302
        %v3342 = vunpack.c.l.b16 %v3303
        %v3343 = vunpack.c.l.b16 %v3304
        %v3344 = vunpack.c.l.b16 %v3305
        %v3345 = vunpack.c.l.b16 %v3306
        %v3346 = vunpack.c.l.b16 %v3307
        %v3347 = vunpack.c.l.b16 %v3308
        %v3348 = vunpack.c.l.b16 %v3309
        %v3349 = vunpack.c.l.b16 %v3310
        %v3350 = vunpack.c.l.b16 %v3311
        %v3351 = vunpack.c.l.b16 %v3312
        %v3352 = vunpack.c.l.b16 %v3313
        %v3353 = vunpack.c.l.b16 %v3314
        %v3354 = vunpack.c.l.b16 %v3315
        %v3355 = vunpack.c.l.b16 %v3316
        %v3356 = vpack.c.b16 %v3341, %v3340
        %v3357 = vpack.c.b16 %v3343, %v3342
        %v3358 = vpack.c.b16 %v3345, %v3344
        %v3359 = vpack.c.b16 %v3347, %v3346
        %v3360 = vpack.c.b16 %v3349, %v3348
        %v3361 = vpack.c.b16 %v3351, %v3350
        %v3362 = vpack.c.b16 %v3353, %v3352
        %v3363 = vpack.c.b16 %v3355, %v3354
        %3372 = vmatprep.subr.bf16.mxu0 0
        %3373 = vmatpush1.bf16.msra.mxu0 %v3356
        %3374 = vmatprep.subr.bf16.mxu0 0
        %3375 = vmatpush1.bf16.msra.mxu0 %v3357
        %3376 = vmatprep.subr.bf16.mxu0 0
        %3377 = vmatpush1.bf16.msra.mxu0 %v3358
        %3378 = vmatprep.subr.bf16.mxu0 0
        %3379 = vmatpush1.bf16.msra.mxu0 %v3359
        %3380 = vmatprep.subr.bf16.mxu0 0
        %3381 = vmatpush1.bf16.msra.mxu0 %v3360
        %3382 = vmatprep.subr.bf16.mxu0 0
        %3383 = vmatpush1.bf16.msra.mxu0 %v3361
        %3384 = vmatprep.subr.bf16.mxu0 0
        %3385 = vmatpush1.bf16.msra.mxu0 %v3362
        %3386 = vmatprep.subr.bf16.mxu0 0
        %3387 = vmatpush1.bf16.msra.mxu0 %v3363
        %3388 = vmatprep.subr.bf16.mxu0 0
        %3389 = vmatpush1.bf16.msra.mxu0 0
        %3390 = vmatprep.subr.bf16.mxu0 0
        %3391 = vmatpush1.bf16.msra.mxu0 0
        %3392 = vmatprep.subr.bf16.mxu0 0
        %3393 = vmatpush1.bf16.msra.mxu0 0
        %3394 = vmatprep.subr.bf16.mxu0 0
        %3395 = vmatpush1.bf16.msra.mxu0 0
        %3396 = vmatprep.subr.bf16.mxu0 0
        %3397 = vmatpush1.bf16.msra.mxu0 0
        %3398 = vmatprep.subr.bf16.mxu0 0
        %3399 = vmatpush1.bf16.msra.mxu0 0
        %3400 = vmatprep.subr.bf16.mxu0 0
        %3401 = vmatpush1.bf16.msra.mxu0 0
        %3402 = vmatprep.subr.bf16.mxu0 0
        %3403 = vmatpush1.bf16.msra.mxu0 0
        %3404 = vmatprep.mubr.bf16.mxu0 0
        %3405 = vmatmul.mubr.bf16.gmra.mrb[0].mxu0 %v3299
        %v3406 = vpop.f32.mrb[0].mxu0
        %v3407 = vadd.f32 %v3322, %v3406
        %v3408 = vpop.f32.mrb[0].mxu0
        %v3409 = vpop.f32.mrb[0].mxu0
        %v3410 = vadd.f32 %v3322, %v3409
        %v3411 = vpop.f32.mrb[0].mxu0
        %3412 = vmatprep.mubr.bf16.mxu0 0
        %3413 = vmatmul.mubr.bf16.gmra.mrb[0].mxu0 %v3300
        %v3414 = vpop.f32.mrb[0].mxu0
        %v3415 = vadd.f32 %v3322, %v3414
        %v3416 = vpop.f32.mrb[0].mxu0
        %v3417 = vpop.f32.mrb[0].mxu0
        %v3418 = vadd.f32 %v3322, %v3417
        %v3419 = vpop.f32.mrb[0].mxu0
        %3420 = vdwg.mxu0
        %3421 = vst [vmem:[%s346] sm:$0xff] %v3407
        %3422 = vst [vmem:[%s346 + $0x8] sm:$0xff] %v3410
        %3423 = vst [vmem:[%s346 + $0x10] sm:$0xff] %v3415
        %3424 = vst [vmem:[%s346 + $0x18] sm:$0xff] %v3418
        %s3425 = sand.u32 %s230, 1
        %s3426 = scalar_lea.sflag [#allocation3], %s3425
        %s3427 = sand.u32 %s230, 1
        %s3428 = smul.addr %s3427, 32
        %s3429 = scalar_lea.vmem [#allocation2], %s3428
        // Predicated region
        $region57: #{tpu_custom_call.1} parent=55 // pred_check
          %p3430 = pneg %p240
        $region58: #{tpu_custom_call.1} parent=55 // pred_check_branch
          %3432 = sbr.rel (%p3430) target = $region60
        $region59: #{tpu_custom_call.1} parent=55 // pred_region
          %s3433 = smul.u32 4, %s23
          %s3435 = ssub.s32 512, 512
          %3436 = vsyncadd %s3426, %s3435
          %s3437 = smul.addr %s3433, 128
          %s3438 = scalar_lea.hbm %s9, %s3437
          %s3439 = sshll.u32 %s3429, 4
          %s3440 = int_to_ptr.vmem [resolvable:$true] %s3439
          %3445 = dma.vmem_to_hbm [thread:$0]  %s3440, 512, %s3438, %s3426, 128, 128, 8
        $region60: #{tpu_custom_call.1} parent=55 // pred_fallthru
          _
      $region56: #{tpu_custom_call.1} parent=5 // pred_fallthru
        _
      %p3446 = scmp.le.s32.totalorder 2, %s18
      // Predicated region
      $region61: #{tpu_custom_call.1} parent=5 // pred_check
        %p3447 = pneg %p3446
      $region62: #{tpu_custom_call.1} parent=5 // pred_check_branch
        %3449 = sbr.rel (%p3447) target = $region64
      $region63: #{tpu_custom_call.1} parent=5 // pred_region
        %s3450 = ssub.s32 %s18, 2
        // Predicated region
        $region65: #{tpu_custom_call.1} parent=63 // pred_check
          %p3451 = pneg %p246
        $region66: #{tpu_custom_call.1} parent=63 // pred_check_branch
          %3453 = sbr.rel (%p3451) target = $region68
        $region67: #{tpu_custom_call.1} parent=63 // pred_region
          %s3454 = sand.u32 %s231, 1
          %s3455 = scalar_lea.sflag [#allocation3], %s3454
          %s3456 = sand.u32 %s231, 1
          %s3457 = smul.addr %s3456, 32
          %s3458 = scalar_lea.vmem [#allocation2], %s3457
          %3459 = dma.done %s3455, 512
        $region68: #{tpu_custom_call.1} parent=63 // pred_fallthru
          _
      $region64: #{tpu_custom_call.1} parent=5 // pred_fallthru
        _
    $region6: #{tpu_custom_call.1} parent=1 // loop_footer
      %s22 = sadd.s32 1, %s18
    $region7: #{tpu_custom_call.1} parent=1 // loop_footer_branch
      %17 = sbr.rel target = $region3
    $region8: #{tpu_custom_call.1} parent=1 // loop_exit
      _
    %3460 = vsyncpa [#allocation3], 1
    %s3461 = scalar_lea.sflag [#allocation3], 1
    %3462 = vsyncpa %s3461, 1

</llo_original>
